<compile_context>
chip_gen: v7x
topology: tpu7x:2x2x1
jax: 0.10.0
libtpu: 0.0.40
codegen_flags: <defaults>
</compile_context>

<pallas_src>
from functools import partial

import jax
import jax.numpy as jnp
from jax.experimental import pallas as pl
from jax.experimental.pallas import tpu as pltpu

NEG_SLOPE = 0.2
DILATIONS = (1, 2, 3, 4)          # square=False variant of ContextBlock
PAD = max(DILATIONS)              # row halo (top/bottom)
LPAD = 8                          # left column halo, f32 sublane tile aligned
RPAD = 8                          # right column halo (>= PAD, keeps width %8==0)


def _lrelu(x):
    return jnp.where(x >= 0, x, NEG_SLOPE * x)


def context_block_kernel(x_ref, w0_ref, b0_ref, wd_ref, bd_ref, wf_ref,
                         bf_ref, out_ref, xr_pad_ref, *, H, W, Cin, Cout):
    f32 = jnp.float32
    bf16 = jnp.bfloat16
    w_pad = LPAD + W + RPAD

    # ---- conv0 (1x1): one bf16 MXU matmul, f32 accumulation ----
    x = x_ref[0, :, :, :].reshape(H * W, Cin)                     # f32 (residual)
    xr = jnp.dot(x.astype(bf16), w0_ref[...],
                 preferred_element_type=f32) + b0_ref[...]        # (H*W, Cout)

    # ---- stash padded x_reduce in VMEM scratch ----
    # Interior starts at column LPAD=8, so the big store and the zero strips
    # are sublane-aligned.  Halos are re-zeroed every grid step (no pid==0
    # init) so the kernel stays correct when the batch axis is split across
    # TensorCores.
    xr_pad_ref[0:PAD, :, :] = jnp.zeros((PAD, w_pad, Cout), f32)
    xr_pad_ref[PAD + H:2 * PAD + H, :, :] = jnp.zeros((PAD, w_pad, Cout), f32)
    xr_pad_ref[PAD:PAD + H, 0:LPAD, :] = jnp.zeros((H, LPAD, Cout), f32)
    xr_pad_ref[PAD:PAD + H, LPAD + W:w_pad, :] = jnp.zeros((H, RPAD, Cout), f32)
    xr_pad_ref[PAD:PAD + H, LPAD:LPAD + W, :] = xr.reshape(H, W, Cout)

    # ---- four dilated 3x3 convs -> lane-dense branch buffer ----
    # TODO(synk): switch this static unroll to lax.fori_loop once H*W >= 4096
    # to bound live ranges (neutral at this size).
    pre_branches = []
    for d_idx, dil in enumerate(DILATIONS):
        pre = jnp.zeros((H * W, Cout), f32)
        for kw in range(3):
            # One tall, column-shifted slab per (dilation, kw) is the only
            # sublane-misaligned read; the three kh taps are free leading-dim
            # slices of this value (misaligned reads: 36 -> 12).
            c0 = LPAD + (kw - 1) * dil
            slab = xr_pad_ref[PAD - dil:PAD + H + dil, c0:c0 + W, :]
            taps = [slab[kh * dil:kh * dil + H, :, :].reshape(H * W, Cout)
                    for kh in range(3)]
            patch = jnp.concatenate(taps, axis=1)                  # (H*W, 3*Cout)
            pre = pre + jnp.dot(patch.astype(bf16), wd_ref[d_idx, kw, :, :],
                                preferred_element_type=f32)
        pre_branches.append(pre)

    # bias + LeakyReLU once over the full 4*Cout (=128) lane-dense buffer.
    branch = jnp.concatenate(pre_branches, axis=1)                 # (H*W, 4*Cout)
    act = _lrelu(branch + bd_ref[...])                             # f32 epilogue

    # ---- fusion 1x1 conv: a single K=4*Cout bf16 matmul + residual add ----
    out = jnp.dot(act.astype(bf16), wf_ref[...],
                  preferred_element_type=f32) + bf_ref[...] + x
    out_ref[0, :, :, :] = out.reshape(H, W, Cin)


def context_block_forward(x_nchw, w0, b0, wds, bds, wf, bf):
    """x_nchw: (B, Cin, H, W) f32.  Weights in PyTorch layouts:
       w0: (Cout, Cin, 1, 1), wds[i]: (Cout, Cout, 3, 3), wf: (Cin, 4*Cout, 1, 1)."""
    B, Cin, H, W = x_nchw.shape
    Cout = w0.shape[0]
    nd = len(DILATIONS)

    x = jnp.transpose(x_nchw, (0, 2, 3, 1)).astype(jnp.float32)     # NHWC

    # conv0 (1x1): OIHW -> (Cin, Cout), bf16 matmul operand.
    w0k = jnp.transpose(w0.reshape(Cout, Cin), (1, 0)).astype(jnp.bfloat16)
    b0k = b0.reshape(1, Cout).astype(jnp.float32)

    # dilated 3x3 convs: OIHW -> (kw, kh*Cmid, Cout): one (3C, C) matrix per kw
    # (patch columns are kh-major, input-channel-minor, matching the kernel).
    wd_list = [jnp.transpose(w, (3, 2, 1, 0)).reshape(3, 3 * Cout, Cout)
               .astype(jnp.bfloat16) for w in wds]
    wdk = jnp.stack(wd_list, axis=0)                    # (4, 3, 3*Cout, Cout)
    bdk = jnp.concatenate([b.reshape(1, Cout) for b in bds],
                          axis=1).astype(jnp.float32)   # (1, 4*Cout)

    # fusion (1x1): (Cin, 4*Cout) -> one (4*Cout, Cin) matrix (K=128 matmul).
    wfk = jnp.transpose(wf.reshape(Cin, nd * Cout), (1, 0)).astype(jnp.bfloat16)
    bfk = bf.reshape(1, Cin).astype(jnp.float32)

    out_nhwc = pl.pallas_call(
        partial(context_block_kernel, H=H, W=W, Cin=Cin, Cout=Cout),
        out_shape=jax.ShapeDtypeStruct((B, H, W, Cin), jnp.float32),
        grid_spec=pltpu.PrefetchScalarGridSpec(
            num_scalar_prefetch=0,
            grid=(B,),
            in_specs=[
                pl.BlockSpec((1, H, W, Cin), lambda b: (b, 0, 0, 0)),
                pl.BlockSpec((Cin, Cout), lambda b: (0, 0)),
                pl.BlockSpec((1, Cout), lambda b: (0, 0)),
                pl.BlockSpec((nd, 3, 3 * Cout, Cout), lambda b: (0, 0, 0, 0)),
                pl.BlockSpec((1, nd * Cout), lambda b: (0, 0)),
                pl.BlockSpec((nd * Cout, Cin), lambda b: (0, 0)),
                pl.BlockSpec((1, Cin), lambda b: (0, 0)),
            ],
            out_specs=pl.BlockSpec((1, H, W, Cin), lambda b: (b, 0, 0, 0)),
            scratch_shapes=[
                pltpu.VMEM((H + 2 * PAD, LPAD + W + RPAD, Cout), jnp.float32)],
        ),
        compiler_params=pltpu.CompilerParams(
            dimension_semantics=("parallel",),
            vmem_limit_bytes=64 * 1024 * 1024),
    )(x, w0k, b0k, wdk, bdk, wfk, bfk)

    return jnp.transpose(out_nhwc, (0, 3, 1, 2))                    # NCHW


def context_block_reference(x, w0, b0, wds, bds, wf, bf):
    """Pure-JAX NCHW reference matching the PyTorch ContextBlock forward."""
    prec = jax.lax.Precision.HIGHEST

    def conv(h, w, b, pad, dil):
        y = jax.lax.conv_general_dilated(
            h, w, window_strides=(1, 1),
            padding=((pad, pad), (pad, pad)),
            rhs_dilation=(dil, dil),
            dimension_numbers=("NCHW", "OIHW", "NCHW"),
            precision=prec)
        return y + b.reshape(1, -1, 1, 1)

    xr = conv(x, w0, b0, 0, 1)
    branches = [_lrelu(conv(xr, w, b, d, d))
                for (w, b, d) in zip(wds, bds, DILATIONS)]
    cat = jnp.concatenate(branches, axis=1)
    return conv(cat, wf, bf, 0, 1) + x


if __name__ == "__main__":
    # Default ContextBlock: in_channels = out_channels = 32, square=False.
    B, Cin, Cout, H, W = 2, 32, 32, 16, 16

    key = jax.random.PRNGKey(0)
    ks = jax.random.split(key, 13)

    x = jax.random.normal(ks[0], (B, Cin, H, W), dtype=jnp.float32)
    w0 = jax.random.normal(ks[1], (Cout, Cin, 1, 1), dtype=jnp.float32) * 0.1
    b0 = jax.random.normal(ks[2], (Cout,), dtype=jnp.float32) * 0.1
    wds = tuple(jax.random.normal(ks[3 + i], (Cout, Cout, 3, 3),
                                  dtype=jnp.float32) * 0.1 for i in range(4))
    bds = tuple(jax.random.normal(ks[7 + i], (Cout,),
                                  dtype=jnp.float32) * 0.1 for i in range(4))
    wf = jax.random.normal(ks[11], (Cin, 4 * Cout, 1, 1),
                           dtype=jnp.float32) * 0.05
    bf = jax.random.normal(ks[12], (Cin,), dtype=jnp.float32) * 0.1

    out = jax.block_until_ready(
        context_block_forward(x, w0, b0, wds, bds, wf, bf))
    ref = jax.block_until_ready(
        context_block_reference(x, w0, b0, wds, bds, wf, bf))

    assert out.shape == (B, Cin, H, W)
    max_err = jnp.max(jnp.abs(out - ref))
    # bf16 matmul operands (f32 accumulation) vs. the full-f32 HIGHEST-precision
    # reference: typical error is ~1e-2 at these magnitudes.
    assert jnp.allclose(out, ref, atol=1e-1, rtol=1e-2), (
        f"max abs err = {max_err}")

    print("KERNEL_OK")
</pallas_src>

<mosaic_0001>
module attributes {stable_mosaic.version = 11 : i64} {
  func.func @context_block_kernel(%arg0: i32, %arg1: memref<1x16x16x32xf32, #tpu.memory_space<vmem>>, %arg2: memref<32x32xbf16, #tpu.memory_space<vmem>>, %arg3: memref<1x32xf32, #tpu.memory_space<vmem>>, %arg4: memref<4x3x96x32xbf16, #tpu.memory_space<vmem>>, %arg5: memref<1x128xf32, #tpu.memory_space<vmem>>, %arg6: memref<128x32xbf16, #tpu.memory_space<vmem>>, %arg7: memref<1x32xf32, #tpu.memory_space<vmem>>, %arg8: memref<1x16x16x32xf32, #tpu.memory_space<vmem>>, %arg9: memref<24x32x32xf32, #tpu.memory_space<vmem>>) attributes {dimension_semantics = [#tpu.dimension_semantics<parallel>], iteration_bounds = array<i64: 2>, scalar_prefetch = 0 : i64, scratch_operands = 1 : i64, tpu.core_type = #tpu.core_type<tc>, window_params = [{transform_indices = @transform_0, window_bounds = array<i64: 1, 16, 16, 32>}, {pipeline_mode = #tpu.pipeline_mode<synchronous>, transform_indices = @transform_1, window_bounds = array<i64: 32, 32>}, {pipeline_mode = #tpu.pipeline_mode<synchronous>, transform_indices = @transform_2, window_bounds = array<i64: 1, 32>}, {pipeline_mode = #tpu.pipeline_mode<synchronous>, transform_indices = @transform_3, window_bounds = array<i64: 4, 3, 96, 32>}, {pipeline_mode = #tpu.pipeline_mode<synchronous>, transform_indices = @transform_4, window_bounds = array<i64: 1, 128>}, {pipeline_mode = #tpu.pipeline_mode<synchronous>, transform_indices = @transform_5, window_bounds = array<i64: 128, 32>}, {pipeline_mode = #tpu.pipeline_mode<synchronous>, transform_indices = @transform_6, window_bounds = array<i64: 1, 32>}, {transform_indices = @transform_7, window_bounds = array<i64: 1, 16, 16, 32>}]} {
    %c0 = arith.constant 0 : index
    %c0_0 = arith.constant 0 : index
    %c0_1 = arith.constant 0 : index
    %c0_2 = arith.constant 0 : index
    %0 = vector.load %arg1[%c0, %c0_0, %c0_1, %c0_2] : memref<1x16x16x32xf32, #tpu.memory_space<vmem>>, vector<1x16x16x32xf32>
    %1 = vector.shape_cast %0 : vector<1x16x16x32xf32> to vector<16x16x32xf32>
    %2 = vector.shape_cast %1 : vector<16x16x32xf32> to vector<256x32xf32>
    %3 = arith.truncf %2 : vector<256x32xf32> to vector<256x32xbf16>
    %c0_3 = arith.constant 0 : index
    %c0_4 = arith.constant 0 : index
    %4 = vector.load %arg2[%c0_3, %c0_4] : memref<32x32xbf16, #tpu.memory_space<vmem>>, vector<32x32xbf16>
    %cst = arith.constant dense<0.000000e+00> : vector<256x32xf32>
    %5 = tpu.matmul %3, %4, %cst {dimension_numbers = #tpu.dot_dimension_numbers<[1], [0], [0], [1], [0, 0, 1, 1], [], []>} : vector<256x32xbf16>, vector<32x32xbf16>, vector<256x32xf32> -> vector<256x32xf32>
    %c0_5 = arith.constant 0 : index
    %c0_6 = arith.constant 0 : index
    %6 = vector.load %arg3[%c0_5, %c0_6] : memref<1x32xf32, #tpu.memory_space<vmem>>, vector<1x32xf32>
    %7 = vector.broadcast %6 : vector<1x32xf32> to vector<256x32xf32>
    %8 = arith.addf %5, %7 : vector<256x32xf32>
    %cst_7 = arith.constant 0.000000e+00 : f32
    %9 = vector.broadcast %cst_7 : f32 to vector<4x32x32xf32>
    %c0_8 = arith.constant 0 : index
    %c0_9 = arith.constant 0 : index
    %c0_10 = arith.constant 0 : index
    %10 = vector.load %arg9[%c0_8, %c0_9, %c0_10] : memref<24x32x32xf32, #tpu.memory_space<vmem>>, vector<4x32x32xf32>
    tpu.vector_store %arg9[%c0_8, %c0_9, %c0_10], %9 {strides = array<i32>} : memref<24x32x32xf32, #tpu.memory_space<vmem>>, vector<4x32x32xf32>,
    %cst_11 = arith.constant 0.000000e+00 : f32
    %11 = vector.broadcast %cst_11 : f32 to vector<4x32x32xf32>
    %c20 = arith.constant 20 : index
    %c0_12 = arith.constant 0 : index
    %c0_13 = arith.constant 0 : index
    %12 = vector.load %arg9[%c20, %c0_12, %c0_13] : memref<24x32x32xf32, #tpu.memory_space<vmem>>, vector<4x32x32xf32>
    tpu.vector_store %arg9[%c20, %c0_12, %c0_13], %11 {strides = array<i32>} : memref<24x32x32xf32, #tpu.memory_space<vmem>>, vector<4x32x32xf32>,
    %cst_14 = arith.constant 0.000000e+00 : f32
    %13 = vector.broadcast %cst_14 : f32 to vector<16x8x32xf32>
    %c4 = arith.constant 4 : index
    %c0_15 = arith.constant 0 : index
    %c0_16 = arith.constant 0 : index
    %14 = vector.load %arg9[%c4, %c0_15, %c0_16] : memref<24x32x32xf32, #tpu.memory_space<vmem>>, vector<16x8x32xf32>
    tpu.vector_store %arg9[%c4, %c0_15, %c0_16], %13 {strides = array<i32>} : memref<24x32x32xf32, #tpu.memory_space<vmem>>, vector<16x8x32xf32>,
    %cst_17 = arith.constant 0.000000e+00 : f32
    %15 = vector.broadcast %cst_17 : f32 to vector<16x8x32xf32>
    %c4_18 = arith.constant 4 : index
    %c24 = arith.constant 24 : index
    %c0_19 = arith.constant 0 : index
    %16 = vector.load %arg9[%c4_18, %c24, %c0_19] : memref<24x32x32xf32, #tpu.memory_space<vmem>>, vector<16x8x32xf32>
    tpu.vector_store %arg9[%c4_18, %c24, %c0_19], %15 {strides = array<i32>} : memref<24x32x32xf32, #tpu.memory_space<vmem>>, vector<16x8x32xf32>,
    %17 = vector.shape_cast %8 : vector<256x32xf32> to vector<16x16x32xf32>
    %c4_20 = arith.constant 4 : index
    %c8 = arith.constant 8 : index
    %c0_21 = arith.constant 0 : index
    %18 = vector.load %arg9[%c4_20, %c8, %c0_21] : memref<24x32x32xf32, #tpu.memory_space<vmem>>, vector<16x16x32xf32>
    tpu.vector_store %arg9[%c4_20, %c8, %c0_21], %17 {strides = array<i32>} : memref<24x32x32xf32, #tpu.memory_space<vmem>>, vector<16x16x32xf32>,
    %cst_22 = arith.constant 0.000000e+00 : f32
    %19 = vector.broadcast %cst_22 : f32 to vector<256x32xf32>
    %c3 = arith.constant 3 : index
    %c7 = arith.constant 7 : index
    %c0_23 = arith.constant 0 : index
    %20 = vector.load %arg9[%c3, %c7, %c0_23] : memref<24x32x32xf32, #tpu.memory_space<vmem>>, vector<18x16x32xf32>
    %21 = vector.extract_strided_slice %20 {offsets = [0, 0, 0], sizes = [16, 16, 32], strides = [1, 1, 1]} : vector<18x16x32xf32> to vector<16x16x32xf32>
    %22 = vector.shape_cast %21 : vector<16x16x32xf32> to vector<256x32xf32>
    %23 = vector.extract_strided_slice %20 {offsets = [1, 0, 0], sizes = [16, 16, 32], strides = [1, 1, 1]} : vector<18x16x32xf32> to vector<16x16x32xf32>
    %24 = vector.shape_cast %23 : vector<16x16x32xf32> to vector<256x32xf32>
    %25 = vector.extract_strided_slice %20 {offsets = [2, 0, 0], sizes = [16, 16, 32], strides = [1, 1, 1]} : vector<18x16x32xf32> to vector<16x16x32xf32>
    %26 = vector.shape_cast %25 : vector<16x16x32xf32> to vector<256x32xf32>
    %27 = tpu.concatenate %22, %24, %26 in 1 : vector<256x32xf32>, vector<256x32xf32>, vector<256x32xf32> -> vector<256x96xf32>
    %28 = arith.truncf %27 : vector<256x96xf32> to vector<256x96xbf16>
    %c0_24 = arith.constant 0 : index
    %c0_25 = arith.constant 0 : index
    %c0_26 = arith.constant 0 : index
    %c0_27 = arith.constant 0 : index
    %29 = vector.load %arg4[%c0_24, %c0_25, %c0_26, %c0_27] : memref<4x3x96x32xbf16, #tpu.memory_space<vmem>>, vector<1x1x96x32xbf16>
    %30 = vector.shape_cast %29 : vector<1x1x96x32xbf16> to vector<96x32xbf16>
    %cst_28 = arith.constant dense<0.000000e+00> : vector<256x32xf32>
    %31 = tpu.matmul %28, %30, %cst_28 {dimension_numbers = #tpu.dot_dimension_numbers<[1], [0], [0], [1], [0, 0, 1, 1], [], []>} : vector<256x96xbf16>, vector<96x32xbf16>, vector<256x32xf32> -> vector<256x32xf32>
    %32 = arith.addf %19, %31 : vector<256x32xf32>
    %c3_29 = arith.constant 3 : index
    %c8_30 = arith.constant 8 : index
    %c0_31 = arith.constant 0 : index
    %33 = vector.load %arg9[%c3_29, %c8_30, %c0_31] : memref<24x32x32xf32, #tpu.memory_space<vmem>>, vector<18x16x32xf32>
    %34 = vector.extract_strided_slice %33 {offsets = [0, 0, 0], sizes = [16, 16, 32], strides = [1, 1, 1]} : vector<18x16x32xf32> to vector<16x16x32xf32>
    %35 = vector.shape_cast %34 : vector<16x16x32xf32> to vector<256x32xf32>
    %36 = vector.extract_strided_slice %33 {offsets = [1, 0, 0], sizes = [16, 16, 32], strides = [1, 1, 1]} : vector<18x16x32xf32> to vector<16x16x32xf32>
    %37 = vector.shape_cast %36 : vector<16x16x32xf32> to vector<256x32xf32>
    %38 = vector.extract_strided_slice %33 {offsets = [2, 0, 0], sizes = [16, 16, 32], strides = [1, 1, 1]} : vector<18x16x32xf32> to vector<16x16x32xf32>
    %39 = vector.shape_cast %38 : vector<16x16x32xf32> to vector<256x32xf32>
    %40 = tpu.concatenate %35, %37, %39 in 1 : vector<256x32xf32>, vector<256x32xf32>, vector<256x32xf32> -> vector<256x96xf32>
    %41 = arith.truncf %40 : vector<256x96xf32> to vector<256x96xbf16>
    %c0_32 = arith.constant 0 : index
    %c1 = arith.constant 1 : index
    %c0_33 = arith.constant 0 : index
    %c0_34 = arith.constant 0 : index
    %42 = vector.load %arg4[%c0_32, %c1, %c0_33, %c0_34] : memref<4x3x96x32xbf16, #tpu.memory_space<vmem>>, vector<1x1x96x32xbf16>
    %43 = vector.shape_cast %42 : vector<1x1x96x32xbf16> to vector<96x32xbf16>
    %cst_35 = arith.constant dense<0.000000e+00> : vector<256x32xf32>
    %44 = tpu.matmul %41, %43, %cst_35 {dimension_numbers = #tpu.dot_dimension_numbers<[1], [0], [0], [1], [0, 0, 1, 1], [], []>} : vector<256x96xbf16>, vector<96x32xbf16>, vector<256x32xf32> -> vector<256x32xf32>
    %45 = arith.addf %32, %44 : vector<256x32xf32>
    %c3_36 = arith.constant 3 : index
    %c9 = arith.constant 9 : index
    %c0_37 = arith.constant 0 : index
    %46 = vector.load %arg9[%c3_36, %c9, %c0_37] : memref<24x32x32xf32, #tpu.memory_space<vmem>>, vector<18x16x32xf32>
    %47 = vector.extract_strided_slice %46 {offsets = [0, 0, 0], sizes = [16, 16, 32], strides = [1, 1, 1]} : vector<18x16x32xf32> to vector<16x16x32xf32>
    %48 = vector.shape_cast %47 : vector<16x16x32xf32> to vector<256x32xf32>
    %49 = vector.extract_strided_slice %46 {offsets = [1, 0, 0], sizes = [16, 16, 32], strides = [1, 1, 1]} : vector<18x16x32xf32> to vector<16x16x32xf32>
    %50 = vector.shape_cast %49 : vector<16x16x32xf32> to vector<256x32xf32>
    %51 = vector.extract_strided_slice %46 {offsets = [2, 0, 0], sizes = [16, 16, 32], strides = [1, 1, 1]} : vector<18x16x32xf32> to vector<16x16x32xf32>
    %52 = vector.shape_cast %51 : vector<16x16x32xf32> to vector<256x32xf32>
    %53 = tpu.concatenate %48, %50, %52 in 1 : vector<256x32xf32>, vector<256x32xf32>, vector<256x32xf32> -> vector<256x96xf32>
    %54 = arith.truncf %53 : vector<256x96xf32> to vector<256x96xbf16>
    %c0_38 = arith.constant 0 : index
    %c2 = arith.constant 2 : index
    %c0_39 = arith.constant 0 : index
    %c0_40 = arith.constant 0 : index
    %55 = vector.load %arg4[%c0_38, %c2, %c0_39, %c0_40] : memref<4x3x96x32xbf16, #tpu.memory_space<vmem>>, vector<1x1x96x32xbf16>
    %56 = vector.shape_cast %55 : vector<1x1x96x32xbf16> to vector<96x32xbf16>
    %cst_41 = arith.constant dense<0.000000e+00> : vector<256x32xf32>
    %57 = tpu.matmul %54, %56, %cst_41 {dimension_numbers = #tpu.dot_dimension_numbers<[1], [0], [0], [1], [0, 0, 1, 1], [], []>} : vector<256x96xbf16>, vector<96x32xbf16>, vector<256x32xf32> -> vector<256x32xf32>
    %58 = arith.addf %45, %57 : vector<256x32xf32>
    %cst_42 = arith.constant 0.000000e+00 : f32
    %59 = vector.broadcast %cst_42 : f32 to vector<256x32xf32>
    %c2_43 = arith.constant 2 : index
    %c6 = arith.constant 6 : index
    %c0_44 = arith.constant 0 : index
    %60 = vector.load %arg9[%c2_43, %c6, %c0_44] : memref<24x32x32xf32, #tpu.memory_space<vmem>>, vector<20x16x32xf32>
    %61 = vector.extract_strided_slice %60 {offsets = [0, 0, 0], sizes = [16, 16, 32], strides = [1, 1, 1]} : vector<20x16x32xf32> to vector<16x16x32xf32>
    %62 = vector.shape_cast %61 : vector<16x16x32xf32> to vector<256x32xf32>
    %63 = vector.extract_strided_slice %60 {offsets = [2, 0, 0], sizes = [16, 16, 32], strides = [1, 1, 1]} : vector<20x16x32xf32> to vector<16x16x32xf32>
    %64 = vector.shape_cast %63 : vector<16x16x32xf32> to vector<256x32xf32>
    %65 = vector.extract_strided_slice %60 {offsets = [4, 0, 0], sizes = [16, 16, 32], strides = [1, 1, 1]} : vector<20x16x32xf32> to vector<16x16x32xf32>
    %66 = vector.shape_cast %65 : vector<16x16x32xf32> to vector<256x32xf32>
    %67 = tpu.concatenate %62, %64, %66 in 1 : vector<256x32xf32>, vector<256x32xf32>, vector<256x32xf32> -> vector<256x96xf32>
    %68 = arith.truncf %67 : vector<256x96xf32> to vector<256x96xbf16>
    %c1_45 = arith.constant 1 : index
    %c0_46 = arith.constant 0 : index
    %c0_47 = arith.constant 0 : index
    %c0_48 = arith.constant 0 : index
    %69 = vector.load %arg4[%c1_45, %c0_46, %c0_47, %c0_48] : memref<4x3x96x32xbf16, #tpu.memory_space<vmem>>, vector<1x1x96x32xbf16>
    %70 = vector.shape_cast %69 : vector<1x1x96x32xbf16> to vector<96x32xbf16>
    %cst_49 = arith.constant dense<0.000000e+00> : vector<256x32xf32>
    %71 = tpu.matmul %68, %70, %cst_49 {dimension_numbers = #tpu.dot_dimension_numbers<[1], [0], [0], [1], [0, 0, 1, 1], [], []>} : vector<256x96xbf16>, vector<96x32xbf16>, vector<256x32xf32> -> vector<256x32xf32>
    %72 = arith.addf %59, %71 : vector<256x32xf32>
    %c2_50 = arith.constant 2 : index
    %c8_51 = arith.constant 8 : index
    %c0_52 = arith.constant 0 : index
    %73 = vector.load %arg9[%c2_50, %c8_51, %c0_52] : memref<24x32x32xf32, #tpu.memory_space<vmem>>, vector<20x16x32xf32>
    %74 = vector.extract_strided_slice %73 {offsets = [0, 0, 0], sizes = [16, 16, 32], strides = [1, 1, 1]} : vector<20x16x32xf32> to vector<16x16x32xf32>
    %75 = vector.shape_cast %74 : vector<16x16x32xf32> to vector<256x32xf32>
    %76 = vector.extract_strided_slice %73 {offsets = [2, 0, 0], sizes = [16, 16, 32], strides = [1, 1, 1]} : vector<20x16x32xf32> to vector<16x16x32xf32>
    %77 = vector.shape_cast %76 : vector<16x16x32xf32> to vector<256x32xf32>
    %78 = vector.extract_strided_slice %73 {offsets = [4, 0, 0], sizes = [16, 16, 32], strides = [1, 1, 1]} : vector<20x16x32xf32> to vector<16x16x32xf32>
    %79 = vector.shape_cast %78 : vector<16x16x32xf32> to vector<256x32xf32>
    %80 = tpu.concatenate %75, %77, %79 in 1 : vector<256x32xf32>, vector<256x32xf32>, vector<256x32xf32> -> vector<256x96xf32>
    %81 = arith.truncf %80 : vector<256x96xf32> to vector<256x96xbf16>
    %c1_53 = arith.constant 1 : index
    %c1_54 = arith.constant 1 : index
    %c0_55 = arith.constant 0 : index
    %c0_56 = arith.constant 0 : index
    %82 = vector.load %arg4[%c1_53, %c1_54, %c0_55, %c0_56] : memref<4x3x96x32xbf16, #tpu.memory_space<vmem>>, vector<1x1x96x32xbf16>
    %83 = vector.shape_cast %82 : vector<1x1x96x32xbf16> to vector<96x32xbf16>
    %cst_57 = arith.constant dense<0.000000e+00> : vector<256x32xf32>
    %84 = tpu.matmul %81, %83, %cst_57 {dimension_numbers = #tpu.dot_dimension_numbers<[1], [0], [0], [1], [0, 0, 1, 1], [], []>} : vector<256x96xbf16>, vector<96x32xbf16>, vector<256x32xf32> -> vector<256x32xf32>
    %85 = arith.addf %72, %84 : vector<256x32xf32>
    %c2_58 = arith.constant 2 : index
    %c10 = arith.constant 10 : index
    %c0_59 = arith.constant 0 : index
    %86 = vector.load %arg9[%c2_58, %c10, %c0_59] : memref<24x32x32xf32, #tpu.memory_space<vmem>>, vector<20x16x32xf32>
    %87 = vector.extract_strided_slice %86 {offsets = [0, 0, 0], sizes = [16, 16, 32], strides = [1, 1, 1]} : vector<20x16x32xf32> to vector<16x16x32xf32>
    %88 = vector.shape_cast %87 : vector<16x16x32xf32> to vector<256x32xf32>
    %89 = vector.extract_strided_slice %86 {offsets = [2, 0, 0], sizes = [16, 16, 32], strides = [1, 1, 1]} : vector<20x16x32xf32> to vector<16x16x32xf32>
    %90 = vector.shape_cast %89 : vector<16x16x32xf32> to vector<256x32xf32>
    %91 = vector.extract_strided_slice %86 {offsets = [4, 0, 0], sizes = [16, 16, 32], strides = [1, 1, 1]} : vector<20x16x32xf32> to vector<16x16x32xf32>
    %92 = vector.shape_cast %91 : vector<16x16x32xf32> to vector<256x32xf32>
    %93 = tpu.concatenate %88, %90, %92 in 1 : vector<256x32xf32>, vector<256x32xf32>, vector<256x32xf32> -> vector<256x96xf32>
    %94 = arith.truncf %93 : vector<256x96xf32> to vector<256x96xbf16>
    %c1_60 = arith.constant 1 : index
    %c2_61 = arith.constant 2 : index
    %c0_62 = arith.constant 0 : index
    %c0_63 = arith.constant 0 : index
    %95 = vector.load %arg4[%c1_60, %c2_61, %c0_62, %c0_63] : memref<4x3x96x32xbf16, #tpu.memory_space<vmem>>, vector<1x1x96x32xbf16>
    %96 = vector.shape_cast %95 : vector<1x1x96x32xbf16> to vector<96x32xbf16>
    %cst_64 = arith.constant dense<0.000000e+00> : vector<256x32xf32>
    %97 = tpu.matmul %94, %96, %cst_64 {dimension_numbers = #tpu.dot_dimension_numbers<[1], [0], [0], [1], [0, 0, 1, 1], [], []>} : vector<256x96xbf16>, vector<96x32xbf16>, vector<256x32xf32> -> vector<256x32xf32>
    %98 = arith.addf %85, %97 : vector<256x32xf32>
    %cst_65 = arith.constant 0.000000e+00 : f32
    %99 = vector.broadcast %cst_65 : f32 to vector<256x32xf32>
    %c1_66 = arith.constant 1 : index
    %c5 = arith.constant 5 : index
    %c0_67 = arith.constant 0 : index
    %100 = vector.load %arg9[%c1_66, %c5, %c0_67] : memref<24x32x32xf32, #tpu.memory_space<vmem>>, vector<22x16x32xf32>
    %101 = vector.extract_strided_slice %100 {offsets = [0, 0, 0], sizes = [16, 16, 32], strides = [1, 1, 1]} : vector<22x16x32xf32> to vector<16x16x32xf32>
    %102 = vector.shape_cast %101 : vector<16x16x32xf32> to vector<256x32xf32>
    %103 = vector.extract_strided_slice %100 {offsets = [3, 0, 0], sizes = [16, 16, 32], strides = [1, 1, 1]} : vector<22x16x32xf32> to vector<16x16x32xf32>
    %104 = vector.shape_cast %103 : vector<16x16x32xf32> to vector<256x32xf32>
    %105 = vector.extract_strided_slice %100 {offsets = [6, 0, 0], sizes = [16, 16, 32], strides = [1, 1, 1]} : vector<22x16x32xf32> to vector<16x16x32xf32>
    %106 = vector.shape_cast %105 : vector<16x16x32xf32> to vector<256x32xf32>
    %107 = tpu.concatenate %102, %104, %106 in 1 : vector<256x32xf32>, vector<256x32xf32>, vector<256x32xf32> -> vector<256x96xf32>
    %108 = arith.truncf %107 : vector<256x96xf32> to vector<256x96xbf16>
    %c2_68 = arith.constant 2 : index
    %c0_69 = arith.constant 0 : index
    %c0_70 = arith.constant 0 : index
    %c0_71 = arith.constant 0 : index
    %109 = vector.load %arg4[%c2_68, %c0_69, %c0_70, %c0_71] : memref<4x3x96x32xbf16, #tpu.memory_space<vmem>>, vector<1x1x96x32xbf16>
    %110 = vector.shape_cast %109 : vector<1x1x96x32xbf16> to vector<96x32xbf16>
    %cst_72 = arith.constant dense<0.000000e+00> : vector<256x32xf32>
    %111 = tpu.matmul %108, %110, %cst_72 {dimension_numbers = #tpu.dot_dimension_numbers<[1], [0], [0], [1], [0, 0, 1, 1], [], []>} : vector<256x96xbf16>, vector<96x32xbf16>, vector<256x32xf32> -> vector<256x32xf32>
    %112 = arith.addf %99, %111 : vector<256x32xf32>
    %c1_73 = arith.constant 1 : index
    %c8_74 = arith.constant 8 : index
    %c0_75 = arith.constant 0 : index
    %113 = vector.load %arg9[%c1_73, %c8_74, %c0_75] : memref<24x32x32xf32, #tpu.memory_space<vmem>>, vector<22x16x32xf32>
    %114 = vector.extract_strided_slice %113 {offsets = [0, 0, 0], sizes = [16, 16, 32], strides = [1, 1, 1]} : vector<22x16x32xf32> to vector<16x16x32xf32>
    %115 = vector.shape_cast %114 : vector<16x16x32xf32> to vector<256x32xf32>
    %116 = vector.extract_strided_slice %113 {offsets = [3, 0, 0], sizes = [16, 16, 32], strides = [1, 1, 1]} : vector<22x16x32xf32> to vector<16x16x32xf32>
    %117 = vector.shape_cast %116 : vector<16x16x32xf32> to vector<256x32xf32>
    %118 = vector.extract_strided_slice %113 {offsets = [6, 0, 0], sizes = [16, 16, 32], strides = [1, 1, 1]} : vector<22x16x32xf32> to vector<16x16x32xf32>
    %119 = vector.shape_cast %118 : vector<16x16x32xf32> to vector<256x32xf32>
    %120 = tpu.concatenate %115, %117, %119 in 1 : vector<256x32xf32>, vector<256x32xf32>, vector<256x32xf32> -> vector<256x96xf32>
    %121 = arith.truncf %120 : vector<256x96xf32> to vector<256x96xbf16>
    %c2_76 = arith.constant 2 : index
    %c1_77 = arith.constant 1 : index
    %c0_78 = arith.constant 0 : index
    %c0_79 = arith.constant 0 : index
    %122 = vector.load %arg4[%c2_76, %c1_77, %c0_78, %c0_79] : memref<4x3x96x32xbf16, #tpu.memory_space<vmem>>, vector<1x1x96x32xbf16>
    %123 = vector.shape_cast %122 : vector<1x1x96x32xbf16> to vector<96x32xbf16>
    %cst_80 = arith.constant dense<0.000000e+00> : vector<256x32xf32>
    %124 = tpu.matmul %121, %123, %cst_80 {dimension_numbers = #tpu.dot_dimension_numbers<[1], [0], [0], [1], [0, 0, 1, 1], [], []>} : vector<256x96xbf16>, vector<96x32xbf16>, vector<256x32xf32> -> vector<256x32xf32>
    %125 = arith.addf %112, %124 : vector<256x32xf32>
    %c1_81 = arith.constant 1 : index
    %c11 = arith.constant 11 : index
    %c0_82 = arith.constant 0 : index
    %126 = vector.load %arg9[%c1_81, %c11, %c0_82] : memref<24x32x32xf32, #tpu.memory_space<vmem>>, vector<22x16x32xf32>
    %127 = vector.extract_strided_slice %126 {offsets = [0, 0, 0], sizes = [16, 16, 32], strides = [1, 1, 1]} : vector<22x16x32xf32> to vector<16x16x32xf32>
    %128 = vector.shape_cast %127 : vector<16x16x32xf32> to vector<256x32xf32>
    %129 = vector.extract_strided_slice %126 {offsets = [3, 0, 0], sizes = [16, 16, 32], strides = [1, 1, 1]} : vector<22x16x32xf32> to vector<16x16x32xf32>
    %130 = vector.shape_cast %129 : vector<16x16x32xf32> to vector<256x32xf32>
    %131 = vector.extract_strided_slice %126 {offsets = [6, 0, 0], sizes = [16, 16, 32], strides = [1, 1, 1]} : vector<22x16x32xf32> to vector<16x16x32xf32>
    %132 = vector.shape_cast %131 : vector<16x16x32xf32> to vector<256x32xf32>
    %133 = tpu.concatenate %128, %130, %132 in 1 : vector<256x32xf32>, vector<256x32xf32>, vector<256x32xf32> -> vector<256x96xf32>
    %134 = arith.truncf %133 : vector<256x96xf32> to vector<256x96xbf16>
    %c2_83 = arith.constant 2 : index
    %c2_84 = arith.constant 2 : index
    %c0_85 = arith.constant 0 : index
    %c0_86 = arith.constant 0 : index
    %135 = vector.load %arg4[%c2_83, %c2_84, %c0_85, %c0_86] : memref<4x3x96x32xbf16, #tpu.memory_space<vmem>>, vector<1x1x96x32xbf16>
    %136 = vector.shape_cast %135 : vector<1x1x96x32xbf16> to vector<96x32xbf16>
    %cst_87 = arith.constant dense<0.000000e+00> : vector<256x32xf32>
    %137 = tpu.matmul %134, %136, %cst_87 {dimension_numbers = #tpu.dot_dimension_numbers<[1], [0], [0], [1], [0, 0, 1, 1], [], []>} : vector<256x96xbf16>, vector<96x32xbf16>, vector<256x32xf32> -> vector<256x32xf32>
    %138 = arith.addf %125, %137 : vector<256x32xf32>
    %cst_88 = arith.constant 0.000000e+00 : f32
    %139 = vector.broadcast %cst_88 : f32 to vector<256x32xf32>
    %c0_89 = arith.constant 0 : index
    %c4_90 = arith.constant 4 : index
    %c0_91 = arith.constant 0 : index
    %140 = vector.load %arg9[%c0_89, %c4_90, %c0_91] : memref<24x32x32xf32, #tpu.memory_space<vmem>>, vector<24x16x32xf32>
    %141 = vector.extract_strided_slice %140 {offsets = [0, 0, 0], sizes = [16, 16, 32], strides = [1, 1, 1]} : vector<24x16x32xf32> to vector<16x16x32xf32>
    %142 = vector.shape_cast %141 : vector<16x16x32xf32> to vector<256x32xf32>
    %143 = vector.extract_strided_slice %140 {offsets = [4, 0, 0], sizes = [16, 16, 32], strides = [1, 1, 1]} : vector<24x16x32xf32> to vector<16x16x32xf32>
    %144 = vector.shape_cast %143 : vector<16x16x32xf32> to vector<256x32xf32>
    %145 = vector.extract_strided_slice %140 {offsets = [8, 0, 0], sizes = [16, 16, 32], strides = [1, 1, 1]} : vector<24x16x32xf32> to vector<16x16x32xf32>
    %146 = vector.shape_cast %145 : vector<16x16x32xf32> to vector<256x32xf32>
    %147 = tpu.concatenate %142, %144, %146 in 1 : vector<256x32xf32>, vector<256x32xf32>, vector<256x32xf32> -> vector<256x96xf32>
    %148 = arith.truncf %147 : vector<256x96xf32> to vector<256x96xbf16>
    %c3_92 = arith.constant 3 : index
    %c0_93 = arith.constant 0 : index
    %c0_94 = arith.constant 0 : index
    %c0_95 = arith.constant 0 : index
    %149 = vector.load %arg4[%c3_92, %c0_93, %c0_94, %c0_95] : memref<4x3x96x32xbf16, #tpu.memory_space<vmem>>, vector<1x1x96x32xbf16>
    %150 = vector.shape_cast %149 : vector<1x1x96x32xbf16> to vector<96x32xbf16>
    %cst_96 = arith.constant dense<0.000000e+00> : vector<256x32xf32>
    %151 = tpu.matmul %148, %150, %cst_96 {dimension_numbers = #tpu.dot_dimension_numbers<[1], [0], [0], [1], [0, 0, 1, 1], [], []>} : vector<256x96xbf16>, vector<96x32xbf16>, vector<256x32xf32> -> vector<256x32xf32>
    %152 = arith.addf %139, %151 : vector<256x32xf32>
    %c0_97 = arith.constant 0 : index
    %c8_98 = arith.constant 8 : index
    %c0_99 = arith.constant 0 : index
    %153 = vector.load %arg9[%c0_97, %c8_98, %c0_99] : memref<24x32x32xf32, #tpu.memory_space<vmem>>, vector<24x16x32xf32>
    %154 = vector.extract_strided_slice %153 {offsets = [0, 0, 0], sizes = [16, 16, 32], strides = [1, 1, 1]} : vector<24x16x32xf32> to vector<16x16x32xf32>
    %155 = vector.shape_cast %154 : vector<16x16x32xf32> to vector<256x32xf32>
    %156 = vector.extract_strided_slice %153 {offsets = [4, 0, 0], sizes = [16, 16, 32], strides = [1, 1, 1]} : vector<24x16x32xf32> to vector<16x16x32xf32>
    %157 = vector.shape_cast %156 : vector<16x16x32xf32> to vector<256x32xf32>
    %158 = vector.extract_strided_slice %153 {offsets = [8, 0, 0], sizes = [16, 16, 32], strides = [1, 1, 1]} : vector<24x16x32xf32> to vector<16x16x32xf32>
    %159 = vector.shape_cast %158 : vector<16x16x32xf32> to vector<256x32xf32>
    %160 = tpu.concatenate %155, %157, %159 in 1 : vector<256x32xf32>, vector<256x32xf32>, vector<256x32xf32> -> vector<256x96xf32>
    %161 = arith.truncf %160 : vector<256x96xf32> to vector<256x96xbf16>
    %c3_100 = arith.constant 3 : index
    %c1_101 = arith.constant 1 : index
    %c0_102 = arith.constant 0 : index
    %c0_103 = arith.constant 0 : index
    %162 = vector.load %arg4[%c3_100, %c1_101, %c0_102, %c0_103] : memref<4x3x96x32xbf16, #tpu.memory_space<vmem>>, vector<1x1x96x32xbf16>
    %163 = vector.shape_cast %162 : vector<1x1x96x32xbf16> to vector<96x32xbf16>
    %cst_104 = arith.constant dense<0.000000e+00> : vector<256x32xf32>
    %164 = tpu.matmul %161, %163, %cst_104 {dimension_numbers = #tpu.dot_dimension_numbers<[1], [0], [0], [1], [0, 0, 1, 1], [], []>} : vector<256x96xbf16>, vector<96x32xbf16>, vector<256x32xf32> -> vector<256x32xf32>
    %165 = arith.addf %152, %164 : vector<256x32xf32>
    %c0_105 = arith.constant 0 : index
    %c12 = arith.constant 12 : index
    %c0_106 = arith.constant 0 : index
    %166 = vector.load %arg9[%c0_105, %c12, %c0_106] : memref<24x32x32xf32, #tpu.memory_space<vmem>>, vector<24x16x32xf32>
    %167 = vector.extract_strided_slice %166 {offsets = [0, 0, 0], sizes = [16, 16, 32], strides = [1, 1, 1]} : vector<24x16x32xf32> to vector<16x16x32xf32>
    %168 = vector.shape_cast %167 : vector<16x16x32xf32> to vector<256x32xf32>
    %169 = vector.extract_strided_slice %166 {offsets = [4, 0, 0], sizes = [16, 16, 32], strides = [1, 1, 1]} : vector<24x16x32xf32> to vector<16x16x32xf32>
    %170 = vector.shape_cast %169 : vector<16x16x32xf32> to vector<256x32xf32>
    %171 = vector.extract_strided_slice %166 {offsets = [8, 0, 0], sizes = [16, 16, 32], strides = [1, 1, 1]} : vector<24x16x32xf32> to vector<16x16x32xf32>
    %172 = vector.shape_cast %171 : vector<16x16x32xf32> to vector<256x32xf32>
    %173 = tpu.concatenate %168, %170, %172 in 1 : vector<256x32xf32>, vector<256x32xf32>, vector<256x32xf32> -> vector<256x96xf32>
    %174 = arith.truncf %173 : vector<256x96xf32> to vector<256x96xbf16>
    %c3_107 = arith.constant 3 : index
    %c2_108 = arith.constant 2 : index
    %c0_109 = arith.constant 0 : index
    %c0_110 = arith.constant 0 : index
    %175 = vector.load %arg4[%c3_107, %c2_108, %c0_109, %c0_110] : memref<4x3x96x32xbf16, #tpu.memory_space<vmem>>, vector<1x1x96x32xbf16>
    %176 = vector.shape_cast %175 : vector<1x1x96x32xbf16> to vector<96x32xbf16>
    %cst_111 = arith.constant dense<0.000000e+00> : vector<256x32xf32>
    %177 = tpu.matmul %174, %176, %cst_111 {dimension_numbers = #tpu.dot_dimension_numbers<[1], [0], [0], [1], [0, 0, 1, 1], [], []>} : vector<256x96xbf16>, vector<96x32xbf16>, vector<256x32xf32> -> vector<256x32xf32>
    %178 = arith.addf %165, %177 : vector<256x32xf32>
    %179 = tpu.concatenate %58, %98, %138, %178 in 1 : vector<256x32xf32>, vector<256x32xf32>, vector<256x32xf32>, vector<256x32xf32> -> vector<256x128xf32>
    %c0_112 = arith.constant 0 : index
    %c0_113 = arith.constant 0 : index
    %180 = vector.load %arg5[%c0_112, %c0_113] : memref<1x128xf32, #tpu.memory_space<vmem>>, vector<1x128xf32>
    %181 = vector.broadcast %180 : vector<1x128xf32> to vector<256x128xf32>
    %182 = arith.addf %179, %181 : vector<256x128xf32>
    %cst_114 = arith.constant 0.000000e+00 : f32
    %183 = vector.broadcast %cst_114 : f32 to vector<256x128xf32>
    %184 = arith.cmpf oge, %182, %183 : vector<256x128xf32>
    %cst_115 = arith.constant 2.000000e-01 : f32
    %185 = vector.broadcast %cst_115 : f32 to vector<256x128xf32>
    %186 = arith.mulf %185, %182 : vector<256x128xf32>
    %187 = arith.select %184, %182, %186 : vector<256x128xi1>, vector<256x128xf32>
    %188 = arith.truncf %187 : vector<256x128xf32> to vector<256x128xbf16>
    %c0_116 = arith.constant 0 : index
    %c0_117 = arith.constant 0 : index
    %189 = vector.load %arg6[%c0_116, %c0_117] : memref<128x32xbf16, #tpu.memory_space<vmem>>, vector<128x32xbf16>
    %cst_118 = arith.constant dense<0.000000e+00> : vector<256x32xf32>
    %190 = tpu.matmul %188, %189, %cst_118 {dimension_numbers = #tpu.dot_dimension_numbers<[1], [0], [0], [1], [0, 0, 1, 1], [], []>} : vector<256x128xbf16>, vector<128x32xbf16>, vector<256x32xf32> -> vector<256x32xf32>
    %c0_119 = arith.constant 0 : index
    %c0_120 = arith.constant 0 : index
    %191 = vector.load %arg7[%c0_119, %c0_120] : memref<1x32xf32, #tpu.memory_space<vmem>>, vector<1x32xf32>
    %192 = vector.broadcast %191 : vector<1x32xf32> to vector<256x32xf32>
    %193 = arith.addf %190, %192 : vector<256x32xf32>
    %194 = arith.addf %193, %2 : vector<256x32xf32>
    %195 = vector.shape_cast %194 : vector<256x32xf32> to vector<16x16x32xf32>
    %c0_121 = arith.constant 0 : index
    %c0_122 = arith.constant 0 : index
    %c0_123 = arith.constant 0 : index
    %c0_124 = arith.constant 0 : index
    %196 = vector.load %arg8[%c0_121, %c0_122, %c0_123, %c0_124] : memref<1x16x16x32xf32, #tpu.memory_space<vmem>>, vector<1x16x16x32xf32>
    %197 = vector.shape_cast %196 : vector<1x16x16x32xf32> to vector<16x16x32xf32>
    %198 = vector.shape_cast %195 : vector<16x16x32xf32> to vector<1x16x16x32xf32>
    tpu.vector_store %arg8[%c0_121, %c0_122, %c0_123, %c0_124], %198 {strides = array<i32>} : memref<1x16x16x32xf32, #tpu.memory_space<vmem>>, vector<1x16x16x32xf32>,
    return
  }
  func.func @transform_0(%arg0: i32) -> (i32, i32, i32, i32) {
    %c0_i32 = arith.constant 0 : i32
    %c0_i32_0 = arith.constant 0 : i32
    %c0_i32_1 = arith.constant 0 : i32
    %c0_i32_2 = arith.constant 0 : i32
    return %arg0, %c0_i32, %c0_i32_0, %c0_i32_1 : i32, i32, i32, i32
  }
  func.func @transform_1(%arg0: i32) -> (i32, i32) {
    %c0_i32 = arith.constant 0 : i32
    %c0_i32_0 = arith.constant 0 : i32
    %c0_i32_1 = arith.constant 0 : i32
    return %c0_i32, %c0_i32_0 : i32, i32
  }
  func.func @transform_2(%arg0: i32) -> (i32, i32) {
    %c0_i32 = arith.constant 0 : i32
    %c0_i32_0 = arith.constant 0 : i32
    %c0_i32_1 = arith.constant 0 : i32
    return %c0_i32, %c0_i32_0 : i32, i32
  }
  func.func @transform_3(%arg0: i32) -> (i32, i32, i32, i32) {
    %c0_i32 = arith.constant 0 : i32
    %c0_i32_0 = arith.constant 0 : i32
    %c0_i32_1 = arith.constant 0 : i32
    %c0_i32_2 = arith.constant 0 : i32
    %c0_i32_3 = arith.constant 0 : i32
    return %c0_i32, %c0_i32_0, %c0_i32_1, %c0_i32_2 : i32, i32, i32, i32
  }
  func.func @transform_4(%arg0: i32) -> (i32, i32) {
    %c0_i32 = arith.constant 0 : i32
    %c0_i32_0 = arith.constant 0 : i32
    %c0_i32_1 = arith.constant 0 : i32
    return %c0_i32, %c0_i32_0 : i32, i32
  }
  func.func @transform_5(%arg0: i32) -> (i32, i32) {
    %c0_i32 = arith.constant 0 : i32
    %c0_i32_0 = arith.constant 0 : i32
    %c0_i32_1 = arith.constant 0 : i32
    return %c0_i32, %c0_i32_0 : i32, i32
  }
  func.func @transform_6(%arg0: i32) -> (i32, i32) {
    %c0_i32 = arith.constant 0 : i32
    %c0_i32_0 = arith.constant 0 : i32
    %c0_i32_1 = arith.constant 0 : i32
    return %c0_i32, %c0_i32_0 : i32, i32
  }
  func.func @transform_7(%arg0: i32) -> (i32, i32, i32, i32) {
    %c0_i32 = arith.constant 0 : i32
    %c0_i32_0 = arith.constant 0 : i32
    %c0_i32_1 = arith.constant 0 : i32
    %c0_i32_2 = arith.constant 0 : i32
    return %arg0, %c0_i32, %c0_i32_0, %c0_i32_1 : i32, i32, i32, i32
  }
}

</mosaic_0001>

<llo_original>
// kernel: tpu_custom_call.1
$region0: #{tpu_custom_call.1}
  #allocation0 [shape = 'u32[]', space=smem, size = 0x4, offset = 0x4, fixed_abs, tag = 'smem constant byte address 0x4 - core index']
  #allocation1 [shape = 'u32[144,128]{1,0:T(1,128)}', space=vmem, size = 0x12000, scoped, tag = 'internal scratch']
  #allocation2 [shape = 'f32[24,32,32]{2,1,0:T(8,128)}', space=vmem, size = 0x60000, scoped, tag = 'scratch operand']
  %s0 = inlined_call_operand.hbm [shape: f32[2,16,16,32], index: 0, kind: input, shape index: {}]
  %s1 = inlined_call_operand.hbm [shape: bf16[32,32], index: 1, kind: input, shape index: {}]
  %s2 = inlined_call_operand.hbm [shape: f32[1,32], index: 2, kind: input, shape index: {}]
  %s3 = inlined_call_operand.hbm [shape: bf16[4,3,96,32], index: 3, kind: input, shape index: {}]
  %s4 = inlined_call_operand.hbm [shape: f32[1,128], index: 4, kind: input, shape index: {}]
  %s5 = inlined_call_operand.hbm [shape: bf16[128,32], index: 5, kind: input, shape index: {}]
  %s6 = inlined_call_operand.hbm [shape: f32[1,32], index: 6, kind: input, shape index: {}]
  %s7 = inlined_call_operand.hbm [shape: f32[2,16,16,32], index: 7, kind: output, shape index: {}]
  %s8 = sld [smem:[#allocation0]]
  $region89: #{tpu_custom_call.1} parent=0
    _
  %s10 = ssub.s32 1, %s8
  %s11 = scalar_select 0, %s10, %s8
  $region1: #{tpu_custom_call.1} parent=0
    #allocation3 [shape = 'u8[262144]{0}', space=vmem, size = 0x40000, scoped, tag = 'input window, operand 0']
    #allocation4 [shape = 's32[2]{0}', space=sflag, size = 0x8, scoped, tag = 'scoped memory for tpu_custom_call.1']
    #allocation5 [shape = 's32[2]{0}', space=sflag, size = 0x8, scoped, tag = 'scoped memory for tpu_custom_call.1']
    #allocation6 [shape = 'u8[8192]{0}', space=vmem, size = 0x2000, scoped, tag = 'input window, operand 1, single buffered']
    #allocation7 [shape = 's32[1]{0}', space=sflag, size = 0x4, scoped, tag = 'scoped memory for tpu_custom_call.1']
    #allocation8 [shape = 'u8[512]{0}', space=vmem, size = 0x400, scoped, tag = 'input window, operand 2, single buffered']
    #allocation9 [shape = 'u8[294912]{0}', space=vmem, size = 0x48000, scoped, tag = 'input window, operand 3, single buffered']
    #allocation10 [shape = 's32[1]{0}', space=sflag, size = 0x4, scoped, tag = 'scoped memory for tpu_custom_call.1']
    #allocation11 [shape = 'u8[512]{0}', space=vmem, size = 0x400, scoped, tag = 'input window, operand 4, single buffered']
    #allocation12 [shape = 'u8[32768]{0}', space=vmem, size = 0x8000, scoped, tag = 'input window, operand 5, single buffered']
    #allocation13 [shape = 's32[1]{0}', space=sflag, size = 0x4, scoped, tag = 'scoped memory for tpu_custom_call.1']
    #allocation14 [shape = 'u8[512]{0}', space=vmem, size = 0x400, scoped, tag = 'input window, operand 6, single buffered']
    #allocation15 [shape = 'u8[262144]{0}', space=vmem, size = 0x40000, scoped, tag = 'output window, operand 0']
    %12 = vsyncpa [#allocation4], 0
    %s13 = scalar_lea.sflag [#allocation4], 1
    %14 = vsyncpa %s13, 0
    %15 = vsyncpa [#allocation7], 0
    %16 = vsyncpa [#allocation10], 0
    %17 = vsyncpa [#allocation13], 0
    %18 = vsyncpa [#allocation5], 0
    %s19 = scalar_lea.sflag [#allocation5], 1
    %20 = vsyncpa %s19, 0
    loop: start=0, step=1, limit=4
    $region2: #{tpu_custom_call.1} parent=1 // loop_pre_header
      _
    $region3: #{tpu_custom_call.1} parent=1 // loop_header
      %s22 = sphi 0, %s26
      %p23 = scmp.ge.s32.totalorder %s22, 4
      %s32 = sphi 0, %s34
      %s35 = sphi 0, %s32
      %s36 = sphi 0, %s35
      %s52 = sphi 0, %s36
      %s56 = sphi 0, %s56
      %s58 = sphi 0, %s56
      %s59 = sphi 0, %s58
      %s73 = sphi 0, %s59
      %s77 = sphi 0, %s77
      %s79 = sphi 0, %s77
      %s80 = sphi 0, %s79
      %s94 = sphi 0, %s80
      %s98 = sphi 0, %s98
      %s100 = sphi 0, %s98
      %s101 = sphi 0, %s100
      %s115 = sphi 0, %s101
      %s119 = sphi 0, %s119
      %s121 = sphi 0, %s119
      %s122 = sphi 0, %s121
      %s136 = sphi 0, %s122
      %s140 = sphi 0, %s140
      %s142 = sphi 0, %s140
      %s143 = sphi 0, %s142
      %s157 = sphi 0, %s143
      %s161 = sphi 0, %s161
      %s163 = sphi 0, %s161
      %s164 = sphi 0, %s163
      %s178 = sphi 0, %s164
      %s184 = sphi 0, %s186
      %s187 = sphi 0, %s184
      %s188 = sphi 0, %s187
      %s204 = sphi 0, %s188
    $region4: #{tpu_custom_call.1} parent=1 // loop_header_branch
      %25 = sbr.rel (%p23) target = $region8
    $region5: #{tpu_custom_call.1} parent=1 // loop_body
      %s27 = ssub.s32 %s22, 1
      %s28 = ssub.s32 %s22, 2
      %s29 = sadd.s32 %s22, 1
      %s30 = ssub.s32 %s22, %s29
      %p31 = scmp.eq.s32.totalorder %s30, 0
      %s33 = sadd.s32 %s32, 1
      %s34 = scalar_select %p31, %s32, %s33
      %p37 = pneg %p31
      %p38 = scmp.eq.s32.totalorder %s22, 1
      %p39 = por %p37, %p38
      %p40 = scmp.ne.s32.totalorder %s32, %s35
      %p41 = scmp.eq.s32.totalorder %s22, 0
      %p42 = por %p40, %p41
      %p43 = scmp.ne.s32.totalorder %s32, %s35
      %p44 = scmp.eq.s32.totalorder %s27, 1
      %p45 = por %p43, %p44
      %p46 = scmp.ne.s32.totalorder %s35, %s36
      %p47 = scmp.eq.s32.totalorder %s27, 0
      %p48 = por %p46, %p47
      %p49 = scmp.ne.s32.totalorder %s35, %s36
      %p50 = scmp.eq.s32.totalorder %s28, 1
      %p51 = por %p49, %p50
      %p53 = scmp.ne.s32.totalorder %s36, %s52
      %p54 = scmp.eq.s32.totalorder %s28, 0
      %p55 = por %p53, %p54
      %s57 = sadd.s32 %s56, 1
      %p60 = scmp.eq.s32.totalorder %s22, 1
      %p61 = scmp.ne.s32.totalorder %s56, %s58
      %p62 = scmp.eq.s32.totalorder %s22, 0
      %p63 = por %p61, %p62
      %p64 = scmp.ne.s32.totalorder %s56, %s58
      %p65 = scmp.eq.s32.totalorder %s27, 1
      %p66 = por %p64, %p65
      %p67 = scmp.ne.s32.totalorder %s58, %s59
      %p68 = scmp.eq.s32.totalorder %s27, 0
      %p69 = por %p67, %p68
      %p70 = scmp.ne.s32.totalorder %s58, %s59
      %p71 = scmp.eq.s32.totalorder %s28, 1
      %p72 = por %p70, %p71
      %p74 = scmp.ne.s32.totalorder %s59, %s73
      %p75 = scmp.eq.s32.totalorder %s28, 0
      %p76 = por %p74, %p75
      %s78 = sadd.s32 %s77, 1
      %p81 = scmp.eq.s32.totalorder %s22, 1
      %p82 = scmp.ne.s32.totalorder %s77, %s79
      %p83 = scmp.eq.s32.totalorder %s22, 0
      %p84 = por %p82, %p83
      %p85 = scmp.ne.s32.totalorder %s77, %s79
      %p86 = scmp.eq.s32.totalorder %s27, 1
      %p87 = por %p85, %p86
      %p88 = scmp.ne.s32.totalorder %s79, %s80
      %p89 = scmp.eq.s32.totalorder %s27, 0
      %p90 = por %p88, %p89
      %p91 = scmp.ne.s32.totalorder %s79, %s80
      %p92 = scmp.eq.s32.totalorder %s28, 1
      %p93 = por %p91, %p92
      %p95 = scmp.ne.s32.totalorder %s80, %s94
      %p96 = scmp.eq.s32.totalorder %s28, 0
      %p97 = por %p95, %p96
      %s99 = sadd.s32 %s98, 1
      %p102 = scmp.eq.s32.totalorder %s22, 1
      %p103 = scmp.ne.s32.totalorder %s98, %s100
      %p104 = scmp.eq.s32.totalorder %s22, 0
      %p105 = por %p103, %p104
      %p106 = scmp.ne.s32.totalorder %s98, %s100
      %p107 = scmp.eq.s32.totalorder %s27, 1
      %p108 = por %p106, %p107
      %p109 = scmp.ne.s32.totalorder %s100, %s101
      %p110 = scmp.eq.s32.totalorder %s27, 0
      %p111 = por %p109, %p110
      %p112 = scmp.ne.s32.totalorder %s100, %s101
      %p113 = scmp.eq.s32.totalorder %s28, 1
      %p114 = por %p112, %p113
      %p116 = scmp.ne.s32.totalorder %s101, %s115
      %p117 = scmp.eq.s32.totalorder %s28, 0
      %p118 = por %p116, %p117
      %s120 = sadd.s32 %s119, 1
      %p123 = scmp.eq.s32.totalorder %s22, 1
      %p124 = scmp.ne.s32.totalorder %s119, %s121
      %p125 = scmp.eq.s32.totalorder %s22, 0
      %p126 = por %p124, %p125
      %p127 = scmp.ne.s32.totalorder %s119, %s121
      %p128 = scmp.eq.s32.totalorder %s27, 1
      %p129 = por %p127, %p128
      %p130 = scmp.ne.s32.totalorder %s121, %s122
      %p131 = scmp.eq.s32.totalorder %s27, 0
      %p132 = por %p130, %p131
      %p133 = scmp.ne.s32.totalorder %s121, %s122
      %p134 = scmp.eq.s32.totalorder %s28, 1
      %p135 = por %p133, %p134
      %p137 = scmp.ne.s32.totalorder %s122, %s136
      %p138 = scmp.eq.s32.totalorder %s28, 0
      %p139 = por %p137, %p138
      %s141 = sadd.s32 %s140, 1
      %p144 = scmp.eq.s32.totalorder %s22, 1
      %p145 = scmp.ne.s32.totalorder %s140, %s142
      %p146 = scmp.eq.s32.totalorder %s22, 0
      %p147 = por %p145, %p146
      %p148 = scmp.ne.s32.totalorder %s140, %s142
      %p149 = scmp.eq.s32.totalorder %s27, 1
      %p150 = por %p148, %p149
      %p151 = scmp.ne.s32.totalorder %s142, %s143
      %p152 = scmp.eq.s32.totalorder %s27, 0
      %p153 = por %p151, %p152
      %p154 = scmp.ne.s32.totalorder %s142, %s143
      %p155 = scmp.eq.s32.totalorder %s28, 1
      %p156 = por %p154, %p155
      %p158 = scmp.ne.s32.totalorder %s143, %s157
      %p159 = scmp.eq.s32.totalorder %s28, 0
      %p160 = por %p158, %p159
      %s162 = sadd.s32 %s161, 1
      %p165 = scmp.eq.s32.totalorder %s22, 1
      %p166 = scmp.ne.s32.totalorder %s161, %s163
      %p167 = scmp.eq.s32.totalorder %s22, 0
      %p168 = por %p166, %p167
      %p169 = scmp.ne.s32.totalorder %s161, %s163
      %p170 = scmp.eq.s32.totalorder %s27, 1
      %p171 = por %p169, %p170
      %p172 = scmp.ne.s32.totalorder %s163, %s164
      %p173 = scmp.eq.s32.totalorder %s27, 0
      %p174 = por %p172, %p173
      %p175 = scmp.ne.s32.totalorder %s163, %s164
      %p176 = scmp.eq.s32.totalorder %s28, 1
      %p177 = por %p175, %p176
      %p179 = scmp.ne.s32.totalorder %s164, %s178
      %p180 = scmp.eq.s32.totalorder %s28, 0
      %p181 = por %p179, %p180
      %s182 = ssub.s32 %s22, %s29
      %p183 = scmp.eq.s32.totalorder %s182, 0
      %s185 = sadd.s32 %s184, 1
      %s186 = scalar_select %p183, %s184, %s185
      %p189 = pneg %p183
      %p190 = scmp.eq.s32.totalorder %s22, 1
      %p191 = por %p189, %p190
      %p192 = scmp.ne.s32.totalorder %s184, %s187
      %p193 = scmp.eq.s32.totalorder %s22, 0
      %p194 = por %p192, %p193
      %p195 = scmp.ne.s32.totalorder %s184, %s187
      %p196 = scmp.eq.s32.totalorder %s27, 1
      %p197 = por %p195, %p196
      %p198 = scmp.ne.s32.totalorder %s187, %s188
      %p199 = scmp.eq.s32.totalorder %s27, 0
      %p200 = por %p198, %p199
      %p201 = scmp.ne.s32.totalorder %s187, %s188
      %p202 = scmp.eq.s32.totalorder %s28, 1
      %p203 = por %p201, %p202
      %p205 = scmp.ne.s32.totalorder %s188, %s204
      %p206 = scmp.eq.s32.totalorder %s28, 0
      %p207 = por %p205, %p206
      %p208 = scmp.le.s32.totalorder 1, %s22
      %p209 = scmp.lt.s32.totalorder %s22, 3
      %p210 = pnand %p208, %p209
      %p211 = pneg %p210
      // Predicated region
      $region9: #{tpu_custom_call.1} parent=5 // pred_check
        _
      $region10: #{tpu_custom_call.1} parent=5 // pred_check_branch
        %213 = sbr.rel (%p210) target = $region12
      $region11: #{tpu_custom_call.1} parent=5 // pred_region
        %s214 = ssub.s32 %s22, 1
        // Predicated region
        $region13: #{tpu_custom_call.1} parent=11 // pred_check
          %p215 = pneg %p69
        $region14: #{tpu_custom_call.1} parent=11 // pred_check_branch
          %217 = sbr.rel (%p215) target = $region16
        $region15: #{tpu_custom_call.1} parent=11 // pred_region
          %s219 = ssub.s32 256, 256
          %220 = vsyncadd [#allocation7], %s219
          %s221 = sshll.u32 [#allocation6], 4
          %s222 = int_to_ptr.vmem [resolvable:$true] %s221
          %227 = dma.hbm_to_vmem [thread:$0]  %s1, 256, %s222, [#allocation7], 64, 64, 4
        $region16: #{tpu_custom_call.1} parent=11 // pred_fallthru
          _
        // Predicated region
        $region17: #{tpu_custom_call.1} parent=11 // pred_check
          %p228 = pneg %p90
        $region18: #{tpu_custom_call.1} parent=11 // pred_check_branch
          %230 = sbr.rel (%p228) target = $region20
        $region19: #{tpu_custom_call.1} parent=11 // pred_region
          %s232 = ssub.s32 16, 16
          %233 = vsyncadd [#allocation7], %s232
          %s235 = sshll.u32 [#allocation8], 4
          %s236 = int_to_ptr.vmem [resolvable:$true] %s235
          %238 = dma.hbm_to_vmem [thread:$0]  %s2, 16, %s236, [#allocation7]
        $region20: #{tpu_custom_call.1} parent=11 // pred_fallthru
          _
        // Predicated region
        $region21: #{tpu_custom_call.1} parent=11 // pred_check
          %p239 = pneg %p111
        $region22: #{tpu_custom_call.1} parent=11 // pred_check_branch
          %241 = sbr.rel (%p239) target = $region24
        $region23: #{tpu_custom_call.1} parent=11 // pred_region
          %s243 = ssub.s32 9216, 9216
          %244 = vsyncadd [#allocation10], %s243
          %s245 = sshll.u32 [#allocation9], 4
          %s246 = int_to_ptr.vmem [resolvable:$true] %s245
          %251 = dma.hbm_to_vmem [thread:$0]  %s3, 9216, %s246, [#allocation10], 64, 64, 4
        $region24: #{tpu_custom_call.1} parent=11 // pred_fallthru
          _
        // Predicated region
        $region25: #{tpu_custom_call.1} parent=11 // pred_check
          %p252 = pneg %p132
        $region26: #{tpu_custom_call.1} parent=11 // pred_check_branch
          %254 = sbr.rel (%p252) target = $region28
        $region27: #{tpu_custom_call.1} parent=11 // pred_region
          %s256 = ssub.s32 16, 16
          %257 = vsyncadd [#allocation10], %s256
          %s259 = sshll.u32 [#allocation11], 4
          %s260 = int_to_ptr.vmem [resolvable:$true] %s259
          %262 = dma.hbm_to_vmem [thread:$0]  %s4, 16, %s260, [#allocation10]
        $region28: #{tpu_custom_call.1} parent=11 // pred_fallthru
          _
        // Predicated region
        $region29: #{tpu_custom_call.1} parent=11 // pred_check
          %p263 = pneg %p153
        $region30: #{tpu_custom_call.1} parent=11 // pred_check_branch
          %265 = sbr.rel (%p263) target = $region32
        $region31: #{tpu_custom_call.1} parent=11 // pred_region
          %s267 = ssub.s32 1024, 1024
          %268 = vsyncadd [#allocation13], %s267
          %s269 = sshll.u32 [#allocation12], 4
          %s270 = int_to_ptr.vmem [resolvable:$true] %s269
          %275 = dma.hbm_to_vmem [thread:$0]  %s5, 1024, %s270, [#allocation13], 64, 64, 4
        $region32: #{tpu_custom_call.1} parent=11 // pred_fallthru
          _
        // Predicated region
        $region33: #{tpu_custom_call.1} parent=11 // pred_check
          %p276 = pneg %p174
        $region34: #{tpu_custom_call.1} parent=11 // pred_check_branch
          %278 = sbr.rel (%p276) target = $region36
        $region35: #{tpu_custom_call.1} parent=11 // pred_region
          %s280 = ssub.s32 16, 16
          %281 = vsyncadd [#allocation13], %s280
          %s283 = sshll.u32 [#allocation14], 4
          %s284 = int_to_ptr.vmem [resolvable:$true] %s283
          %286 = dma.hbm_to_vmem [thread:$0]  %s6, 16, %s284, [#allocation13]
        $region36: #{tpu_custom_call.1} parent=11 // pred_fallthru
          _
      $region12: #{tpu_custom_call.1} parent=5 // pred_fallthru
        _
      %p287 = scmp.lt.s32.totalorder %s22, 2
      // Predicated region
      $region37: #{tpu_custom_call.1} parent=5 // pred_check
        %p288 = pneg %p287
      $region38: #{tpu_custom_call.1} parent=5 // pred_check_branch
        %290 = sbr.rel (%p288) target = $region40
      $region39: #{tpu_custom_call.1} parent=5 // pred_region
        // Predicated region
        $region41: #{tpu_custom_call.1} parent=39 // pred_check
          %p291 = pneg %p42
        $region42: #{tpu_custom_call.1} parent=39 // pred_check_branch
          %293 = sbr.rel (%p291) target = $region44
        $region43: #{tpu_custom_call.1} parent=39 // pred_region
          %s294 = sand.u32 %s32, 1
          %s295 = scalar_lea.sflag [#allocation4], %s294
          %s296 = sand.u32 %s32, 1
          %s297 = smul.addr %s296, 256
          %s298 = scalar_lea.vmem [#allocation3], %s297
          %s300 = ssub.s32 4096, 4096
          %301 = vsyncadd %s295, %s300
          %s302 = smul.addr %s22, 32
          %s303 = smul.addr %s302, 128
          %s304 = scalar_lea.hbm %s0, %s303
          %s305 = sshll.u32 %s298, 4
          %s306 = int_to_ptr.vmem [resolvable:$true] %s305
          %311 = dma.hbm_to_vmem [thread:$0]  %s304, 4096, %s306, %s295, 128, 128, 8
        $region44: #{tpu_custom_call.1} parent=39 // pred_fallthru
          _
      $region40: #{tpu_custom_call.1} parent=5 // pred_fallthru
        _
      %p312 = scmp.le.s32.totalorder 1, %s22
      %p313 = scmp.lt.s32.totalorder %s22, 3
      %p314 = pnand %p312, %p313
      %p315 = pneg %p314
      // Predicated region
      $region45: #{tpu_custom_call.1} parent=5 // pred_check
        _
      $region46: #{tpu_custom_call.1} parent=5 // pred_check_branch
        %317 = sbr.rel (%p314) target = $region48
      $region47: #{tpu_custom_call.1} parent=5 // pred_region
        %s318 = ssub.s32 %s22, 1
        %s319 = sand.u32 %s35, 1
        %s320 = scalar_lea.sflag [#allocation4], %s319
        %s321 = sand.u32 %s35, 1
        %s322 = smul.addr %s321, 256
        %s323 = scalar_lea.vmem [#allocation3], %s322
        // Predicated region
        $region49: #{tpu_custom_call.1} parent=47 // pred_check
          %p324 = pneg %p48
        $region50: #{tpu_custom_call.1} parent=47 // pred_check_branch
          %326 = sbr.rel (%p324) target = $region52
        $region51: #{tpu_custom_call.1} parent=47 // pred_region
          %327 = dma.done %s320, 4096
        $region52: #{tpu_custom_call.1} parent=47 // pred_fallthru
          _
        // Predicated region
        $region53: #{tpu_custom_call.1} parent=47 // pred_check
          %p328 = pneg %p69
        $region54: #{tpu_custom_call.1} parent=47 // pred_check_branch
          %330 = sbr.rel (%p328) target = $region56
        $region55: #{tpu_custom_call.1} parent=47 // pred_region
          %331 = dma.done [#allocation7], 256
        $region56: #{tpu_custom_call.1} parent=47 // pred_fallthru
          _
        // Predicated region
        $region57: #{tpu_custom_call.1} parent=47 // pred_check
          %p332 = pneg %p90
        $region58: #{tpu_custom_call.1} parent=47 // pred_check_branch
          %334 = sbr.rel (%p332) target = $region60
        $region59: #{tpu_custom_call.1} parent=47 // pred_region
          %335 = dma.done [#allocation7], 16
        $region60: #{tpu_custom_call.1} parent=47 // pred_fallthru
          _
        // Predicated region
        $region61: #{tpu_custom_call.1} parent=47 // pred_check
          %p336 = pneg %p111
        $region62: #{tpu_custom_call.1} parent=47 // pred_check_branch
          %338 = sbr.rel (%p336) target = $region64
        $region63: #{tpu_custom_call.1} parent=47 // pred_region
          %339 = dma.done [#allocation10], 9216
        $region64: #{tpu_custom_call.1} parent=47 // pred_fallthru
          _
        // Predicated region
        $region65: #{tpu_custom_call.1} parent=47 // pred_check
          %p340 = pneg %p132
        $region66: #{tpu_custom_call.1} parent=47 // pred_check_branch
          %342 = sbr.rel (%p340) target = $region68
        $region67: #{tpu_custom_call.1} parent=47 // pred_region
          %343 = dma.done [#allocation10], 16
        $region68: #{tpu_custom_call.1} parent=47 // pred_fallthru
          _
        // Predicated region
        $region69: #{tpu_custom_call.1} parent=47 // pred_check
          %p344 = pneg %p153
        $region70: #{tpu_custom_call.1} parent=47 // pred_check_branch
          %346 = sbr.rel (%p344) target = $region72
        $region71: #{tpu_custom_call.1} parent=47 // pred_region
          %347 = dma.done [#allocation13], 1024
        $region72: #{tpu_custom_call.1} parent=47 // pred_fallthru
          _
        // Predicated region
        $region73: #{tpu_custom_call.1} parent=47 // pred_check
          %p348 = pneg %p174
        $region74: #{tpu_custom_call.1} parent=47 // pred_check_branch
          %350 = sbr.rel (%p348) target = $region76
        $region75: #{tpu_custom_call.1} parent=47 // pred_region
          %351 = dma.done [#allocation13], 16
        $region76: #{tpu_custom_call.1} parent=47 // pred_fallthru
          _
        %s352 = sand.u32 %s35, 1
        %s353 = scalar_lea.sflag [#allocation4], %s352
        %s354 = sand.u32 %s35, 1
        %s355 = smul.addr %s354, 256
        %s356 = scalar_lea.vmem [#allocation3], %s355
        %p357 = pneg %p48
        %p358 = pneg %p45
        %p359 = pneg %p69
        %p360 = pneg %p66
        %p361 = pneg %p90
        %p362 = pneg %p87
        %p363 = pneg %p111
        %p364 = pneg %p108
        %p365 = pneg %p132
        %p366 = pneg %p129
        %p367 = pneg %p153
        %p368 = pneg %p150
        %p369 = pneg %p174
        %p370 = pneg %p171
        %p371 = pneg %p200
        %p372 = pneg %p197
        %s373 = sand.u32 %s187, 1
        %s374 = scalar_lea.sflag [#allocation5], %s373
        %s375 = sand.u32 %s187, 1
        %s376 = smul.addr %s375, 256
        %s377 = scalar_lea.vmem [#allocation15], %s376
        %v379 = vld [vmem:[%s323] sm:$0xff]
        %v380 = vld [vmem:[%s323 + $0x8] sm:$0xff]
        %v381 = vld [vmem:[%s323 + $0x10] sm:$0xff]
        %v382 = vld [vmem:[%s323 + $0x18] sm:$0xff]
        %v383 = vld [vmem:[%s323 + $0x20] sm:$0xff]
        %v384 = vld [vmem:[%s323 + $0x28] sm:$0xff]
        %v385 = vld [vmem:[%s323 + $0x30] sm:$0xff]
        %v386 = vld [vmem:[%s323 + $0x38] sm:$0xff]
        %v387 = vld [vmem:[%s323 + $0x40] sm:$0xff]
        %v388 = vld [vmem:[%s323 + $0x48] sm:$0xff]
        %v389 = vld [vmem:[%s323 + $0x50] sm:$0xff]
        %v390 = vld [vmem:[%s323 + $0x58] sm:$0xff]
        %v391 = vld [vmem:[%s323 + $0x60] sm:$0xff]
        %v392 = vld [vmem:[%s323 + $0x68] sm:$0xff]
        %v393 = vld [vmem:[%s323 + $0x70] sm:$0xff]
        %v394 = vld [vmem:[%s323 + $0x78] sm:$0xff]
        %v395 = vld [vmem:[%s323 + $0x80] sm:$0xff]
        %v396 = vld [vmem:[%s323 + $0x88] sm:$0xff]
        %v397 = vld [vmem:[%s323 + $0x90] sm:$0xff]
        %v398 = vld [vmem:[%s323 + $0x98] sm:$0xff]
        %v399 = vld [vmem:[%s323 + $0xa0] sm:$0xff]
        %v400 = vld [vmem:[%s323 + $0xa8] sm:$0xff]
        %v401 = vld [vmem:[%s323 + $0xb0] sm:$0xff]
        %v402 = vld [vmem:[%s323 + $0xb8] sm:$0xff]
        %v403 = vld [vmem:[%s323 + $0xc0] sm:$0xff]
        %v404 = vld [vmem:[%s323 + $0xc8] sm:$0xff]
        %v405 = vld [vmem:[%s323 + $0xd0] sm:$0xff]
        %v406 = vld [vmem:[%s323 + $0xd8] sm:$0xff]
        %v407 = vld [vmem:[%s323 + $0xe0] sm:$0xff]
        %v408 = vld [vmem:[%s323 + $0xe8] sm:$0xff]
        %v409 = vld [vmem:[%s323 + $0xf0] sm:$0xff]
        %v410 = vld [vmem:[%s323 + $0xf8] sm:$0xff]
        %v411 = vpack.c.bf16 %v380, %v379
        %v412 = vpack.c.bf16 %v382, %v381
        %v413 = vpack.c.bf16 %v384, %v383
        %v414 = vpack.c.bf16 %v386, %v385
        %v415 = vpack.c.bf16 %v388, %v387
        %v416 = vpack.c.bf16 %v390, %v389
        %v417 = vpack.c.bf16 %v392, %v391
        %v418 = vpack.c.bf16 %v394, %v393
        %v419 = vpack.c.bf16 %v396, %v395
        %v420 = vpack.c.bf16 %v398, %v397
        %v421 = vpack.c.bf16 %v400, %v399
        %v422 = vpack.c.bf16 %v402, %v401
        %v423 = vpack.c.bf16 %v404, %v403
        %v424 = vpack.c.bf16 %v406, %v405
        %v425 = vpack.c.bf16 %v408, %v407
        %v426 = vpack.c.bf16 %v410, %v409
        %v427 = vld [vmem:[#allocation6] sm:$0xf]
        %v428 = vld [vmem:[#allocation6 + $0x4] sm:$0xf]
        %v429 = vld [vmem:[#allocation6 + $0x8] sm:$0xf]
        %v430 = vld [vmem:[#allocation6 + $0xc] sm:$0xf]
        %v431 = vld [vmem:[#allocation8] sm:$0x1]
        %v433 = vlaneseq
        %v434 = vshrl.u32 %v433, 7
        %v435 = vsub.s32 0, %v434
        %v436 = vrot.slane %v431, %v435
        %v442 = vunpack.c.l.b16 %v427
        %v443 = vunpack.c.l.b16 %v428
        %v444 = vunpack.c.l.b16 %v429
        %v445 = vunpack.c.l.b16 %v430
        %v446 = vpack.c.b16 %v443, %v442
        %v447 = vpack.c.b16 %v445, %v444
        %vm450 = vcmask 261120
        %v452 = vsel %vm450, %v411, 0
        %v455 = vsel %vm450, %v412, 0
        %v458 = vsel %vm450, %v413, 0
        %v461 = vsel %vm450, %v414, 0
        %v464 = vsel %vm450, %v415, 0
        %v467 = vsel %vm450, %v416, 0
        %v470 = vsel %vm450, %v417, 0
        %v473 = vsel %vm450, %v418, 0
        %v476 = vsel %vm450, %v419, 0
        %v479 = vsel %vm450, %v420, 0
        %v482 = vsel %vm450, %v421, 0
        %v485 = vsel %vm450, %v422, 0
        %v488 = vsel %vm450, %v423, 0
        %v491 = vsel %vm450, %v424, 0
        %v494 = vsel %vm450, %v425, 0
        %v497 = vsel %vm450, %v426, 0
        %499 = vmatprep.subr.bf16.mxu0 0
        %500 = vmatpush1.bf16.msra.mxu0 %v446
        %501 = vmatprep.subr.bf16.mxu0 0
        %502 = vmatpush1.bf16.msra.mxu0 %v447
        %503 = vmatprep.subr.bf16.mxu0 0
        %504 = vmatpush1.bf16.msra.mxu0 0
        %505 = vmatprep.subr.bf16.mxu0 0
        %506 = vmatpush1.bf16.msra.mxu0 0
        %507 = vmatprep.subr.bf16.mxu0 0
        %508 = vmatpush1.bf16.msra.mxu0 0
        %509 = vmatprep.subr.bf16.mxu0 0
        %510 = vmatpush1.bf16.msra.mxu0 0
        %511 = vmatprep.subr.bf16.mxu0 0
        %512 = vmatpush1.bf16.msra.mxu0 0
        %513 = vmatprep.subr.bf16.mxu0 0
        %514 = vmatpush1.bf16.msra.mxu0 0
        %515 = vmatprep.subr.bf16.mxu0 0
        %516 = vmatpush1.bf16.msra.mxu0 0
        %517 = vmatprep.subr.bf16.mxu0 0
        %518 = vmatpush1.bf16.msra.mxu0 0
        %519 = vmatprep.subr.bf16.mxu0 0
        %520 = vmatpush1.bf16.msra.mxu0 0
        %521 = vmatprep.subr.bf16.mxu0 0
        %522 = vmatpush1.bf16.msra.mxu0 0
        %523 = vmatprep.subr.bf16.mxu0 0
        %524 = vmatpush1.bf16.msra.mxu0 0
        %525 = vmatprep.subr.bf16.mxu0 0
        %526 = vmatpush1.bf16.msra.mxu0 0
        %527 = vmatprep.subr.bf16.mxu0 0
        %528 = vmatpush1.bf16.msra.mxu0 0
        %529 = vmatprep.subr.bf16.mxu0 0
        %530 = vmatpush1.bf16.msra.mxu0 0
        %531 = vmatprep.mubr.bf16.mxu0 0
        %532 = vmatmul.mubr.bf16.gmra.mrb[0].mxu0 %v452
        %v533 = vpop.f32.mrb[0].mxu0
        %v534 = vadd.f32 %v436, %v533
        %v535 = vpop.f32.mrb[0].mxu0
        %v536 = vpop.f32.mrb[0].mxu0
        %v537 = vadd.f32 %v436, %v536
        %v538 = vpop.f32.mrb[0].mxu0
        %539 = vmatprep.mubr.bf16.mxu0 0
        %540 = vmatmul.mubr.bf16.gmra.mrb[0].mxu0 %v455
        %v541 = vpop.f32.mrb[0].mxu0
        %v542 = vadd.f32 %v436, %v541
        %v543 = vpop.f32.mrb[0].mxu0
        %v544 = vpop.f32.mrb[0].mxu0
        %v545 = vadd.f32 %v436, %v544
        %v546 = vpop.f32.mrb[0].mxu0
        %547 = vmatprep.mubr.bf16.mxu0 0
        %548 = vmatmul.mubr.bf16.gmra.mrb[0].mxu0 %v458
        %v549 = vpop.f32.mrb[0].mxu0
        %v550 = vadd.f32 %v436, %v549
        %v551 = vpop.f32.mrb[0].mxu0
        %v552 = vpop.f32.mrb[0].mxu0
        %v553 = vadd.f32 %v436, %v552
        %v554 = vpop.f32.mrb[0].mxu0
        %555 = vmatprep.mubr.bf16.mxu0 0
        %556 = vmatmul.mubr.bf16.gmra.mrb[0].mxu0 %v461
        %v557 = vpop.f32.mrb[0].mxu0
        %v558 = vadd.f32 %v436, %v557
        %v559 = vpop.f32.mrb[0].mxu0
        %v560 = vpop.f32.mrb[0].mxu0
        %v561 = vadd.f32 %v436, %v560
        %v562 = vpop.f32.mrb[0].mxu0
        %563 = vmatprep.mubr.bf16.mxu0 0
        %564 = vmatmul.mubr.bf16.gmra.mrb[0].mxu0 %v464
        %v565 = vpop.f32.mrb[0].mxu0
        %v566 = vadd.f32 %v436, %v565
        %v567 = vpop.f32.mrb[0].mxu0
        %v568 = vpop.f32.mrb[0].mxu0
        %v569 = vadd.f32 %v436, %v568
        %v570 = vpop.f32.mrb[0].mxu0
        %571 = vmatprep.mubr.bf16.mxu0 0
        %572 = vmatmul.mubr.bf16.gmra.mrb[0].mxu0 %v467
        %v573 = vpop.f32.mrb[0].mxu0
        %v574 = vadd.f32 %v436, %v573
        %v575 = vpop.f32.mrb[0].mxu0
        %v576 = vpop.f32.mrb[0].mxu0
        %v577 = vadd.f32 %v436, %v576
        %v578 = vpop.f32.mrb[0].mxu0
        %579 = vmatprep.mubr.bf16.mxu0 0
        %580 = vmatmul.mubr.bf16.gmra.mrb[0].mxu0 %v470
        %v581 = vpop.f32.mrb[0].mxu0
        %v582 = vadd.f32 %v436, %v581
        %v583 = vpop.f32.mrb[0].mxu0
        %v584 = vpop.f32.mrb[0].mxu0
        %v585 = vadd.f32 %v436, %v584
        %v586 = vpop.f32.mrb[0].mxu0
        %587 = vmatprep.mubr.bf16.mxu0 0
        %588 = vmatmul.mubr.bf16.gmra.mrb[0].mxu0 %v473
        %v589 = vpop.f32.mrb[0].mxu0
        %v590 = vadd.f32 %v436, %v589
        %v591 = vpop.f32.mrb[0].mxu0
        %v592 = vpop.f32.mrb[0].mxu0
        %v593 = vadd.f32 %v436, %v592
        %v594 = vpop.f32.mrb[0].mxu0
        %595 = vmatprep.mubr.bf16.mxu0 0
        %596 = vmatmul.mubr.bf16.gmra.mrb[0].mxu0 %v476
        %v597 = vpop.f32.mrb[0].mxu0
        %v598 = vadd.f32 %v436, %v597
        %v599 = vpop.f32.mrb[0].mxu0
        %v600 = vpop.f32.mrb[0].mxu0
        %v601 = vadd.f32 %v436, %v600
        %v602 = vpop.f32.mrb[0].mxu0
        %603 = vmatprep.mubr.bf16.mxu0 0
        %604 = vmatmul.mubr.bf16.gmra.mrb[0].mxu0 %v479
        %v605 = vpop.f32.mrb[0].mxu0
        %v606 = vadd.f32 %v436, %v605
        %v607 = vpop.f32.mrb[0].mxu0
        %v608 = vpop.f32.mrb[0].mxu0
        %v609 = vadd.f32 %v436, %v608
        %v610 = vpop.f32.mrb[0].mxu0
        %611 = vmatprep.mubr.bf16.mxu0 0
        %612 = vmatmul.mubr.bf16.gmra.mrb[0].mxu0 %v482
        %v613 = vpop.f32.mrb[0].mxu0
        %v614 = vadd.f32 %v436, %v613
        %v615 = vpop.f32.mrb[0].mxu0
        %v616 = vpop.f32.mrb[0].mxu0
        %v617 = vadd.f32 %v436, %v616
        %v618 = vpop.f32.mrb[0].mxu0
        %619 = vmatprep.mubr.bf16.mxu0 0
        %620 = vmatmul.mubr.bf16.gmra.mrb[0].mxu0 %v485
        %v621 = vpop.f32.mrb[0].mxu0
        %v622 = vadd.f32 %v436, %v621
        %v623 = vpop.f32.mrb[0].mxu0
        %v624 = vpop.f32.mrb[0].mxu0
        %v625 = vadd.f32 %v436, %v624
        %v626 = vpop.f32.mrb[0].mxu0
        %627 = vmatprep.mubr.bf16.mxu0 0
        %628 = vmatmul.mubr.bf16.gmra.mrb[0].mxu0 %v488
        %v629 = vpop.f32.mrb[0].mxu0
        %v630 = vadd.f32 %v436, %v629
        %v631 = vpop.f32.mrb[0].mxu0
        %v632 = vpop.f32.mrb[0].mxu0
        %v633 = vadd.f32 %v436, %v632
        %v634 = vpop.f32.mrb[0].mxu0
        %635 = vmatprep.mubr.bf16.mxu0 0
        %636 = vmatmul.mubr.bf16.gmra.mrb[0].mxu0 %v491
        %v637 = vpop.f32.mrb[0].mxu0
        %v638 = vadd.f32 %v436, %v637
        %v639 = vpop.f32.mrb[0].mxu0
        %v640 = vpop.f32.mrb[0].mxu0
        %v641 = vadd.f32 %v436, %v640
        %v642 = vpop.f32.mrb[0].mxu0
        %643 = vmatprep.mubr.bf16.mxu0 0
        %644 = vmatmul.mubr.bf16.gmra.mrb[0].mxu0 %v494
        %v645 = vpop.f32.mrb[0].mxu0
        %v646 = vadd.f32 %v436, %v645
        %v647 = vpop.f32.mrb[0].mxu0
        %v648 = vpop.f32.mrb[0].mxu0
        %v649 = vadd.f32 %v436, %v648
        %v650 = vpop.f32.mrb[0].mxu0
        %651 = vmatprep.mubr.bf16.mxu0 0
        %652 = vmatmul.mubr.bf16.gmra.mrb[0].mxu0 %v497
        %v653 = vpop.f32.mrb[0].mxu0
        %v654 = vadd.f32 %v436, %v653
        %v655 = vpop.f32.mrb[0].mxu0
        %v656 = vpop.f32.mrb[0].mxu0
        %v657 = vadd.f32 %v436, %v656
        %v658 = vpop.f32.mrb[0].mxu0
        %659 = vdwg.mxu0
        %660 = vst.msk [vmem:[#allocation2] sm:$0xff] %vm450, 0.0
        %661 = vst.msk [vmem:[#allocation2 + $0x8] sm:$0xff] %vm450, 0.0
        %662 = vst.msk [vmem:[#allocation2 + $0x10] sm:$0xff] %vm450, 0.0
        %663 = vst.msk [vmem:[#allocation2 + $0x18] sm:$0xff] %vm450, 0.0
        %664 = vst.msk [vmem:[#allocation2 + $0x20] sm:$0xff] %vm450, 0.0
        %665 = vst.msk [vmem:[#allocation2 + $0x28] sm:$0xff] %vm450, 0.0
        %666 = vst.msk [vmem:[#allocation2 + $0x30] sm:$0xff] %vm450, 0.0
        %667 = vst.msk [vmem:[#allocation2 + $0x38] sm:$0xff] %vm450, 0.0
        %668 = vst.msk [vmem:[#allocation2 + $0x40] sm:$0xff] %vm450, 0.0
        %669 = vst.msk [vmem:[#allocation2 + $0x48] sm:$0xff] %vm450, 0.0
        %670 = vst.msk [vmem:[#allocation2 + $0x50] sm:$0xff] %vm450, 0.0
        %671 = vst.msk [vmem:[#allocation2 + $0x58] sm:$0xff] %vm450, 0.0
        %672 = vst.msk [vmem:[#allocation2 + $0x60] sm:$0xff] %vm450, 0.0
        %673 = vst.msk [vmem:[#allocation2 + $0x68] sm:$0xff] %vm450, 0.0
        %674 = vst.msk [vmem:[#allocation2 + $0x70] sm:$0xff] %vm450, 0.0
        %675 = vst.msk [vmem:[#allocation2 + $0x78] sm:$0xff] %vm450, 0.0
        %s676 = scalar_lea.vmem [#allocation2], 640
        %677 = vst.msk [vmem:[%s676] sm:$0xff] %vm450, 0.0
        %678 = vst.msk [vmem:[%s676 + $0x8] sm:$0xff] %vm450, 0.0
        %679 = vst.msk [vmem:[%s676 + $0x10] sm:$0xff] %vm450, 0.0
        %680 = vst.msk [vmem:[%s676 + $0x18] sm:$0xff] %vm450, 0.0
        %681 = vst.msk [vmem:[%s676 + $0x20] sm:$0xff] %vm450, 0.0
        %682 = vst.msk [vmem:[%s676 + $0x28] sm:$0xff] %vm450, 0.0
        %683 = vst.msk [vmem:[%s676 + $0x30] sm:$0xff] %vm450, 0.0
        %684 = vst.msk [vmem:[%s676 + $0x38] sm:$0xff] %vm450, 0.0
        %685 = vst.msk [vmem:[%s676 + $0x40] sm:$0xff] %vm450, 0.0
        %686 = vst.msk [vmem:[%s676 + $0x48] sm:$0xff] %vm450, 0.0
        %687 = vst.msk [vmem:[%s676 + $0x50] sm:$0xff] %vm450, 0.0
        %688 = vst.msk [vmem:[%s676 + $0x58] sm:$0xff] %vm450, 0.0
        %689 = vst.msk [vmem:[%s676 + $0x60] sm:$0xff] %vm450, 0.0
        %690 = vst.msk [vmem:[%s676 + $0x68] sm:$0xff] %vm450, 0.0
        %691 = vst.msk [vmem:[%s676 + $0x70] sm:$0xff] %vm450, 0.0
        %692 = vst.msk [vmem:[%s676 + $0x78] sm:$0xff] %vm450, 0.0
        %s693 = scalar_lea.vmem [#allocation2], 128
        %694 = vst.msk [vmem:[%s693] sm:$0xff] %vm450, 0.0
        %695 = vst.msk [vmem:[%s693 + $0x20] sm:$0xff] %vm450, 0.0
        %696 = vst.msk [vmem:[%s693 + $0x40] sm:$0xff] %vm450, 0.0
        %697 = vst.msk [vmem:[%s693 + $0x60] sm:$0xff] %vm450, 0.0
        %698 = vst.msk [vmem:[%s693 + $0x80] sm:$0xff] %vm450, 0.0
        %699 = vst.msk [vmem:[%s693 + $0xa0] sm:$0xff] %vm450, 0.0
        %700 = vst.msk [vmem:[%s693 + $0xc0] sm:$0xff] %vm450, 0.0
        %701 = vst.msk [vmem:[%s693 + $0xe0] sm:$0xff] %vm450, 0.0
        %702 = vst.msk [vmem:[%s693 + $0x100] sm:$0xff] %vm450, 0.0
        %703 = vst.msk [vmem:[%s693 + $0x120] sm:$0xff] %vm450, 0.0
        %704 = vst.msk [vmem:[%s693 + $0x140] sm:$0xff] %vm450, 0.0
        %705 = vst.msk [vmem:[%s693 + $0x160] sm:$0xff] %vm450, 0.0
        %706 = vst.msk [vmem:[%s693 + $0x180] sm:$0xff] %vm450, 0.0
        %707 = vst.msk [vmem:[%s693 + $0x1a0] sm:$0xff] %vm450, 0.0
        %708 = vst.msk [vmem:[%s693 + $0x1c0] sm:$0xff] %vm450, 0.0
        %709 = vst.msk [vmem:[%s693 + $0x1e0] sm:$0xff] %vm450, 0.0
        %710 = vst.msk [vmem:[%s693 + $0x18] sm:$0xff] %vm450, 0.0
        %711 = vst.msk [vmem:[%s693 + $0x38] sm:$0xff] %vm450, 0.0
        %712 = vst.msk [vmem:[%s693 + $0x58] sm:$0xff] %vm450, 0.0
        %713 = vst.msk [vmem:[%s693 + $0x78] sm:$0xff] %vm450, 0.0
        %714 = vst.msk [vmem:[%s693 + $0x98] sm:$0xff] %vm450, 0.0
        %715 = vst.msk [vmem:[%s693 + $0xb8] sm:$0xff] %vm450, 0.0
        %716 = vst.msk [vmem:[%s693 + $0xd8] sm:$0xff] %vm450, 0.0
        %717 = vst.msk [vmem:[%s693 + $0xf8] sm:$0xff] %vm450, 0.0
        %718 = vst.msk [vmem:[%s693 + $0x118] sm:$0xff] %vm450, 0.0
        %719 = vst.msk [vmem:[%s693 + $0x138] sm:$0xff] %vm450, 0.0
        %720 = vst.msk [vmem:[%s693 + $0x158] sm:$0xff] %vm450, 0.0
        %721 = vst.msk [vmem:[%s693 + $0x178] sm:$0xff] %vm450, 0.0
        %722 = vst.msk [vmem:[%s693 + $0x198] sm:$0xff] %vm450, 0.0
        %723 = vst.msk [vmem:[%s693 + $0x1b8] sm:$0xff] %vm450, 0.0
        %724 = vst.msk [vmem:[%s693 + $0x1d8] sm:$0xff] %vm450, 0.0
        %725 = vst.msk [vmem:[%s693 + $0x1f8] sm:$0xff] %vm450, 0.0
        %726 = vst.msk [vmem:[%s693 + $0x8] sm:$0xff] %vm450, %v534
        %727 = vst.msk [vmem:[%s693 + $0x10] sm:$0xff] %vm450, %v537
        %728 = vst.msk [vmem:[%s693 + $0x28] sm:$0xff] %vm450, %v542
        %729 = vst.msk [vmem:[%s693 + $0x30] sm:$0xff] %vm450, %v545
        %730 = vst.msk [vmem:[%s693 + $0x48] sm:$0xff] %vm450, %v550
        %731 = vst.msk [vmem:[%s693 + $0x50] sm:$0xff] %vm450, %v553
        %732 = vst.msk [vmem:[%s693 + $0x68] sm:$0xff] %vm450, %v558
        %733 = vst.msk [vmem:[%s693 + $0x70] sm:$0xff] %vm450, %v561
        %734 = vst.msk [vmem:[%s693 + $0x88] sm:$0xff] %vm450, %v566
        %735 = vst.msk [vmem:[%s693 + $0x90] sm:$0xff] %vm450, %v569
        %736 = vst.msk [vmem:[%s693 + $0xa8] sm:$0xff] %vm450, %v574
        %737 = vst.msk [vmem:[%s693 + $0xb0] sm:$0xff] %vm450, %v577
        %738 = vst.msk [vmem:[%s693 + $0xc8] sm:$0xff] %vm450, %v582
        %739 = vst.msk [vmem:[%s693 + $0xd0] sm:$0xff] %vm450, %v585
        %740 = vst.msk [vmem:[%s693 + $0xe8] sm:$0xff] %vm450, %v590
        %741 = vst.msk [vmem:[%s693 + $0xf0] sm:$0xff] %vm450, %v593
        %742 = vst.msk [vmem:[%s693 + $0x108] sm:$0xff] %vm450, %v598
        %743 = vst.msk [vmem:[%s693 + $0x110] sm:$0xff] %vm450, %v601
        %744 = vst.msk [vmem:[%s693 + $0x128] sm:$0xff] %vm450, %v606
        %745 = vst.msk [vmem:[%s693 + $0x130] sm:$0xff] %vm450, %v609
        %746 = vst.msk [vmem:[%s693 + $0x148] sm:$0xff] %vm450, %v614
        %747 = vst.msk [vmem:[%s693 + $0x150] sm:$0xff] %vm450, %v617
        %748 = vst.msk [vmem:[%s693 + $0x168] sm:$0xff] %vm450, %v622
        %749 = vst.msk [vmem:[%s693 + $0x170] sm:$0xff] %vm450, %v625
        %750 = vst.msk [vmem:[%s693 + $0x188] sm:$0xff] %vm450, %v630
        %751 = vst.msk [vmem:[%s693 + $0x190] sm:$0xff] %vm450, %v633
        %752 = vst.msk [vmem:[%s693 + $0x1a8] sm:$0xff] %vm450, %v638
        %753 = vst.msk [vmem:[%s693 + $0x1b0] sm:$0xff] %vm450, %v641
        %754 = vst.msk [vmem:[%s693 + $0x1c8] sm:$0xff] %vm450, %v646
        %755 = vst.msk [vmem:[%s693 + $0x1d0] sm:$0xff] %vm450, %v649
        %756 = vst.msk [vmem:[%s693 + $0x1e8] sm:$0xff] %vm450, %v654
        %757 = vst.msk [vmem:[%s693 + $0x1f0] sm:$0xff] %vm450, %v657
        %s758 = scalar_lea.vmem [#allocation2], 96
        %v759 = vld [vmem:[%s758 + $0x7] sm:$0xff]
        %v760 = vld [vmem:[%s758 + $0xf] sm:$0xff]
        %v761 = vld [vmem:[%s758 + $0x27] sm:$0xff]
        %v762 = vld [vmem:[%s758 + $0x2f] sm:$0xff]
        %v763 = vld [vmem:[%s758 + $0x47] sm:$0xff]
        %v764 = vld [vmem:[%s758 + $0x4f] sm:$0xff]
        %v765 = vld [vmem:[%s758 + $0x67] sm:$0xff]
        %v766 = vld [vmem:[%s758 + $0x6f] sm:$0xff]
        %v767 = vld [vmem:[%s758 + $0x87] sm:$0xff]
        %v768 = vld [vmem:[%s758 + $0x8f] sm:$0xff]
        %v769 = vld [vmem:[%s758 + $0xa7] sm:$0xff]
        %v770 = vld [vmem:[%s758 + $0xaf] sm:$0xff]
        %v771 = vld [vmem:[%s758 + $0xc7] sm:$0xff]
        %v772 = vld [vmem:[%s758 + $0xcf] sm:$0xff]
        %v773 = vld [vmem:[%s758 + $0xe7] sm:$0xff]
        %v774 = vld [vmem:[%s758 + $0xef] sm:$0xff]
        %v775 = vld [vmem:[%s758 + $0x107] sm:$0xff]
        %v776 = vld [vmem:[%s758 + $0x10f] sm:$0xff]
        %v777 = vld [vmem:[%s758 + $0x127] sm:$0xff]
        %v778 = vld [vmem:[%s758 + $0x12f] sm:$0xff]
        %v779 = vld [vmem:[%s758 + $0x147] sm:$0xff]
        %v780 = vld [vmem:[%s758 + $0x14f] sm:$0xff]
        %v781 = vld [vmem:[%s758 + $0x167] sm:$0xff]
        %v782 = vld [vmem:[%s758 + $0x16f] sm:$0xff]
        %v783 = vld [vmem:[%s758 + $0x187] sm:$0xff]
        %v784 = vld [vmem:[%s758 + $0x18f] sm:$0xff]
        %v785 = vld [vmem:[%s758 + $0x1a7] sm:$0xff]
        %v786 = vld [vmem:[%s758 + $0x1af] sm:$0xff]
        %v787 = vld [vmem:[%s758 + $0x1c7] sm:$0xff]
        %v788 = vld [vmem:[%s758 + $0x1cf] sm:$0xff]
        %v789 = vld [vmem:[%s758 + $0x1e7] sm:$0xff]
        %v790 = vld [vmem:[%s758 + $0x1ef] sm:$0xff]
        %v791 = vld [vmem:[%s758 + $0x207] sm:$0xff]
        %v792 = vld [vmem:[%s758 + $0x20f] sm:$0xff]
        %v793 = vld [vmem:[%s758 + $0x227] sm:$0xff]
        %v794 = vld [vmem:[%s758 + $0x22f] sm:$0xff]
        %827 = vrot.lane.b32.xlu0 %v761, 32
        %v828 = vpop.permute.xlu0 %827
        %829 = vrot.lane.b32.xlu0 %v762, 32
        %v830 = vpop.permute.xlu0 %829
        %831 = vrot.lane.b32.xlu0 %v763, 32
        %v832 = vpop.permute.xlu0 %831
        %833 = vrot.lane.b32.xlu0 %v764, 32
        %v834 = vpop.permute.xlu0 %833
        %835 = vrot.lane.b32.xlu0 %v765, 32
        %v836 = vpop.permute.xlu0 %835
        %837 = vrot.lane.b32.xlu0 %v766, 32
        %v838 = vpop.permute.xlu0 %837
        %839 = vrot.lane.b32.xlu0 %v767, 32
        %v840 = vpop.permute.xlu0 %839
        %841 = vrot.lane.b32.xlu0 %v768, 32
        %v842 = vpop.permute.xlu0 %841
        %843 = vrot.lane.b32.xlu0 %v769, 32
        %v844 = vpop.permute.xlu0 %843
        %845 = vrot.lane.b32.xlu0 %v770, 32
        %v846 = vpop.permute.xlu0 %845
        %847 = vrot.lane.b32.xlu0 %v771, 32
        %v848 = vpop.permute.xlu0 %847
        %849 = vrot.lane.b32.xlu0 %v772, 32
        %v850 = vpop.permute.xlu0 %849
        %851 = vrot.lane.b32.xlu0 %v773, 32
        %v852 = vpop.permute.xlu0 %851
        %853 = vrot.lane.b32.xlu0 %v774, 32
        %v854 = vpop.permute.xlu0 %853
        %855 = vrot.lane.b32.xlu0 %v775, 32
        %v856 = vpop.permute.xlu0 %855
        %857 = vrot.lane.b32.xlu0 %v776, 32
        %v858 = vpop.permute.xlu0 %857
        %859 = vrot.lane.b32.xlu0 %v777, 32
        %v860 = vpop.permute.xlu0 %859
        %861 = vrot.lane.b32.xlu0 %v778, 32
        %v862 = vpop.permute.xlu0 %861
        %863 = vrot.lane.b32.xlu0 %v779, 32
        %v864 = vpop.permute.xlu0 %863
        %865 = vrot.lane.b32.xlu0 %v780, 32
        %v866 = vpop.permute.xlu0 %865
        %867 = vrot.lane.b32.xlu0 %v781, 32
        %v868 = vpop.permute.xlu0 %867
        %869 = vrot.lane.b32.xlu0 %v782, 32
        %v870 = vpop.permute.xlu0 %869
        %871 = vrot.lane.b32.xlu0 %v783, 32
        %v872 = vpop.permute.xlu0 %871
        %873 = vrot.lane.b32.xlu0 %v784, 32
        %v874 = vpop.permute.xlu0 %873
        %875 = vrot.lane.b32.xlu0 %v785, 32
        %v876 = vpop.permute.xlu0 %875
        %877 = vrot.lane.b32.xlu0 %v786, 32
        %v878 = vpop.permute.xlu0 %877
        %879 = vrot.lane.b32.xlu0 %v787, 32
        %v880 = vpop.permute.xlu0 %879
        %881 = vrot.lane.b32.xlu0 %v788, 32
        %v882 = vpop.permute.xlu0 %881
        %883 = vrot.lane.b32.xlu0 %v789, 32
        %v884 = vpop.permute.xlu0 %883
        %885 = vrot.lane.b32.xlu0 %v790, 32
        %v886 = vpop.permute.xlu0 %885
        %887 = vrot.lane.b32.xlu0 %v791, 32
        %v888 = vpop.permute.xlu0 %887
        %889 = vrot.lane.b32.xlu0 %v792, 32
        %v890 = vpop.permute.xlu0 %889
        %925 = vrot.lane.b32.xlu0 %v763, 64
        %v926 = vpop.permute.xlu0 %925
        %927 = vrot.lane.b32.xlu0 %v764, 64
        %v928 = vpop.permute.xlu0 %927
        %929 = vrot.lane.b32.xlu0 %v765, 64
        %v930 = vpop.permute.xlu0 %929
        %931 = vrot.lane.b32.xlu0 %v766, 64
        %v932 = vpop.permute.xlu0 %931
        %933 = vrot.lane.b32.xlu0 %v767, 64
        %v934 = vpop.permute.xlu0 %933
        %935 = vrot.lane.b32.xlu0 %v768, 64
        %v936 = vpop.permute.xlu0 %935
        %937 = vrot.lane.b32.xlu0 %v769, 64
        %v938 = vpop.permute.xlu0 %937
        %939 = vrot.lane.b32.xlu0 %v770, 64
        %v940 = vpop.permute.xlu0 %939
        %941 = vrot.lane.b32.xlu0 %v771, 64
        %v942 = vpop.permute.xlu0 %941
        %943 = vrot.lane.b32.xlu0 %v772, 64
        %v944 = vpop.permute.xlu0 %943
        %945 = vrot.lane.b32.xlu0 %v773, 64
        %v946 = vpop.permute.xlu0 %945
        %947 = vrot.lane.b32.xlu0 %v774, 64
        %v948 = vpop.permute.xlu0 %947
        %949 = vrot.lane.b32.xlu0 %v775, 64
        %v950 = vpop.permute.xlu0 %949
        %951 = vrot.lane.b32.xlu0 %v776, 64
        %v952 = vpop.permute.xlu0 %951
        %953 = vrot.lane.b32.xlu0 %v777, 64
        %v954 = vpop.permute.xlu0 %953
        %955 = vrot.lane.b32.xlu0 %v778, 64
        %v956 = vpop.permute.xlu0 %955
        %957 = vrot.lane.b32.xlu0 %v779, 64
        %v958 = vpop.permute.xlu0 %957
        %959 = vrot.lane.b32.xlu0 %v780, 64
        %v960 = vpop.permute.xlu0 %959
        %961 = vrot.lane.b32.xlu0 %v781, 64
        %v962 = vpop.permute.xlu0 %961
        %963 = vrot.lane.b32.xlu0 %v782, 64
        %v964 = vpop.permute.xlu0 %963
        %965 = vrot.lane.b32.xlu0 %v783, 64
        %v966 = vpop.permute.xlu0 %965
        %967 = vrot.lane.b32.xlu0 %v784, 64
        %v968 = vpop.permute.xlu0 %967
        %969 = vrot.lane.b32.xlu0 %v785, 64
        %v970 = vpop.permute.xlu0 %969
        %971 = vrot.lane.b32.xlu0 %v786, 64
        %v972 = vpop.permute.xlu0 %971
        %973 = vrot.lane.b32.xlu0 %v787, 64
        %v974 = vpop.permute.xlu0 %973
        %975 = vrot.lane.b32.xlu0 %v788, 64
        %v976 = vpop.permute.xlu0 %975
        %977 = vrot.lane.b32.xlu0 %v789, 64
        %v978 = vpop.permute.xlu0 %977
        %979 = vrot.lane.b32.xlu0 %v790, 64
        %v980 = vpop.permute.xlu0 %979
        %981 = vrot.lane.b32.xlu0 %v791, 64
        %v982 = vpop.permute.xlu0 %981
        %983 = vrot.lane.b32.xlu0 %v792, 64
        %v984 = vpop.permute.xlu0 %983
        %985 = vrot.lane.b32.xlu0 %v793, 64
        %v986 = vpop.permute.xlu0 %985
        %987 = vrot.lane.b32.xlu0 %v794, 64
        %v988 = vpop.permute.xlu0 %987
        %v1021 = vsel %vm450, %v759, %v828
        %v1022 = vsel %vm450, %v760, %v830
        %v1023 = vsel %vm450, %v761, %v832
        %v1024 = vsel %vm450, %v762, %v834
        %v1025 = vsel %vm450, %v763, %v836
        %v1026 = vsel %vm450, %v764, %v838
        %v1027 = vsel %vm450, %v765, %v840
        %v1028 = vsel %vm450, %v766, %v842
        %v1029 = vsel %vm450, %v767, %v844
        %v1030 = vsel %vm450, %v768, %v846
        %v1031 = vsel %vm450, %v769, %v848
        %v1032 = vsel %vm450, %v770, %v850
        %v1033 = vsel %vm450, %v771, %v852
        %v1034 = vsel %vm450, %v772, %v854
        %v1035 = vsel %vm450, %v773, %v856
        %v1036 = vsel %vm450, %v774, %v858
        %v1037 = vsel %vm450, %v775, %v860
        %v1038 = vsel %vm450, %v776, %v862
        %v1039 = vsel %vm450, %v777, %v864
        %v1040 = vsel %vm450, %v778, %v866
        %v1041 = vsel %vm450, %v779, %v868
        %v1042 = vsel %vm450, %v780, %v870
        %v1043 = vsel %vm450, %v781, %v872
        %v1044 = vsel %vm450, %v782, %v874
        %v1045 = vsel %vm450, %v783, %v876
        %v1046 = vsel %vm450, %v784, %v878
        %v1047 = vsel %vm450, %v785, %v880
        %v1048 = vsel %vm450, %v786, %v882
        %v1049 = vsel %vm450, %v787, %v884
        %v1050 = vsel %vm450, %v788, %v886
        %v1051 = vsel %vm450, %v789, %v888
        %v1052 = vsel %vm450, %v790, %v890
        %vm1053 = vcmask 523264
        %v1054 = vsel %vm1053, %v1021, %v926
        %v1055 = vsel %vm1053, %v1022, %v928
        %v1056 = vsel %vm1053, %v1023, %v930
        %v1057 = vsel %vm1053, %v1024, %v932
        %v1058 = vsel %vm1053, %v1025, %v934
        %v1059 = vsel %vm1053, %v1026, %v936
        %v1060 = vsel %vm1053, %v1027, %v938
        %v1061 = vsel %vm1053, %v1028, %v940
        %v1062 = vsel %vm1053, %v1029, %v942
        %v1063 = vsel %vm1053, %v1030, %v944
        %v1064 = vsel %vm1053, %v1031, %v946
        %v1065 = vsel %vm1053, %v1032, %v948
        %v1066 = vsel %vm1053, %v1033, %v950
        %v1067 = vsel %vm1053, %v1034, %v952
        %v1068 = vsel %vm1053, %v1035, %v954
        %v1069 = vsel %vm1053, %v1036, %v956
        %v1070 = vsel %vm1053, %v1037, %v958
        %v1071 = vsel %vm1053, %v1038, %v960
        %v1072 = vsel %vm1053, %v1039, %v962
        %v1073 = vsel %vm1053, %v1040, %v964
        %v1074 = vsel %vm1053, %v1041, %v966
        %v1075 = vsel %vm1053, %v1042, %v968
        %v1076 = vsel %vm1053, %v1043, %v970
        %v1077 = vsel %vm1053, %v1044, %v972
        %v1078 = vsel %vm1053, %v1045, %v974
        %v1079 = vsel %vm1053, %v1046, %v976
        %v1080 = vsel %vm1053, %v1047, %v978
        %v1081 = vsel %vm1053, %v1048, %v980
        %v1082 = vsel %vm1053, %v1049, %v982
        %v1083 = vsel %vm1053, %v1050, %v984
        %v1084 = vsel %vm1053, %v1051, %v986
        %v1085 = vsel %vm1053, %v1052, %v988
        %v1086 = vpack.c.bf16 %v1055, %v1054
        %v1087 = vpack.c.bf16 %v1057, %v1056
        %v1088 = vpack.c.bf16 %v1059, %v1058
        %v1089 = vpack.c.bf16 %v1061, %v1060
        %v1090 = vpack.c.bf16 %v1063, %v1062
        %v1091 = vpack.c.bf16 %v1065, %v1064
        %v1092 = vpack.c.bf16 %v1067, %v1066
        %v1093 = vpack.c.bf16 %v1069, %v1068
        %v1094 = vpack.c.bf16 %v1071, %v1070
        %v1095 = vpack.c.bf16 %v1073, %v1072
        %v1096 = vpack.c.bf16 %v1075, %v1074
        %v1097 = vpack.c.bf16 %v1077, %v1076
        %v1098 = vpack.c.bf16 %v1079, %v1078
        %v1099 = vpack.c.bf16 %v1081, %v1080
        %v1100 = vpack.c.bf16 %v1083, %v1082
        %v1101 = vpack.c.bf16 %v1085, %v1084
        %v1102 = vld [vmem:[#allocation9] sm:$0xf]
        %v1103 = vld [vmem:[#allocation9 + $0x4] sm:$0xf]
        %v1104 = vld [vmem:[#allocation9 + $0x8] sm:$0xf]
        %v1105 = vld [vmem:[#allocation9 + $0xc] sm:$0xf]
        %v1106 = vld [vmem:[#allocation9 + $0x10] sm:$0xf]
        %v1107 = vld [vmem:[#allocation9 + $0x14] sm:$0xf]
        %v1108 = vld [vmem:[#allocation9 + $0x18] sm:$0xf]
        %v1109 = vld [vmem:[#allocation9 + $0x1c] sm:$0xf]
        %v1110 = vld [vmem:[#allocation9 + $0x20] sm:$0xf]
        %v1111 = vld [vmem:[#allocation9 + $0x24] sm:$0xf]
        %v1112 = vld [vmem:[#allocation9 + $0x28] sm:$0xf]
        %v1113 = vld [vmem:[#allocation9 + $0x2c] sm:$0xf]
        %v1114 = vld [vmem:[%s758 + $0x8] sm:$0xff]
        %v1115 = vld [vmem:[%s758 + $0x10] sm:$0xff]
        %v1116 = vld [vmem:[%s758 + $0x28] sm:$0xff]
        %v1117 = vld [vmem:[%s758 + $0x30] sm:$0xff]
        %v1118 = vld [vmem:[%s758 + $0x48] sm:$0xff]
        %v1119 = vld [vmem:[%s758 + $0x50] sm:$0xff]
        %v1120 = vld [vmem:[%s758 + $0x68] sm:$0xff]
        %v1121 = vld [vmem:[%s758 + $0x70] sm:$0xff]
        %v1122 = vld [vmem:[%s758 + $0x88] sm:$0xff]
        %v1123 = vld [vmem:[%s758 + $0x90] sm:$0xff]
        %v1124 = vld [vmem:[%s758 + $0xa8] sm:$0xff]
        %v1125 = vld [vmem:[%s758 + $0xb0] sm:$0xff]
        %v1126 = vld [vmem:[%s758 + $0xc8] sm:$0xff]
        %v1127 = vld [vmem:[%s758 + $0xd0] sm:$0xff]
        %v1128 = vld [vmem:[%s758 + $0xe8] sm:$0xff]
        %v1129 = vld [vmem:[%s758 + $0xf0] sm:$0xff]
        %v1130 = vld [vmem:[%s758 + $0x108] sm:$0xff]
        %v1131 = vld [vmem:[%s758 + $0x110] sm:$0xff]
        %v1132 = vld [vmem:[%s758 + $0x128] sm:$0xff]
        %v1133 = vld [vmem:[%s758 + $0x130] sm:$0xff]
        %v1134 = vld [vmem:[%s758 + $0x148] sm:$0xff]
        %v1135 = vld [vmem:[%s758 + $0x150] sm:$0xff]
        %v1136 = vld [vmem:[%s758 + $0x168] sm:$0xff]
        %v1137 = vld [vmem:[%s758 + $0x170] sm:$0xff]
        %v1138 = vld [vmem:[%s758 + $0x188] sm:$0xff]
        %v1139 = vld [vmem:[%s758 + $0x190] sm:$0xff]
        %v1140 = vld [vmem:[%s758 + $0x1a8] sm:$0xff]
        %v1141 = vld [vmem:[%s758 + $0x1b0] sm:$0xff]
        %v1142 = vld [vmem:[%s758 + $0x1c8] sm:$0xff]
        %v1143 = vld [vmem:[%s758 + $0x1d0] sm:$0xff]
        %v1144 = vld [vmem:[%s758 + $0x1e8] sm:$0xff]
        %v1145 = vld [vmem:[%s758 + $0x1f0] sm:$0xff]
        %v1146 = vld [vmem:[%s758 + $0x208] sm:$0xff]
        %v1147 = vld [vmem:[%s758 + $0x210] sm:$0xff]
        %v1148 = vld [vmem:[%s758 + $0x228] sm:$0xff]
        %v1149 = vld [vmem:[%s758 + $0x230] sm:$0xff]
        %1182 = vrot.lane.b32.xlu0 %v1116, 32
        %v1183 = vpop.permute.xlu0 %1182
        %1184 = vrot.lane.b32.xlu0 %v1117, 32
        %v1185 = vpop.permute.xlu0 %1184
        %1186 = vrot.lane.b32.xlu0 %v1118, 32
        %v1187 = vpop.permute.xlu0 %1186
        %1188 = vrot.lane.b32.xlu0 %v1119, 32
        %v1189 = vpop.permute.xlu0 %1188
        %1190 = vrot.lane.b32.xlu0 %v1120, 32
        %v1191 = vpop.permute.xlu0 %1190
        %1192 = vrot.lane.b32.xlu0 %v1121, 32
        %v1193 = vpop.permute.xlu0 %1192
        %1194 = vrot.lane.b32.xlu0 %v1122, 32
        %v1195 = vpop.permute.xlu0 %1194
        %1196 = vrot.lane.b32.xlu0 %v1123, 32
        %v1197 = vpop.permute.xlu0 %1196
        %1198 = vrot.lane.b32.xlu0 %v1124, 32
        %v1199 = vpop.permute.xlu0 %1198
        %1200 = vrot.lane.b32.xlu0 %v1125, 32
        %v1201 = vpop.permute.xlu0 %1200
        %1202 = vrot.lane.b32.xlu0 %v1126, 32
        %v1203 = vpop.permute.xlu0 %1202
        %1204 = vrot.lane.b32.xlu0 %v1127, 32
        %v1205 = vpop.permute.xlu0 %1204
        %1206 = vrot.lane.b32.xlu0 %v1128, 32
        %v1207 = vpop.permute.xlu0 %1206
        %1208 = vrot.lane.b32.xlu0 %v1129, 32
        %v1209 = vpop.permute.xlu0 %1208
        %1210 = vrot.lane.b32.xlu0 %v1130, 32
        %v1211 = vpop.permute.xlu0 %1210
        %1212 = vrot.lane.b32.xlu0 %v1131, 32
        %v1213 = vpop.permute.xlu0 %1212
        %1214 = vrot.lane.b32.xlu0 %v1132, 32
        %v1215 = vpop.permute.xlu0 %1214
        %1216 = vrot.lane.b32.xlu0 %v1133, 32
        %v1217 = vpop.permute.xlu0 %1216
        %1218 = vrot.lane.b32.xlu0 %v1134, 32
        %v1219 = vpop.permute.xlu0 %1218
        %1220 = vrot.lane.b32.xlu0 %v1135, 32
        %v1221 = vpop.permute.xlu0 %1220
        %1222 = vrot.lane.b32.xlu0 %v1136, 32
        %v1223 = vpop.permute.xlu0 %1222
        %1224 = vrot.lane.b32.xlu0 %v1137, 32
        %v1225 = vpop.permute.xlu0 %1224
        %1226 = vrot.lane.b32.xlu0 %v1138, 32
        %v1227 = vpop.permute.xlu0 %1226
        %1228 = vrot.lane.b32.xlu0 %v1139, 32
        %v1229 = vpop.permute.xlu0 %1228
        %1230 = vrot.lane.b32.xlu0 %v1140, 32
        %v1231 = vpop.permute.xlu0 %1230
        %1232 = vrot.lane.b32.xlu0 %v1141, 32
        %v1233 = vpop.permute.xlu0 %1232
        %1234 = vrot.lane.b32.xlu0 %v1142, 32
        %v1235 = vpop.permute.xlu0 %1234
        %1236 = vrot.lane.b32.xlu0 %v1143, 32
        %v1237 = vpop.permute.xlu0 %1236
        %1238 = vrot.lane.b32.xlu0 %v1144, 32
        %v1239 = vpop.permute.xlu0 %1238
        %1240 = vrot.lane.b32.xlu0 %v1145, 32
        %v1241 = vpop.permute.xlu0 %1240
        %1242 = vrot.lane.b32.xlu0 %v1146, 32
        %v1243 = vpop.permute.xlu0 %1242
        %1244 = vrot.lane.b32.xlu0 %v1147, 32
        %v1245 = vpop.permute.xlu0 %1244
        %1280 = vrot.lane.b32.xlu0 %v1118, 64
        %v1281 = vpop.permute.xlu0 %1280
        %1282 = vrot.lane.b32.xlu0 %v1119, 64
        %v1283 = vpop.permute.xlu0 %1282
        %1284 = vrot.lane.b32.xlu0 %v1120, 64
        %v1285 = vpop.permute.xlu0 %1284
        %1286 = vrot.lane.b32.xlu0 %v1121, 64
        %v1287 = vpop.permute.xlu0 %1286
        %1288 = vrot.lane.b32.xlu0 %v1122, 64
        %v1289 = vpop.permute.xlu0 %1288
        %1290 = vrot.lane.b32.xlu0 %v1123, 64
        %v1291 = vpop.permute.xlu0 %1290
        %1292 = vrot.lane.b32.xlu0 %v1124, 64
        %v1293 = vpop.permute.xlu0 %1292
        %1294 = vrot.lane.b32.xlu0 %v1125, 64
        %v1295 = vpop.permute.xlu0 %1294
        %1296 = vrot.lane.b32.xlu0 %v1126, 64
        %v1297 = vpop.permute.xlu0 %1296
        %1298 = vrot.lane.b32.xlu0 %v1127, 64
        %v1299 = vpop.permute.xlu0 %1298
        %1300 = vrot.lane.b32.xlu0 %v1128, 64
        %v1301 = vpop.permute.xlu0 %1300
        %1302 = vrot.lane.b32.xlu0 %v1129, 64
        %v1303 = vpop.permute.xlu0 %1302
        %1304 = vrot.lane.b32.xlu0 %v1130, 64
        %v1305 = vpop.permute.xlu0 %1304
        %1306 = vrot.lane.b32.xlu0 %v1131, 64
        %v1307 = vpop.permute.xlu0 %1306
        %1308 = vrot.lane.b32.xlu0 %v1132, 64
        %v1309 = vpop.permute.xlu0 %1308
        %1310 = vrot.lane.b32.xlu0 %v1133, 64
        %v1311 = vpop.permute.xlu0 %1310
        %1312 = vrot.lane.b32.xlu0 %v1134, 64
        %v1313 = vpop.permute.xlu0 %1312
        %1314 = vrot.lane.b32.xlu0 %v1135, 64
        %v1315 = vpop.permute.xlu0 %1314
        %1316 = vrot.lane.b32.xlu0 %v1136, 64
        %v1317 = vpop.permute.xlu0 %1316
        %1318 = vrot.lane.b32.xlu0 %v1137, 64
        %v1319 = vpop.permute.xlu0 %1318
        %1320 = vrot.lane.b32.xlu0 %v1138, 64
        %v1321 = vpop.permute.xlu0 %1320
        %1322 = vrot.lane.b32.xlu0 %v1139, 64
        %v1323 = vpop.permute.xlu0 %1322
        %1324 = vrot.lane.b32.xlu0 %v1140, 64
        %v1325 = vpop.permute.xlu0 %1324
        %1326 = vrot.lane.b32.xlu0 %v1141, 64
        %v1327 = vpop.permute.xlu0 %1326
        %1328 = vrot.lane.b32.xlu0 %v1142, 64
        %v1329 = vpop.permute.xlu0 %1328
        %1330 = vrot.lane.b32.xlu0 %v1143, 64
        %v1331 = vpop.permute.xlu0 %1330
        %1332 = vrot.lane.b32.xlu0 %v1144, 64
        %v1333 = vpop.permute.xlu0 %1332
        %1334 = vrot.lane.b32.xlu0 %v1145, 64
        %v1335 = vpop.permute.xlu0 %1334
        %1336 = vrot.lane.b32.xlu0 %v1146, 64
        %v1337 = vpop.permute.xlu0 %1336
        %1338 = vrot.lane.b32.xlu0 %v1147, 64
        %v1339 = vpop.permute.xlu0 %1338
        %1340 = vrot.lane.b32.xlu0 %v1148, 64
        %v1341 = vpop.permute.xlu0 %1340
        %1342 = vrot.lane.b32.xlu0 %v1149, 64
        %v1343 = vpop.permute.xlu0 %1342
        %v1376 = vsel %vm450, %v1114, %v1183
        %v1377 = vsel %vm450, %v1115, %v1185
        %v1378 = vsel %vm450, %v1116, %v1187
        %v1379 = vsel %vm450, %v1117, %v1189
        %v1380 = vsel %vm450, %v1118, %v1191
        %v1381 = vsel %vm450, %v1119, %v1193
        %v1382 = vsel %vm450, %v1120, %v1195
        %v1383 = vsel %vm450, %v1121, %v1197
        %v1384 = vsel %vm450, %v1122, %v1199
        %v1385 = vsel %vm450, %v1123, %v1201
        %v1386 = vsel %vm450, %v1124, %v1203
        %v1387 = vsel %vm450, %v1125, %v1205
        %v1388 = vsel %vm450, %v1126, %v1207
        %v1389 = vsel %vm450, %v1127, %v1209
        %v1390 = vsel %vm450, %v1128, %v1211
        %v1391 = vsel %vm450, %v1129, %v1213
        %v1392 = vsel %vm450, %v1130, %v1215
        %v1393 = vsel %vm450, %v1131, %v1217
        %v1394 = vsel %vm450, %v1132, %v1219
        %v1395 = vsel %vm450, %v1133, %v1221
        %v1396 = vsel %vm450, %v1134, %v1223
        %v1397 = vsel %vm450, %v1135, %v1225
        %v1398 = vsel %vm450, %v1136, %v1227
        %v1399 = vsel %vm450, %v1137, %v1229
        %v1400 = vsel %vm450, %v1138, %v1231
        %v1401 = vsel %vm450, %v1139, %v1233
        %v1402 = vsel %vm450, %v1140, %v1235
        %v1403 = vsel %vm450, %v1141, %v1237
        %v1404 = vsel %vm450, %v1142, %v1239
        %v1405 = vsel %vm450, %v1143, %v1241
        %v1406 = vsel %vm450, %v1144, %v1243
        %v1407 = vsel %vm450, %v1145, %v1245
        %v1408 = vsel %vm1053, %v1376, %v1281
        %v1409 = vsel %vm1053, %v1377, %v1283
        %v1410 = vsel %vm1053, %v1378, %v1285
        %v1411 = vsel %vm1053, %v1379, %v1287
        %v1412 = vsel %vm1053, %v1380, %v1289
        %v1413 = vsel %vm1053, %v1381, %v1291
        %v1414 = vsel %vm1053, %v1382, %v1293
        %v1415 = vsel %vm1053, %v1383, %v1295
        %v1416 = vsel %vm1053, %v1384, %v1297
        %v1417 = vsel %vm1053, %v1385, %v1299
        %v1418 = vsel %vm1053, %v1386, %v1301
        %v1419 = vsel %vm1053, %v1387, %v1303
        %v1420 = vsel %vm1053, %v1388, %v1305
        %v1421 = vsel %vm1053, %v1389, %v1307
        %v1422 = vsel %vm1053, %v1390, %v1309
        %v1423 = vsel %vm1053, %v1391, %v1311
        %v1424 = vsel %vm1053, %v1392, %v1313
        %v1425 = vsel %vm1053, %v1393, %v1315
        %v1426 = vsel %vm1053, %v1394, %v1317
        %v1427 = vsel %vm1053, %v1395, %v1319
        %v1428 = vsel %vm1053, %v1396, %v1321
        %v1429 = vsel %vm1053, %v1397, %v1323
        %v1430 = vsel %vm1053, %v1398, %v1325
        %v1431 = vsel %vm1053, %v1399, %v1327
        %v1432 = vsel %vm1053, %v1400, %v1329
        %v1433 = vsel %vm1053, %v1401, %v1331
        %v1434 = vsel %vm1053, %v1402, %v1333
        %v1435 = vsel %vm1053, %v1403, %v1335
        %v1436 = vsel %vm1053, %v1404, %v1337
        %v1437 = vsel %vm1053, %v1405, %v1339
        %v1438 = vsel %vm1053, %v1406, %v1341
        %v1439 = vsel %vm1053, %v1407, %v1343
        %v1440 = vpack.c.bf16 %v1409, %v1408
        %v1441 = vpack.c.bf16 %v1411, %v1410
        %v1442 = vpack.c.bf16 %v1413, %v1412
        %v1443 = vpack.c.bf16 %v1415, %v1414
        %v1444 = vpack.c.bf16 %v1417, %v1416
        %v1445 = vpack.c.bf16 %v1419, %v1418
        %v1446 = vpack.c.bf16 %v1421, %v1420
        %v1447 = vpack.c.bf16 %v1423, %v1422
        %v1448 = vpack.c.bf16 %v1425, %v1424
        %v1449 = vpack.c.bf16 %v1427, %v1426
        %v1450 = vpack.c.bf16 %v1429, %v1428
        %v1451 = vpack.c.bf16 %v1431, %v1430
        %v1452 = vpack.c.bf16 %v1433, %v1432
        %v1453 = vpack.c.bf16 %v1435, %v1434
        %v1454 = vpack.c.bf16 %v1437, %v1436
        %v1455 = vpack.c.bf16 %v1439, %v1438
        %s1456 = scalar_lea.vmem [#allocation9], 48
        %v1457 = vld [vmem:[%s1456] sm:$0xf]
        %v1458 = vld [vmem:[%s1456 + $0x4] sm:$0xf]
        %v1459 = vld [vmem:[%s1456 + $0x8] sm:$0xf]
        %v1460 = vld [vmem:[%s1456 + $0xc] sm:$0xf]
        %v1461 = vld [vmem:[%s1456 + $0x10] sm:$0xf]
        %v1462 = vld [vmem:[%s1456 + $0x14] sm:$0xf]
        %v1463 = vld [vmem:[%s1456 + $0x18] sm:$0xf]
        %v1464 = vld [vmem:[%s1456 + $0x1c] sm:$0xf]
        %v1465 = vld [vmem:[%s1456 + $0x20] sm:$0xf]
        %v1466 = vld [vmem:[%s1456 + $0x24] sm:$0xf]
        %v1467 = vld [vmem:[%s1456 + $0x28] sm:$0xf]
        %v1468 = vld [vmem:[%s1456 + $0x2c] sm:$0xf]
        %v1481 = vunpack.c.l.b16 %v1457
        %v1482 = vunpack.c.l.b16 %v1458
        %v1483 = vunpack.c.l.b16 %v1459
        %v1484 = vunpack.c.l.b16 %v1460
        %v1485 = vunpack.c.l.b16 %v1461
        %v1486 = vunpack.c.l.b16 %v1462
        %v1487 = vunpack.c.l.b16 %v1463
        %v1488 = vunpack.c.l.b16 %v1464
        %v1489 = vunpack.c.l.b16 %v1465
        %v1490 = vunpack.c.l.b16 %v1466
        %v1491 = vunpack.c.l.b16 %v1467
        %v1492 = vunpack.c.l.b16 %v1468
        %v1493 = vpack.c.b16 %v1482, %v1481
        %v1494 = vpack.c.b16 %v1484, %v1483
        %v1495 = vpack.c.b16 %v1486, %v1485
        %v1496 = vpack.c.b16 %v1488, %v1487
        %v1497 = vpack.c.b16 %v1490, %v1489
        %v1498 = vpack.c.b16 %v1492, %v1491
        %vm1505 = vcmask 785408
        %v1507 = vsel %vm1505, %v1440, 0
        %v1510 = vsel %vm1505, %v1441, 0
        %v1513 = vsel %vm1505, %v1442, 0
        %v1516 = vsel %vm1505, %v1443, 0
        %v1519 = vsel %vm1505, %v1444, 0
        %v1522 = vsel %vm1505, %v1445, 0
        %v1525 = vsel %vm1505, %v1446, 0
        %v1528 = vsel %vm1505, %v1447, 0
        %v1531 = vsel %vm1505, %v1448, 0
        %v1534 = vsel %vm1505, %v1449, 0
        %v1537 = vsel %vm1505, %v1450, 0
        %v1540 = vsel %vm1505, %v1451, 0
        %v1543 = vsel %vm1505, %v1452, 0
        %v1546 = vsel %vm1505, %v1453, 0
        %v1549 = vsel %vm1505, %v1454, 0
        %v1552 = vsel %vm1505, %v1455, 0
        %1554 = vmatprep.subr.bf16.mxu0 0
        %1555 = vmatpush1.bf16.msra.mxu0 %v1493
        %1556 = vmatprep.subr.bf16.mxu0 0
        %1557 = vmatpush1.bf16.msra.mxu0 %v1494
        %1558 = vmatprep.subr.bf16.mxu0 0
        %1559 = vmatpush1.bf16.msra.mxu0 %v1495
        %1560 = vmatprep.subr.bf16.mxu0 0
        %1561 = vmatpush1.bf16.msra.mxu0 %v1496
        %1562 = vmatprep.subr.bf16.mxu0 0
        %1563 = vmatpush1.bf16.msra.mxu0 %v1497
        %1564 = vmatprep.subr.bf16.mxu0 0
        %1565 = vmatpush1.bf16.msra.mxu0 %v1498
        %1566 = vmatprep.subr.bf16.mxu0 0
        %1567 = vmatpush1.bf16.msra.mxu0 0
        %1568 = vmatprep.subr.bf16.mxu0 0
        %1569 = vmatpush1.bf16.msra.mxu0 0
        %1570 = vmatprep.subr.bf16.mxu0 0
        %1571 = vmatpush1.bf16.msra.mxu0 0
        %1572 = vmatprep.subr.bf16.mxu0 0
        %1573 = vmatpush1.bf16.msra.mxu0 0
        %1574 = vmatprep.subr.bf16.mxu0 0
        %1575 = vmatpush1.bf16.msra.mxu0 0
        %1576 = vmatprep.subr.bf16.mxu0 0
        %1577 = vmatpush1.bf16.msra.mxu0 0
        %1578 = vmatprep.subr.bf16.mxu0 0
        %1579 = vmatpush1.bf16.msra.mxu0 0
        %1580 = vmatprep.subr.bf16.mxu0 0
        %1581 = vmatpush1.bf16.msra.mxu0 0
        %1582 = vmatprep.subr.bf16.mxu0 0
        %1583 = vmatpush1.bf16.msra.mxu0 0
        %1584 = vmatprep.subr.bf16.mxu0 0
        %1585 = vmatpush1.bf16.msra.mxu0 0
        %1586 = vmatprep.mubr.bf16.mxu0 0
        %1587 = vmatmul.mubr.bf16.gmra.mrb[0].mxu0 %v1507
        %v1588 = vpop.f32.mrb[0].mxu0
        %v1589 = vadd.f32 0.0, %v1588
        %v1590 = vpop.f32.mrb[0].mxu0
        %v1591 = vpop.f32.mrb[0].mxu0
        %v1592 = vadd.f32 0.0, %v1591
        %v1593 = vpop.f32.mrb[0].mxu0
        %1594 = vmatprep.mubr.bf16.mxu0 0
        %1595 = vmatmul.mubr.bf16.gmra.mrb[0].mxu0 %v1510
        %v1596 = vpop.f32.mrb[0].mxu0
        %v1597 = vadd.f32 0.0, %v1596
        %v1598 = vpop.f32.mrb[0].mxu0
        %v1599 = vpop.f32.mrb[0].mxu0
        %v1600 = vadd.f32 0.0, %v1599
        %v1601 = vpop.f32.mrb[0].mxu0
        %1602 = vmatprep.mubr.bf16.mxu0 0
        %1603 = vmatmul.mubr.bf16.gmra.mrb[0].mxu0 %v1513
        %v1604 = vpop.f32.mrb[0].mxu0
        %v1605 = vadd.f32 0.0, %v1604
        %v1606 = vpop.f32.mrb[0].mxu0
        %v1607 = vpop.f32.mrb[0].mxu0
        %v1608 = vadd.f32 0.0, %v1607
        %v1609 = vpop.f32.mrb[0].mxu0
        %1610 = vmatprep.mubr.bf16.mxu0 0
        %1611 = vmatmul.mubr.bf16.gmra.mrb[0].mxu0 %v1516
        %v1612 = vpop.f32.mrb[0].mxu0
        %v1613 = vadd.f32 0.0, %v1612
        %v1614 = vpop.f32.mrb[0].mxu0
        %v1615 = vpop.f32.mrb[0].mxu0
        %v1616 = vadd.f32 0.0, %v1615
        %v1617 = vpop.f32.mrb[0].mxu0
        %1618 = vmatprep.mubr.bf16.mxu0 0
        %1619 = vmatmul.mubr.bf16.gmra.mrb[0].mxu0 %v1519
        %v1620 = vpop.f32.mrb[0].mxu0
        %v1621 = vadd.f32 0.0, %v1620
        %v1622 = vpop.f32.mrb[0].mxu0
        %v1623 = vpop.f32.mrb[0].mxu0
        %v1624 = vadd.f32 0.0, %v1623
        %v1625 = vpop.f32.mrb[0].mxu0
        %1626 = vmatprep.mubr.bf16.mxu0 0
        %1627 = vmatmul.mubr.bf16.gmra.mrb[0].mxu0 %v1522
        %v1628 = vpop.f32.mrb[0].mxu0
        %v1629 = vadd.f32 0.0, %v1628
        %v1630 = vpop.f32.mrb[0].mxu0
        %v1631 = vpop.f32.mrb[0].mxu0
        %v1632 = vadd.f32 0.0, %v1631
        %v1633 = vpop.f32.mrb[0].mxu0
        %1634 = vmatprep.mubr.bf16.mxu0 0
        %1635 = vmatmul.mubr.bf16.gmra.mrb[0].mxu0 %v1525
        %v1636 = vpop.f32.mrb[0].mxu0
        %v1637 = vadd.f32 0.0, %v1636
        %v1638 = vpop.f32.mrb[0].mxu0
        %v1639 = vpop.f32.mrb[0].mxu0
        %v1640 = vadd.f32 0.0, %v1639
        %v1641 = vpop.f32.mrb[0].mxu0
        %1642 = vmatprep.mubr.bf16.mxu0 0
        %1643 = vmatmul.mubr.bf16.gmra.mrb[0].mxu0 %v1528
        %v1644 = vpop.f32.mrb[0].mxu0
        %v1645 = vadd.f32 0.0, %v1644
        %v1646 = vpop.f32.mrb[0].mxu0
        %v1647 = vpop.f32.mrb[0].mxu0
        %v1648 = vadd.f32 0.0, %v1647
        %v1649 = vpop.f32.mrb[0].mxu0
        %1650 = vmatprep.mubr.bf16.mxu0 0
        %1651 = vmatmul.mubr.bf16.gmra.mrb[0].mxu0 %v1531
        %v1652 = vpop.f32.mrb[0].mxu0
        %v1653 = vadd.f32 0.0, %v1652
        %v1654 = vpop.f32.mrb[0].mxu0
        %v1655 = vpop.f32.mrb[0].mxu0
        %v1656 = vadd.f32 0.0, %v1655
        %v1657 = vpop.f32.mrb[0].mxu0
        %1658 = vmatprep.mubr.bf16.mxu0 0
        %1659 = vmatmul.mubr.bf16.gmra.mrb[0].mxu0 %v1534
        %v1660 = vpop.f32.mrb[0].mxu0
        %v1661 = vadd.f32 0.0, %v1660
        %v1662 = vpop.f32.mrb[0].mxu0
        %v1663 = vpop.f32.mrb[0].mxu0
        %v1664 = vadd.f32 0.0, %v1663
        %v1665 = vpop.f32.mrb[0].mxu0
        %1666 = vmatprep.mubr.bf16.mxu0 0
        %1667 = vmatmul.mubr.bf16.gmra.mrb[0].mxu0 %v1537
        %v1668 = vpop.f32.mrb[0].mxu0
        %v1669 = vadd.f32 0.0, %v1668
        %v1670 = vpop.f32.mrb[0].mxu0
        %v1671 = vpop.f32.mrb[0].mxu0
        %v1672 = vadd.f32 0.0, %v1671
        %v1673 = vpop.f32.mrb[0].mxu0
        %1674 = vmatprep.mubr.bf16.mxu0 0
        %1675 = vmatmul.mubr.bf16.gmra.mrb[0].mxu0 %v1540
        %v1676 = vpop.f32.mrb[0].mxu0
        %v1677 = vadd.f32 0.0, %v1676
        %v1678 = vpop.f32.mrb[0].mxu0
        %v1679 = vpop.f32.mrb[0].mxu0
        %v1680 = vadd.f32 0.0, %v1679
        %v1681 = vpop.f32.mrb[0].mxu0
        %1682 = vmatprep.mubr.bf16.mxu0 0
        %1683 = vmatmul.mubr.bf16.gmra.mrb[0].mxu0 %v1543
        %v1684 = vpop.f32.mrb[0].mxu0
        %v1685 = vadd.f32 0.0, %v1684
        %v1686 = vpop.f32.mrb[0].mxu0
        %v1687 = vpop.f32.mrb[0].mxu0
        %v1688 = vadd.f32 0.0, %v1687
        %v1689 = vpop.f32.mrb[0].mxu0
        %1690 = vmatprep.mubr.bf16.mxu0 0
        %1691 = vmatmul.mubr.bf16.gmra.mrb[0].mxu0 %v1546
        %v1692 = vpop.f32.mrb[0].mxu0
        %v1693 = vadd.f32 0.0, %v1692
        %v1694 = vpop.f32.mrb[0].mxu0
        %v1695 = vpop.f32.mrb[0].mxu0
        %v1696 = vadd.f32 0.0, %v1695
        %v1697 = vpop.f32.mrb[0].mxu0
        %1698 = vmatprep.mubr.bf16.mxu0 0
        %1699 = vmatmul.mubr.bf16.gmra.mrb[0].mxu0 %v1549
        %v1700 = vpop.f32.mrb[0].mxu0
        %v1701 = vadd.f32 0.0, %v1700
        %v1702 = vpop.f32.mrb[0].mxu0
        %v1703 = vpop.f32.mrb[0].mxu0
        %v1704 = vadd.f32 0.0, %v1703
        %v1705 = vpop.f32.mrb[0].mxu0
        %1706 = vmatprep.mubr.bf16.mxu0 0
        %1707 = vmatmul.mubr.bf16.gmra.mrb[0].mxu0 %v1552
        %v1708 = vpop.f32.mrb[0].mxu0
        %v1709 = vadd.f32 0.0, %v1708
        %v1710 = vpop.f32.mrb[0].mxu0
        %v1711 = vpop.f32.mrb[0].mxu0
        %v1712 = vadd.f32 0.0, %v1711
        %v1713 = vpop.f32.mrb[0].mxu0
        %1714 = vdwg.mxu0
        %v1727 = vunpack.c.l.b16 %v1102
        %v1728 = vunpack.c.l.b16 %v1103
        %v1729 = vunpack.c.l.b16 %v1104
        %v1730 = vunpack.c.l.b16 %v1105
        %v1731 = vunpack.c.l.b16 %v1106
        %v1732 = vunpack.c.l.b16 %v1107
        %v1733 = vunpack.c.l.b16 %v1108
        %v1734 = vunpack.c.l.b16 %v1109
        %v1735 = vunpack.c.l.b16 %v1110
        %v1736 = vunpack.c.l.b16 %v1111
        %v1737 = vunpack.c.l.b16 %v1112
        %v1738 = vunpack.c.l.b16 %v1113
        %v1739 = vpack.c.b16 %v1728, %v1727
        %v1740 = vpack.c.b16 %v1730, %v1729
        %v1741 = vpack.c.b16 %v1732, %v1731
        %v1742 = vpack.c.b16 %v1734, %v1733
        %v1743 = vpack.c.b16 %v1736, %v1735
        %v1744 = vpack.c.b16 %v1738, %v1737
        %v1752 = vsel %vm1505, %v1086, 0
        %v1755 = vsel %vm1505, %v1087, 0
        %v1758 = vsel %vm1505, %v1088, 0
        %v1761 = vsel %vm1505, %v1089, 0
        %v1764 = vsel %vm1505, %v1090, 0
        %v1767 = vsel %vm1505, %v1091, 0
        %v1770 = vsel %vm1505, %v1092, 0
        %v1773 = vsel %vm1505, %v1093, 0
        %v1776 = vsel %vm1505, %v1094, 0
        %v1779 = vsel %vm1505, %v1095, 0
        %v1782 = vsel %vm1505, %v1096, 0
        %v1785 = vsel %vm1505, %v1097, 0
        %v1788 = vsel %vm1505, %v1098, 0
        %v1791 = vsel %vm1505, %v1099, 0
        %v1794 = vsel %vm1505, %v1100, 0
        %v1797 = vsel %vm1505, %v1101, 0
        %1799 = vmatprep.subr.bf16.mxu0 0
        %1800 = vmatpush1.bf16.msra.mxu0 %v1739
        %1801 = vmatprep.subr.bf16.mxu0 0
        %1802 = vmatpush1.bf16.msra.mxu0 %v1740
        %1803 = vmatprep.subr.bf16.mxu0 0
        %1804 = vmatpush1.bf16.msra.mxu0 %v1741
        %1805 = vmatprep.subr.bf16.mxu0 0
        %1806 = vmatpush1.bf16.msra.mxu0 %v1742
        %1807 = vmatprep.subr.bf16.mxu0 0
        %1808 = vmatpush1.bf16.msra.mxu0 %v1743
        %1809 = vmatprep.subr.bf16.mxu0 0
        %1810 = vmatpush1.bf16.msra.mxu0 %v1744
        %1811 = vmatprep.subr.bf16.mxu0 0
        %1812 = vmatpush1.bf16.msra.mxu0 0
        %1813 = vmatprep.subr.bf16.mxu0 0
        %1814 = vmatpush1.bf16.msra.mxu0 0
        %1815 = vmatprep.subr.bf16.mxu0 0
        %1816 = vmatpush1.bf16.msra.mxu0 0
        %1817 = vmatprep.subr.bf16.mxu0 0
        %1818 = vmatpush1.bf16.msra.mxu0 0
        %1819 = vmatprep.subr.bf16.mxu0 0
        %1820 = vmatpush1.bf16.msra.mxu0 0
        %1821 = vmatprep.subr.bf16.mxu0 0
        %1822 = vmatpush1.bf16.msra.mxu0 0
        %1823 = vmatprep.subr.bf16.mxu0 0
        %1824 = vmatpush1.bf16.msra.mxu0 0
        %1825 = vmatprep.subr.bf16.mxu0 0
        %1826 = vmatpush1.bf16.msra.mxu0 0
        %1827 = vmatprep.subr.bf16.mxu0 0
        %1828 = vmatpush1.bf16.msra.mxu0 0
        %1829 = vmatprep.subr.bf16.mxu0 0
        %1830 = vmatpush1.bf16.msra.mxu0 0
        %1831 = vmatprep.mubr.bf16.mxu0 0
        %1832 = vmatmul.mubr.bf16.gmra.mrb[0].mxu0 %v1752
        %v1833 = vpop.f32.mrb[0].mxu0
        %v1834 = vadd.f32 %v1589, %v1833
        %v1835 = vpop.f32.mrb[0].mxu0
        %v1836 = vpop.f32.mrb[0].mxu0
        %v1837 = vadd.f32 %v1592, %v1836
        %v1838 = vpop.f32.mrb[0].mxu0
        %1839 = vmatprep.mubr.bf16.mxu0 0
        %1840 = vmatmul.mubr.bf16.gmra.mrb[0].mxu0 %v1755
        %v1841 = vpop.f32.mrb[0].mxu0
        %v1842 = vadd.f32 %v1597, %v1841
        %v1843 = vpop.f32.mrb[0].mxu0
        %v1844 = vpop.f32.mrb[0].mxu0
        %v1845 = vadd.f32 %v1600, %v1844
        %v1846 = vpop.f32.mrb[0].mxu0
        %1847 = vmatprep.mubr.bf16.mxu0 0
        %1848 = vmatmul.mubr.bf16.gmra.mrb[0].mxu0 %v1758
        %v1849 = vpop.f32.mrb[0].mxu0
        %v1850 = vadd.f32 %v1605, %v1849
        %v1851 = vpop.f32.mrb[0].mxu0
        %v1852 = vpop.f32.mrb[0].mxu0
        %v1853 = vadd.f32 %v1608, %v1852
        %v1854 = vpop.f32.mrb[0].mxu0
        %1855 = vmatprep.mubr.bf16.mxu0 0
        %1856 = vmatmul.mubr.bf16.gmra.mrb[0].mxu0 %v1761
        %v1857 = vpop.f32.mrb[0].mxu0
        %v1858 = vadd.f32 %v1613, %v1857
        %v1859 = vpop.f32.mrb[0].mxu0
        %v1860 = vpop.f32.mrb[0].mxu0
        %v1861 = vadd.f32 %v1616, %v1860
        %v1862 = vpop.f32.mrb[0].mxu0
        %1863 = vmatprep.mubr.bf16.mxu0 0
        %1864 = vmatmul.mubr.bf16.gmra.mrb[0].mxu0 %v1764
        %v1865 = vpop.f32.mrb[0].mxu0
        %v1866 = vadd.f32 %v1621, %v1865
        %v1867 = vpop.f32.mrb[0].mxu0
        %v1868 = vpop.f32.mrb[0].mxu0
        %v1869 = vadd.f32 %v1624, %v1868
        %v1870 = vpop.f32.mrb[0].mxu0
        %1871 = vmatprep.mubr.bf16.mxu0 0
        %1872 = vmatmul.mubr.bf16.gmra.mrb[0].mxu0 %v1767
        %v1873 = vpop.f32.mrb[0].mxu0
        %v1874 = vadd.f32 %v1629, %v1873
        %v1875 = vpop.f32.mrb[0].mxu0
        %v1876 = vpop.f32.mrb[0].mxu0
        %v1877 = vadd.f32 %v1632, %v1876
        %v1878 = vpop.f32.mrb[0].mxu0
        %1879 = vmatprep.mubr.bf16.mxu0 0
        %1880 = vmatmul.mubr.bf16.gmra.mrb[0].mxu0 %v1770
        %v1881 = vpop.f32.mrb[0].mxu0
        %v1882 = vadd.f32 %v1637, %v1881
        %v1883 = vpop.f32.mrb[0].mxu0
        %v1884 = vpop.f32.mrb[0].mxu0
        %v1885 = vadd.f32 %v1640, %v1884
        %v1886 = vpop.f32.mrb[0].mxu0
        %1887 = vmatprep.mubr.bf16.mxu0 0
        %1888 = vmatmul.mubr.bf16.gmra.mrb[0].mxu0 %v1773
        %v1889 = vpop.f32.mrb[0].mxu0
        %v1890 = vadd.f32 %v1645, %v1889
        %v1891 = vpop.f32.mrb[0].mxu0
        %v1892 = vpop.f32.mrb[0].mxu0
        %v1893 = vadd.f32 %v1648, %v1892
        %v1894 = vpop.f32.mrb[0].mxu0
        %1895 = vmatprep.mubr.bf16.mxu0 0
        %1896 = vmatmul.mubr.bf16.gmra.mrb[0].mxu0 %v1776
        %v1897 = vpop.f32.mrb[0].mxu0
        %v1898 = vadd.f32 %v1653, %v1897
        %v1899 = vpop.f32.mrb[0].mxu0
        %v1900 = vpop.f32.mrb[0].mxu0
        %v1901 = vadd.f32 %v1656, %v1900
        %v1902 = vpop.f32.mrb[0].mxu0
        %1903 = vmatprep.mubr.bf16.mxu0 0
        %1904 = vmatmul.mubr.bf16.gmra.mrb[0].mxu0 %v1779
        %v1905 = vpop.f32.mrb[0].mxu0
        %v1906 = vadd.f32 %v1661, %v1905
        %v1907 = vpop.f32.mrb[0].mxu0
        %v1908 = vpop.f32.mrb[0].mxu0
        %v1909 = vadd.f32 %v1664, %v1908
        %v1910 = vpop.f32.mrb[0].mxu0
        %1911 = vmatprep.mubr.bf16.mxu0 0
        %1912 = vmatmul.mubr.bf16.gmra.mrb[0].mxu0 %v1782
        %v1913 = vpop.f32.mrb[0].mxu0
        %v1914 = vadd.f32 %v1669, %v1913
        %v1915 = vpop.f32.mrb[0].mxu0
        %v1916 = vpop.f32.mrb[0].mxu0
        %v1917 = vadd.f32 %v1672, %v1916
        %v1918 = vpop.f32.mrb[0].mxu0
        %1919 = vmatprep.mubr.bf16.mxu0 0
        %1920 = vmatmul.mubr.bf16.gmra.mrb[0].mxu0 %v1785
        %v1921 = vpop.f32.mrb[0].mxu0
        %v1922 = vadd.f32 %v1677, %v1921
        %v1923 = vpop.f32.mrb[0].mxu0
        %v1924 = vpop.f32.mrb[0].mxu0
        %v1925 = vadd.f32 %v1680, %v1924
        %v1926 = vpop.f32.mrb[0].mxu0
        %1927 = vmatprep.mubr.bf16.mxu0 0
        %1928 = vmatmul.mubr.bf16.gmra.mrb[0].mxu0 %v1788
        %v1929 = vpop.f32.mrb[0].mxu0
        %v1930 = vadd.f32 %v1685, %v1929
        %v1931 = vpop.f32.mrb[0].mxu0
        %v1932 = vpop.f32.mrb[0].mxu0
        %v1933 = vadd.f32 %v1688, %v1932
        %v1934 = vpop.f32.mrb[0].mxu0
        %1935 = vmatprep.mubr.bf16.mxu0 0
        %1936 = vmatmul.mubr.bf16.gmra.mrb[0].mxu0 %v1791
        %v1937 = vpop.f32.mrb[0].mxu0
        %v1938 = vadd.f32 %v1693, %v1937
        %v1939 = vpop.f32.mrb[0].mxu0
        %v1940 = vpop.f32.mrb[0].mxu0
        %v1941 = vadd.f32 %v1696, %v1940
        %v1942 = vpop.f32.mrb[0].mxu0
        %1943 = vmatprep.mubr.bf16.mxu0 0
        %1944 = vmatmul.mubr.bf16.gmra.mrb[0].mxu0 %v1794
        %v1945 = vpop.f32.mrb[0].mxu0
        %v1946 = vadd.f32 %v1701, %v1945
        %v1947 = vpop.f32.mrb[0].mxu0
        %v1948 = vpop.f32.mrb[0].mxu0
        %v1949 = vadd.f32 %v1704, %v1948
        %v1950 = vpop.f32.mrb[0].mxu0
        %1951 = vmatprep.mubr.bf16.mxu0 0
        %1952 = vmatmul.mubr.bf16.gmra.mrb[0].mxu0 %v1797
        %v1953 = vpop.f32.mrb[0].mxu0
        %v1954 = vadd.f32 %v1709, %v1953
        %v1955 = vpop.f32.mrb[0].mxu0
        %v1956 = vpop.f32.mrb[0].mxu0
        %v1957 = vadd.f32 %v1712, %v1956
        %v1958 = vpop.f32.mrb[0].mxu0
        %1959 = vdwg.mxu0
        %v1960 = vld [vmem:[%s758 + $0x9] sm:$0xff]
        %v1961 = vld [vmem:[%s758 + $0x11] sm:$0xff]
        %v1962 = vld [vmem:[%s758 + $0x29] sm:$0xff]
        %v1963 = vld [vmem:[%s758 + $0x31] sm:$0xff]
        %v1964 = vld [vmem:[%s758 + $0x49] sm:$0xff]
        %v1965 = vld [vmem:[%s758 + $0x51] sm:$0xff]
        %v1966 = vld [vmem:[%s758 + $0x69] sm:$0xff]
        %v1967 = vld [vmem:[%s758 + $0x71] sm:$0xff]
        %v1968 = vld [vmem:[%s758 + $0x89] sm:$0xff]
        %v1969 = vld [vmem:[%s758 + $0x91] sm:$0xff]
        %v1970 = vld [vmem:[%s758 + $0xa9] sm:$0xff]
        %v1971 = vld [vmem:[%s758 + $0xb1] sm:$0xff]
        %v1972 = vld [vmem:[%s758 + $0xc9] sm:$0xff]
        %v1973 = vld [vmem:[%s758 + $0xd1] sm:$0xff]
        %v1974 = vld [vmem:[%s758 + $0xe9] sm:$0xff]
        %v1975 = vld [vmem:[%s758 + $0xf1] sm:$0xff]
        %v1976 = vld [vmem:[%s758 + $0x109] sm:$0xff]
        %v1977 = vld [vmem:[%s758 + $0x111] sm:$0xff]
        %v1978 = vld [vmem:[%s758 + $0x129] sm:$0xff]
        %v1979 = vld [vmem:[%s758 + $0x131] sm:$0xff]
        %v1980 = vld [vmem:[%s758 + $0x149] sm:$0xff]
        %v1981 = vld [vmem:[%s758 + $0x151] sm:$0xff]
        %v1982 = vld [vmem:[%s758 + $0x169] sm:$0xff]
        %v1983 = vld [vmem:[%s758 + $0x171] sm:$0xff]
        %v1984 = vld [vmem:[%s758 + $0x189] sm:$0xff]
        %v1985 = vld [vmem:[%s758 + $0x191] sm:$0xff]
        %v1986 = vld [vmem:[%s758 + $0x1a9] sm:$0xff]
        %v1987 = vld [vmem:[%s758 + $0x1b1] sm:$0xff]
        %v1988 = vld [vmem:[%s758 + $0x1c9] sm:$0xff]
        %v1989 = vld [vmem:[%s758 + $0x1d1] sm:$0xff]
        %v1990 = vld [vmem:[%s758 + $0x1e9] sm:$0xff]
        %v1991 = vld [vmem:[%s758 + $0x1f1] sm:$0xff]
        %v1992 = vld [vmem:[%s758 + $0x209] sm:$0xff]
        %v1993 = vld [vmem:[%s758 + $0x211] sm:$0xff]
        %v1994 = vld [vmem:[%s758 + $0x229] sm:$0xff]
        %v1995 = vld [vmem:[%s758 + $0x231] sm:$0xff]
        %2028 = vrot.lane.b32.xlu0 %v1962, 32
        %v2029 = vpop.permute.xlu0 %2028
        %2030 = vrot.lane.b32.xlu0 %v1963, 32
        %v2031 = vpop.permute.xlu0 %2030
        %2032 = vrot.lane.b32.xlu0 %v1964, 32
        %v2033 = vpop.permute.xlu0 %2032
        %2034 = vrot.lane.b32.xlu0 %v1965, 32
        %v2035 = vpop.permute.xlu0 %2034
        %2036 = vrot.lane.b32.xlu0 %v1966, 32
        %v2037 = vpop.permute.xlu0 %2036
        %2038 = vrot.lane.b32.xlu0 %v1967, 32
        %v2039 = vpop.permute.xlu0 %2038
        %2040 = vrot.lane.b32.xlu0 %v1968, 32
        %v2041 = vpop.permute.xlu0 %2040
        %2042 = vrot.lane.b32.xlu0 %v1969, 32
        %v2043 = vpop.permute.xlu0 %2042
        %2044 = vrot.lane.b32.xlu0 %v1970, 32
        %v2045 = vpop.permute.xlu0 %2044
        %2046 = vrot.lane.b32.xlu0 %v1971, 32
        %v2047 = vpop.permute.xlu0 %2046
        %2048 = vrot.lane.b32.xlu0 %v1972, 32
        %v2049 = vpop.permute.xlu0 %2048
        %2050 = vrot.lane.b32.xlu0 %v1973, 32
        %v2051 = vpop.permute.xlu0 %2050
        %2052 = vrot.lane.b32.xlu0 %v1974, 32
        %v2053 = vpop.permute.xlu0 %2052
        %2054 = vrot.lane.b32.xlu0 %v1975, 32
        %v2055 = vpop.permute.xlu0 %2054
        %2056 = vrot.lane.b32.xlu0 %v1976, 32
        %v2057 = vpop.permute.xlu0 %2056
        %2058 = vrot.lane.b32.xlu0 %v1977, 32
        %v2059 = vpop.permute.xlu0 %2058
        %2060 = vrot.lane.b32.xlu0 %v1978, 32
        %v2061 = vpop.permute.xlu0 %2060
        %2062 = vrot.lane.b32.xlu0 %v1979, 32
        %v2063 = vpop.permute.xlu0 %2062
        %2064 = vrot.lane.b32.xlu0 %v1980, 32
        %v2065 = vpop.permute.xlu0 %2064
        %2066 = vrot.lane.b32.xlu0 %v1981, 32
        %v2067 = vpop.permute.xlu0 %2066
        %2068 = vrot.lane.b32.xlu0 %v1982, 32
        %v2069 = vpop.permute.xlu0 %2068
        %2070 = vrot.lane.b32.xlu0 %v1983, 32
        %v2071 = vpop.permute.xlu0 %2070
        %2072 = vrot.lane.b32.xlu0 %v1984, 32
        %v2073 = vpop.permute.xlu0 %2072
        %2074 = vrot.lane.b32.xlu0 %v1985, 32
        %v2075 = vpop.permute.xlu0 %2074
        %2076 = vrot.lane.b32.xlu0 %v1986, 32
        %v2077 = vpop.permute.xlu0 %2076
        %2078 = vrot.lane.b32.xlu0 %v1987, 32
        %v2079 = vpop.permute.xlu0 %2078
        %2080 = vrot.lane.b32.xlu0 %v1988, 32
        %v2081 = vpop.permute.xlu0 %2080
        %2082 = vrot.lane.b32.xlu0 %v1989, 32
        %v2083 = vpop.permute.xlu0 %2082
        %2084 = vrot.lane.b32.xlu0 %v1990, 32
        %v2085 = vpop.permute.xlu0 %2084
        %2086 = vrot.lane.b32.xlu0 %v1991, 32
        %v2087 = vpop.permute.xlu0 %2086
        %2088 = vrot.lane.b32.xlu0 %v1992, 32
        %v2089 = vpop.permute.xlu0 %2088
        %2090 = vrot.lane.b32.xlu0 %v1993, 32
        %v2091 = vpop.permute.xlu0 %2090
        %2126 = vrot.lane.b32.xlu0 %v1964, 64
        %v2127 = vpop.permute.xlu0 %2126
        %2128 = vrot.lane.b32.xlu0 %v1965, 64
        %v2129 = vpop.permute.xlu0 %2128
        %2130 = vrot.lane.b32.xlu0 %v1966, 64
        %v2131 = vpop.permute.xlu0 %2130
        %2132 = vrot.lane.b32.xlu0 %v1967, 64
        %v2133 = vpop.permute.xlu0 %2132
        %2134 = vrot.lane.b32.xlu0 %v1968, 64
        %v2135 = vpop.permute.xlu0 %2134
        %2136 = vrot.lane.b32.xlu0 %v1969, 64
        %v2137 = vpop.permute.xlu0 %2136
        %2138 = vrot.lane.b32.xlu0 %v1970, 64
        %v2139 = vpop.permute.xlu0 %2138
        %2140 = vrot.lane.b32.xlu0 %v1971, 64
        %v2141 = vpop.permute.xlu0 %2140
        %2142 = vrot.lane.b32.xlu0 %v1972, 64
        %v2143 = vpop.permute.xlu0 %2142
        %2144 = vrot.lane.b32.xlu0 %v1973, 64
        %v2145 = vpop.permute.xlu0 %2144
        %2146 = vrot.lane.b32.xlu0 %v1974, 64
        %v2147 = vpop.permute.xlu0 %2146
        %2148 = vrot.lane.b32.xlu0 %v1975, 64
        %v2149 = vpop.permute.xlu0 %2148
        %2150 = vrot.lane.b32.xlu0 %v1976, 64
        %v2151 = vpop.permute.xlu0 %2150
        %2152 = vrot.lane.b32.xlu0 %v1977, 64
        %v2153 = vpop.permute.xlu0 %2152
        %2154 = vrot.lane.b32.xlu0 %v1978, 64
        %v2155 = vpop.permute.xlu0 %2154
        %2156 = vrot.lane.b32.xlu0 %v1979, 64
        %v2157 = vpop.permute.xlu0 %2156
        %2158 = vrot.lane.b32.xlu0 %v1980, 64
        %v2159 = vpop.permute.xlu0 %2158
        %2160 = vrot.lane.b32.xlu0 %v1981, 64
        %v2161 = vpop.permute.xlu0 %2160
        %2162 = vrot.lane.b32.xlu0 %v1982, 64
        %v2163 = vpop.permute.xlu0 %2162
        %2164 = vrot.lane.b32.xlu0 %v1983, 64
        %v2165 = vpop.permute.xlu0 %2164
        %2166 = vrot.lane.b32.xlu0 %v1984, 64
        %v2167 = vpop.permute.xlu0 %2166
        %2168 = vrot.lane.b32.xlu0 %v1985, 64
        %v2169 = vpop.permute.xlu0 %2168
        %2170 = vrot.lane.b32.xlu0 %v1986, 64
        %v2171 = vpop.permute.xlu0 %2170
        %2172 = vrot.lane.b32.xlu0 %v1987, 64
        %v2173 = vpop.permute.xlu0 %2172
        %2174 = vrot.lane.b32.xlu0 %v1988, 64
        %v2175 = vpop.permute.xlu0 %2174
        %2176 = vrot.lane.b32.xlu0 %v1989, 64
        %v2177 = vpop.permute.xlu0 %2176
        %2178 = vrot.lane.b32.xlu0 %v1990, 64
        %v2179 = vpop.permute.xlu0 %2178
        %2180 = vrot.lane.b32.xlu0 %v1991, 64
        %v2181 = vpop.permute.xlu0 %2180
        %2182 = vrot.lane.b32.xlu0 %v1992, 64
        %v2183 = vpop.permute.xlu0 %2182
        %2184 = vrot.lane.b32.xlu0 %v1993, 64
        %v2185 = vpop.permute.xlu0 %2184
        %2186 = vrot.lane.b32.xlu0 %v1994, 64
        %v2187 = vpop.permute.xlu0 %2186
        %2188 = vrot.lane.b32.xlu0 %v1995, 64
        %v2189 = vpop.permute.xlu0 %2188
        %v2222 = vsel %vm450, %v1960, %v2029
        %v2223 = vsel %vm450, %v1961, %v2031
        %v2224 = vsel %vm450, %v1962, %v2033
        %v2225 = vsel %vm450, %v1963, %v2035
        %v2226 = vsel %vm450, %v1964, %v2037
        %v2227 = vsel %vm450, %v1965, %v2039
        %v2228 = vsel %vm450, %v1966, %v2041
        %v2229 = vsel %vm450, %v1967, %v2043
        %v2230 = vsel %vm450, %v1968, %v2045
        %v2231 = vsel %vm450, %v1969, %v2047
        %v2232 = vsel %vm450, %v1970, %v2049
        %v2233 = vsel %vm450, %v1971, %v2051
        %v2234 = vsel %vm450, %v1972, %v2053
        %v2235 = vsel %vm450, %v1973, %v2055
        %v2236 = vsel %vm450, %v1974, %v2057
        %v2237 = vsel %vm450, %v1975, %v2059
        %v2238 = vsel %vm450, %v1976, %v2061
        %v2239 = vsel %vm450, %v1977, %v2063
        %v2240 = vsel %vm450, %v1978, %v2065
        %v2241 = vsel %vm450, %v1979, %v2067
        %v2242 = vsel %vm450, %v1980, %v2069
        %v2243 = vsel %vm450, %v1981, %v2071
        %v2244 = vsel %vm450, %v1982, %v2073
        %v2245 = vsel %vm450, %v1983, %v2075
        %v2246 = vsel %vm450, %v1984, %v2077
        %v2247 = vsel %vm450, %v1985, %v2079
        %v2248 = vsel %vm450, %v1986, %v2081
        %v2249 = vsel %vm450, %v1987, %v2083
        %v2250 = vsel %vm450, %v1988, %v2085
        %v2251 = vsel %vm450, %v1989, %v2087
        %v2252 = vsel %vm450, %v1990, %v2089
        %v2253 = vsel %vm450, %v1991, %v2091
        %v2254 = vsel %vm1053, %v2222, %v2127
        %v2255 = vsel %vm1053, %v2223, %v2129
        %v2256 = vsel %vm1053, %v2224, %v2131
        %v2257 = vsel %vm1053, %v2225, %v2133
        %v2258 = vsel %vm1053, %v2226, %v2135
        %v2259 = vsel %vm1053, %v2227, %v2137
        %v2260 = vsel %vm1053, %v2228, %v2139
        %v2261 = vsel %vm1053, %v2229, %v2141
        %v2262 = vsel %vm1053, %v2230, %v2143
        %v2263 = vsel %vm1053, %v2231, %v2145
        %v2264 = vsel %vm1053, %v2232, %v2147
        %v2265 = vsel %vm1053, %v2233, %v2149
        %v2266 = vsel %vm1053, %v2234, %v2151
        %v2267 = vsel %vm1053, %v2235, %v2153
        %v2268 = vsel %vm1053, %v2236, %v2155
        %v2269 = vsel %vm1053, %v2237, %v2157
        %v2270 = vsel %vm1053, %v2238, %v2159
        %v2271 = vsel %vm1053, %v2239, %v2161
        %v2272 = vsel %vm1053, %v2240, %v2163
        %v2273 = vsel %vm1053, %v2241, %v2165
        %v2274 = vsel %vm1053, %v2242, %v2167
        %v2275 = vsel %vm1053, %v2243, %v2169
        %v2276 = vsel %vm1053, %v2244, %v2171
        %v2277 = vsel %vm1053, %v2245, %v2173
        %v2278 = vsel %vm1053, %v2246, %v2175
        %v2279 = vsel %vm1053, %v2247, %v2177
        %v2280 = vsel %vm1053, %v2248, %v2179
        %v2281 = vsel %vm1053, %v2249, %v2181
        %v2282 = vsel %vm1053, %v2250, %v2183
        %v2283 = vsel %vm1053, %v2251, %v2185
        %v2284 = vsel %vm1053, %v2252, %v2187
        %v2285 = vsel %vm1053, %v2253, %v2189
        %v2286 = vpack.c.bf16 %v2255, %v2254
        %v2287 = vpack.c.bf16 %v2257, %v2256
        %v2288 = vpack.c.bf16 %v2259, %v2258
        %v2289 = vpack.c.bf16 %v2261, %v2260
        %v2290 = vpack.c.bf16 %v2263, %v2262
        %v2291 = vpack.c.bf16 %v2265, %v2264
        %v2292 = vpack.c.bf16 %v2267, %v2266
        %v2293 = vpack.c.bf16 %v2269, %v2268
        %v2294 = vpack.c.bf16 %v2271, %v2270
        %v2295 = vpack.c.bf16 %v2273, %v2272
        %v2296 = vpack.c.bf16 %v2275, %v2274
        %v2297 = vpack.c.bf16 %v2277, %v2276
        %v2298 = vpack.c.bf16 %v2279, %v2278
        %v2299 = vpack.c.bf16 %v2281, %v2280
        %v2300 = vpack.c.bf16 %v2283, %v2282
        %v2301 = vpack.c.bf16 %v2285, %v2284
        %s2302 = scalar_lea.vmem [#allocation9], 96
        %v2303 = vld [vmem:[%s2302] sm:$0xf]
        %v2304 = vld [vmem:[%s2302 + $0x4] sm:$0xf]
        %v2305 = vld [vmem:[%s2302 + $0x8] sm:$0xf]
        %v2306 = vld [vmem:[%s2302 + $0xc] sm:$0xf]
        %v2307 = vld [vmem:[%s2302 + $0x10] sm:$0xf]
        %v2308 = vld [vmem:[%s2302 + $0x14] sm:$0xf]
        %v2309 = vld [vmem:[%s2302 + $0x18] sm:$0xf]
        %v2310 = vld [vmem:[%s2302 + $0x1c] sm:$0xf]
        %v2311 = vld [vmem:[%s2302 + $0x20] sm:$0xf]
        %v2312 = vld [vmem:[%s2302 + $0x24] sm:$0xf]
        %v2313 = vld [vmem:[%s2302 + $0x28] sm:$0xf]
        %v2314 = vld [vmem:[%s2302 + $0x2c] sm:$0xf]
        %v2327 = vunpack.c.l.b16 %v2303
        %v2328 = vunpack.c.l.b16 %v2304
        %v2329 = vunpack.c.l.b16 %v2305
        %v2330 = vunpack.c.l.b16 %v2306
        %v2331 = vunpack.c.l.b16 %v2307
        %v2332 = vunpack.c.l.b16 %v2308
        %v2333 = vunpack.c.l.b16 %v2309
        %v2334 = vunpack.c.l.b16 %v2310
        %v2335 = vunpack.c.l.b16 %v2311
        %v2336 = vunpack.c.l.b16 %v2312
        %v2337 = vunpack.c.l.b16 %v2313
        %v2338 = vunpack.c.l.b16 %v2314
        %v2339 = vpack.c.b16 %v2328, %v2327
        %v2340 = vpack.c.b16 %v2330, %v2329
        %v2341 = vpack.c.b16 %v2332, %v2331
        %v2342 = vpack.c.b16 %v2334, %v2333
        %v2343 = vpack.c.b16 %v2336, %v2335
        %v2344 = vpack.c.b16 %v2338, %v2337
        %v2352 = vsel %vm1505, %v2286, 0
        %v2355 = vsel %vm1505, %v2287, 0
        %v2358 = vsel %vm1505, %v2288, 0
        %v2361 = vsel %vm1505, %v2289, 0
        %v2364 = vsel %vm1505, %v2290, 0
        %v2367 = vsel %vm1505, %v2291, 0
        %v2370 = vsel %vm1505, %v2292, 0
        %v2373 = vsel %vm1505, %v2293, 0
        %v2376 = vsel %vm1505, %v2294, 0
        %v2379 = vsel %vm1505, %v2295, 0
        %v2382 = vsel %vm1505, %v2296, 0
        %v2385 = vsel %vm1505, %v2297, 0
        %v2388 = vsel %vm1505, %v2298, 0
        %v2391 = vsel %vm1505, %v2299, 0
        %v2394 = vsel %vm1505, %v2300, 0
        %v2397 = vsel %vm1505, %v2301, 0
        %2399 = vmatprep.subr.bf16.mxu0 0
        %2400 = vmatpush1.bf16.msra.mxu0 %v2339
        %2401 = vmatprep.subr.bf16.mxu0 0
        %2402 = vmatpush1.bf16.msra.mxu0 %v2340
        %2403 = vmatprep.subr.bf16.mxu0 0
        %2404 = vmatpush1.bf16.msra.mxu0 %v2341
        %2405 = vmatprep.subr.bf16.mxu0 0
        %2406 = vmatpush1.bf16.msra.mxu0 %v2342
        %2407 = vmatprep.subr.bf16.mxu0 0
        %2408 = vmatpush1.bf16.msra.mxu0 %v2343
        %2409 = vmatprep.subr.bf16.mxu0 0
        %2410 = vmatpush1.bf16.msra.mxu0 %v2344
        %2411 = vmatprep.subr.bf16.mxu0 0
        %2412 = vmatpush1.bf16.msra.mxu0 0
        %2413 = vmatprep.subr.bf16.mxu0 0
        %2414 = vmatpush1.bf16.msra.mxu0 0
        %2415 = vmatprep.subr.bf16.mxu0 0
        %2416 = vmatpush1.bf16.msra.mxu0 0
        %2417 = vmatprep.subr.bf16.mxu0 0
        %2418 = vmatpush1.bf16.msra.mxu0 0
        %2419 = vmatprep.subr.bf16.mxu0 0
        %2420 = vmatpush1.bf16.msra.mxu0 0
        %2421 = vmatprep.subr.bf16.mxu0 0
        %2422 = vmatpush1.bf16.msra.mxu0 0
        %2423 = vmatprep.subr.bf16.mxu0 0
        %2424 = vmatpush1.bf16.msra.mxu0 0
        %2425 = vmatprep.subr.bf16.mxu0 0
        %2426 = vmatpush1.bf16.msra.mxu0 0
        %2427 = vmatprep.subr.bf16.mxu0 0
        %2428 = vmatpush1.bf16.msra.mxu0 0
        %2429 = vmatprep.subr.bf16.mxu0 0
        %2430 = vmatpush1.bf16.msra.mxu0 0
        %2431 = vmatprep.mubr.bf16.mxu0 0
        %2432 = vmatmul.mubr.bf16.gmra.mrb[0].mxu0 %v2352
        %v2433 = vpop.f32.mrb[0].mxu0
        %v2434 = vadd.f32 0.0, %v2433
        %v2435 = vpop.f32.mrb[0].mxu0
        %v2436 = vpop.f32.mrb[0].mxu0
        %v2437 = vadd.f32 0.0, %v2436
        %v2438 = vpop.f32.mrb[0].mxu0
        %2439 = vmatprep.mubr.bf16.mxu0 0
        %2440 = vmatmul.mubr.bf16.gmra.mrb[0].mxu0 %v2355
        %v2441 = vpop.f32.mrb[0].mxu0
        %v2442 = vadd.f32 0.0, %v2441
        %v2443 = vpop.f32.mrb[0].mxu0
        %v2444 = vpop.f32.mrb[0].mxu0
        %v2445 = vadd.f32 0.0, %v2444
        %v2446 = vpop.f32.mrb[0].mxu0
        %2447 = vmatprep.mubr.bf16.mxu0 0
        %2448 = vmatmul.mubr.bf16.gmra.mrb[0].mxu0 %v2358
        %v2449 = vpop.f32.mrb[0].mxu0
        %v2450 = vadd.f32 0.0, %v2449
        %v2451 = vpop.f32.mrb[0].mxu0
        %v2452 = vpop.f32.mrb[0].mxu0
        %v2453 = vadd.f32 0.0, %v2452
        %v2454 = vpop.f32.mrb[0].mxu0
        %2455 = vmatprep.mubr.bf16.mxu0 0
        %2456 = vmatmul.mubr.bf16.gmra.mrb[0].mxu0 %v2361
        %v2457 = vpop.f32.mrb[0].mxu0
        %v2458 = vadd.f32 0.0, %v2457
        %v2459 = vpop.f32.mrb[0].mxu0
        %v2460 = vpop.f32.mrb[0].mxu0
        %v2461 = vadd.f32 0.0, %v2460
        %v2462 = vpop.f32.mrb[0].mxu0
        %2463 = vmatprep.mubr.bf16.mxu0 0
        %2464 = vmatmul.mubr.bf16.gmra.mrb[0].mxu0 %v2364
        %v2465 = vpop.f32.mrb[0].mxu0
        %v2466 = vadd.f32 0.0, %v2465
        %v2467 = vpop.f32.mrb[0].mxu0
        %v2468 = vpop.f32.mrb[0].mxu0
        %v2469 = vadd.f32 0.0, %v2468
        %v2470 = vpop.f32.mrb[0].mxu0
        %2471 = vmatprep.mubr.bf16.mxu0 0
        %2472 = vmatmul.mubr.bf16.gmra.mrb[0].mxu0 %v2367
        %v2473 = vpop.f32.mrb[0].mxu0
        %v2474 = vadd.f32 0.0, %v2473
        %v2475 = vpop.f32.mrb[0].mxu0
        %v2476 = vpop.f32.mrb[0].mxu0
        %v2477 = vadd.f32 0.0, %v2476
        %v2478 = vpop.f32.mrb[0].mxu0
        %2479 = vmatprep.mubr.bf16.mxu0 0
        %2480 = vmatmul.mubr.bf16.gmra.mrb[0].mxu0 %v2370
        %v2481 = vpop.f32.mrb[0].mxu0
        %v2482 = vadd.f32 0.0, %v2481
        %v2483 = vpop.f32.mrb[0].mxu0
        %v2484 = vpop.f32.mrb[0].mxu0
        %v2485 = vadd.f32 0.0, %v2484
        %v2486 = vpop.f32.mrb[0].mxu0
        %2487 = vmatprep.mubr.bf16.mxu0 0
        %2488 = vmatmul.mubr.bf16.gmra.mrb[0].mxu0 %v2373
        %v2489 = vpop.f32.mrb[0].mxu0
        %v2490 = vadd.f32 0.0, %v2489
        %v2491 = vpop.f32.mrb[0].mxu0
        %v2492 = vpop.f32.mrb[0].mxu0
        %v2493 = vadd.f32 0.0, %v2492
        %v2494 = vpop.f32.mrb[0].mxu0
        %2495 = vmatprep.mubr.bf16.mxu0 0
        %2496 = vmatmul.mubr.bf16.gmra.mrb[0].mxu0 %v2376
        %v2497 = vpop.f32.mrb[0].mxu0
        %v2498 = vadd.f32 0.0, %v2497
        %v2499 = vpop.f32.mrb[0].mxu0
        %v2500 = vpop.f32.mrb[0].mxu0
        %v2501 = vadd.f32 0.0, %v2500
        %v2502 = vpop.f32.mrb[0].mxu0
        %2503 = vmatprep.mubr.bf16.mxu0 0
        %2504 = vmatmul.mubr.bf16.gmra.mrb[0].mxu0 %v2379
        %v2505 = vpop.f32.mrb[0].mxu0
        %v2506 = vadd.f32 0.0, %v2505
        %v2507 = vpop.f32.mrb[0].mxu0
        %v2508 = vpop.f32.mrb[0].mxu0
        %v2509 = vadd.f32 0.0, %v2508
        %v2510 = vpop.f32.mrb[0].mxu0
        %2511 = vmatprep.mubr.bf16.mxu0 0
        %2512 = vmatmul.mubr.bf16.gmra.mrb[0].mxu0 %v2382
        %v2513 = vpop.f32.mrb[0].mxu0
        %v2514 = vadd.f32 0.0, %v2513
        %v2515 = vpop.f32.mrb[0].mxu0
        %v2516 = vpop.f32.mrb[0].mxu0
        %v2517 = vadd.f32 0.0, %v2516
        %v2518 = vpop.f32.mrb[0].mxu0
        %2519 = vmatprep.mubr.bf16.mxu0 0
        %2520 = vmatmul.mubr.bf16.gmra.mrb[0].mxu0 %v2385
        %v2521 = vpop.f32.mrb[0].mxu0
        %v2522 = vadd.f32 0.0, %v2521
        %v2523 = vpop.f32.mrb[0].mxu0
        %v2524 = vpop.f32.mrb[0].mxu0
        %v2525 = vadd.f32 0.0, %v2524
        %v2526 = vpop.f32.mrb[0].mxu0
        %2527 = vmatprep.mubr.bf16.mxu0 0
        %2528 = vmatmul.mubr.bf16.gmra.mrb[0].mxu0 %v2388
        %v2529 = vpop.f32.mrb[0].mxu0
        %v2530 = vadd.f32 0.0, %v2529
        %v2531 = vpop.f32.mrb[0].mxu0
        %v2532 = vpop.f32.mrb[0].mxu0
        %v2533 = vadd.f32 0.0, %v2532
        %v2534 = vpop.f32.mrb[0].mxu0
        %2535 = vmatprep.mubr.bf16.mxu0 0
        %2536 = vmatmul.mubr.bf16.gmra.mrb[0].mxu0 %v2391
        %v2537 = vpop.f32.mrb[0].mxu0
        %v2538 = vadd.f32 0.0, %v2537
        %v2539 = vpop.f32.mrb[0].mxu0
        %v2540 = vpop.f32.mrb[0].mxu0
        %v2541 = vadd.f32 0.0, %v2540
        %v2542 = vpop.f32.mrb[0].mxu0
        %2543 = vmatprep.mubr.bf16.mxu0 0
        %2544 = vmatmul.mubr.bf16.gmra.mrb[0].mxu0 %v2394
        %v2545 = vpop.f32.mrb[0].mxu0
        %v2546 = vadd.f32 0.0, %v2545
        %v2547 = vpop.f32.mrb[0].mxu0
        %v2548 = vpop.f32.mrb[0].mxu0
        %v2549 = vadd.f32 0.0, %v2548
        %v2550 = vpop.f32.mrb[0].mxu0
        %2551 = vmatprep.mubr.bf16.mxu0 0
        %2552 = vmatmul.mubr.bf16.gmra.mrb[0].mxu0 %v2397
        %v2553 = vpop.f32.mrb[0].mxu0
        %v2554 = vadd.f32 0.0, %v2553
        %v2555 = vpop.f32.mrb[0].mxu0
        %v2556 = vpop.f32.mrb[0].mxu0
        %v2557 = vadd.f32 0.0, %v2556
        %v2558 = vpop.f32.mrb[0].mxu0
        %2559 = vdwg.mxu0
        %v2560 = vadd.f32 %v1834, %v2434
        %v2561 = vadd.f32 %v1837, %v2437
        %v2562 = vadd.f32 %v1842, %v2442
        %v2563 = vadd.f32 %v1845, %v2445
        %v2564 = vadd.f32 %v1850, %v2450
        %v2565 = vadd.f32 %v1853, %v2453
        %v2566 = vadd.f32 %v1858, %v2458
        %v2567 = vadd.f32 %v1861, %v2461
        %v2568 = vadd.f32 %v1866, %v2466
        %v2569 = vadd.f32 %v1869, %v2469
        %v2570 = vadd.f32 %v1874, %v2474
        %v2571 = vadd.f32 %v1877, %v2477
        %v2572 = vadd.f32 %v1882, %v2482
        %v2573 = vadd.f32 %v1885, %v2485
        %v2574 = vadd.f32 %v1890, %v2490
        %v2575 = vadd.f32 %v1893, %v2493
        %v2576 = vadd.f32 %v1898, %v2498
        %v2577 = vadd.f32 %v1901, %v2501
        %v2578 = vadd.f32 %v1906, %v2506
        %v2579 = vadd.f32 %v1909, %v2509
        %v2580 = vadd.f32 %v1914, %v2514
        %v2581 = vadd.f32 %v1917, %v2517
        %v2582 = vadd.f32 %v1922, %v2522
        %v2583 = vadd.f32 %v1925, %v2525
        %v2584 = vadd.f32 %v1930, %v2530
        %v2585 = vadd.f32 %v1933, %v2533
        %v2586 = vadd.f32 %v1938, %v2538
        %v2587 = vadd.f32 %v1941, %v2541
        %v2588 = vadd.f32 %v1946, %v2546
        %v2589 = vadd.f32 %v1949, %v2549
        %v2590 = vadd.f32 %v1954, %v2554
        %v2591 = vadd.f32 %v1957, %v2557
        %s2592 = scalar_lea.vmem [#allocation2], 64
        %v2593 = vld [vmem:[%s2592 + $0x6] sm:$0xff]
        %v2594 = vld [vmem:[%s2592 + $0xe] sm:$0xff]
        %v2595 = vld [vmem:[%s2592 + $0x26] sm:$0xff]
        %v2596 = vld [vmem:[%s2592 + $0x2e] sm:$0xff]
        %v2597 = vld [vmem:[%s2592 + $0x46] sm:$0xff]
        %v2598 = vld [vmem:[%s2592 + $0x4e] sm:$0xff]
        %v2599 = vld [vmem:[%s2592 + $0x66] sm:$0xff]
        %v2600 = vld [vmem:[%s2592 + $0x6e] sm:$0xff]
        %v2601 = vld [vmem:[%s2592 + $0x86] sm:$0xff]
        %v2602 = vld [vmem:[%s2592 + $0x8e] sm:$0xff]
        %v2603 = vld [vmem:[%s2592 + $0xa6] sm:$0xff]
        %v2604 = vld [vmem:[%s2592 + $0xae] sm:$0xff]
        %v2605 = vld [vmem:[%s2592 + $0xc6] sm:$0xff]
        %v2606 = vld [vmem:[%s2592 + $0xce] sm:$0xff]
        %v2607 = vld [vmem:[%s2592 + $0xe6] sm:$0xff]
        %v2608 = vld [vmem:[%s2592 + $0xee] sm:$0xff]
        %v2609 = vld [vmem:[%s2592 + $0x106] sm:$0xff]
        %v2610 = vld [vmem:[%s2592 + $0x10e] sm:$0xff]
        %v2611 = vld [vmem:[%s2592 + $0x126] sm:$0xff]
        %v2612 = vld [vmem:[%s2592 + $0x12e] sm:$0xff]
        %v2613 = vld [vmem:[%s2592 + $0x146] sm:$0xff]
        %v2614 = vld [vmem:[%s2592 + $0x14e] sm:$0xff]
        %v2615 = vld [vmem:[%s2592 + $0x166] sm:$0xff]
        %v2616 = vld [vmem:[%s2592 + $0x16e] sm:$0xff]
        %v2617 = vld [vmem:[%s2592 + $0x186] sm:$0xff]
        %v2618 = vld [vmem:[%s2592 + $0x18e] sm:$0xff]
        %v2619 = vld [vmem:[%s2592 + $0x1a6] sm:$0xff]
        %v2620 = vld [vmem:[%s2592 + $0x1ae] sm:$0xff]
        %v2621 = vld [vmem:[%s2592 + $0x1c6] sm:$0xff]
        %v2622 = vld [vmem:[%s2592 + $0x1ce] sm:$0xff]
        %v2623 = vld [vmem:[%s2592 + $0x1e6] sm:$0xff]
        %v2624 = vld [vmem:[%s2592 + $0x1ee] sm:$0xff]
        %v2625 = vld [vmem:[%s2592 + $0x206] sm:$0xff]
        %v2626 = vld [vmem:[%s2592 + $0x20e] sm:$0xff]
        %v2627 = vld [vmem:[%s2592 + $0x226] sm:$0xff]
        %v2628 = vld [vmem:[%s2592 + $0x22e] sm:$0xff]
        %v2629 = vld [vmem:[%s2592 + $0x246] sm:$0xff]
        %v2630 = vld [vmem:[%s2592 + $0x24e] sm:$0xff]
        %v2631 = vld [vmem:[%s2592 + $0x266] sm:$0xff]
        %v2632 = vld [vmem:[%s2592 + $0x26e] sm:$0xff]
        %2665 = vrot.lane.b32.xlu0 %v2597, 32
        %v2666 = vpop.permute.xlu0 %2665
        %2667 = vrot.lane.b32.xlu0 %v2598, 32
        %v2668 = vpop.permute.xlu0 %2667
        %2669 = vrot.lane.b32.xlu0 %v2599, 32
        %v2670 = vpop.permute.xlu0 %2669
        %2671 = vrot.lane.b32.xlu0 %v2600, 32
        %v2672 = vpop.permute.xlu0 %2671
        %2673 = vrot.lane.b32.xlu0 %v2601, 32
        %v2674 = vpop.permute.xlu0 %2673
        %2675 = vrot.lane.b32.xlu0 %v2602, 32
        %v2676 = vpop.permute.xlu0 %2675
        %2677 = vrot.lane.b32.xlu0 %v2603, 32
        %v2678 = vpop.permute.xlu0 %2677
        %2679 = vrot.lane.b32.xlu0 %v2604, 32
        %v2680 = vpop.permute.xlu0 %2679
        %2681 = vrot.lane.b32.xlu0 %v2605, 32
        %v2682 = vpop.permute.xlu0 %2681
        %2683 = vrot.lane.b32.xlu0 %v2606, 32
        %v2684 = vpop.permute.xlu0 %2683
        %2685 = vrot.lane.b32.xlu0 %v2607, 32
        %v2686 = vpop.permute.xlu0 %2685
        %2687 = vrot.lane.b32.xlu0 %v2608, 32
        %v2688 = vpop.permute.xlu0 %2687
        %2689 = vrot.lane.b32.xlu0 %v2609, 32
        %v2690 = vpop.permute.xlu0 %2689
        %2691 = vrot.lane.b32.xlu0 %v2610, 32
        %v2692 = vpop.permute.xlu0 %2691
        %2693 = vrot.lane.b32.xlu0 %v2611, 32
        %v2694 = vpop.permute.xlu0 %2693
        %2695 = vrot.lane.b32.xlu0 %v2612, 32
        %v2696 = vpop.permute.xlu0 %2695
        %2697 = vrot.lane.b32.xlu0 %v2613, 32
        %v2698 = vpop.permute.xlu0 %2697
        %2699 = vrot.lane.b32.xlu0 %v2614, 32
        %v2700 = vpop.permute.xlu0 %2699
        %2701 = vrot.lane.b32.xlu0 %v2615, 32
        %v2702 = vpop.permute.xlu0 %2701
        %2703 = vrot.lane.b32.xlu0 %v2616, 32
        %v2704 = vpop.permute.xlu0 %2703
        %2705 = vrot.lane.b32.xlu0 %v2617, 32
        %v2706 = vpop.permute.xlu0 %2705
        %2707 = vrot.lane.b32.xlu0 %v2618, 32
        %v2708 = vpop.permute.xlu0 %2707
        %2709 = vrot.lane.b32.xlu0 %v2619, 32
        %v2710 = vpop.permute.xlu0 %2709
        %2711 = vrot.lane.b32.xlu0 %v2620, 32
        %v2712 = vpop.permute.xlu0 %2711
        %2713 = vrot.lane.b32.xlu0 %v2621, 32
        %v2714 = vpop.permute.xlu0 %2713
        %2715 = vrot.lane.b32.xlu0 %v2622, 32
        %v2716 = vpop.permute.xlu0 %2715
        %2717 = vrot.lane.b32.xlu0 %v2623, 32
        %v2718 = vpop.permute.xlu0 %2717
        %2719 = vrot.lane.b32.xlu0 %v2624, 32
        %v2720 = vpop.permute.xlu0 %2719
        %2721 = vrot.lane.b32.xlu0 %v2625, 32
        %v2722 = vpop.permute.xlu0 %2721
        %2723 = vrot.lane.b32.xlu0 %v2626, 32
        %v2724 = vpop.permute.xlu0 %2723
        %2725 = vrot.lane.b32.xlu0 %v2627, 32
        %v2726 = vpop.permute.xlu0 %2725
        %2727 = vrot.lane.b32.xlu0 %v2628, 32
        %v2728 = vpop.permute.xlu0 %2727
        %2765 = vrot.lane.b32.xlu0 %v2601, 64
        %v2766 = vpop.permute.xlu0 %2765
        %2767 = vrot.lane.b32.xlu0 %v2602, 64
        %v2768 = vpop.permute.xlu0 %2767
        %2769 = vrot.lane.b32.xlu0 %v2603, 64
        %v2770 = vpop.permute.xlu0 %2769
        %2771 = vrot.lane.b32.xlu0 %v2604, 64
        %v2772 = vpop.permute.xlu0 %2771
        %2773 = vrot.lane.b32.xlu0 %v2605, 64
        %v2774 = vpop.permute.xlu0 %2773
        %2775 = vrot.lane.b32.xlu0 %v2606, 64
        %v2776 = vpop.permute.xlu0 %2775
        %2777 = vrot.lane.b32.xlu0 %v2607, 64
        %v2778 = vpop.permute.xlu0 %2777
        %2779 = vrot.lane.b32.xlu0 %v2608, 64
        %v2780 = vpop.permute.xlu0 %2779
        %2781 = vrot.lane.b32.xlu0 %v2609, 64
        %v2782 = vpop.permute.xlu0 %2781
        %2783 = vrot.lane.b32.xlu0 %v2610, 64
        %v2784 = vpop.permute.xlu0 %2783
        %2785 = vrot.lane.b32.xlu0 %v2611, 64
        %v2786 = vpop.permute.xlu0 %2785
        %2787 = vrot.lane.b32.xlu0 %v2612, 64
        %v2788 = vpop.permute.xlu0 %2787
        %2789 = vrot.lane.b32.xlu0 %v2613, 64
        %v2790 = vpop.permute.xlu0 %2789
        %2791 = vrot.lane.b32.xlu0 %v2614, 64
        %v2792 = vpop.permute.xlu0 %2791
        %2793 = vrot.lane.b32.xlu0 %v2615, 64
        %v2794 = vpop.permute.xlu0 %2793
        %2795 = vrot.lane.b32.xlu0 %v2616, 64
        %v2796 = vpop.permute.xlu0 %2795
        %2797 = vrot.lane.b32.xlu0 %v2617, 64
        %v2798 = vpop.permute.xlu0 %2797
        %2799 = vrot.lane.b32.xlu0 %v2618, 64
        %v2800 = vpop.permute.xlu0 %2799
        %2801 = vrot.lane.b32.xlu0 %v2619, 64
        %v2802 = vpop.permute.xlu0 %2801
        %2803 = vrot.lane.b32.xlu0 %v2620, 64
        %v2804 = vpop.permute.xlu0 %2803
        %2805 = vrot.lane.b32.xlu0 %v2621, 64
        %v2806 = vpop.permute.xlu0 %2805
        %2807 = vrot.lane.b32.xlu0 %v2622, 64
        %v2808 = vpop.permute.xlu0 %2807
        %2809 = vrot.lane.b32.xlu0 %v2623, 64
        %v2810 = vpop.permute.xlu0 %2809
        %2811 = vrot.lane.b32.xlu0 %v2624, 64
        %v2812 = vpop.permute.xlu0 %2811
        %2813 = vrot.lane.b32.xlu0 %v2625, 64
        %v2814 = vpop.permute.xlu0 %2813
        %2815 = vrot.lane.b32.xlu0 %v2626, 64
        %v2816 = vpop.permute.xlu0 %2815
        %2817 = vrot.lane.b32.xlu0 %v2627, 64
        %v2818 = vpop.permute.xlu0 %2817
        %2819 = vrot.lane.b32.xlu0 %v2628, 64
        %v2820 = vpop.permute.xlu0 %2819
        %2821 = vrot.lane.b32.xlu0 %v2629, 64
        %v2822 = vpop.permute.xlu0 %2821
        %2823 = vrot.lane.b32.xlu0 %v2630, 64
        %v2824 = vpop.permute.xlu0 %2823
        %2825 = vrot.lane.b32.xlu0 %v2631, 64
        %v2826 = vpop.permute.xlu0 %2825
        %2827 = vrot.lane.b32.xlu0 %v2632, 64
        %v2828 = vpop.permute.xlu0 %2827
        %v2861 = vsel %vm450, %v2593, %v2666
        %v2862 = vsel %vm450, %v2594, %v2668
        %v2863 = vsel %vm450, %v2595, %v2670
        %v2864 = vsel %vm450, %v2596, %v2672
        %v2865 = vsel %vm450, %v2597, %v2674
        %v2866 = vsel %vm450, %v2598, %v2676
        %v2867 = vsel %vm450, %v2599, %v2678
        %v2868 = vsel %vm450, %v2600, %v2680
        %v2869 = vsel %vm450, %v2601, %v2682
        %v2870 = vsel %vm450, %v2602, %v2684
        %v2871 = vsel %vm450, %v2603, %v2686
        %v2872 = vsel %vm450, %v2604, %v2688
        %v2873 = vsel %vm450, %v2605, %v2690
        %v2874 = vsel %vm450, %v2606, %v2692
        %v2875 = vsel %vm450, %v2607, %v2694
        %v2876 = vsel %vm450, %v2608, %v2696
        %v2877 = vsel %vm450, %v2609, %v2698
        %v2878 = vsel %vm450, %v2610, %v2700
        %v2879 = vsel %vm450, %v2611, %v2702
        %v2880 = vsel %vm450, %v2612, %v2704
        %v2881 = vsel %vm450, %v2613, %v2706
        %v2882 = vsel %vm450, %v2614, %v2708
        %v2883 = vsel %vm450, %v2615, %v2710
        %v2884 = vsel %vm450, %v2616, %v2712
        %v2885 = vsel %vm450, %v2617, %v2714
        %v2886 = vsel %vm450, %v2618, %v2716
        %v2887 = vsel %vm450, %v2619, %v2718
        %v2888 = vsel %vm450, %v2620, %v2720
        %v2889 = vsel %vm450, %v2621, %v2722
        %v2890 = vsel %vm450, %v2622, %v2724
        %v2891 = vsel %vm450, %v2623, %v2726
        %v2892 = vsel %vm450, %v2624, %v2728
        %v2893 = vsel %vm1053, %v2861, %v2766
        %v2894 = vsel %vm1053, %v2862, %v2768
        %v2895 = vsel %vm1053, %v2863, %v2770
        %v2896 = vsel %vm1053, %v2864, %v2772
        %v2897 = vsel %vm1053, %v2865, %v2774
        %v2898 = vsel %vm1053, %v2866, %v2776
        %v2899 = vsel %vm1053, %v2867, %v2778
        %v2900 = vsel %vm1053, %v2868, %v2780
        %v2901 = vsel %vm1053, %v2869, %v2782
        %v2902 = vsel %vm1053, %v2870, %v2784
        %v2903 = vsel %vm1053, %v2871, %v2786
        %v2904 = vsel %vm1053, %v2872, %v2788
        %v2905 = vsel %vm1053, %v2873, %v2790
        %v2906 = vsel %vm1053, %v2874, %v2792
        %v2907 = vsel %vm1053, %v2875, %v2794
        %v2908 = vsel %vm1053, %v2876, %v2796
        %v2909 = vsel %vm1053, %v2877, %v2798
        %v2910 = vsel %vm1053, %v2878, %v2800
        %v2911 = vsel %vm1053, %v2879, %v2802
        %v2912 = vsel %vm1053, %v2880, %v2804
        %v2913 = vsel %vm1053, %v2881, %v2806
        %v2914 = vsel %vm1053, %v2882, %v2808
        %v2915 = vsel %vm1053, %v2883, %v2810
        %v2916 = vsel %vm1053, %v2884, %v2812
        %v2917 = vsel %vm1053, %v2885, %v2814
        %v2918 = vsel %vm1053, %v2886, %v2816
        %v2919 = vsel %vm1053, %v2887, %v2818
        %v2920 = vsel %vm1053, %v2888, %v2820
        %v2921 = vsel %vm1053, %v2889, %v2822
        %v2922 = vsel %vm1053, %v2890, %v2824
        %v2923 = vsel %vm1053, %v2891, %v2826
        %v2924 = vsel %vm1053, %v2892, %v2828
        %v2925 = vpack.c.bf16 %v2894, %v2893
        %v2926 = vpack.c.bf16 %v2896, %v2895
        %v2927 = vpack.c.bf16 %v2898, %v2897
        %v2928 = vpack.c.bf16 %v2900, %v2899
        %v2929 = vpack.c.bf16 %v2902, %v2901
        %v2930 = vpack.c.bf16 %v2904, %v2903
        %v2931 = vpack.c.bf16 %v2906, %v2905
        %v2932 = vpack.c.bf16 %v2908, %v2907
        %v2933 = vpack.c.bf16 %v2910, %v2909
        %v2934 = vpack.c.bf16 %v2912, %v2911
        %v2935 = vpack.c.bf16 %v2914, %v2913
        %v2936 = vpack.c.bf16 %v2916, %v2915
        %v2937 = vpack.c.bf16 %v2918, %v2917
        %v2938 = vpack.c.bf16 %v2920, %v2919
        %v2939 = vpack.c.bf16 %v2922, %v2921
        %v2940 = vpack.c.bf16 %v2924, %v2923
        %s2941 = scalar_lea.vmem [#allocation9], 144
        %v2942 = vld [vmem:[%s2941] sm:$0xf]
        %v2943 = vld [vmem:[%s2941 + $0x4] sm:$0xf]
        %v2944 = vld [vmem:[%s2941 + $0x8] sm:$0xf]
        %v2945 = vld [vmem:[%s2941 + $0xc] sm:$0xf]
        %v2946 = vld [vmem:[%s2941 + $0x10] sm:$0xf]
        %v2947 = vld [vmem:[%s2941 + $0x14] sm:$0xf]
        %v2948 = vld [vmem:[%s2941 + $0x18] sm:$0xf]
        %v2949 = vld [vmem:[%s2941 + $0x1c] sm:$0xf]
        %v2950 = vld [vmem:[%s2941 + $0x20] sm:$0xf]
        %v2951 = vld [vmem:[%s2941 + $0x24] sm:$0xf]
        %v2952 = vld [vmem:[%s2941 + $0x28] sm:$0xf]
        %v2953 = vld [vmem:[%s2941 + $0x2c] sm:$0xf]
        %v2954 = vld [vmem:[%s2592 + $0x8] sm:$0xff]
        %v2955 = vld [vmem:[%s2592 + $0x10] sm:$0xff]
        %v2956 = vld [vmem:[%s2592 + $0x28] sm:$0xff]
        %v2957 = vld [vmem:[%s2592 + $0x30] sm:$0xff]
        %v2958 = vld [vmem:[%s2592 + $0x48] sm:$0xff]
        %v2959 = vld [vmem:[%s2592 + $0x50] sm:$0xff]
        %v2960 = vld [vmem:[%s2592 + $0x68] sm:$0xff]
        %v2961 = vld [vmem:[%s2592 + $0x70] sm:$0xff]
        %v2962 = vld [vmem:[%s2592 + $0x88] sm:$0xff]
        %v2963 = vld [vmem:[%s2592 + $0x90] sm:$0xff]
        %v2964 = vld [vmem:[%s2592 + $0xa8] sm:$0xff]
        %v2965 = vld [vmem:[%s2592 + $0xb0] sm:$0xff]
        %v2966 = vld [vmem:[%s2592 + $0xc8] sm:$0xff]
        %v2967 = vld [vmem:[%s2592 + $0xd0] sm:$0xff]
        %v2968 = vld [vmem:[%s2592 + $0xe8] sm:$0xff]
        %v2969 = vld [vmem:[%s2592 + $0xf0] sm:$0xff]
        %v2970 = vld [vmem:[%s2592 + $0x108] sm:$0xff]
        %v2971 = vld [vmem:[%s2592 + $0x110] sm:$0xff]
        %v2972 = vld [vmem:[%s2592 + $0x128] sm:$0xff]
        %v2973 = vld [vmem:[%s2592 + $0x130] sm:$0xff]
        %v2974 = vld [vmem:[%s2592 + $0x148] sm:$0xff]
        %v2975 = vld [vmem:[%s2592 + $0x150] sm:$0xff]
        %v2976 = vld [vmem:[%s2592 + $0x168] sm:$0xff]
        %v2977 = vld [vmem:[%s2592 + $0x170] sm:$0xff]
        %v2978 = vld [vmem:[%s2592 + $0x188] sm:$0xff]
        %v2979 = vld [vmem:[%s2592 + $0x190] sm:$0xff]
        %v2980 = vld [vmem:[%s2592 + $0x1a8] sm:$0xff]
        %v2981 = vld [vmem:[%s2592 + $0x1b0] sm:$0xff]
        %v2982 = vld [vmem:[%s2592 + $0x1c8] sm:$0xff]
        %v2983 = vld [vmem:[%s2592 + $0x1d0] sm:$0xff]
        %v2984 = vld [vmem:[%s2592 + $0x1e8] sm:$0xff]
        %v2985 = vld [vmem:[%s2592 + $0x1f0] sm:$0xff]
        %v2986 = vld [vmem:[%s2592 + $0x208] sm:$0xff]
        %v2987 = vld [vmem:[%s2592 + $0x210] sm:$0xff]
        %v2988 = vld [vmem:[%s2592 + $0x228] sm:$0xff]
        %v2989 = vld [vmem:[%s2592 + $0x230] sm:$0xff]
        %v2990 = vld [vmem:[%s2592 + $0x248] sm:$0xff]
        %v2991 = vld [vmem:[%s2592 + $0x250] sm:$0xff]
        %v2992 = vld [vmem:[%s2592 + $0x268] sm:$0xff]
        %v2993 = vld [vmem:[%s2592 + $0x270] sm:$0xff]
        %3026 = vrot.lane.b32.xlu0 %v2958, 32
        %v3027 = vpop.permute.xlu0 %3026
        %3028 = vrot.lane.b32.xlu0 %v2959, 32
        %v3029 = vpop.permute.xlu0 %3028
        %3030 = vrot.lane.b32.xlu0 %v2960, 32
        %v3031 = vpop.permute.xlu0 %3030
        %3032 = vrot.lane.b32.xlu0 %v2961, 32
        %v3033 = vpop.permute.xlu0 %3032
        %3034 = vrot.lane.b32.xlu0 %v2962, 32
        %v3035 = vpop.permute.xlu0 %3034
        %3036 = vrot.lane.b32.xlu0 %v2963, 32
        %v3037 = vpop.permute.xlu0 %3036
        %3038 = vrot.lane.b32.xlu0 %v2964, 32
        %v3039 = vpop.permute.xlu0 %3038
        %3040 = vrot.lane.b32.xlu0 %v2965, 32
        %v3041 = vpop.permute.xlu0 %3040
        %3042 = vrot.lane.b32.xlu0 %v2966, 32
        %v3043 = vpop.permute.xlu0 %3042
        %3044 = vrot.lane.b32.xlu0 %v2967, 32
        %v3045 = vpop.permute.xlu0 %3044
        %3046 = vrot.lane.b32.xlu0 %v2968, 32
        %v3047 = vpop.permute.xlu0 %3046
        %3048 = vrot.lane.b32.xlu0 %v2969, 32
        %v3049 = vpop.permute.xlu0 %3048
        %3050 = vrot.lane.b32.xlu0 %v2970, 32
        %v3051 = vpop.permute.xlu0 %3050
        %3052 = vrot.lane.b32.xlu0 %v2971, 32
        %v3053 = vpop.permute.xlu0 %3052
        %3054 = vrot.lane.b32.xlu0 %v2972, 32
        %v3055 = vpop.permute.xlu0 %3054
        %3056 = vrot.lane.b32.xlu0 %v2973, 32
        %v3057 = vpop.permute.xlu0 %3056
        %3058 = vrot.lane.b32.xlu0 %v2974, 32
        %v3059 = vpop.permute.xlu0 %3058
        %3060 = vrot.lane.b32.xlu0 %v2975, 32
        %v3061 = vpop.permute.xlu0 %3060
        %3062 = vrot.lane.b32.xlu0 %v2976, 32
        %v3063 = vpop.permute.xlu0 %3062
        %3064 = vrot.lane.b32.xlu0 %v2977, 32
        %v3065 = vpop.permute.xlu0 %3064
        %3066 = vrot.lane.b32.xlu0 %v2978, 32
        %v3067 = vpop.permute.xlu0 %3066
        %3068 = vrot.lane.b32.xlu0 %v2979, 32
        %v3069 = vpop.permute.xlu0 %3068
        %3070 = vrot.lane.b32.xlu0 %v2980, 32
        %v3071 = vpop.permute.xlu0 %3070
        %3072 = vrot.lane.b32.xlu0 %v2981, 32
        %v3073 = vpop.permute.xlu0 %3072
        %3074 = vrot.lane.b32.xlu0 %v2982, 32
        %v3075 = vpop.permute.xlu0 %3074
        %3076 = vrot.lane.b32.xlu0 %v2983, 32
        %v3077 = vpop.permute.xlu0 %3076
        %3078 = vrot.lane.b32.xlu0 %v2984, 32
        %v3079 = vpop.permute.xlu0 %3078
        %3080 = vrot.lane.b32.xlu0 %v2985, 32
        %v3081 = vpop.permute.xlu0 %3080
        %3082 = vrot.lane.b32.xlu0 %v2986, 32
        %v3083 = vpop.permute.xlu0 %3082
        %3084 = vrot.lane.b32.xlu0 %v2987, 32
        %v3085 = vpop.permute.xlu0 %3084
        %3086 = vrot.lane.b32.xlu0 %v2988, 32
        %v3087 = vpop.permute.xlu0 %3086
        %3088 = vrot.lane.b32.xlu0 %v2989, 32
        %v3089 = vpop.permute.xlu0 %3088
        %3126 = vrot.lane.b32.xlu0 %v2962, 64
        %v3127 = vpop.permute.xlu0 %3126
        %3128 = vrot.lane.b32.xlu0 %v2963, 64
        %v3129 = vpop.permute.xlu0 %3128
        %3130 = vrot.lane.b32.xlu0 %v2964, 64
        %v3131 = vpop.permute.xlu0 %3130
        %3132 = vrot.lane.b32.xlu0 %v2965, 64
        %v3133 = vpop.permute.xlu0 %3132
        %3134 = vrot.lane.b32.xlu0 %v2966, 64
        %v3135 = vpop.permute.xlu0 %3134
        %3136 = vrot.lane.b32.xlu0 %v2967, 64
        %v3137 = vpop.permute.xlu0 %3136
        %3138 = vrot.lane.b32.xlu0 %v2968, 64
        %v3139 = vpop.permute.xlu0 %3138
        %3140 = vrot.lane.b32.xlu0 %v2969, 64
        %v3141 = vpop.permute.xlu0 %3140
        %3142 = vrot.lane.b32.xlu0 %v2970, 64
        %v3143 = vpop.permute.xlu0 %3142
        %3144 = vrot.lane.b32.xlu0 %v2971, 64
        %v3145 = vpop.permute.xlu0 %3144
        %3146 = vrot.lane.b32.xlu0 %v2972, 64
        %v3147 = vpop.permute.xlu0 %3146
        %3148 = vrot.lane.b32.xlu0 %v2973, 64
        %v3149 = vpop.permute.xlu0 %3148
        %3150 = vrot.lane.b32.xlu0 %v2974, 64
        %v3151 = vpop.permute.xlu0 %3150
        %3152 = vrot.lane.b32.xlu0 %v2975, 64
        %v3153 = vpop.permute.xlu0 %3152
        %3154 = vrot.lane.b32.xlu0 %v2976, 64
        %v3155 = vpop.permute.xlu0 %3154
        %3156 = vrot.lane.b32.xlu0 %v2977, 64
        %v3157 = vpop.permute.xlu0 %3156
        %3158 = vrot.lane.b32.xlu0 %v2978, 64
        %v3159 = vpop.permute.xlu0 %3158
        %3160 = vrot.lane.b32.xlu0 %v2979, 64
        %v3161 = vpop.permute.xlu0 %3160
        %3162 = vrot.lane.b32.xlu0 %v2980, 64
        %v3163 = vpop.permute.xlu0 %3162
        %3164 = vrot.lane.b32.xlu0 %v2981, 64
        %v3165 = vpop.permute.xlu0 %3164
        %3166 = vrot.lane.b32.xlu0 %v2982, 64
        %v3167 = vpop.permute.xlu0 %3166
        %3168 = vrot.lane.b32.xlu0 %v2983, 64
        %v3169 = vpop.permute.xlu0 %3168
        %3170 = vrot.lane.b32.xlu0 %v2984, 64
        %v3171 = vpop.permute.xlu0 %3170
        %3172 = vrot.lane.b32.xlu0 %v2985, 64
        %v3173 = vpop.permute.xlu0 %3172
        %3174 = vrot.lane.b32.xlu0 %v2986, 64
        %v3175 = vpop.permute.xlu0 %3174
        %3176 = vrot.lane.b32.xlu0 %v2987, 64
        %v3177 = vpop.permute.xlu0 %3176
        %3178 = vrot.lane.b32.xlu0 %v2988, 64
        %v3179 = vpop.permute.xlu0 %3178
        %3180 = vrot.lane.b32.xlu0 %v2989, 64
        %v3181 = vpop.permute.xlu0 %3180
        %3182 = vrot.lane.b32.xlu0 %v2990, 64
        %v3183 = vpop.permute.xlu0 %3182
        %3184 = vrot.lane.b32.xlu0 %v2991, 64
        %v3185 = vpop.permute.xlu0 %3184
        %3186 = vrot.lane.b32.xlu0 %v2992, 64
        %v3187 = vpop.permute.xlu0 %3186
        %3188 = vrot.lane.b32.xlu0 %v2993, 64
        %v3189 = vpop.permute.xlu0 %3188
        %v3222 = vsel %vm450, %v2954, %v3027
        %v3223 = vsel %vm450, %v2955, %v3029
        %v3224 = vsel %vm450, %v2956, %v3031
        %v3225 = vsel %vm450, %v2957, %v3033
        %v3226 = vsel %vm450, %v2958, %v3035
        %v3227 = vsel %vm450, %v2959, %v3037
        %v3228 = vsel %vm450, %v2960, %v3039
        %v3229 = vsel %vm450, %v2961, %v3041
        %v3230 = vsel %vm450, %v2962, %v3043
        %v3231 = vsel %vm450, %v2963, %v3045
        %v3232 = vsel %vm450, %v2964, %v3047
        %v3233 = vsel %vm450, %v2965, %v3049
        %v3234 = vsel %vm450, %v2966, %v3051
        %v3235 = vsel %vm450, %v2967, %v3053
        %v3236 = vsel %vm450, %v2968, %v3055
        %v3237 = vsel %vm450, %v2969, %v3057
        %v3238 = vsel %vm450, %v2970, %v3059
        %v3239 = vsel %vm450, %v2971, %v3061
        %v3240 = vsel %vm450, %v2972, %v3063
        %v3241 = vsel %vm450, %v2973, %v3065
        %v3242 = vsel %vm450, %v2974, %v3067
        %v3243 = vsel %vm450, %v2975, %v3069
        %v3244 = vsel %vm450, %v2976, %v3071
        %v3245 = vsel %vm450, %v2977, %v3073
        %v3246 = vsel %vm450, %v2978, %v3075
        %v3247 = vsel %vm450, %v2979, %v3077
        %v3248 = vsel %vm450, %v2980, %v3079
        %v3249 = vsel %vm450, %v2981, %v3081
        %v3250 = vsel %vm450, %v2982, %v3083
        %v3251 = vsel %vm450, %v2983, %v3085
        %v3252 = vsel %vm450, %v2984, %v3087
        %v3253 = vsel %vm450, %v2985, %v3089
        %v3254 = vsel %vm1053, %v3222, %v3127
        %v3255 = vsel %vm1053, %v3223, %v3129
        %v3256 = vsel %vm1053, %v3224, %v3131
        %v3257 = vsel %vm1053, %v3225, %v3133
        %v3258 = vsel %vm1053, %v3226, %v3135
        %v3259 = vsel %vm1053, %v3227, %v3137
        %v3260 = vsel %vm1053, %v3228, %v3139
        %v3261 = vsel %vm1053, %v3229, %v3141
        %v3262 = vsel %vm1053, %v3230, %v3143
        %v3263 = vsel %vm1053, %v3231, %v3145
        %v3264 = vsel %vm1053, %v3232, %v3147
        %v3265 = vsel %vm1053, %v3233, %v3149
        %v3266 = vsel %vm1053, %v3234, %v3151
        %v3267 = vsel %vm1053, %v3235, %v3153
        %v3268 = vsel %vm1053, %v3236, %v3155
        %v3269 = vsel %vm1053, %v3237, %v3157
        %v3270 = vsel %vm1053, %v3238, %v3159
        %v3271 = vsel %vm1053, %v3239, %v3161
        %v3272 = vsel %vm1053, %v3240, %v3163
        %v3273 = vsel %vm1053, %v3241, %v3165
        %v3274 = vsel %vm1053, %v3242, %v3167
        %v3275 = vsel %vm1053, %v3243, %v3169
        %v3276 = vsel %vm1053, %v3244, %v3171
        %v3277 = vsel %vm1053, %v3245, %v3173
        %v3278 = vsel %vm1053, %v3246, %v3175
        %v3279 = vsel %vm1053, %v3247, %v3177
        %v3280 = vsel %vm1053, %v3248, %v3179
        %v3281 = vsel %vm1053, %v3249, %v3181
        %v3282 = vsel %vm1053, %v3250, %v3183
        %v3283 = vsel %vm1053, %v3251, %v3185
        %v3284 = vsel %vm1053, %v3252, %v3187
        %v3285 = vsel %vm1053, %v3253, %v3189
        %v3286 = vpack.c.bf16 %v3255, %v3254
        %v3287 = vpack.c.bf16 %v3257, %v3256
        %v3288 = vpack.c.bf16 %v3259, %v3258
        %v3289 = vpack.c.bf16 %v3261, %v3260
        %v3290 = vpack.c.bf16 %v3263, %v3262
        %v3291 = vpack.c.bf16 %v3265, %v3264
        %v3292 = vpack.c.bf16 %v3267, %v3266
        %v3293 = vpack.c.bf16 %v3269, %v3268
        %v3294 = vpack.c.bf16 %v3271, %v3270
        %v3295 = vpack.c.bf16 %v3273, %v3272
        %v3296 = vpack.c.bf16 %v3275, %v3274
        %v3297 = vpack.c.bf16 %v3277, %v3276
        %v3298 = vpack.c.bf16 %v3279, %v3278
        %v3299 = vpack.c.bf16 %v3281, %v3280
        %v3300 = vpack.c.bf16 %v3283, %v3282
        %v3301 = vpack.c.bf16 %v3285, %v3284
        %s3302 = scalar_lea.vmem [#allocation9], 192
        %v3303 = vld [vmem:[%s3302] sm:$0xf]
        %v3304 = vld [vmem:[%s3302 + $0x4] sm:$0xf]
        %v3305 = vld [vmem:[%s3302 + $0x8] sm:$0xf]
        %v3306 = vld [vmem:[%s3302 + $0xc] sm:$0xf]
        %v3307 = vld [vmem:[%s3302 + $0x10] sm:$0xf]
        %v3308 = vld [vmem:[%s3302 + $0x14] sm:$0xf]
        %v3309 = vld [vmem:[%s3302 + $0x18] sm:$0xf]
        %v3310 = vld [vmem:[%s3302 + $0x1c] sm:$0xf]
        %v3311 = vld [vmem:[%s3302 + $0x20] sm:$0xf]
        %v3312 = vld [vmem:[%s3302 + $0x24] sm:$0xf]
        %v3313 = vld [vmem:[%s3302 + $0x28] sm:$0xf]
        %v3314 = vld [vmem:[%s3302 + $0x2c] sm:$0xf]
        %v3327 = vunpack.c.l.b16 %v3303
        %v3328 = vunpack.c.l.b16 %v3304
        %v3329 = vunpack.c.l.b16 %v3305
        %v3330 = vunpack.c.l.b16 %v3306
        %v3331 = vunpack.c.l.b16 %v3307
        %v3332 = vunpack.c.l.b16 %v3308
        %v3333 = vunpack.c.l.b16 %v3309
        %v3334 = vunpack.c.l.b16 %v3310
        %v3335 = vunpack.c.l.b16 %v3311
        %v3336 = vunpack.c.l.b16 %v3312
        %v3337 = vunpack.c.l.b16 %v3313
        %v3338 = vunpack.c.l.b16 %v3314
        %v3339 = vpack.c.b16 %v3328, %v3327
        %v3340 = vpack.c.b16 %v3330, %v3329
        %v3341 = vpack.c.b16 %v3332, %v3331
        %v3342 = vpack.c.b16 %v3334, %v3333
        %v3343 = vpack.c.b16 %v3336, %v3335
        %v3344 = vpack.c.b16 %v3338, %v3337
        %v3352 = vsel %vm1505, %v3286, 0
        %v3355 = vsel %vm1505, %v3287, 0
        %v3358 = vsel %vm1505, %v3288, 0
        %v3361 = vsel %vm1505, %v3289, 0
        %v3364 = vsel %vm1505, %v3290, 0
        %v3367 = vsel %vm1505, %v3291, 0
        %v3370 = vsel %vm1505, %v3292, 0
        %v3373 = vsel %vm1505, %v3293, 0
        %v3376 = vsel %vm1505, %v3294, 0
        %v3379 = vsel %vm1505, %v3295, 0
        %v3382 = vsel %vm1505, %v3296, 0
        %v3385 = vsel %vm1505, %v3297, 0
        %v3388 = vsel %vm1505, %v3298, 0
        %v3391 = vsel %vm1505, %v3299, 0
        %v3394 = vsel %vm1505, %v3300, 0
        %v3397 = vsel %vm1505, %v3301, 0
        %3399 = vmatprep.subr.bf16.mxu0 0
        %3400 = vmatpush1.bf16.msra.mxu0 %v3339
        %3401 = vmatprep.subr.bf16.mxu0 0
        %3402 = vmatpush1.bf16.msra.mxu0 %v3340
        %3403 = vmatprep.subr.bf16.mxu0 0
        %3404 = vmatpush1.bf16.msra.mxu0 %v3341
        %3405 = vmatprep.subr.bf16.mxu0 0
        %3406 = vmatpush1.bf16.msra.mxu0 %v3342
        %3407 = vmatprep.subr.bf16.mxu0 0
        %3408 = vmatpush1.bf16.msra.mxu0 %v3343
        %3409 = vmatprep.subr.bf16.mxu0 0
        %3410 = vmatpush1.bf16.msra.mxu0 %v3344
        %3411 = vmatprep.subr.bf16.mxu0 0
        %3412 = vmatpush1.bf16.msra.mxu0 0
        %3413 = vmatprep.subr.bf16.mxu0 0
        %3414 = vmatpush1.bf16.msra.mxu0 0
        %3415 = vmatprep.subr.bf16.mxu0 0
        %3416 = vmatpush1.bf16.msra.mxu0 0
        %3417 = vmatprep.subr.bf16.mxu0 0
        %3418 = vmatpush1.bf16.msra.mxu0 0
        %3419 = vmatprep.subr.bf16.mxu0 0
        %3420 = vmatpush1.bf16.msra.mxu0 0
        %3421 = vmatprep.subr.bf16.mxu0 0
        %3422 = vmatpush1.bf16.msra.mxu0 0
        %3423 = vmatprep.subr.bf16.mxu0 0
        %3424 = vmatpush1.bf16.msra.mxu0 0
        %3425 = vmatprep.subr.bf16.mxu0 0
        %3426 = vmatpush1.bf16.msra.mxu0 0
        %3427 = vmatprep.subr.bf16.mxu0 0
        %3428 = vmatpush1.bf16.msra.mxu0 0
        %3429 = vmatprep.subr.bf16.mxu0 0
        %3430 = vmatpush1.bf16.msra.mxu0 0
        %3431 = vmatprep.mubr.bf16.mxu0 0
        %3432 = vmatmul.mubr.bf16.gmra.mrb[0].mxu0 %v3352
        %v3433 = vpop.f32.mrb[0].mxu0
        %v3434 = vadd.f32 0.0, %v3433
        %v3435 = vpop.f32.mrb[0].mxu0
        %v3436 = vpop.f32.mrb[0].mxu0
        %v3437 = vadd.f32 0.0, %v3436
        %v3438 = vpop.f32.mrb[0].mxu0
        %3439 = vmatprep.mubr.bf16.mxu0 0
        %3440 = vmatmul.mubr.bf16.gmra.mrb[0].mxu0 %v3355
        %v3441 = vpop.f32.mrb[0].mxu0
        %v3442 = vadd.f32 0.0, %v3441
        %v3443 = vpop.f32.mrb[0].mxu0
        %v3444 = vpop.f32.mrb[0].mxu0
        %v3445 = vadd.f32 0.0, %v3444
        %v3446 = vpop.f32.mrb[0].mxu0
        %3447 = vmatprep.mubr.bf16.mxu0 0
        %3448 = vmatmul.mubr.bf16.gmra.mrb[0].mxu0 %v3358
        %v3449 = vpop.f32.mrb[0].mxu0
        %v3450 = vadd.f32 0.0, %v3449
        %v3451 = vpop.f32.mrb[0].mxu0
        %v3452 = vpop.f32.mrb[0].mxu0
        %v3453 = vadd.f32 0.0, %v3452
        %v3454 = vpop.f32.mrb[0].mxu0
        %3455 = vmatprep.mubr.bf16.mxu0 0
        %3456 = vmatmul.mubr.bf16.gmra.mrb[0].mxu0 %v3361
        %v3457 = vpop.f32.mrb[0].mxu0
        %v3458 = vadd.f32 0.0, %v3457
        %v3459 = vpop.f32.mrb[0].mxu0
        %v3460 = vpop.f32.mrb[0].mxu0
        %v3461 = vadd.f32 0.0, %v3460
        %v3462 = vpop.f32.mrb[0].mxu0
        %3463 = vmatprep.mubr.bf16.mxu0 0
        %3464 = vmatmul.mubr.bf16.gmra.mrb[0].mxu0 %v3364
        %v3465 = vpop.f32.mrb[0].mxu0
        %v3466 = vadd.f32 0.0, %v3465
        %v3467 = vpop.f32.mrb[0].mxu0
        %v3468 = vpop.f32.mrb[0].mxu0
        %v3469 = vadd.f32 0.0, %v3468
        %v3470 = vpop.f32.mrb[0].mxu0
        %3471 = vmatprep.mubr.bf16.mxu0 0
        %3472 = vmatmul.mubr.bf16.gmra.mrb[0].mxu0 %v3367
        %v3473 = vpop.f32.mrb[0].mxu0
        %v3474 = vadd.f32 0.0, %v3473
        %v3475 = vpop.f32.mrb[0].mxu0
        %v3476 = vpop.f32.mrb[0].mxu0
        %v3477 = vadd.f32 0.0, %v3476
        %v3478 = vpop.f32.mrb[0].mxu0
        %3479 = vmatprep.mubr.bf16.mxu0 0
        %3480 = vmatmul.mubr.bf16.gmra.mrb[0].mxu0 %v3370
        %v3481 = vpop.f32.mrb[0].mxu0
        %v3482 = vadd.f32 0.0, %v3481
        %v3483 = vpop.f32.mrb[0].mxu0
        %v3484 = vpop.f32.mrb[0].mxu0
        %v3485 = vadd.f32 0.0, %v3484
        %v3486 = vpop.f32.mrb[0].mxu0
        %3487 = vmatprep.mubr.bf16.mxu0 0
        %3488 = vmatmul.mubr.bf16.gmra.mrb[0].mxu0 %v3373
        %v3489 = vpop.f32.mrb[0].mxu0
        %v3490 = vadd.f32 0.0, %v3489
        %v3491 = vpop.f32.mrb[0].mxu0
        %v3492 = vpop.f32.mrb[0].mxu0
        %v3493 = vadd.f32 0.0, %v3492
        %v3494 = vpop.f32.mrb[0].mxu0
        %3495 = vmatprep.mubr.bf16.mxu0 0
        %3496 = vmatmul.mubr.bf16.gmra.mrb[0].mxu0 %v3376
        %v3497 = vpop.f32.mrb[0].mxu0
        %v3498 = vadd.f32 0.0, %v3497
        %v3499 = vpop.f32.mrb[0].mxu0
        %v3500 = vpop.f32.mrb[0].mxu0
        %v3501 = vadd.f32 0.0, %v3500
        %v3502 = vpop.f32.mrb[0].mxu0
        %3503 = vmatprep.mubr.bf16.mxu0 0
        %3504 = vmatmul.mubr.bf16.gmra.mrb[0].mxu0 %v3379
        %v3505 = vpop.f32.mrb[0].mxu0
        %v3506 = vadd.f32 0.0, %v3505
        %v3507 = vpop.f32.mrb[0].mxu0
        %v3508 = vpop.f32.mrb[0].mxu0
        %v3509 = vadd.f32 0.0, %v3508
        %v3510 = vpop.f32.mrb[0].mxu0
        %3511 = vmatprep.mubr.bf16.mxu0 0
        %3512 = vmatmul.mubr.bf16.gmra.mrb[0].mxu0 %v3382
        %v3513 = vpop.f32.mrb[0].mxu0
        %v3514 = vadd.f32 0.0, %v3513
        %v3515 = vpop.f32.mrb[0].mxu0
        %v3516 = vpop.f32.mrb[0].mxu0
        %v3517 = vadd.f32 0.0, %v3516
        %v3518 = vpop.f32.mrb[0].mxu0
        %3519 = vmatprep.mubr.bf16.mxu0 0
        %3520 = vmatmul.mubr.bf16.gmra.mrb[0].mxu0 %v3385
        %v3521 = vpop.f32.mrb[0].mxu0
        %v3522 = vadd.f32 0.0, %v3521
        %v3523 = vpop.f32.mrb[0].mxu0
        %v3524 = vpop.f32.mrb[0].mxu0
        %v3525 = vadd.f32 0.0, %v3524
        %v3526 = vpop.f32.mrb[0].mxu0
        %3527 = vmatprep.mubr.bf16.mxu0 0
        %3528 = vmatmul.mubr.bf16.gmra.mrb[0].mxu0 %v3388
        %v3529 = vpop.f32.mrb[0].mxu0
        %v3530 = vadd.f32 0.0, %v3529
        %v3531 = vpop.f32.mrb[0].mxu0
        %v3532 = vpop.f32.mrb[0].mxu0
        %v3533 = vadd.f32 0.0, %v3532
        %v3534 = vpop.f32.mrb[0].mxu0
        %3535 = vmatprep.mubr.bf16.mxu0 0
        %3536 = vmatmul.mubr.bf16.gmra.mrb[0].mxu0 %v3391
        %v3537 = vpop.f32.mrb[0].mxu0
        %v3538 = vadd.f32 0.0, %v3537
        %v3539 = vpop.f32.mrb[0].mxu0
        %v3540 = vpop.f32.mrb[0].mxu0
        %v3541 = vadd.f32 0.0, %v3540
        %v3542 = vpop.f32.mrb[0].mxu0
        %3543 = vmatprep.mubr.bf16.mxu0 0
        %3544 = vmatmul.mubr.bf16.gmra.mrb[0].mxu0 %v3394
        %v3545 = vpop.f32.mrb[0].mxu0
        %v3546 = vadd.f32 0.0, %v3545
        %v3547 = vpop.f32.mrb[0].mxu0
        %v3548 = vpop.f32.mrb[0].mxu0
        %v3549 = vadd.f32 0.0, %v3548
        %v3550 = vpop.f32.mrb[0].mxu0
        %3551 = vmatprep.mubr.bf16.mxu0 0
        %3552 = vmatmul.mubr.bf16.gmra.mrb[0].mxu0 %v3397
        %v3553 = vpop.f32.mrb[0].mxu0
        %v3554 = vadd.f32 0.0, %v3553
        %v3555 = vpop.f32.mrb[0].mxu0
        %v3556 = vpop.f32.mrb[0].mxu0
        %v3557 = vadd.f32 0.0, %v3556
        %v3558 = vpop.f32.mrb[0].mxu0
        %3559 = vdwg.mxu0
        %v3572 = vunpack.c.l.b16 %v2942
        %v3573 = vunpack.c.l.b16 %v2943
        %v3574 = vunpack.c.l.b16 %v2944
        %v3575 = vunpack.c.l.b16 %v2945
        %v3576 = vunpack.c.l.b16 %v2946
        %v3577 = vunpack.c.l.b16 %v2947
        %v3578 = vunpack.c.l.b16 %v2948
        %v3579 = vunpack.c.l.b16 %v2949
        %v3580 = vunpack.c.l.b16 %v2950
        %v3581 = vunpack.c.l.b16 %v2951
        %v3582 = vunpack.c.l.b16 %v2952
        %v3583 = vunpack.c.l.b16 %v2953
        %v3584 = vpack.c.b16 %v3573, %v3572
        %v3585 = vpack.c.b16 %v3575, %v3574
        %v3586 = vpack.c.b16 %v3577, %v3576
        %v3587 = vpack.c.b16 %v3579, %v3578
        %v3588 = vpack.c.b16 %v3581, %v3580
        %v3589 = vpack.c.b16 %v3583, %v3582
        %v3597 = vsel %vm1505, %v2925, 0
        %v3600 = vsel %vm1505, %v2926, 0
        %v3603 = vsel %vm1505, %v2927, 0
        %v3606 = vsel %vm1505, %v2928, 0
        %v3609 = vsel %vm1505, %v2929, 0
        %v3612 = vsel %vm1505, %v2930, 0
        %v3615 = vsel %vm1505, %v2931, 0
        %v3618 = vsel %vm1505, %v2932, 0
        %v3621 = vsel %vm1505, %v2933, 0
        %v3624 = vsel %vm1505, %v2934, 0
        %v3627 = vsel %vm1505, %v2935, 0
        %v3630 = vsel %vm1505, %v2936, 0
        %v3633 = vsel %vm1505, %v2937, 0
        %v3636 = vsel %vm1505, %v2938, 0
        %v3639 = vsel %vm1505, %v2939, 0
        %v3642 = vsel %vm1505, %v2940, 0
        %3644 = vmatprep.subr.bf16.mxu0 0
        %3645 = vmatpush1.bf16.msra.mxu0 %v3584
        %3646 = vmatprep.subr.bf16.mxu0 0
        %3647 = vmatpush1.bf16.msra.mxu0 %v3585
        %3648 = vmatprep.subr.bf16.mxu0 0
        %3649 = vmatpush1.bf16.msra.mxu0 %v3586
        %3650 = vmatprep.subr.bf16.mxu0 0
        %3651 = vmatpush1.bf16.msra.mxu0 %v3587
        %3652 = vmatprep.subr.bf16.mxu0 0
        %3653 = vmatpush1.bf16.msra.mxu0 %v3588
        %3654 = vmatprep.subr.bf16.mxu0 0
        %3655 = vmatpush1.bf16.msra.mxu0 %v3589
        %3656 = vmatprep.subr.bf16.mxu0 0
        %3657 = vmatpush1.bf16.msra.mxu0 0
        %3658 = vmatprep.subr.bf16.mxu0 0
        %3659 = vmatpush1.bf16.msra.mxu0 0
        %3660 = vmatprep.subr.bf16.mxu0 0
        %3661 = vmatpush1.bf16.msra.mxu0 0
        %3662 = vmatprep.subr.bf16.mxu0 0
        %3663 = vmatpush1.bf16.msra.mxu0 0
        %3664 = vmatprep.subr.bf16.mxu0 0
        %3665 = vmatpush1.bf16.msra.mxu0 0
        %3666 = vmatprep.subr.bf16.mxu0 0
        %3667 = vmatpush1.bf16.msra.mxu0 0
        %3668 = vmatprep.subr.bf16.mxu0 0
        %3669 = vmatpush1.bf16.msra.mxu0 0
        %3670 = vmatprep.subr.bf16.mxu0 0
        %3671 = vmatpush1.bf16.msra.mxu0 0
        %3672 = vmatprep.subr.bf16.mxu0 0
        %3673 = vmatpush1.bf16.msra.mxu0 0
        %3674 = vmatprep.subr.bf16.mxu0 0
        %3675 = vmatpush1.bf16.msra.mxu0 0
        %3676 = vmatprep.mubr.bf16.mxu0 0
        %3677 = vmatmul.mubr.bf16.gmra.mrb[0].mxu0 %v3597
        %v3678 = vpop.f32.mrb[0].mxu0
        %v3679 = vadd.f32 %v3434, %v3678
        %v3680 = vpop.f32.mrb[0].mxu0
        %v3681 = vpop.f32.mrb[0].mxu0
        %v3682 = vadd.f32 %v3437, %v3681
        %v3683 = vpop.f32.mrb[0].mxu0
        %3684 = vmatprep.mubr.bf16.mxu0 0
        %3685 = vmatmul.mubr.bf16.gmra.mrb[0].mxu0 %v3600
        %v3686 = vpop.f32.mrb[0].mxu0
        %v3687 = vadd.f32 %v3442, %v3686
        %v3688 = vpop.f32.mrb[0].mxu0
        %v3689 = vpop.f32.mrb[0].mxu0
        %v3690 = vadd.f32 %v3445, %v3689
        %v3691 = vpop.f32.mrb[0].mxu0
        %3692 = vmatprep.mubr.bf16.mxu0 0
        %3693 = vmatmul.mubr.bf16.gmra.mrb[0].mxu0 %v3603
        %v3694 = vpop.f32.mrb[0].mxu0
        %v3695 = vadd.f32 %v3450, %v3694
        %v3696 = vpop.f32.mrb[0].mxu0
        %v3697 = vpop.f32.mrb[0].mxu0
        %v3698 = vadd.f32 %v3453, %v3697
        %v3699 = vpop.f32.mrb[0].mxu0
        %3700 = vmatprep.mubr.bf16.mxu0 0
        %3701 = vmatmul.mubr.bf16.gmra.mrb[0].mxu0 %v3606
        %v3702 = vpop.f32.mrb[0].mxu0
        %v3703 = vadd.f32 %v3458, %v3702
        %v3704 = vpop.f32.mrb[0].mxu0
        %v3705 = vpop.f32.mrb[0].mxu0
        %v3706 = vadd.f32 %v3461, %v3705
        %v3707 = vpop.f32.mrb[0].mxu0
        %3708 = vmatprep.mubr.bf16.mxu0 0
        %3709 = vmatmul.mubr.bf16.gmra.mrb[0].mxu0 %v3609
        %v3710 = vpop.f32.mrb[0].mxu0
        %v3711 = vadd.f32 %v3466, %v3710
        %v3712 = vpop.f32.mrb[0].mxu0
        %v3713 = vpop.f32.mrb[0].mxu0
        %v3714 = vadd.f32 %v3469, %v3713
        %v3715 = vpop.f32.mrb[0].mxu0
        %3716 = vmatprep.mubr.bf16.mxu0 0
        %3717 = vmatmul.mubr.bf16.gmra.mrb[0].mxu0 %v3612
        %v3718 = vpop.f32.mrb[0].mxu0
        %v3719 = vadd.f32 %v3474, %v3718
        %v3720 = vpop.f32.mrb[0].mxu0
        %v3721 = vpop.f32.mrb[0].mxu0
        %v3722 = vadd.f32 %v3477, %v3721
        %v3723 = vpop.f32.mrb[0].mxu0
        %3724 = vmatprep.mubr.bf16.mxu0 0
        %3725 = vmatmul.mubr.bf16.gmra.mrb[0].mxu0 %v3615
        %v3726 = vpop.f32.mrb[0].mxu0
        %v3727 = vadd.f32 %v3482, %v3726
        %v3728 = vpop.f32.mrb[0].mxu0
        %v3729 = vpop.f32.mrb[0].mxu0
        %v3730 = vadd.f32 %v3485, %v3729
        %v3731 = vpop.f32.mrb[0].mxu0
        %3732 = vmatprep.mubr.bf16.mxu0 0
        %3733 = vmatmul.mubr.bf16.gmra.mrb[0].mxu0 %v3618
        %v3734 = vpop.f32.mrb[0].mxu0
        %v3735 = vadd.f32 %v3490, %v3734
        %v3736 = vpop.f32.mrb[0].mxu0
        %v3737 = vpop.f32.mrb[0].mxu0
        %v3738 = vadd.f32 %v3493, %v3737
        %v3739 = vpop.f32.mrb[0].mxu0
        %3740 = vmatprep.mubr.bf16.mxu0 0
        %3741 = vmatmul.mubr.bf16.gmra.mrb[0].mxu0 %v3621
        %v3742 = vpop.f32.mrb[0].mxu0
        %v3743 = vadd.f32 %v3498, %v3742
        %v3744 = vpop.f32.mrb[0].mxu0
        %v3745 = vpop.f32.mrb[0].mxu0
        %v3746 = vadd.f32 %v3501, %v3745
        %v3747 = vpop.f32.mrb[0].mxu0
        %3748 = vmatprep.mubr.bf16.mxu0 0
        %3749 = vmatmul.mubr.bf16.gmra.mrb[0].mxu0 %v3624
        %v3750 = vpop.f32.mrb[0].mxu0
        %v3751 = vadd.f32 %v3506, %v3750
        %v3752 = vpop.f32.mrb[0].mxu0
        %v3753 = vpop.f32.mrb[0].mxu0
        %v3754 = vadd.f32 %v3509, %v3753
        %v3755 = vpop.f32.mrb[0].mxu0
        %3756 = vmatprep.mubr.bf16.mxu0 0
        %3757 = vmatmul.mubr.bf16.gmra.mrb[0].mxu0 %v3627
        %v3758 = vpop.f32.mrb[0].mxu0
        %v3759 = vadd.f32 %v3514, %v3758
        %v3760 = vpop.f32.mrb[0].mxu0
        %v3761 = vpop.f32.mrb[0].mxu0
        %v3762 = vadd.f32 %v3517, %v3761
        %v3763 = vpop.f32.mrb[0].mxu0
        %3764 = vmatprep.mubr.bf16.mxu0 0
        %3765 = vmatmul.mubr.bf16.gmra.mrb[0].mxu0 %v3630
        %v3766 = vpop.f32.mrb[0].mxu0
        %v3767 = vadd.f32 %v3522, %v3766
        %v3768 = vpop.f32.mrb[0].mxu0
        %v3769 = vpop.f32.mrb[0].mxu0
        %v3770 = vadd.f32 %v3525, %v3769
        %v3771 = vpop.f32.mrb[0].mxu0
        %3772 = vmatprep.mubr.bf16.mxu0 0
        %3773 = vmatmul.mubr.bf16.gmra.mrb[0].mxu0 %v3633
        %v3774 = vpop.f32.mrb[0].mxu0
        %v3775 = vadd.f32 %v3530, %v3774
        %v3776 = vpop.f32.mrb[0].mxu0
        %v3777 = vpop.f32.mrb[0].mxu0
        %v3778 = vadd.f32 %v3533, %v3777
        %v3779 = vpop.f32.mrb[0].mxu0
        %3780 = vmatprep.mubr.bf16.mxu0 0
        %3781 = vmatmul.mubr.bf16.gmra.mrb[0].mxu0 %v3636
        %v3782 = vpop.f32.mrb[0].mxu0
        %v3783 = vadd.f32 %v3538, %v3782
        %v3784 = vpop.f32.mrb[0].mxu0
        %v3785 = vpop.f32.mrb[0].mxu0
        %v3786 = vadd.f32 %v3541, %v3785
        %v3787 = vpop.f32.mrb[0].mxu0
        %3788 = vmatprep.mubr.bf16.mxu0 0
        %3789 = vmatmul.mubr.bf16.gmra.mrb[0].mxu0 %v3639
        %v3790 = vpop.f32.mrb[0].mxu0
        %v3791 = vadd.f32 %v3546, %v3790
        %v3792 = vpop.f32.mrb[0].mxu0
        %v3793 = vpop.f32.mrb[0].mxu0
        %v3794 = vadd.f32 %v3549, %v3793
        %v3795 = vpop.f32.mrb[0].mxu0
        %3796 = vmatprep.mubr.bf16.mxu0 0
        %3797 = vmatmul.mubr.bf16.gmra.mrb[0].mxu0 %v3642
        %v3798 = vpop.f32.mrb[0].mxu0
        %v3799 = vadd.f32 %v3554, %v3798
        %v3800 = vpop.f32.mrb[0].mxu0
        %v3801 = vpop.f32.mrb[0].mxu0
        %v3802 = vadd.f32 %v3557, %v3801
        %v3803 = vpop.f32.mrb[0].mxu0
        %3804 = vdwg.mxu0
        %v3805 = vld [vmem:[%s2592 + $0xa] sm:$0xff]
        %v3806 = vld [vmem:[%s2592 + $0x12] sm:$0xff]
        %v3807 = vld [vmem:[%s2592 + $0x2a] sm:$0xff]
        %v3808 = vld [vmem:[%s2592 + $0x32] sm:$0xff]
        %v3809 = vld [vmem:[%s2592 + $0x4a] sm:$0xff]
        %v3810 = vld [vmem:[%s2592 + $0x52] sm:$0xff]
        %v3811 = vld [vmem:[%s2592 + $0x6a] sm:$0xff]
        %v3812 = vld [vmem:[%s2592 + $0x72] sm:$0xff]
        %v3813 = vld [vmem:[%s2592 + $0x8a] sm:$0xff]
        %v3814 = vld [vmem:[%s2592 + $0x92] sm:$0xff]
        %v3815 = vld [vmem:[%s2592 + $0xaa] sm:$0xff]
        %v3816 = vld [vmem:[%s2592 + $0xb2] sm:$0xff]
        %v3817 = vld [vmem:[%s2592 + $0xca] sm:$0xff]
        %v3818 = vld [vmem:[%s2592 + $0xd2] sm:$0xff]
        %v3819 = vld [vmem:[%s2592 + $0xea] sm:$0xff]
        %v3820 = vld [vmem:[%s2592 + $0xf2] sm:$0xff]
        %v3821 = vld [vmem:[%s2592 + $0x10a] sm:$0xff]
        %v3822 = vld [vmem:[%s2592 + $0x112] sm:$0xff]
        %v3823 = vld [vmem:[%s2592 + $0x12a] sm:$0xff]
        %v3824 = vld [vmem:[%s2592 + $0x132] sm:$0xff]
        %v3825 = vld [vmem:[%s2592 + $0x14a] sm:$0xff]
        %v3826 = vld [vmem:[%s2592 + $0x152] sm:$0xff]
        %v3827 = vld [vmem:[%s2592 + $0x16a] sm:$0xff]
        %v3828 = vld [vmem:[%s2592 + $0x172] sm:$0xff]
        %v3829 = vld [vmem:[%s2592 + $0x18a] sm:$0xff]
        %v3830 = vld [vmem:[%s2592 + $0x192] sm:$0xff]
        %v3831 = vld [vmem:[%s2592 + $0x1aa] sm:$0xff]
        %v3832 = vld [vmem:[%s2592 + $0x1b2] sm:$0xff]
        %v3833 = vld [vmem:[%s2592 + $0x1ca] sm:$0xff]
        %v3834 = vld [vmem:[%s2592 + $0x1d2] sm:$0xff]
        %v3835 = vld [vmem:[%s2592 + $0x1ea] sm:$0xff]
        %v3836 = vld [vmem:[%s2592 + $0x1f2] sm:$0xff]
        %v3837 = vld [vmem:[%s2592 + $0x20a] sm:$0xff]
        %v3838 = vld [vmem:[%s2592 + $0x212] sm:$0xff]
        %v3839 = vld [vmem:[%s2592 + $0x22a] sm:$0xff]
        %v3840 = vld [vmem:[%s2592 + $0x232] sm:$0xff]
        %v3841 = vld [vmem:[%s2592 + $0x24a] sm:$0xff]
        %v3842 = vld [vmem:[%s2592 + $0x252] sm:$0xff]
        %v3843 = vld [vmem:[%s2592 + $0x26a] sm:$0xff]
        %v3844 = vld [vmem:[%s2592 + $0x272] sm:$0xff]
        %3877 = vrot.lane.b32.xlu0 %v3809, 32
        %v3878 = vpop.permute.xlu0 %3877
        %3879 = vrot.lane.b32.xlu0 %v3810, 32
        %v3880 = vpop.permute.xlu0 %3879
        %3881 = vrot.lane.b32.xlu0 %v3811, 32
        %v3882 = vpop.permute.xlu0 %3881
        %3883 = vrot.lane.b32.xlu0 %v3812, 32
        %v3884 = vpop.permute.xlu0 %3883
        %3885 = vrot.lane.b32.xlu0 %v3813, 32
        %v3886 = vpop.permute.xlu0 %3885
        %3887 = vrot.lane.b32.xlu0 %v3814, 32
        %v3888 = vpop.permute.xlu0 %3887
        %3889 = vrot.lane.b32.xlu0 %v3815, 32
        %v3890 = vpop.permute.xlu0 %3889
        %3891 = vrot.lane.b32.xlu0 %v3816, 32
        %v3892 = vpop.permute.xlu0 %3891
        %3893 = vrot.lane.b32.xlu0 %v3817, 32
        %v3894 = vpop.permute.xlu0 %3893
        %3895 = vrot.lane.b32.xlu0 %v3818, 32
        %v3896 = vpop.permute.xlu0 %3895
        %3897 = vrot.lane.b32.xlu0 %v3819, 32
        %v3898 = vpop.permute.xlu0 %3897
        %3899 = vrot.lane.b32.xlu0 %v3820, 32
        %v3900 = vpop.permute.xlu0 %3899
        %3901 = vrot.lane.b32.xlu0 %v3821, 32
        %v3902 = vpop.permute.xlu0 %3901
        %3903 = vrot.lane.b32.xlu0 %v3822, 32
        %v3904 = vpop.permute.xlu0 %3903
        %3905 = vrot.lane.b32.xlu0 %v3823, 32
        %v3906 = vpop.permute.xlu0 %3905
        %3907 = vrot.lane.b32.xlu0 %v3824, 32
        %v3908 = vpop.permute.xlu0 %3907
        %3909 = vrot.lane.b32.xlu0 %v3825, 32
        %v3910 = vpop.permute.xlu0 %3909
        %3911 = vrot.lane.b32.xlu0 %v3826, 32
        %v3912 = vpop.permute.xlu0 %3911
        %3913 = vrot.lane.b32.xlu0 %v3827, 32
        %v3914 = vpop.permute.xlu0 %3913
        %3915 = vrot.lane.b32.xlu0 %v3828, 32
        %v3916 = vpop.permute.xlu0 %3915
        %3917 = vrot.lane.b32.xlu0 %v3829, 32
        %v3918 = vpop.permute.xlu0 %3917
        %3919 = vrot.lane.b32.xlu0 %v3830, 32
        %v3920 = vpop.permute.xlu0 %3919
        %3921 = vrot.lane.b32.xlu0 %v3831, 32
        %v3922 = vpop.permute.xlu0 %3921
        %3923 = vrot.lane.b32.xlu0 %v3832, 32
        %v3924 = vpop.permute.xlu0 %3923
        %3925 = vrot.lane.b32.xlu0 %v3833, 32
        %v3926 = vpop.permute.xlu0 %3925
        %3927 = vrot.lane.b32.xlu0 %v3834, 32
        %v3928 = vpop.permute.xlu0 %3927
        %3929 = vrot.lane.b32.xlu0 %v3835, 32
        %v3930 = vpop.permute.xlu0 %3929
        %3931 = vrot.lane.b32.xlu0 %v3836, 32
        %v3932 = vpop.permute.xlu0 %3931
        %3933 = vrot.lane.b32.xlu0 %v3837, 32
        %v3934 = vpop.permute.xlu0 %3933
        %3935 = vrot.lane.b32.xlu0 %v3838, 32
        %v3936 = vpop.permute.xlu0 %3935
        %3937 = vrot.lane.b32.xlu0 %v3839, 32
        %v3938 = vpop.permute.xlu0 %3937
        %3939 = vrot.lane.b32.xlu0 %v3840, 32
        %v3940 = vpop.permute.xlu0 %3939
        %3977 = vrot.lane.b32.xlu0 %v3813, 64
        %v3978 = vpop.permute.xlu0 %3977
        %3979 = vrot.lane.b32.xlu0 %v3814, 64
        %v3980 = vpop.permute.xlu0 %3979
        %3981 = vrot.lane.b32.xlu0 %v3815, 64
        %v3982 = vpop.permute.xlu0 %3981
        %3983 = vrot.lane.b32.xlu0 %v3816, 64
        %v3984 = vpop.permute.xlu0 %3983
        %3985 = vrot.lane.b32.xlu0 %v3817, 64
        %v3986 = vpop.permute.xlu0 %3985
        %3987 = vrot.lane.b32.xlu0 %v3818, 64
        %v3988 = vpop.permute.xlu0 %3987
        %3989 = vrot.lane.b32.xlu0 %v3819, 64
        %v3990 = vpop.permute.xlu0 %3989
        %3991 = vrot.lane.b32.xlu0 %v3820, 64
        %v3992 = vpop.permute.xlu0 %3991
        %3993 = vrot.lane.b32.xlu0 %v3821, 64
        %v3994 = vpop.permute.xlu0 %3993
        %3995 = vrot.lane.b32.xlu0 %v3822, 64
        %v3996 = vpop.permute.xlu0 %3995
        %3997 = vrot.lane.b32.xlu0 %v3823, 64
        %v3998 = vpop.permute.xlu0 %3997
        %3999 = vrot.lane.b32.xlu0 %v3824, 64
        %v4000 = vpop.permute.xlu0 %3999
        %4001 = vrot.lane.b32.xlu0 %v3825, 64
        %v4002 = vpop.permute.xlu0 %4001
        %4003 = vrot.lane.b32.xlu0 %v3826, 64
        %v4004 = vpop.permute.xlu0 %4003
        %4005 = vrot.lane.b32.xlu0 %v3827, 64
        %v4006 = vpop.permute.xlu0 %4005
        %4007 = vrot.lane.b32.xlu0 %v3828, 64
        %v4008 = vpop.permute.xlu0 %4007
        %4009 = vrot.lane.b32.xlu0 %v3829, 64
        %v4010 = vpop.permute.xlu0 %4009
        %4011 = vrot.lane.b32.xlu0 %v3830, 64
        %v4012 = vpop.permute.xlu0 %4011
        %4013 = vrot.lane.b32.xlu0 %v3831, 64
        %v4014 = vpop.permute.xlu0 %4013
        %4015 = vrot.lane.b32.xlu0 %v3832, 64
        %v4016 = vpop.permute.xlu0 %4015
        %4017 = vrot.lane.b32.xlu0 %v3833, 64
        %v4018 = vpop.permute.xlu0 %4017
        %4019 = vrot.lane.b32.xlu0 %v3834, 64
        %v4020 = vpop.permute.xlu0 %4019
        %4021 = vrot.lane.b32.xlu0 %v3835, 64
        %v4022 = vpop.permute.xlu0 %4021
        %4023 = vrot.lane.b32.xlu0 %v3836, 64
        %v4024 = vpop.permute.xlu0 %4023
        %4025 = vrot.lane.b32.xlu0 %v3837, 64
        %v4026 = vpop.permute.xlu0 %4025
        %4027 = vrot.lane.b32.xlu0 %v3838, 64
        %v4028 = vpop.permute.xlu0 %4027
        %4029 = vrot.lane.b32.xlu0 %v3839, 64
        %v4030 = vpop.permute.xlu0 %4029
        %4031 = vrot.lane.b32.xlu0 %v3840, 64
        %v4032 = vpop.permute.xlu0 %4031
        %4033 = vrot.lane.b32.xlu0 %v3841, 64
        %v4034 = vpop.permute.xlu0 %4033
        %4035 = vrot.lane.b32.xlu0 %v3842, 64
        %v4036 = vpop.permute.xlu0 %4035
        %4037 = vrot.lane.b32.xlu0 %v3843, 64
        %v4038 = vpop.permute.xlu0 %4037
        %4039 = vrot.lane.b32.xlu0 %v3844, 64
        %v4040 = vpop.permute.xlu0 %4039
        %v4073 = vsel %vm450, %v3805, %v3878
        %v4074 = vsel %vm450, %v3806, %v3880
        %v4075 = vsel %vm450, %v3807, %v3882
        %v4076 = vsel %vm450, %v3808, %v3884
        %v4077 = vsel %vm450, %v3809, %v3886
        %v4078 = vsel %vm450, %v3810, %v3888
        %v4079 = vsel %vm450, %v3811, %v3890
        %v4080 = vsel %vm450, %v3812, %v3892
        %v4081 = vsel %vm450, %v3813, %v3894
        %v4082 = vsel %vm450, %v3814, %v3896
        %v4083 = vsel %vm450, %v3815, %v3898
        %v4084 = vsel %vm450, %v3816, %v3900
        %v4085 = vsel %vm450, %v3817, %v3902
        %v4086 = vsel %vm450, %v3818, %v3904
        %v4087 = vsel %vm450, %v3819, %v3906
        %v4088 = vsel %vm450, %v3820, %v3908
        %v4089 = vsel %vm450, %v3821, %v3910
        %v4090 = vsel %vm450, %v3822, %v3912
        %v4091 = vsel %vm450, %v3823, %v3914
        %v4092 = vsel %vm450, %v3824, %v3916
        %v4093 = vsel %vm450, %v3825, %v3918
        %v4094 = vsel %vm450, %v3826, %v3920
        %v4095 = vsel %vm450, %v3827, %v3922
        %v4096 = vsel %vm450, %v3828, %v3924
        %v4097 = vsel %vm450, %v3829, %v3926
        %v4098 = vsel %vm450, %v3830, %v3928
        %v4099 = vsel %vm450, %v3831, %v3930
        %v4100 = vsel %vm450, %v3832, %v3932
        %v4101 = vsel %vm450, %v3833, %v3934
        %v4102 = vsel %vm450, %v3834, %v3936
        %v4103 = vsel %vm450, %v3835, %v3938
        %v4104 = vsel %vm450, %v3836, %v3940
        %v4105 = vsel %vm1053, %v4073, %v3978
        %v4106 = vsel %vm1053, %v4074, %v3980
        %v4107 = vsel %vm1053, %v4075, %v3982
        %v4108 = vsel %vm1053, %v4076, %v3984
        %v4109 = vsel %vm1053, %v4077, %v3986
        %v4110 = vsel %vm1053, %v4078, %v3988
        %v4111 = vsel %vm1053, %v4079, %v3990
        %v4112 = vsel %vm1053, %v4080, %v3992
        %v4113 = vsel %vm1053, %v4081, %v3994
        %v4114 = vsel %vm1053, %v4082, %v3996
        %v4115 = vsel %vm1053, %v4083, %v3998
        %v4116 = vsel %vm1053, %v4084, %v4000
        %v4117 = vsel %vm1053, %v4085, %v4002
        %v4118 = vsel %vm1053, %v4086, %v4004
        %v4119 = vsel %vm1053, %v4087, %v4006
        %v4120 = vsel %vm1053, %v4088, %v4008
        %v4121 = vsel %vm1053, %v4089, %v4010
        %v4122 = vsel %vm1053, %v4090, %v4012
        %v4123 = vsel %vm1053, %v4091, %v4014
        %v4124 = vsel %vm1053, %v4092, %v4016
        %v4125 = vsel %vm1053, %v4093, %v4018
        %v4126 = vsel %vm1053, %v4094, %v4020
        %v4127 = vsel %vm1053, %v4095, %v4022
        %v4128 = vsel %vm1053, %v4096, %v4024
        %v4129 = vsel %vm1053, %v4097, %v4026
        %v4130 = vsel %vm1053, %v4098, %v4028
        %v4131 = vsel %vm1053, %v4099, %v4030
        %v4132 = vsel %vm1053, %v4100, %v4032
        %v4133 = vsel %vm1053, %v4101, %v4034
        %v4134 = vsel %vm1053, %v4102, %v4036
        %v4135 = vsel %vm1053, %v4103, %v4038
        %v4136 = vsel %vm1053, %v4104, %v4040
        %v4137 = vpack.c.bf16 %v4106, %v4105
        %v4138 = vpack.c.bf16 %v4108, %v4107
        %v4139 = vpack.c.bf16 %v4110, %v4109
        %v4140 = vpack.c.bf16 %v4112, %v4111
        %v4141 = vpack.c.bf16 %v4114, %v4113
        %v4142 = vpack.c.bf16 %v4116, %v4115
        %v4143 = vpack.c.bf16 %v4118, %v4117
        %v4144 = vpack.c.bf16 %v4120, %v4119
        %v4145 = vpack.c.bf16 %v4122, %v4121
        %v4146 = vpack.c.bf16 %v4124, %v4123
        %v4147 = vpack.c.bf16 %v4126, %v4125
        %v4148 = vpack.c.bf16 %v4128, %v4127
        %v4149 = vpack.c.bf16 %v4130, %v4129
        %v4150 = vpack.c.bf16 %v4132, %v4131
        %v4151 = vpack.c.bf16 %v4134, %v4133
        %v4152 = vpack.c.bf16 %v4136, %v4135
        %s4153 = scalar_lea.vmem [#allocation9], 240
        %v4154 = vld [vmem:[%s4153] sm:$0xf]
        %v4155 = vld [vmem:[%s4153 + $0x4] sm:$0xf]
        %v4156 = vld [vmem:[%s4153 + $0x8] sm:$0xf]
        %v4157 = vld [vmem:[%s4153 + $0xc] sm:$0xf]
        %v4158 = vld [vmem:[%s4153 + $0x10] sm:$0xf]
        %v4159 = vld [vmem:[%s4153 + $0x14] sm:$0xf]
        %v4160 = vld [vmem:[%s4153 + $0x18] sm:$0xf]
        %v4161 = vld [vmem:[%s4153 + $0x1c] sm:$0xf]
        %v4162 = vld [vmem:[%s4153 + $0x20] sm:$0xf]
        %v4163 = vld [vmem:[%s4153 + $0x24] sm:$0xf]
        %v4164 = vld [vmem:[%s4153 + $0x28] sm:$0xf]
        %v4165 = vld [vmem:[%s4153 + $0x2c] sm:$0xf]
        %v4178 = vunpack.c.l.b16 %v4154
        %v4179 = vunpack.c.l.b16 %v4155
        %v4180 = vunpack.c.l.b16 %v4156
        %v4181 = vunpack.c.l.b16 %v4157
        %v4182 = vunpack.c.l.b16 %v4158
        %v4183 = vunpack.c.l.b16 %v4159
        %v4184 = vunpack.c.l.b16 %v4160
        %v4185 = vunpack.c.l.b16 %v4161
        %v4186 = vunpack.c.l.b16 %v4162
        %v4187 = vunpack.c.l.b16 %v4163
        %v4188 = vunpack.c.l.b16 %v4164
        %v4189 = vunpack.c.l.b16 %v4165
        %v4190 = vpack.c.b16 %v4179, %v4178
        %v4191 = vpack.c.b16 %v4181, %v4180
        %v4192 = vpack.c.b16 %v4183, %v4182
        %v4193 = vpack.c.b16 %v4185, %v4184
        %v4194 = vpack.c.b16 %v4187, %v4186
        %v4195 = vpack.c.b16 %v4189, %v4188
        %v4203 = vsel %vm1505, %v4137, 0
        %v4206 = vsel %vm1505, %v4138, 0
        %v4209 = vsel %vm1505, %v4139, 0
        %v4212 = vsel %vm1505, %v4140, 0
        %v4215 = vsel %vm1505, %v4141, 0
        %v4218 = vsel %vm1505, %v4142, 0
        %v4221 = vsel %vm1505, %v4143, 0
        %v4224 = vsel %vm1505, %v4144, 0
        %v4227 = vsel %vm1505, %v4145, 0
        %v4230 = vsel %vm1505, %v4146, 0
        %v4233 = vsel %vm1505, %v4147, 0
        %v4236 = vsel %vm1505, %v4148, 0
        %v4239 = vsel %vm1505, %v4149, 0
        %v4242 = vsel %vm1505, %v4150, 0
        %v4245 = vsel %vm1505, %v4151, 0
        %v4248 = vsel %vm1505, %v4152, 0
        %4250 = vmatprep.subr.bf16.mxu0 0
        %4251 = vmatpush1.bf16.msra.mxu0 %v4190
        %4252 = vmatprep.subr.bf16.mxu0 0
        %4253 = vmatpush1.bf16.msra.mxu0 %v4191
        %4254 = vmatprep.subr.bf16.mxu0 0
        %4255 = vmatpush1.bf16.msra.mxu0 %v4192
        %4256 = vmatprep.subr.bf16.mxu0 0
        %4257 = vmatpush1.bf16.msra.mxu0 %v4193
        %4258 = vmatprep.subr.bf16.mxu0 0
        %4259 = vmatpush1.bf16.msra.mxu0 %v4194
        %4260 = vmatprep.subr.bf16.mxu0 0
        %4261 = vmatpush1.bf16.msra.mxu0 %v4195
        %4262 = vmatprep.subr.bf16.mxu0 0
        %4263 = vmatpush1.bf16.msra.mxu0 0
        %4264 = vmatprep.subr.bf16.mxu0 0
        %4265 = vmatpush1.bf16.msra.mxu0 0
        %4266 = vmatprep.subr.bf16.mxu0 0
        %4267 = vmatpush1.bf16.msra.mxu0 0
        %4268 = vmatprep.subr.bf16.mxu0 0
        %4269 = vmatpush1.bf16.msra.mxu0 0
        %4270 = vmatprep.subr.bf16.mxu0 0
        %4271 = vmatpush1.bf16.msra.mxu0 0
        %4272 = vmatprep.subr.bf16.mxu0 0
        %4273 = vmatpush1.bf16.msra.mxu0 0
        %4274 = vmatprep.subr.bf16.mxu0 0
        %4275 = vmatpush1.bf16.msra.mxu0 0
        %4276 = vmatprep.subr.bf16.mxu0 0
        %4277 = vmatpush1.bf16.msra.mxu0 0
        %4278 = vmatprep.subr.bf16.mxu0 0
        %4279 = vmatpush1.bf16.msra.mxu0 0
        %4280 = vmatprep.subr.bf16.mxu0 0
        %4281 = vmatpush1.bf16.msra.mxu0 0
        %4282 = vmatprep.mubr.bf16.mxu0 0
        %4283 = vmatmul.mubr.bf16.gmra.mrb[0].mxu0 %v4203
        %v4284 = vpop.f32.mrb[0].mxu0
        %v4285 = vadd.f32 0.0, %v4284
        %v4286 = vpop.f32.mrb[0].mxu0
        %v4287 = vpop.f32.mrb[0].mxu0
        %v4288 = vadd.f32 0.0, %v4287
        %v4289 = vpop.f32.mrb[0].mxu0
        %4290 = vmatprep.mubr.bf16.mxu0 0
        %4291 = vmatmul.mubr.bf16.gmra.mrb[0].mxu0 %v4206
        %v4292 = vpop.f32.mrb[0].mxu0
        %v4293 = vadd.f32 0.0, %v4292
        %v4294 = vpop.f32.mrb[0].mxu0
        %v4295 = vpop.f32.mrb[0].mxu0
        %v4296 = vadd.f32 0.0, %v4295
        %v4297 = vpop.f32.mrb[0].mxu0
        %4298 = vmatprep.mubr.bf16.mxu0 0
        %4299 = vmatmul.mubr.bf16.gmra.mrb[0].mxu0 %v4209
        %v4300 = vpop.f32.mrb[0].mxu0
        %v4301 = vadd.f32 0.0, %v4300
        %v4302 = vpop.f32.mrb[0].mxu0
        %v4303 = vpop.f32.mrb[0].mxu0
        %v4304 = vadd.f32 0.0, %v4303
        %v4305 = vpop.f32.mrb[0].mxu0
        %4306 = vmatprep.mubr.bf16.mxu0 0
        %4307 = vmatmul.mubr.bf16.gmra.mrb[0].mxu0 %v4212
        %v4308 = vpop.f32.mrb[0].mxu0
        %v4309 = vadd.f32 0.0, %v4308
        %v4310 = vpop.f32.mrb[0].mxu0
        %v4311 = vpop.f32.mrb[0].mxu0
        %v4312 = vadd.f32 0.0, %v4311
        %v4313 = vpop.f32.mrb[0].mxu0
        %4314 = vmatprep.mubr.bf16.mxu0 0
        %4315 = vmatmul.mubr.bf16.gmra.mrb[0].mxu0 %v4215
        %v4316 = vpop.f32.mrb[0].mxu0
        %v4317 = vadd.f32 0.0, %v4316
        %v4318 = vpop.f32.mrb[0].mxu0
        %v4319 = vpop.f32.mrb[0].mxu0
        %v4320 = vadd.f32 0.0, %v4319
        %v4321 = vpop.f32.mrb[0].mxu0
        %4322 = vmatprep.mubr.bf16.mxu0 0
        %4323 = vmatmul.mubr.bf16.gmra.mrb[0].mxu0 %v4218
        %v4324 = vpop.f32.mrb[0].mxu0
        %v4325 = vadd.f32 0.0, %v4324
        %v4326 = vpop.f32.mrb[0].mxu0
        %v4327 = vpop.f32.mrb[0].mxu0
        %v4328 = vadd.f32 0.0, %v4327
        %v4329 = vpop.f32.mrb[0].mxu0
        %4330 = vmatprep.mubr.bf16.mxu0 0
        %4331 = vmatmul.mubr.bf16.gmra.mrb[0].mxu0 %v4221
        %v4332 = vpop.f32.mrb[0].mxu0
        %v4333 = vadd.f32 0.0, %v4332
        %v4334 = vpop.f32.mrb[0].mxu0
        %v4335 = vpop.f32.mrb[0].mxu0
        %v4336 = vadd.f32 0.0, %v4335
        %v4337 = vpop.f32.mrb[0].mxu0
        %4338 = vmatprep.mubr.bf16.mxu0 0
        %4339 = vmatmul.mubr.bf16.gmra.mrb[0].mxu0 %v4224
        %v4340 = vpop.f32.mrb[0].mxu0
        %v4341 = vadd.f32 0.0, %v4340
        %v4342 = vpop.f32.mrb[0].mxu0
        %v4343 = vpop.f32.mrb[0].mxu0
        %v4344 = vadd.f32 0.0, %v4343
        %v4345 = vpop.f32.mrb[0].mxu0
        %4346 = vmatprep.mubr.bf16.mxu0 0
        %4347 = vmatmul.mubr.bf16.gmra.mrb[0].mxu0 %v4227
        %v4348 = vpop.f32.mrb[0].mxu0
        %v4349 = vadd.f32 0.0, %v4348
        %v4350 = vpop.f32.mrb[0].mxu0
        %v4351 = vpop.f32.mrb[0].mxu0
        %v4352 = vadd.f32 0.0, %v4351
        %v4353 = vpop.f32.mrb[0].mxu0
        %4354 = vmatprep.mubr.bf16.mxu0 0
        %4355 = vmatmul.mubr.bf16.gmra.mrb[0].mxu0 %v4230
        %v4356 = vpop.f32.mrb[0].mxu0
        %v4357 = vadd.f32 0.0, %v4356
        %v4358 = vpop.f32.mrb[0].mxu0
        %v4359 = vpop.f32.mrb[0].mxu0
        %v4360 = vadd.f32 0.0, %v4359
        %v4361 = vpop.f32.mrb[0].mxu0
        %4362 = vmatprep.mubr.bf16.mxu0 0
        %4363 = vmatmul.mubr.bf16.gmra.mrb[0].mxu0 %v4233
        %v4364 = vpop.f32.mrb[0].mxu0
        %v4365 = vadd.f32 0.0, %v4364
        %v4366 = vpop.f32.mrb[0].mxu0
        %v4367 = vpop.f32.mrb[0].mxu0
        %v4368 = vadd.f32 0.0, %v4367
        %v4369 = vpop.f32.mrb[0].mxu0
        %4370 = vmatprep.mubr.bf16.mxu0 0
        %4371 = vmatmul.mubr.bf16.gmra.mrb[0].mxu0 %v4236
        %v4372 = vpop.f32.mrb[0].mxu0
        %v4373 = vadd.f32 0.0, %v4372
        %v4374 = vpop.f32.mrb[0].mxu0
        %v4375 = vpop.f32.mrb[0].mxu0
        %v4376 = vadd.f32 0.0, %v4375
        %v4377 = vpop.f32.mrb[0].mxu0
        %4378 = vmatprep.mubr.bf16.mxu0 0
        %4379 = vmatmul.mubr.bf16.gmra.mrb[0].mxu0 %v4239
        %v4380 = vpop.f32.mrb[0].mxu0
        %v4381 = vadd.f32 0.0, %v4380
        %v4382 = vpop.f32.mrb[0].mxu0
        %v4383 = vpop.f32.mrb[0].mxu0
        %v4384 = vadd.f32 0.0, %v4383
        %v4385 = vpop.f32.mrb[0].mxu0
        %4386 = vmatprep.mubr.bf16.mxu0 0
        %4387 = vmatmul.mubr.bf16.gmra.mrb[0].mxu0 %v4242
        %v4388 = vpop.f32.mrb[0].mxu0
        %v4389 = vadd.f32 0.0, %v4388
        %v4390 = vpop.f32.mrb[0].mxu0
        %v4391 = vpop.f32.mrb[0].mxu0
        %v4392 = vadd.f32 0.0, %v4391
        %v4393 = vpop.f32.mrb[0].mxu0
        %4394 = vmatprep.mubr.bf16.mxu0 0
        %4395 = vmatmul.mubr.bf16.gmra.mrb[0].mxu0 %v4245
        %v4396 = vpop.f32.mrb[0].mxu0
        %v4397 = vadd.f32 0.0, %v4396
        %v4398 = vpop.f32.mrb[0].mxu0
        %v4399 = vpop.f32.mrb[0].mxu0
        %v4400 = vadd.f32 0.0, %v4399
        %v4401 = vpop.f32.mrb[0].mxu0
        %4402 = vmatprep.mubr.bf16.mxu0 0
        %4403 = vmatmul.mubr.bf16.gmra.mrb[0].mxu0 %v4248
        %v4404 = vpop.f32.mrb[0].mxu0
        %v4405 = vadd.f32 0.0, %v4404
        %v4406 = vpop.f32.mrb[0].mxu0
        %v4407 = vpop.f32.mrb[0].mxu0
        %v4408 = vadd.f32 0.0, %v4407
        %v4409 = vpop.f32.mrb[0].mxu0
        %4410 = vdwg.mxu0
        %v4411 = vadd.f32 %v3679, %v4285
        %v4412 = vadd.f32 %v3682, %v4288
        %v4413 = vadd.f32 %v3687, %v4293
        %v4414 = vadd.f32 %v3690, %v4296
        %v4415 = vadd.f32 %v3695, %v4301
        %v4416 = vadd.f32 %v3698, %v4304
        %v4417 = vadd.f32 %v3703, %v4309
        %v4418 = vadd.f32 %v3706, %v4312
        %v4419 = vadd.f32 %v3711, %v4317
        %v4420 = vadd.f32 %v3714, %v4320
        %v4421 = vadd.f32 %v3719, %v4325
        %v4422 = vadd.f32 %v3722, %v4328
        %v4423 = vadd.f32 %v3727, %v4333
        %v4424 = vadd.f32 %v3730, %v4336
        %v4425 = vadd.f32 %v3735, %v4341
        %v4426 = vadd.f32 %v3738, %v4344
        %v4427 = vadd.f32 %v3743, %v4349
        %v4428 = vadd.f32 %v3746, %v4352
        %v4429 = vadd.f32 %v3751, %v4357
        %v4430 = vadd.f32 %v3754, %v4360
        %v4431 = vadd.f32 %v3759, %v4365
        %v4432 = vadd.f32 %v3762, %v4368
        %v4433 = vadd.f32 %v3767, %v4373
        %v4434 = vadd.f32 %v3770, %v4376
        %v4435 = vadd.f32 %v3775, %v4381
        %v4436 = vadd.f32 %v3778, %v4384
        %v4437 = vadd.f32 %v3783, %v4389
        %v4438 = vadd.f32 %v3786, %v4392
        %v4439 = vadd.f32 %v3791, %v4397
        %v4440 = vadd.f32 %v3794, %v4400
        %v4441 = vadd.f32 %v3799, %v4405
        %v4442 = vadd.f32 %v3802, %v4408
        %s4443 = scalar_lea.vmem [#allocation2], 32
        %v4444 = vld [vmem:[%s4443 + $0x5] sm:$0xff]
        %v4445 = vld [vmem:[%s4443 + $0xd] sm:$0xff]
        %v4446 = vld [vmem:[%s4443 + $0x25] sm:$0xff]
        %v4447 = vld [vmem:[%s4443 + $0x2d] sm:$0xff]
        %v4448 = vld [vmem:[%s4443 + $0x45] sm:$0xff]
        %v4449 = vld [vmem:[%s4443 + $0x4d] sm:$0xff]
        %v4450 = vld [vmem:[%s4443 + $0x65] sm:$0xff]
        %v4451 = vld [vmem:[%s4443 + $0x6d] sm:$0xff]
        %v4452 = vld [vmem:[%s4443 + $0x85] sm:$0xff]
        %v4453 = vld [vmem:[%s4443 + $0x8d] sm:$0xff]
        %v4454 = vld [vmem:[%s4443 + $0xa5] sm:$0xff]
        %v4455 = vld [vmem:[%s4443 + $0xad] sm:$0xff]
        %v4456 = vld [vmem:[%s4443 + $0xc5] sm:$0xff]
        %v4457 = vld [vmem:[%s4443 + $0xcd] sm:$0xff]
        %v4458 = vld [vmem:[%s4443 + $0xe5] sm:$0xff]
        %v4459 = vld [vmem:[%s4443 + $0xed] sm:$0xff]
        %v4460 = vld [vmem:[%s4443 + $0x105] sm:$0xff]
        %v4461 = vld [vmem:[%s4443 + $0x10d] sm:$0xff]
        %v4462 = vld [vmem:[%s4443 + $0x125] sm:$0xff]
        %v4463 = vld [vmem:[%s4443 + $0x12d] sm:$0xff]
        %v4464 = vld [vmem:[%s4443 + $0x145] sm:$0xff]
        %v4465 = vld [vmem:[%s4443 + $0x14d] sm:$0xff]
        %v4466 = vld [vmem:[%s4443 + $0x165] sm:$0xff]
        %v4467 = vld [vmem:[%s4443 + $0x16d] sm:$0xff]
        %v4468 = vld [vmem:[%s4443 + $0x185] sm:$0xff]
        %v4469 = vld [vmem:[%s4443 + $0x18d] sm:$0xff]
        %v4470 = vld [vmem:[%s4443 + $0x1a5] sm:$0xff]
        %v4471 = vld [vmem:[%s4443 + $0x1ad] sm:$0xff]
        %v4472 = vld [vmem:[%s4443 + $0x1c5] sm:$0xff]
        %v4473 = vld [vmem:[%s4443 + $0x1cd] sm:$0xff]
        %v4474 = vld [vmem:[%s4443 + $0x1e5] sm:$0xff]
        %v4475 = vld [vmem:[%s4443 + $0x1ed] sm:$0xff]
        %v4476 = vld [vmem:[%s4443 + $0x205] sm:$0xff]
        %v4477 = vld [vmem:[%s4443 + $0x20d] sm:$0xff]
        %v4478 = vld [vmem:[%s4443 + $0x225] sm:$0xff]
        %v4479 = vld [vmem:[%s4443 + $0x22d] sm:$0xff]
        %v4480 = vld [vmem:[%s4443 + $0x245] sm:$0xff]
        %v4481 = vld [vmem:[%s4443 + $0x24d] sm:$0xff]
        %v4482 = vld [vmem:[%s4443 + $0x265] sm:$0xff]
        %v4483 = vld [vmem:[%s4443 + $0x26d] sm:$0xff]
        %v4484 = vld [vmem:[%s4443 + $0x285] sm:$0xff]
        %v4485 = vld [vmem:[%s4443 + $0x28d] sm:$0xff]
        %v4486 = vld [vmem:[%s4443 + $0x2a5] sm:$0xff]
        %v4487 = vld [vmem:[%s4443 + $0x2ad] sm:$0xff]
        %4520 = vrot.lane.b32.xlu0 %v4450, 32
        %v4521 = vpop.permute.xlu0 %4520
        %4522 = vrot.lane.b32.xlu0 %v4451, 32
        %v4523 = vpop.permute.xlu0 %4522
        %4524 = vrot.lane.b32.xlu0 %v4452, 32
        %v4525 = vpop.permute.xlu0 %4524
        %4526 = vrot.lane.b32.xlu0 %v4453, 32
        %v4527 = vpop.permute.xlu0 %4526
        %4528 = vrot.lane.b32.xlu0 %v4454, 32
        %v4529 = vpop.permute.xlu0 %4528
        %4530 = vrot.lane.b32.xlu0 %v4455, 32
        %v4531 = vpop.permute.xlu0 %4530
        %4532 = vrot.lane.b32.xlu0 %v4456, 32
        %v4533 = vpop.permute.xlu0 %4532
        %4534 = vrot.lane.b32.xlu0 %v4457, 32
        %v4535 = vpop.permute.xlu0 %4534
        %4536 = vrot.lane.b32.xlu0 %v4458, 32
        %v4537 = vpop.permute.xlu0 %4536
        %4538 = vrot.lane.b32.xlu0 %v4459, 32
        %v4539 = vpop.permute.xlu0 %4538
        %4540 = vrot.lane.b32.xlu0 %v4460, 32
        %v4541 = vpop.permute.xlu0 %4540
        %4542 = vrot.lane.b32.xlu0 %v4461, 32
        %v4543 = vpop.permute.xlu0 %4542
        %4544 = vrot.lane.b32.xlu0 %v4462, 32
        %v4545 = vpop.permute.xlu0 %4544
        %4546 = vrot.lane.b32.xlu0 %v4463, 32
        %v4547 = vpop.permute.xlu0 %4546
        %4548 = vrot.lane.b32.xlu0 %v4464, 32
        %v4549 = vpop.permute.xlu0 %4548
        %4550 = vrot.lane.b32.xlu0 %v4465, 32
        %v4551 = vpop.permute.xlu0 %4550
        %4552 = vrot.lane.b32.xlu0 %v4466, 32
        %v4553 = vpop.permute.xlu0 %4552
        %4554 = vrot.lane.b32.xlu0 %v4467, 32
        %v4555 = vpop.permute.xlu0 %4554
        %4556 = vrot.lane.b32.xlu0 %v4468, 32
        %v4557 = vpop.permute.xlu0 %4556
        %4558 = vrot.lane.b32.xlu0 %v4469, 32
        %v4559 = vpop.permute.xlu0 %4558
        %4560 = vrot.lane.b32.xlu0 %v4470, 32
        %v4561 = vpop.permute.xlu0 %4560
        %4562 = vrot.lane.b32.xlu0 %v4471, 32
        %v4563 = vpop.permute.xlu0 %4562
        %4564 = vrot.lane.b32.xlu0 %v4472, 32
        %v4565 = vpop.permute.xlu0 %4564
        %4566 = vrot.lane.b32.xlu0 %v4473, 32
        %v4567 = vpop.permute.xlu0 %4566
        %4568 = vrot.lane.b32.xlu0 %v4474, 32
        %v4569 = vpop.permute.xlu0 %4568
        %4570 = vrot.lane.b32.xlu0 %v4475, 32
        %v4571 = vpop.permute.xlu0 %4570
        %4572 = vrot.lane.b32.xlu0 %v4476, 32
        %v4573 = vpop.permute.xlu0 %4572
        %4574 = vrot.lane.b32.xlu0 %v4477, 32
        %v4575 = vpop.permute.xlu0 %4574
        %4576 = vrot.lane.b32.xlu0 %v4478, 32
        %v4577 = vpop.permute.xlu0 %4576
        %4578 = vrot.lane.b32.xlu0 %v4479, 32
        %v4579 = vpop.permute.xlu0 %4578
        %4580 = vrot.lane.b32.xlu0 %v4480, 32
        %v4581 = vpop.permute.xlu0 %4580
        %4582 = vrot.lane.b32.xlu0 %v4481, 32
        %v4583 = vpop.permute.xlu0 %4582
        %4622 = vrot.lane.b32.xlu0 %v4456, 64
        %v4623 = vpop.permute.xlu0 %4622
        %4624 = vrot.lane.b32.xlu0 %v4457, 64
        %v4625 = vpop.permute.xlu0 %4624
        %4626 = vrot.lane.b32.xlu0 %v4458, 64
        %v4627 = vpop.permute.xlu0 %4626
        %4628 = vrot.lane.b32.xlu0 %v4459, 64
        %v4629 = vpop.permute.xlu0 %4628
        %4630 = vrot.lane.b32.xlu0 %v4460, 64
        %v4631 = vpop.permute.xlu0 %4630
        %4632 = vrot.lane.b32.xlu0 %v4461, 64
        %v4633 = vpop.permute.xlu0 %4632
        %4634 = vrot.lane.b32.xlu0 %v4462, 64
        %v4635 = vpop.permute.xlu0 %4634
        %4636 = vrot.lane.b32.xlu0 %v4463, 64
        %v4637 = vpop.permute.xlu0 %4636
        %4638 = vrot.lane.b32.xlu0 %v4464, 64
        %v4639 = vpop.permute.xlu0 %4638
        %4640 = vrot.lane.b32.xlu0 %v4465, 64
        %v4641 = vpop.permute.xlu0 %4640
        %4642 = vrot.lane.b32.xlu0 %v4466, 64
        %v4643 = vpop.permute.xlu0 %4642
        %4644 = vrot.lane.b32.xlu0 %v4467, 64
        %v4645 = vpop.permute.xlu0 %4644
        %4646 = vrot.lane.b32.xlu0 %v4468, 64
        %v4647 = vpop.permute.xlu0 %4646
        %4648 = vrot.lane.b32.xlu0 %v4469, 64
        %v4649 = vpop.permute.xlu0 %4648
        %4650 = vrot.lane.b32.xlu0 %v4470, 64
        %v4651 = vpop.permute.xlu0 %4650
        %4652 = vrot.lane.b32.xlu0 %v4471, 64
        %v4653 = vpop.permute.xlu0 %4652
        %4654 = vrot.lane.b32.xlu0 %v4472, 64
        %v4655 = vpop.permute.xlu0 %4654
        %4656 = vrot.lane.b32.xlu0 %v4473, 64
        %v4657 = vpop.permute.xlu0 %4656
        %4658 = vrot.lane.b32.xlu0 %v4474, 64
        %v4659 = vpop.permute.xlu0 %4658
        %4660 = vrot.lane.b32.xlu0 %v4475, 64
        %v4661 = vpop.permute.xlu0 %4660
        %4662 = vrot.lane.b32.xlu0 %v4476, 64
        %v4663 = vpop.permute.xlu0 %4662
        %4664 = vrot.lane.b32.xlu0 %v4477, 64
        %v4665 = vpop.permute.xlu0 %4664
        %4666 = vrot.lane.b32.xlu0 %v4478, 64
        %v4667 = vpop.permute.xlu0 %4666
        %4668 = vrot.lane.b32.xlu0 %v4479, 64
        %v4669 = vpop.permute.xlu0 %4668
        %4670 = vrot.lane.b32.xlu0 %v4480, 64
        %v4671 = vpop.permute.xlu0 %4670
        %4672 = vrot.lane.b32.xlu0 %v4481, 64
        %v4673 = vpop.permute.xlu0 %4672
        %4674 = vrot.lane.b32.xlu0 %v4482, 64
        %v4675 = vpop.permute.xlu0 %4674
        %4676 = vrot.lane.b32.xlu0 %v4483, 64
        %v4677 = vpop.permute.xlu0 %4676
        %4678 = vrot.lane.b32.xlu0 %v4484, 64
        %v4679 = vpop.permute.xlu0 %4678
        %4680 = vrot.lane.b32.xlu0 %v4485, 64
        %v4681 = vpop.permute.xlu0 %4680
        %4682 = vrot.lane.b32.xlu0 %v4486, 64
        %v4683 = vpop.permute.xlu0 %4682
        %4684 = vrot.lane.b32.xlu0 %v4487, 64
        %v4685 = vpop.permute.xlu0 %4684
        %v4718 = vsel %vm450, %v4444, %v4521
        %v4719 = vsel %vm450, %v4445, %v4523
        %v4720 = vsel %vm450, %v4446, %v4525
        %v4721 = vsel %vm450, %v4447, %v4527
        %v4722 = vsel %vm450, %v4448, %v4529
        %v4723 = vsel %vm450, %v4449, %v4531
        %v4724 = vsel %vm450, %v4450, %v4533
        %v4725 = vsel %vm450, %v4451, %v4535
        %v4726 = vsel %vm450, %v4452, %v4537
        %v4727 = vsel %vm450, %v4453, %v4539
        %v4728 = vsel %vm450, %v4454, %v4541
        %v4729 = vsel %vm450, %v4455, %v4543
        %v4730 = vsel %vm450, %v4456, %v4545
        %v4731 = vsel %vm450, %v4457, %v4547
        %v4732 = vsel %vm450, %v4458, %v4549
        %v4733 = vsel %vm450, %v4459, %v4551
        %v4734 = vsel %vm450, %v4460, %v4553
        %v4735 = vsel %vm450, %v4461, %v4555
        %v4736 = vsel %vm450, %v4462, %v4557
        %v4737 = vsel %vm450, %v4463, %v4559
        %v4738 = vsel %vm450, %v4464, %v4561
        %v4739 = vsel %vm450, %v4465, %v4563
        %v4740 = vsel %vm450, %v4466, %v4565
        %v4741 = vsel %vm450, %v4467, %v4567
        %v4742 = vsel %vm450, %v4468, %v4569
        %v4743 = vsel %vm450, %v4469, %v4571
        %v4744 = vsel %vm450, %v4470, %v4573
        %v4745 = vsel %vm450, %v4471, %v4575
        %v4746 = vsel %vm450, %v4472, %v4577
        %v4747 = vsel %vm450, %v4473, %v4579
        %v4748 = vsel %vm450, %v4474, %v4581
        %v4749 = vsel %vm450, %v4475, %v4583
        %v4750 = vsel %vm1053, %v4718, %v4623
        %v4751 = vsel %vm1053, %v4719, %v4625
        %v4752 = vsel %vm1053, %v4720, %v4627
        %v4753 = vsel %vm1053, %v4721, %v4629
        %v4754 = vsel %vm1053, %v4722, %v4631
        %v4755 = vsel %vm1053, %v4723, %v4633
        %v4756 = vsel %vm1053, %v4724, %v4635
        %v4757 = vsel %vm1053, %v4725, %v4637
        %v4758 = vsel %vm1053, %v4726, %v4639
        %v4759 = vsel %vm1053, %v4727, %v4641
        %v4760 = vsel %vm1053, %v4728, %v4643
        %v4761 = vsel %vm1053, %v4729, %v4645
        %v4762 = vsel %vm1053, %v4730, %v4647
        %v4763 = vsel %vm1053, %v4731, %v4649
        %v4764 = vsel %vm1053, %v4732, %v4651
        %v4765 = vsel %vm1053, %v4733, %v4653
        %v4766 = vsel %vm1053, %v4734, %v4655
        %v4767 = vsel %vm1053, %v4735, %v4657
        %v4768 = vsel %vm1053, %v4736, %v4659
        %v4769 = vsel %vm1053, %v4737, %v4661
        %v4770 = vsel %vm1053, %v4738, %v4663
        %v4771 = vsel %vm1053, %v4739, %v4665
        %v4772 = vsel %vm1053, %v4740, %v4667
        %v4773 = vsel %vm1053, %v4741, %v4669
        %v4774 = vsel %vm1053, %v4742, %v4671
        %v4775 = vsel %vm1053, %v4743, %v4673
        %v4776 = vsel %vm1053, %v4744, %v4675
        %v4777 = vsel %vm1053, %v4745, %v4677
        %v4778 = vsel %vm1053, %v4746, %v4679
        %v4779 = vsel %vm1053, %v4747, %v4681
        %v4780 = vsel %vm1053, %v4748, %v4683
        %v4781 = vsel %vm1053, %v4749, %v4685
        %v4782 = vpack.c.bf16 %v4751, %v4750
        %v4783 = vpack.c.bf16 %v4753, %v4752
        %v4784 = vpack.c.bf16 %v4755, %v4754
        %v4785 = vpack.c.bf16 %v4757, %v4756
        %v4786 = vpack.c.bf16 %v4759, %v4758
        %v4787 = vpack.c.bf16 %v4761, %v4760
        %v4788 = vpack.c.bf16 %v4763, %v4762
        %v4789 = vpack.c.bf16 %v4765, %v4764
        %v4790 = vpack.c.bf16 %v4767, %v4766
        %v4791 = vpack.c.bf16 %v4769, %v4768
        %v4792 = vpack.c.bf16 %v4771, %v4770
        %v4793 = vpack.c.bf16 %v4773, %v4772
        %v4794 = vpack.c.bf16 %v4775, %v4774
        %v4795 = vpack.c.bf16 %v4777, %v4776
        %v4796 = vpack.c.bf16 %v4779, %v4778
        %v4797 = vpack.c.bf16 %v4781, %v4780
        %s4798 = scalar_lea.vmem [#allocation9], 288
        %v4799 = vld [vmem:[%s4798] sm:$0xf]
        %v4800 = vld [vmem:[%s4798 + $0x4] sm:$0xf]
        %v4801 = vld [vmem:[%s4798 + $0x8] sm:$0xf]
        %v4802 = vld [vmem:[%s4798 + $0xc] sm:$0xf]
        %v4803 = vld [vmem:[%s4798 + $0x10] sm:$0xf]
        %v4804 = vld [vmem:[%s4798 + $0x14] sm:$0xf]
        %v4805 = vld [vmem:[%s4798 + $0x18] sm:$0xf]
        %v4806 = vld [vmem:[%s4798 + $0x1c] sm:$0xf]
        %v4807 = vld [vmem:[%s4798 + $0x20] sm:$0xf]
        %v4808 = vld [vmem:[%s4798 + $0x24] sm:$0xf]
        %v4809 = vld [vmem:[%s4798 + $0x28] sm:$0xf]
        %v4810 = vld [vmem:[%s4798 + $0x2c] sm:$0xf]
        %v4811 = vld [vmem:[%s4443 + $0x8] sm:$0xff]
        %v4812 = vld [vmem:[%s4443 + $0x10] sm:$0xff]
        %v4813 = vld [vmem:[%s4443 + $0x28] sm:$0xff]
        %v4814 = vld [vmem:[%s4443 + $0x30] sm:$0xff]
        %v4815 = vld [vmem:[%s4443 + $0x48] sm:$0xff]
        %v4816 = vld [vmem:[%s4443 + $0x50] sm:$0xff]
        %v4817 = vld [vmem:[%s4443 + $0x68] sm:$0xff]
        %v4818 = vld [vmem:[%s4443 + $0x70] sm:$0xff]
        %v4819 = vld [vmem:[%s4443 + $0x88] sm:$0xff]
        %v4820 = vld [vmem:[%s4443 + $0x90] sm:$0xff]
        %v4821 = vld [vmem:[%s4443 + $0xa8] sm:$0xff]
        %v4822 = vld [vmem:[%s4443 + $0xb0] sm:$0xff]
        %v4823 = vld [vmem:[%s4443 + $0xc8] sm:$0xff]
        %v4824 = vld [vmem:[%s4443 + $0xd0] sm:$0xff]
        %v4825 = vld [vmem:[%s4443 + $0xe8] sm:$0xff]
        %v4826 = vld [vmem:[%s4443 + $0xf0] sm:$0xff]
        %v4827 = vld [vmem:[%s4443 + $0x108] sm:$0xff]
        %v4828 = vld [vmem:[%s4443 + $0x110] sm:$0xff]
        %v4829 = vld [vmem:[%s4443 + $0x128] sm:$0xff]
        %v4830 = vld [vmem:[%s4443 + $0x130] sm:$0xff]
        %v4831 = vld [vmem:[%s4443 + $0x148] sm:$0xff]
        %v4832 = vld [vmem:[%s4443 + $0x150] sm:$0xff]
        %v4833 = vld [vmem:[%s4443 + $0x168] sm:$0xff]
        %v4834 = vld [vmem:[%s4443 + $0x170] sm:$0xff]
        %v4835 = vld [vmem:[%s4443 + $0x188] sm:$0xff]
        %v4836 = vld [vmem:[%s4443 + $0x190] sm:$0xff]
        %v4837 = vld [vmem:[%s4443 + $0x1a8] sm:$0xff]
        %v4838 = vld [vmem:[%s4443 + $0x1b0] sm:$0xff]
        %v4839 = vld [vmem:[%s4443 + $0x1c8] sm:$0xff]
        %v4840 = vld [vmem:[%s4443 + $0x1d0] sm:$0xff]
        %v4841 = vld [vmem:[%s4443 + $0x1e8] sm:$0xff]
        %v4842 = vld [vmem:[%s4443 + $0x1f0] sm:$0xff]
        %v4843 = vld [vmem:[%s4443 + $0x208] sm:$0xff]
        %v4844 = vld [vmem:[%s4443 + $0x210] sm:$0xff]
        %v4845 = vld [vmem:[%s4443 + $0x228] sm:$0xff]
        %v4846 = vld [vmem:[%s4443 + $0x230] sm:$0xff]
        %v4847 = vld [vmem:[%s4443 + $0x248] sm:$0xff]
        %v4848 = vld [vmem:[%s4443 + $0x250] sm:$0xff]
        %v4849 = vld [vmem:[%s4443 + $0x268] sm:$0xff]
        %v4850 = vld [vmem:[%s4443 + $0x270] sm:$0xff]
        %v4851 = vld [vmem:[%s4443 + $0x288] sm:$0xff]
        %v4852 = vld [vmem:[%s4443 + $0x290] sm:$0xff]
        %v4853 = vld [vmem:[%s4443 + $0x2a8] sm:$0xff]
        %v4854 = vld [vmem:[%s4443 + $0x2b0] sm:$0xff]
        %4887 = vrot.lane.b32.xlu0 %v4817, 32
        %v4888 = vpop.permute.xlu0 %4887
        %4889 = vrot.lane.b32.xlu0 %v4818, 32
        %v4890 = vpop.permute.xlu0 %4889
        %4891 = vrot.lane.b32.xlu0 %v4819, 32
        %v4892 = vpop.permute.xlu0 %4891
        %4893 = vrot.lane.b32.xlu0 %v4820, 32
        %v4894 = vpop.permute.xlu0 %4893
        %4895 = vrot.lane.b32.xlu0 %v4821, 32
        %v4896 = vpop.permute.xlu0 %4895
        %4897 = vrot.lane.b32.xlu0 %v4822, 32
        %v4898 = vpop.permute.xlu0 %4897
        %4899 = vrot.lane.b32.xlu0 %v4823, 32
        %v4900 = vpop.permute.xlu0 %4899
        %4901 = vrot.lane.b32.xlu0 %v4824, 32
        %v4902 = vpop.permute.xlu0 %4901
        %4903 = vrot.lane.b32.xlu0 %v4825, 32
        %v4904 = vpop.permute.xlu0 %4903
        %4905 = vrot.lane.b32.xlu0 %v4826, 32
        %v4906 = vpop.permute.xlu0 %4905
        %4907 = vrot.lane.b32.xlu0 %v4827, 32
        %v4908 = vpop.permute.xlu0 %4907
        %4909 = vrot.lane.b32.xlu0 %v4828, 32
        %v4910 = vpop.permute.xlu0 %4909
        %4911 = vrot.lane.b32.xlu0 %v4829, 32
        %v4912 = vpop.permute.xlu0 %4911
        %4913 = vrot.lane.b32.xlu0 %v4830, 32
        %v4914 = vpop.permute.xlu0 %4913
        %4915 = vrot.lane.b32.xlu0 %v4831, 32
        %v4916 = vpop.permute.xlu0 %4915
        %4917 = vrot.lane.b32.xlu0 %v4832, 32
        %v4918 = vpop.permute.xlu0 %4917
        %4919 = vrot.lane.b32.xlu0 %v4833, 32
        %v4920 = vpop.permute.xlu0 %4919
        %4921 = vrot.lane.b32.xlu0 %v4834, 32
        %v4922 = vpop.permute.xlu0 %4921
        %4923 = vrot.lane.b32.xlu0 %v4835, 32
        %v4924 = vpop.permute.xlu0 %4923
        %4925 = vrot.lane.b32.xlu0 %v4836, 32
        %v4926 = vpop.permute.xlu0 %4925
        %4927 = vrot.lane.b32.xlu0 %v4837, 32
        %v4928 = vpop.permute.xlu0 %4927
        %4929 = vrot.lane.b32.xlu0 %v4838, 32
        %v4930 = vpop.permute.xlu0 %4929
        %4931 = vrot.lane.b32.xlu0 %v4839, 32
        %v4932 = vpop.permute.xlu0 %4931
        %4933 = vrot.lane.b32.xlu0 %v4840, 32
        %v4934 = vpop.permute.xlu0 %4933
        %4935 = vrot.lane.b32.xlu0 %v4841, 32
        %v4936 = vpop.permute.xlu0 %4935
        %4937 = vrot.lane.b32.xlu0 %v4842, 32
        %v4938 = vpop.permute.xlu0 %4937
        %4939 = vrot.lane.b32.xlu0 %v4843, 32
        %v4940 = vpop.permute.xlu0 %4939
        %4941 = vrot.lane.b32.xlu0 %v4844, 32
        %v4942 = vpop.permute.xlu0 %4941
        %4943 = vrot.lane.b32.xlu0 %v4845, 32
        %v4944 = vpop.permute.xlu0 %4943
        %4945 = vrot.lane.b32.xlu0 %v4846, 32
        %v4946 = vpop.permute.xlu0 %4945
        %4947 = vrot.lane.b32.xlu0 %v4847, 32
        %v4948 = vpop.permute.xlu0 %4947
        %4949 = vrot.lane.b32.xlu0 %v4848, 32
        %v4950 = vpop.permute.xlu0 %4949
        %4989 = vrot.lane.b32.xlu0 %v4823, 64
        %v4990 = vpop.permute.xlu0 %4989
        %4991 = vrot.lane.b32.xlu0 %v4824, 64
        %v4992 = vpop.permute.xlu0 %4991
        %4993 = vrot.lane.b32.xlu0 %v4825, 64
        %v4994 = vpop.permute.xlu0 %4993
        %4995 = vrot.lane.b32.xlu0 %v4826, 64
        %v4996 = vpop.permute.xlu0 %4995
        %4997 = vrot.lane.b32.xlu0 %v4827, 64
        %v4998 = vpop.permute.xlu0 %4997
        %4999 = vrot.lane.b32.xlu0 %v4828, 64
        %v5000 = vpop.permute.xlu0 %4999
        %5001 = vrot.lane.b32.xlu0 %v4829, 64
        %v5002 = vpop.permute.xlu0 %5001
        %5003 = vrot.lane.b32.xlu0 %v4830, 64
        %v5004 = vpop.permute.xlu0 %5003
        %5005 = vrot.lane.b32.xlu0 %v4831, 64
        %v5006 = vpop.permute.xlu0 %5005
        %5007 = vrot.lane.b32.xlu0 %v4832, 64
        %v5008 = vpop.permute.xlu0 %5007
        %5009 = vrot.lane.b32.xlu0 %v4833, 64
        %v5010 = vpop.permute.xlu0 %5009
        %5011 = vrot.lane.b32.xlu0 %v4834, 64
        %v5012 = vpop.permute.xlu0 %5011
        %5013 = vrot.lane.b32.xlu0 %v4835, 64
        %v5014 = vpop.permute.xlu0 %5013
        %5015 = vrot.lane.b32.xlu0 %v4836, 64
        %v5016 = vpop.permute.xlu0 %5015
        %5017 = vrot.lane.b32.xlu0 %v4837, 64
        %v5018 = vpop.permute.xlu0 %5017
        %5019 = vrot.lane.b32.xlu0 %v4838, 64
        %v5020 = vpop.permute.xlu0 %5019
        %5021 = vrot.lane.b32.xlu0 %v4839, 64
        %v5022 = vpop.permute.xlu0 %5021
        %5023 = vrot.lane.b32.xlu0 %v4840, 64
        %v5024 = vpop.permute.xlu0 %5023
        %5025 = vrot.lane.b32.xlu0 %v4841, 64
        %v5026 = vpop.permute.xlu0 %5025
        %5027 = vrot.lane.b32.xlu0 %v4842, 64
        %v5028 = vpop.permute.xlu0 %5027
        %5029 = vrot.lane.b32.xlu0 %v4843, 64
        %v5030 = vpop.permute.xlu0 %5029
        %5031 = vrot.lane.b32.xlu0 %v4844, 64
        %v5032 = vpop.permute.xlu0 %5031
        %5033 = vrot.lane.b32.xlu0 %v4845, 64
        %v5034 = vpop.permute.xlu0 %5033
        %5035 = vrot.lane.b32.xlu0 %v4846, 64
        %v5036 = vpop.permute.xlu0 %5035
        %5037 = vrot.lane.b32.xlu0 %v4847, 64
        %v5038 = vpop.permute.xlu0 %5037
        %5039 = vrot.lane.b32.xlu0 %v4848, 64
        %v5040 = vpop.permute.xlu0 %5039
        %5041 = vrot.lane.b32.xlu0 %v4849, 64
        %v5042 = vpop.permute.xlu0 %5041
        %5043 = vrot.lane.b32.xlu0 %v4850, 64
        %v5044 = vpop.permute.xlu0 %5043
        %5045 = vrot.lane.b32.xlu0 %v4851, 64
        %v5046 = vpop.permute.xlu0 %5045
        %5047 = vrot.lane.b32.xlu0 %v4852, 64
        %v5048 = vpop.permute.xlu0 %5047
        %5049 = vrot.lane.b32.xlu0 %v4853, 64
        %v5050 = vpop.permute.xlu0 %5049
        %5051 = vrot.lane.b32.xlu0 %v4854, 64
        %v5052 = vpop.permute.xlu0 %5051
        %v5085 = vsel %vm450, %v4811, %v4888
        %v5086 = vsel %vm450, %v4812, %v4890
        %v5087 = vsel %vm450, %v4813, %v4892
        %v5088 = vsel %vm450, %v4814, %v4894
        %v5089 = vsel %vm450, %v4815, %v4896
        %v5090 = vsel %vm450, %v4816, %v4898
        %v5091 = vsel %vm450, %v4817, %v4900
        %v5092 = vsel %vm450, %v4818, %v4902
        %v5093 = vsel %vm450, %v4819, %v4904
        %v5094 = vsel %vm450, %v4820, %v4906
        %v5095 = vsel %vm450, %v4821, %v4908
        %v5096 = vsel %vm450, %v4822, %v4910
        %v5097 = vsel %vm450, %v4823, %v4912
        %v5098 = vsel %vm450, %v4824, %v4914
        %v5099 = vsel %vm450, %v4825, %v4916
        %v5100 = vsel %vm450, %v4826, %v4918
        %v5101 = vsel %vm450, %v4827, %v4920
        %v5102 = vsel %vm450, %v4828, %v4922
        %v5103 = vsel %vm450, %v4829, %v4924
        %v5104 = vsel %vm450, %v4830, %v4926
        %v5105 = vsel %vm450, %v4831, %v4928
        %v5106 = vsel %vm450, %v4832, %v4930
        %v5107 = vsel %vm450, %v4833, %v4932
        %v5108 = vsel %vm450, %v4834, %v4934
        %v5109 = vsel %vm450, %v4835, %v4936
        %v5110 = vsel %vm450, %v4836, %v4938
        %v5111 = vsel %vm450, %v4837, %v4940
        %v5112 = vsel %vm450, %v4838, %v4942
        %v5113 = vsel %vm450, %v4839, %v4944
        %v5114 = vsel %vm450, %v4840, %v4946
        %v5115 = vsel %vm450, %v4841, %v4948
        %v5116 = vsel %vm450, %v4842, %v4950
        %v5117 = vsel %vm1053, %v5085, %v4990
        %v5118 = vsel %vm1053, %v5086, %v4992
        %v5119 = vsel %vm1053, %v5087, %v4994
        %v5120 = vsel %vm1053, %v5088, %v4996
        %v5121 = vsel %vm1053, %v5089, %v4998
        %v5122 = vsel %vm1053, %v5090, %v5000
        %v5123 = vsel %vm1053, %v5091, %v5002
        %v5124 = vsel %vm1053, %v5092, %v5004
        %v5125 = vsel %vm1053, %v5093, %v5006
        %v5126 = vsel %vm1053, %v5094, %v5008
        %v5127 = vsel %vm1053, %v5095, %v5010
        %v5128 = vsel %vm1053, %v5096, %v5012
        %v5129 = vsel %vm1053, %v5097, %v5014
        %v5130 = vsel %vm1053, %v5098, %v5016
        %v5131 = vsel %vm1053, %v5099, %v5018
        %v5132 = vsel %vm1053, %v5100, %v5020
        %v5133 = vsel %vm1053, %v5101, %v5022
        %v5134 = vsel %vm1053, %v5102, %v5024
        %v5135 = vsel %vm1053, %v5103, %v5026
        %v5136 = vsel %vm1053, %v5104, %v5028
        %v5137 = vsel %vm1053, %v5105, %v5030
        %v5138 = vsel %vm1053, %v5106, %v5032
        %v5139 = vsel %vm1053, %v5107, %v5034
        %v5140 = vsel %vm1053, %v5108, %v5036
        %v5141 = vsel %vm1053, %v5109, %v5038
        %v5142 = vsel %vm1053, %v5110, %v5040
        %v5143 = vsel %vm1053, %v5111, %v5042
        %v5144 = vsel %vm1053, %v5112, %v5044
        %v5145 = vsel %vm1053, %v5113, %v5046
        %v5146 = vsel %vm1053, %v5114, %v5048
        %v5147 = vsel %vm1053, %v5115, %v5050
        %v5148 = vsel %vm1053, %v5116, %v5052
        %v5149 = vpack.c.bf16 %v5118, %v5117
        %v5150 = vpack.c.bf16 %v5120, %v5119
        %v5151 = vpack.c.bf16 %v5122, %v5121
        %v5152 = vpack.c.bf16 %v5124, %v5123
        %v5153 = vpack.c.bf16 %v5126, %v5125
        %v5154 = vpack.c.bf16 %v5128, %v5127
        %v5155 = vpack.c.bf16 %v5130, %v5129
        %v5156 = vpack.c.bf16 %v5132, %v5131
        %v5157 = vpack.c.bf16 %v5134, %v5133
        %v5158 = vpack.c.bf16 %v5136, %v5135
        %v5159 = vpack.c.bf16 %v5138, %v5137
        %v5160 = vpack.c.bf16 %v5140, %v5139
        %v5161 = vpack.c.bf16 %v5142, %v5141
        %v5162 = vpack.c.bf16 %v5144, %v5143
        %v5163 = vpack.c.bf16 %v5146, %v5145
        %v5164 = vpack.c.bf16 %v5148, %v5147
        %s5165 = scalar_lea.vmem [#allocation9], 336
        %v5166 = vld [vmem:[%s5165] sm:$0xf]
        %v5167 = vld [vmem:[%s5165 + $0x4] sm:$0xf]
        %v5168 = vld [vmem:[%s5165 + $0x8] sm:$0xf]
        %v5169 = vld [vmem:[%s5165 + $0xc] sm:$0xf]
        %v5170 = vld [vmem:[%s5165 + $0x10] sm:$0xf]
        %v5171 = vld [vmem:[%s5165 + $0x14] sm:$0xf]
        %v5172 = vld [vmem:[%s5165 + $0x18] sm:$0xf]
        %v5173 = vld [vmem:[%s5165 + $0x1c] sm:$0xf]
        %v5174 = vld [vmem:[%s5165 + $0x20] sm:$0xf]
        %v5175 = vld [vmem:[%s5165 + $0x24] sm:$0xf]
        %v5176 = vld [vmem:[%s5165 + $0x28] sm:$0xf]
        %v5177 = vld [vmem:[%s5165 + $0x2c] sm:$0xf]
        %v5190 = vunpack.c.l.b16 %v5166
        %v5191 = vunpack.c.l.b16 %v5167
        %v5192 = vunpack.c.l.b16 %v5168
        %v5193 = vunpack.c.l.b16 %v5169
        %v5194 = vunpack.c.l.b16 %v5170
        %v5195 = vunpack.c.l.b16 %v5171
        %v5196 = vunpack.c.l.b16 %v5172
        %v5197 = vunpack.c.l.b16 %v5173
        %v5198 = vunpack.c.l.b16 %v5174
        %v5199 = vunpack.c.l.b16 %v5175
        %v5200 = vunpack.c.l.b16 %v5176
        %v5201 = vunpack.c.l.b16 %v5177
        %v5202 = vpack.c.b16 %v5191, %v5190
        %v5203 = vpack.c.b16 %v5193, %v5192
        %v5204 = vpack.c.b16 %v5195, %v5194
        %v5205 = vpack.c.b16 %v5197, %v5196
        %v5206 = vpack.c.b16 %v5199, %v5198
        %v5207 = vpack.c.b16 %v5201, %v5200
        %v5215 = vsel %vm1505, %v5149, 0
        %v5218 = vsel %vm1505, %v5150, 0
        %v5221 = vsel %vm1505, %v5151, 0
        %v5224 = vsel %vm1505, %v5152, 0
        %v5227 = vsel %vm1505, %v5153, 0
        %v5230 = vsel %vm1505, %v5154, 0
        %v5233 = vsel %vm1505, %v5155, 0
        %v5236 = vsel %vm1505, %v5156, 0
        %v5239 = vsel %vm1505, %v5157, 0
        %v5242 = vsel %vm1505, %v5158, 0
        %v5245 = vsel %vm1505, %v5159, 0
        %v5248 = vsel %vm1505, %v5160, 0
        %v5251 = vsel %vm1505, %v5161, 0
        %v5254 = vsel %vm1505, %v5162, 0
        %v5257 = vsel %vm1505, %v5163, 0
        %v5260 = vsel %vm1505, %v5164, 0
        %5262 = vmatprep.subr.bf16.mxu0 0
        %5263 = vmatpush1.bf16.msra.mxu0 %v5202
        %5264 = vmatprep.subr.bf16.mxu0 0
        %5265 = vmatpush1.bf16.msra.mxu0 %v5203
        %5266 = vmatprep.subr.bf16.mxu0 0
        %5267 = vmatpush1.bf16.msra.mxu0 %v5204
        %5268 = vmatprep.subr.bf16.mxu0 0
        %5269 = vmatpush1.bf16.msra.mxu0 %v5205
        %5270 = vmatprep.subr.bf16.mxu0 0
        %5271 = vmatpush1.bf16.msra.mxu0 %v5206
        %5272 = vmatprep.subr.bf16.mxu0 0
        %5273 = vmatpush1.bf16.msra.mxu0 %v5207
        %5274 = vmatprep.subr.bf16.mxu0 0
        %5275 = vmatpush1.bf16.msra.mxu0 0
        %5276 = vmatprep.subr.bf16.mxu0 0
        %5277 = vmatpush1.bf16.msra.mxu0 0
        %5278 = vmatprep.subr.bf16.mxu0 0
        %5279 = vmatpush1.bf16.msra.mxu0 0
        %5280 = vmatprep.subr.bf16.mxu0 0
        %5281 = vmatpush1.bf16.msra.mxu0 0
        %5282 = vmatprep.subr.bf16.mxu0 0
        %5283 = vmatpush1.bf16.msra.mxu0 0
        %5284 = vmatprep.subr.bf16.mxu0 0
        %5285 = vmatpush1.bf16.msra.mxu0 0
        %5286 = vmatprep.subr.bf16.mxu0 0
        %5287 = vmatpush1.bf16.msra.mxu0 0
        %5288 = vmatprep.subr.bf16.mxu0 0
        %5289 = vmatpush1.bf16.msra.mxu0 0
        %5290 = vmatprep.subr.bf16.mxu0 0
        %5291 = vmatpush1.bf16.msra.mxu0 0
        %5292 = vmatprep.subr.bf16.mxu0 0
        %5293 = vmatpush1.bf16.msra.mxu0 0
        %5294 = vmatprep.mubr.bf16.mxu0 0
        %5295 = vmatmul.mubr.bf16.gmra.mrb[0].mxu0 %v5215
        %v5296 = vpop.f32.mrb[0].mxu0
        %v5297 = vadd.f32 0.0, %v5296
        %v5298 = vpop.f32.mrb[0].mxu0
        %v5299 = vpop.f32.mrb[0].mxu0
        %v5300 = vadd.f32 0.0, %v5299
        %v5301 = vpop.f32.mrb[0].mxu0
        %5302 = vmatprep.mubr.bf16.mxu0 0
        %5303 = vmatmul.mubr.bf16.gmra.mrb[0].mxu0 %v5218
        %v5304 = vpop.f32.mrb[0].mxu0
        %v5305 = vadd.f32 0.0, %v5304
        %v5306 = vpop.f32.mrb[0].mxu0
        %v5307 = vpop.f32.mrb[0].mxu0
        %v5308 = vadd.f32 0.0, %v5307
        %v5309 = vpop.f32.mrb[0].mxu0
        %5310 = vmatprep.mubr.bf16.mxu0 0
        %5311 = vmatmul.mubr.bf16.gmra.mrb[0].mxu0 %v5221
        %v5312 = vpop.f32.mrb[0].mxu0
        %v5313 = vadd.f32 0.0, %v5312
        %v5314 = vpop.f32.mrb[0].mxu0
        %v5315 = vpop.f32.mrb[0].mxu0
        %v5316 = vadd.f32 0.0, %v5315
        %v5317 = vpop.f32.mrb[0].mxu0
        %5318 = vmatprep.mubr.bf16.mxu0 0
        %5319 = vmatmul.mubr.bf16.gmra.mrb[0].mxu0 %v5224
        %v5320 = vpop.f32.mrb[0].mxu0
        %v5321 = vadd.f32 0.0, %v5320
        %v5322 = vpop.f32.mrb[0].mxu0
        %v5323 = vpop.f32.mrb[0].mxu0
        %v5324 = vadd.f32 0.0, %v5323
        %v5325 = vpop.f32.mrb[0].mxu0
        %5326 = vmatprep.mubr.bf16.mxu0 0
        %5327 = vmatmul.mubr.bf16.gmra.mrb[0].mxu0 %v5227
        %v5328 = vpop.f32.mrb[0].mxu0
        %v5329 = vadd.f32 0.0, %v5328
        %v5330 = vpop.f32.mrb[0].mxu0
        %v5331 = vpop.f32.mrb[0].mxu0
        %v5332 = vadd.f32 0.0, %v5331
        %v5333 = vpop.f32.mrb[0].mxu0
        %5334 = vmatprep.mubr.bf16.mxu0 0
        %5335 = vmatmul.mubr.bf16.gmra.mrb[0].mxu0 %v5230
        %v5336 = vpop.f32.mrb[0].mxu0
        %v5337 = vadd.f32 0.0, %v5336
        %v5338 = vpop.f32.mrb[0].mxu0
        %v5339 = vpop.f32.mrb[0].mxu0
        %v5340 = vadd.f32 0.0, %v5339
        %v5341 = vpop.f32.mrb[0].mxu0
        %5342 = vmatprep.mubr.bf16.mxu0 0
        %5343 = vmatmul.mubr.bf16.gmra.mrb[0].mxu0 %v5233
        %v5344 = vpop.f32.mrb[0].mxu0
        %v5345 = vadd.f32 0.0, %v5344
        %v5346 = vpop.f32.mrb[0].mxu0
        %v5347 = vpop.f32.mrb[0].mxu0
        %v5348 = vadd.f32 0.0, %v5347
        %v5349 = vpop.f32.mrb[0].mxu0
        %5350 = vmatprep.mubr.bf16.mxu0 0
        %5351 = vmatmul.mubr.bf16.gmra.mrb[0].mxu0 %v5236
        %v5352 = vpop.f32.mrb[0].mxu0
        %v5353 = vadd.f32 0.0, %v5352
        %v5354 = vpop.f32.mrb[0].mxu0
        %v5355 = vpop.f32.mrb[0].mxu0
        %v5356 = vadd.f32 0.0, %v5355
        %v5357 = vpop.f32.mrb[0].mxu0
        %5358 = vmatprep.mubr.bf16.mxu0 0
        %5359 = vmatmul.mubr.bf16.gmra.mrb[0].mxu0 %v5239
        %v5360 = vpop.f32.mrb[0].mxu0
        %v5361 = vadd.f32 0.0, %v5360
        %v5362 = vpop.f32.mrb[0].mxu0
        %v5363 = vpop.f32.mrb[0].mxu0
        %v5364 = vadd.f32 0.0, %v5363
        %v5365 = vpop.f32.mrb[0].mxu0
        %5366 = vmatprep.mubr.bf16.mxu0 0
        %5367 = vmatmul.mubr.bf16.gmra.mrb[0].mxu0 %v5242
        %v5368 = vpop.f32.mrb[0].mxu0
        %v5369 = vadd.f32 0.0, %v5368
        %v5370 = vpop.f32.mrb[0].mxu0
        %v5371 = vpop.f32.mrb[0].mxu0
        %v5372 = vadd.f32 0.0, %v5371
        %v5373 = vpop.f32.mrb[0].mxu0
        %5374 = vmatprep.mubr.bf16.mxu0 0
        %5375 = vmatmul.mubr.bf16.gmra.mrb[0].mxu0 %v5245
        %v5376 = vpop.f32.mrb[0].mxu0
        %v5377 = vadd.f32 0.0, %v5376
        %v5378 = vpop.f32.mrb[0].mxu0
        %v5379 = vpop.f32.mrb[0].mxu0
        %v5380 = vadd.f32 0.0, %v5379
        %v5381 = vpop.f32.mrb[0].mxu0
        %5382 = vmatprep.mubr.bf16.mxu0 0
        %5383 = vmatmul.mubr.bf16.gmra.mrb[0].mxu0 %v5248
        %v5384 = vpop.f32.mrb[0].mxu0
        %v5385 = vadd.f32 0.0, %v5384
        %v5386 = vpop.f32.mrb[0].mxu0
        %v5387 = vpop.f32.mrb[0].mxu0
        %v5388 = vadd.f32 0.0, %v5387
        %v5389 = vpop.f32.mrb[0].mxu0
        %5390 = vmatprep.mubr.bf16.mxu0 0
        %5391 = vmatmul.mubr.bf16.gmra.mrb[0].mxu0 %v5251
        %v5392 = vpop.f32.mrb[0].mxu0
        %v5393 = vadd.f32 0.0, %v5392
        %v5394 = vpop.f32.mrb[0].mxu0
        %v5395 = vpop.f32.mrb[0].mxu0
        %v5396 = vadd.f32 0.0, %v5395
        %v5397 = vpop.f32.mrb[0].mxu0
        %5398 = vmatprep.mubr.bf16.mxu0 0
        %5399 = vmatmul.mubr.bf16.gmra.mrb[0].mxu0 %v5254
        %v5400 = vpop.f32.mrb[0].mxu0
        %v5401 = vadd.f32 0.0, %v5400
        %v5402 = vpop.f32.mrb[0].mxu0
        %v5403 = vpop.f32.mrb[0].mxu0
        %v5404 = vadd.f32 0.0, %v5403
        %v5405 = vpop.f32.mrb[0].mxu0
        %5406 = vmatprep.mubr.bf16.mxu0 0
        %5407 = vmatmul.mubr.bf16.gmra.mrb[0].mxu0 %v5257
        %v5408 = vpop.f32.mrb[0].mxu0
        %v5409 = vadd.f32 0.0, %v5408
        %v5410 = vpop.f32.mrb[0].mxu0
        %v5411 = vpop.f32.mrb[0].mxu0
        %v5412 = vadd.f32 0.0, %v5411
        %v5413 = vpop.f32.mrb[0].mxu0
        %5414 = vmatprep.mubr.bf16.mxu0 0
        %5415 = vmatmul.mubr.bf16.gmra.mrb[0].mxu0 %v5260
        %v5416 = vpop.f32.mrb[0].mxu0
        %v5417 = vadd.f32 0.0, %v5416
        %v5418 = vpop.f32.mrb[0].mxu0
        %v5419 = vpop.f32.mrb[0].mxu0
        %v5420 = vadd.f32 0.0, %v5419
        %v5421 = vpop.f32.mrb[0].mxu0
        %5422 = vdwg.mxu0
        %v5435 = vunpack.c.l.b16 %v4799
        %v5436 = vunpack.c.l.b16 %v4800
        %v5437 = vunpack.c.l.b16 %v4801
        %v5438 = vunpack.c.l.b16 %v4802
        %v5439 = vunpack.c.l.b16 %v4803
        %v5440 = vunpack.c.l.b16 %v4804
        %v5441 = vunpack.c.l.b16 %v4805
        %v5442 = vunpack.c.l.b16 %v4806
        %v5443 = vunpack.c.l.b16 %v4807
        %v5444 = vunpack.c.l.b16 %v4808
        %v5445 = vunpack.c.l.b16 %v4809
        %v5446 = vunpack.c.l.b16 %v4810
        %v5447 = vpack.c.b16 %v5436, %v5435
        %v5448 = vpack.c.b16 %v5438, %v5437
        %v5449 = vpack.c.b16 %v5440, %v5439
        %v5450 = vpack.c.b16 %v5442, %v5441
        %v5451 = vpack.c.b16 %v5444, %v5443
        %v5452 = vpack.c.b16 %v5446, %v5445
        %v5460 = vsel %vm1505, %v4782, 0
        %v5463 = vsel %vm1505, %v4783, 0
        %v5466 = vsel %vm1505, %v4784, 0
        %v5469 = vsel %vm1505, %v4785, 0
        %v5472 = vsel %vm1505, %v4786, 0
        %v5475 = vsel %vm1505, %v4787, 0
        %v5478 = vsel %vm1505, %v4788, 0
        %v5481 = vsel %vm1505, %v4789, 0
        %v5484 = vsel %vm1505, %v4790, 0
        %v5487 = vsel %vm1505, %v4791, 0
        %v5490 = vsel %vm1505, %v4792, 0
        %v5493 = vsel %vm1505, %v4793, 0
        %v5496 = vsel %vm1505, %v4794, 0
        %v5499 = vsel %vm1505, %v4795, 0
        %v5502 = vsel %vm1505, %v4796, 0
        %v5505 = vsel %vm1505, %v4797, 0
        %5507 = vmatprep.subr.bf16.mxu0 0
        %5508 = vmatpush1.bf16.msra.mxu0 %v5447
        %5509 = vmatprep.subr.bf16.mxu0 0
        %5510 = vmatpush1.bf16.msra.mxu0 %v5448
        %5511 = vmatprep.subr.bf16.mxu0 0
        %5512 = vmatpush1.bf16.msra.mxu0 %v5449
        %5513 = vmatprep.subr.bf16.mxu0 0
        %5514 = vmatpush1.bf16.msra.mxu0 %v5450
        %5515 = vmatprep.subr.bf16.mxu0 0
        %5516 = vmatpush1.bf16.msra.mxu0 %v5451
        %5517 = vmatprep.subr.bf16.mxu0 0
        %5518 = vmatpush1.bf16.msra.mxu0 %v5452
        %5519 = vmatprep.subr.bf16.mxu0 0
        %5520 = vmatpush1.bf16.msra.mxu0 0
        %5521 = vmatprep.subr.bf16.mxu0 0
        %5522 = vmatpush1.bf16.msra.mxu0 0
        %5523 = vmatprep.subr.bf16.mxu0 0
        %5524 = vmatpush1.bf16.msra.mxu0 0
        %5525 = vmatprep.subr.bf16.mxu0 0
        %5526 = vmatpush1.bf16.msra.mxu0 0
        %5527 = vmatprep.subr.bf16.mxu0 0
        %5528 = vmatpush1.bf16.msra.mxu0 0
        %5529 = vmatprep.subr.bf16.mxu0 0
        %5530 = vmatpush1.bf16.msra.mxu0 0
        %5531 = vmatprep.subr.bf16.mxu0 0
        %5532 = vmatpush1.bf16.msra.mxu0 0
        %5533 = vmatprep.subr.bf16.mxu0 0
        %5534 = vmatpush1.bf16.msra.mxu0 0
        %5535 = vmatprep.subr.bf16.mxu0 0
        %5536 = vmatpush1.bf16.msra.mxu0 0
        %5537 = vmatprep.subr.bf16.mxu0 0
        %5538 = vmatpush1.bf16.msra.mxu0 0
        %5539 = vmatprep.mubr.bf16.mxu0 0
        %5540 = vmatmul.mubr.bf16.gmra.mrb[0].mxu0 %v5460
        %v5541 = vpop.f32.mrb[0].mxu0
        %v5542 = vadd.f32 %v5297, %v5541
        %v5543 = vpop.f32.mrb[0].mxu0
        %v5544 = vpop.f32.mrb[0].mxu0
        %v5545 = vadd.f32 %v5300, %v5544
        %v5546 = vpop.f32.mrb[0].mxu0
        %5547 = vmatprep.mubr.bf16.mxu0 0
        %5548 = vmatmul.mubr.bf16.gmra.mrb[0].mxu0 %v5463
        %v5549 = vpop.f32.mrb[0].mxu0
        %v5550 = vadd.f32 %v5305, %v5549
        %v5551 = vpop.f32.mrb[0].mxu0
        %v5552 = vpop.f32.mrb[0].mxu0
        %v5553 = vadd.f32 %v5308, %v5552
        %v5554 = vpop.f32.mrb[0].mxu0
        %5555 = vmatprep.mubr.bf16.mxu0 0
        %5556 = vmatmul.mubr.bf16.gmra.mrb[0].mxu0 %v5466
        %v5557 = vpop.f32.mrb[0].mxu0
        %v5558 = vadd.f32 %v5313, %v5557
        %v5559 = vpop.f32.mrb[0].mxu0
        %v5560 = vpop.f32.mrb[0].mxu0
        %v5561 = vadd.f32 %v5316, %v5560
        %v5562 = vpop.f32.mrb[0].mxu0
        %5563 = vmatprep.mubr.bf16.mxu0 0
        %5564 = vmatmul.mubr.bf16.gmra.mrb[0].mxu0 %v5469
        %v5565 = vpop.f32.mrb[0].mxu0
        %v5566 = vadd.f32 %v5321, %v5565
        %v5567 = vpop.f32.mrb[0].mxu0
        %v5568 = vpop.f32.mrb[0].mxu0
        %v5569 = vadd.f32 %v5324, %v5568
        %v5570 = vpop.f32.mrb[0].mxu0
        %5571 = vmatprep.mubr.bf16.mxu0 0
        %5572 = vmatmul.mubr.bf16.gmra.mrb[0].mxu0 %v5472
        %v5573 = vpop.f32.mrb[0].mxu0
        %v5574 = vadd.f32 %v5329, %v5573
        %v5575 = vpop.f32.mrb[0].mxu0
        %v5576 = vpop.f32.mrb[0].mxu0
        %v5577 = vadd.f32 %v5332, %v5576
        %v5578 = vpop.f32.mrb[0].mxu0
        %5579 = vmatprep.mubr.bf16.mxu0 0
        %5580 = vmatmul.mubr.bf16.gmra.mrb[0].mxu0 %v5475
        %v5581 = vpop.f32.mrb[0].mxu0
        %v5582 = vadd.f32 %v5337, %v5581
        %v5583 = vpop.f32.mrb[0].mxu0
        %v5584 = vpop.f32.mrb[0].mxu0
        %v5585 = vadd.f32 %v5340, %v5584
        %v5586 = vpop.f32.mrb[0].mxu0
        %5587 = vmatprep.mubr.bf16.mxu0 0
        %5588 = vmatmul.mubr.bf16.gmra.mrb[0].mxu0 %v5478
        %v5589 = vpop.f32.mrb[0].mxu0
        %v5590 = vadd.f32 %v5345, %v5589
        %v5591 = vpop.f32.mrb[0].mxu0
        %v5592 = vpop.f32.mrb[0].mxu0
        %v5593 = vadd.f32 %v5348, %v5592
        %v5594 = vpop.f32.mrb[0].mxu0
        %5595 = vmatprep.mubr.bf16.mxu0 0
        %5596 = vmatmul.mubr.bf16.gmra.mrb[0].mxu0 %v5481
        %v5597 = vpop.f32.mrb[0].mxu0
        %v5598 = vadd.f32 %v5353, %v5597
        %v5599 = vpop.f32.mrb[0].mxu0
        %v5600 = vpop.f32.mrb[0].mxu0
        %v5601 = vadd.f32 %v5356, %v5600
        %v5602 = vpop.f32.mrb[0].mxu0
        %5603 = vmatprep.mubr.bf16.mxu0 0
        %5604 = vmatmul.mubr.bf16.gmra.mrb[0].mxu0 %v5484
        %v5605 = vpop.f32.mrb[0].mxu0
        %v5606 = vadd.f32 %v5361, %v5605
        %v5607 = vpop.f32.mrb[0].mxu0
        %v5608 = vpop.f32.mrb[0].mxu0
        %v5609 = vadd.f32 %v5364, %v5608
        %v5610 = vpop.f32.mrb[0].mxu0
        %5611 = vmatprep.mubr.bf16.mxu0 0
        %5612 = vmatmul.mubr.bf16.gmra.mrb[0].mxu0 %v5487
        %v5613 = vpop.f32.mrb[0].mxu0
        %v5614 = vadd.f32 %v5369, %v5613
        %v5615 = vpop.f32.mrb[0].mxu0
        %v5616 = vpop.f32.mrb[0].mxu0
        %v5617 = vadd.f32 %v5372, %v5616
        %v5618 = vpop.f32.mrb[0].mxu0
        %5619 = vmatprep.mubr.bf16.mxu0 0
        %5620 = vmatmul.mubr.bf16.gmra.mrb[0].mxu0 %v5490
        %v5621 = vpop.f32.mrb[0].mxu0
        %v5622 = vadd.f32 %v5377, %v5621
        %v5623 = vpop.f32.mrb[0].mxu0
        %v5624 = vpop.f32.mrb[0].mxu0
        %v5625 = vadd.f32 %v5380, %v5624
        %v5626 = vpop.f32.mrb[0].mxu0
        %5627 = vmatprep.mubr.bf16.mxu0 0
        %5628 = vmatmul.mubr.bf16.gmra.mrb[0].mxu0 %v5493
        %v5629 = vpop.f32.mrb[0].mxu0
        %v5630 = vadd.f32 %v5385, %v5629
        %v5631 = vpop.f32.mrb[0].mxu0
        %v5632 = vpop.f32.mrb[0].mxu0
        %v5633 = vadd.f32 %v5388, %v5632
        %v5634 = vpop.f32.mrb[0].mxu0
        %5635 = vmatprep.mubr.bf16.mxu0 0
        %5636 = vmatmul.mubr.bf16.gmra.mrb[0].mxu0 %v5496
        %v5637 = vpop.f32.mrb[0].mxu0
        %v5638 = vadd.f32 %v5393, %v5637
        %v5639 = vpop.f32.mrb[0].mxu0
        %v5640 = vpop.f32.mrb[0].mxu0
        %v5641 = vadd.f32 %v5396, %v5640
        %v5642 = vpop.f32.mrb[0].mxu0
        %5643 = vmatprep.mubr.bf16.mxu0 0
        %5644 = vmatmul.mubr.bf16.gmra.mrb[0].mxu0 %v5499
        %v5645 = vpop.f32.mrb[0].mxu0
        %v5646 = vadd.f32 %v5401, %v5645
        %v5647 = vpop.f32.mrb[0].mxu0
        %v5648 = vpop.f32.mrb[0].mxu0
        %v5649 = vadd.f32 %v5404, %v5648
        %v5650 = vpop.f32.mrb[0].mxu0
        %5651 = vmatprep.mubr.bf16.mxu0 0
        %5652 = vmatmul.mubr.bf16.gmra.mrb[0].mxu0 %v5502
        %v5653 = vpop.f32.mrb[0].mxu0
        %v5654 = vadd.f32 %v5409, %v5653
        %v5655 = vpop.f32.mrb[0].mxu0
        %v5656 = vpop.f32.mrb[0].mxu0
        %v5657 = vadd.f32 %v5412, %v5656
        %v5658 = vpop.f32.mrb[0].mxu0
        %5659 = vmatprep.mubr.bf16.mxu0 0
        %5660 = vmatmul.mubr.bf16.gmra.mrb[0].mxu0 %v5505
        %v5661 = vpop.f32.mrb[0].mxu0
        %v5662 = vadd.f32 %v5417, %v5661
        %v5663 = vpop.f32.mrb[0].mxu0
        %v5664 = vpop.f32.mrb[0].mxu0
        %v5665 = vadd.f32 %v5420, %v5664
        %v5666 = vpop.f32.mrb[0].mxu0
        %5667 = vdwg.mxu0
        %v5668 = vld [vmem:[%s4443 + $0xb] sm:$0xff]
        %v5669 = vld [vmem:[%s4443 + $0x13] sm:$0xff]
        %v5670 = vld [vmem:[%s4443 + $0x2b] sm:$0xff]
        %v5671 = vld [vmem:[%s4443 + $0x33] sm:$0xff]
        %v5672 = vld [vmem:[%s4443 + $0x4b] sm:$0xff]
        %v5673 = vld [vmem:[%s4443 + $0x53] sm:$0xff]
        %v5674 = vld [vmem:[%s4443 + $0x6b] sm:$0xff]
        %v5675 = vld [vmem:[%s4443 + $0x73] sm:$0xff]
        %v5676 = vld [vmem:[%s4443 + $0x8b] sm:$0xff]
        %v5677 = vld [vmem:[%s4443 + $0x93] sm:$0xff]
        %v5678 = vld [vmem:[%s4443 + $0xab] sm:$0xff]
        %v5679 = vld [vmem:[%s4443 + $0xb3] sm:$0xff]
        %v5680 = vld [vmem:[%s4443 + $0xcb] sm:$0xff]
        %v5681 = vld [vmem:[%s4443 + $0xd3] sm:$0xff]
        %v5682 = vld [vmem:[%s4443 + $0xeb] sm:$0xff]
        %v5683 = vld [vmem:[%s4443 + $0xf3] sm:$0xff]
        %v5684 = vld [vmem:[%s4443 + $0x10b] sm:$0xff]
        %v5685 = vld [vmem:[%s4443 + $0x113] sm:$0xff]
        %v5686 = vld [vmem:[%s4443 + $0x12b] sm:$0xff]
        %v5687 = vld [vmem:[%s4443 + $0x133] sm:$0xff]
        %v5688 = vld [vmem:[%s4443 + $0x14b] sm:$0xff]
        %v5689 = vld [vmem:[%s4443 + $0x153] sm:$0xff]
        %v5690 = vld [vmem:[%s4443 + $0x16b] sm:$0xff]
        %v5691 = vld [vmem:[%s4443 + $0x173] sm:$0xff]
        %v5692 = vld [vmem:[%s4443 + $0x18b] sm:$0xff]
        %v5693 = vld [vmem:[%s4443 + $0x193] sm:$0xff]
        %v5694 = vld [vmem:[%s4443 + $0x1ab] sm:$0xff]
        %v5695 = vld [vmem:[%s4443 + $0x1b3] sm:$0xff]
        %v5696 = vld [vmem:[%s4443 + $0x1cb] sm:$0xff]
        %v5697 = vld [vmem:[%s4443 + $0x1d3] sm:$0xff]
        %v5698 = vld [vmem:[%s4443 + $0x1eb] sm:$0xff]
        %v5699 = vld [vmem:[%s4443 + $0x1f3] sm:$0xff]
        %v5700 = vld [vmem:[%s4443 + $0x20b] sm:$0xff]
        %v5701 = vld [vmem:[%s4443 + $0x213] sm:$0xff]
        %v5702 = vld [vmem:[%s4443 + $0x22b] sm:$0xff]
        %v5703 = vld [vmem:[%s4443 + $0x233] sm:$0xff]
        %v5704 = vld [vmem:[%s4443 + $0x24b] sm:$0xff]
        %v5705 = vld [vmem:[%s4443 + $0x253] sm:$0xff]
        %v5706 = vld [vmem:[%s4443 + $0x26b] sm:$0xff]
        %v5707 = vld [vmem:[%s4443 + $0x273] sm:$0xff]
        %v5708 = vld [vmem:[%s4443 + $0x28b] sm:$0xff]
        %v5709 = vld [vmem:[%s4443 + $0x293] sm:$0xff]
        %v5710 = vld [vmem:[%s4443 + $0x2ab] sm:$0xff]
        %v5711 = vld [vmem:[%s4443 + $0x2b3] sm:$0xff]
        %5744 = vrot.lane.b32.xlu0 %v5674, 32
        %v5745 = vpop.permute.xlu0 %5744
        %5746 = vrot.lane.b32.xlu0 %v5675, 32
        %v5747 = vpop.permute.xlu0 %5746
        %5748 = vrot.lane.b32.xlu0 %v5676, 32
        %v5749 = vpop.permute.xlu0 %5748
        %5750 = vrot.lane.b32.xlu0 %v5677, 32
        %v5751 = vpop.permute.xlu0 %5750
        %5752 = vrot.lane.b32.xlu0 %v5678, 32
        %v5753 = vpop.permute.xlu0 %5752
        %5754 = vrot.lane.b32.xlu0 %v5679, 32
        %v5755 = vpop.permute.xlu0 %5754
        %5756 = vrot.lane.b32.xlu0 %v5680, 32
        %v5757 = vpop.permute.xlu0 %5756
        %5758 = vrot.lane.b32.xlu0 %v5681, 32
        %v5759 = vpop.permute.xlu0 %5758
        %5760 = vrot.lane.b32.xlu0 %v5682, 32
        %v5761 = vpop.permute.xlu0 %5760
        %5762 = vrot.lane.b32.xlu0 %v5683, 32
        %v5763 = vpop.permute.xlu0 %5762
        %5764 = vrot.lane.b32.xlu0 %v5684, 32
        %v5765 = vpop.permute.xlu0 %5764
        %5766 = vrot.lane.b32.xlu0 %v5685, 32
        %v5767 = vpop.permute.xlu0 %5766
        %5768 = vrot.lane.b32.xlu0 %v5686, 32
        %v5769 = vpop.permute.xlu0 %5768
        %5770 = vrot.lane.b32.xlu0 %v5687, 32
        %v5771 = vpop.permute.xlu0 %5770
        %5772 = vrot.lane.b32.xlu0 %v5688, 32
        %v5773 = vpop.permute.xlu0 %5772
        %5774 = vrot.lane.b32.xlu0 %v5689, 32
        %v5775 = vpop.permute.xlu0 %5774
        %5776 = vrot.lane.b32.xlu0 %v5690, 32
        %v5777 = vpop.permute.xlu0 %5776
        %5778 = vrot.lane.b32.xlu0 %v5691, 32
        %v5779 = vpop.permute.xlu0 %5778
        %5780 = vrot.lane.b32.xlu0 %v5692, 32
        %v5781 = vpop.permute.xlu0 %5780
        %5782 = vrot.lane.b32.xlu0 %v5693, 32
        %v5783 = vpop.permute.xlu0 %5782
        %5784 = vrot.lane.b32.xlu0 %v5694, 32
        %v5785 = vpop.permute.xlu0 %5784
        %5786 = vrot.lane.b32.xlu0 %v5695, 32
        %v5787 = vpop.permute.xlu0 %5786
        %5788 = vrot.lane.b32.xlu0 %v5696, 32
        %v5789 = vpop.permute.xlu0 %5788
        %5790 = vrot.lane.b32.xlu0 %v5697, 32
        %v5791 = vpop.permute.xlu0 %5790
        %5792 = vrot.lane.b32.xlu0 %v5698, 32
        %v5793 = vpop.permute.xlu0 %5792
        %5794 = vrot.lane.b32.xlu0 %v5699, 32
        %v5795 = vpop.permute.xlu0 %5794
        %5796 = vrot.lane.b32.xlu0 %v5700, 32
        %v5797 = vpop.permute.xlu0 %5796
        %5798 = vrot.lane.b32.xlu0 %v5701, 32
        %v5799 = vpop.permute.xlu0 %5798
        %5800 = vrot.lane.b32.xlu0 %v5702, 32
        %v5801 = vpop.permute.xlu0 %5800
        %5802 = vrot.lane.b32.xlu0 %v5703, 32
        %v5803 = vpop.permute.xlu0 %5802
        %5804 = vrot.lane.b32.xlu0 %v5704, 32
        %v5805 = vpop.permute.xlu0 %5804
        %5806 = vrot.lane.b32.xlu0 %v5705, 32
        %v5807 = vpop.permute.xlu0 %5806
        %5846 = vrot.lane.b32.xlu0 %v5680, 64
        %v5847 = vpop.permute.xlu0 %5846
        %5848 = vrot.lane.b32.xlu0 %v5681, 64
        %v5849 = vpop.permute.xlu0 %5848
        %5850 = vrot.lane.b32.xlu0 %v5682, 64
        %v5851 = vpop.permute.xlu0 %5850
        %5852 = vrot.lane.b32.xlu0 %v5683, 64
        %v5853 = vpop.permute.xlu0 %5852
        %5854 = vrot.lane.b32.xlu0 %v5684, 64
        %v5855 = vpop.permute.xlu0 %5854
        %5856 = vrot.lane.b32.xlu0 %v5685, 64
        %v5857 = vpop.permute.xlu0 %5856
        %5858 = vrot.lane.b32.xlu0 %v5686, 64
        %v5859 = vpop.permute.xlu0 %5858
        %5860 = vrot.lane.b32.xlu0 %v5687, 64
        %v5861 = vpop.permute.xlu0 %5860
        %5862 = vrot.lane.b32.xlu0 %v5688, 64
        %v5863 = vpop.permute.xlu0 %5862
        %5864 = vrot.lane.b32.xlu0 %v5689, 64
        %v5865 = vpop.permute.xlu0 %5864
        %5866 = vrot.lane.b32.xlu0 %v5690, 64
        %v5867 = vpop.permute.xlu0 %5866
        %5868 = vrot.lane.b32.xlu0 %v5691, 64
        %v5869 = vpop.permute.xlu0 %5868
        %5870 = vrot.lane.b32.xlu0 %v5692, 64
        %v5871 = vpop.permute.xlu0 %5870
        %5872 = vrot.lane.b32.xlu0 %v5693, 64
        %v5873 = vpop.permute.xlu0 %5872
        %5874 = vrot.lane.b32.xlu0 %v5694, 64
        %v5875 = vpop.permute.xlu0 %5874
        %5876 = vrot.lane.b32.xlu0 %v5695, 64
        %v5877 = vpop.permute.xlu0 %5876
        %5878 = vrot.lane.b32.xlu0 %v5696, 64
        %v5879 = vpop.permute.xlu0 %5878
        %5880 = vrot.lane.b32.xlu0 %v5697, 64
        %v5881 = vpop.permute.xlu0 %5880
        %5882 = vrot.lane.b32.xlu0 %v5698, 64
        %v5883 = vpop.permute.xlu0 %5882
        %5884 = vrot.lane.b32.xlu0 %v5699, 64
        %v5885 = vpop.permute.xlu0 %5884
        %5886 = vrot.lane.b32.xlu0 %v5700, 64
        %v5887 = vpop.permute.xlu0 %5886
        %5888 = vrot.lane.b32.xlu0 %v5701, 64
        %v5889 = vpop.permute.xlu0 %5888
        %5890 = vrot.lane.b32.xlu0 %v5702, 64
        %v5891 = vpop.permute.xlu0 %5890
        %5892 = vrot.lane.b32.xlu0 %v5703, 64
        %v5893 = vpop.permute.xlu0 %5892
        %5894 = vrot.lane.b32.xlu0 %v5704, 64
        %v5895 = vpop.permute.xlu0 %5894
        %5896 = vrot.lane.b32.xlu0 %v5705, 64
        %v5897 = vpop.permute.xlu0 %5896
        %5898 = vrot.lane.b32.xlu0 %v5706, 64
        %v5899 = vpop.permute.xlu0 %5898
        %5900 = vrot.lane.b32.xlu0 %v5707, 64
        %v5901 = vpop.permute.xlu0 %5900
        %5902 = vrot.lane.b32.xlu0 %v5708, 64
        %v5903 = vpop.permute.xlu0 %5902
        %5904 = vrot.lane.b32.xlu0 %v5709, 64
        %v5905 = vpop.permute.xlu0 %5904
        %5906 = vrot.lane.b32.xlu0 %v5710, 64
        %v5907 = vpop.permute.xlu0 %5906
        %5908 = vrot.lane.b32.xlu0 %v5711, 64
        %v5909 = vpop.permute.xlu0 %5908
        %v5942 = vsel %vm450, %v5668, %v5745
        %v5943 = vsel %vm450, %v5669, %v5747
        %v5944 = vsel %vm450, %v5670, %v5749
        %v5945 = vsel %vm450, %v5671, %v5751
        %v5946 = vsel %vm450, %v5672, %v5753
        %v5947 = vsel %vm450, %v5673, %v5755
        %v5948 = vsel %vm450, %v5674, %v5757
        %v5949 = vsel %vm450, %v5675, %v5759
        %v5950 = vsel %vm450, %v5676, %v5761
        %v5951 = vsel %vm450, %v5677, %v5763
        %v5952 = vsel %vm450, %v5678, %v5765
        %v5953 = vsel %vm450, %v5679, %v5767
        %v5954 = vsel %vm450, %v5680, %v5769
        %v5955 = vsel %vm450, %v5681, %v5771
        %v5956 = vsel %vm450, %v5682, %v5773
        %v5957 = vsel %vm450, %v5683, %v5775
        %v5958 = vsel %vm450, %v5684, %v5777
        %v5959 = vsel %vm450, %v5685, %v5779
        %v5960 = vsel %vm450, %v5686, %v5781
        %v5961 = vsel %vm450, %v5687, %v5783
        %v5962 = vsel %vm450, %v5688, %v5785
        %v5963 = vsel %vm450, %v5689, %v5787
        %v5964 = vsel %vm450, %v5690, %v5789
        %v5965 = vsel %vm450, %v5691, %v5791
        %v5966 = vsel %vm450, %v5692, %v5793
        %v5967 = vsel %vm450, %v5693, %v5795
        %v5968 = vsel %vm450, %v5694, %v5797
        %v5969 = vsel %vm450, %v5695, %v5799
        %v5970 = vsel %vm450, %v5696, %v5801
        %v5971 = vsel %vm450, %v5697, %v5803
        %v5972 = vsel %vm450, %v5698, %v5805
        %v5973 = vsel %vm450, %v5699, %v5807
        %v5974 = vsel %vm1053, %v5942, %v5847
        %v5975 = vsel %vm1053, %v5943, %v5849
        %v5976 = vsel %vm1053, %v5944, %v5851
        %v5977 = vsel %vm1053, %v5945, %v5853
        %v5978 = vsel %vm1053, %v5946, %v5855
        %v5979 = vsel %vm1053, %v5947, %v5857
        %v5980 = vsel %vm1053, %v5948, %v5859
        %v5981 = vsel %vm1053, %v5949, %v5861
        %v5982 = vsel %vm1053, %v5950, %v5863
        %v5983 = vsel %vm1053, %v5951, %v5865
        %v5984 = vsel %vm1053, %v5952, %v5867
        %v5985 = vsel %vm1053, %v5953, %v5869
        %v5986 = vsel %vm1053, %v5954, %v5871
        %v5987 = vsel %vm1053, %v5955, %v5873
        %v5988 = vsel %vm1053, %v5956, %v5875
        %v5989 = vsel %vm1053, %v5957, %v5877
        %v5990 = vsel %vm1053, %v5958, %v5879
        %v5991 = vsel %vm1053, %v5959, %v5881
        %v5992 = vsel %vm1053, %v5960, %v5883
        %v5993 = vsel %vm1053, %v5961, %v5885
        %v5994 = vsel %vm1053, %v5962, %v5887
        %v5995 = vsel %vm1053, %v5963, %v5889
        %v5996 = vsel %vm1053, %v5964, %v5891
        %v5997 = vsel %vm1053, %v5965, %v5893
        %v5998 = vsel %vm1053, %v5966, %v5895
        %v5999 = vsel %vm1053, %v5967, %v5897
        %v6000 = vsel %vm1053, %v5968, %v5899
        %v6001 = vsel %vm1053, %v5969, %v5901
        %v6002 = vsel %vm1053, %v5970, %v5903
        %v6003 = vsel %vm1053, %v5971, %v5905
        %v6004 = vsel %vm1053, %v5972, %v5907
        %v6005 = vsel %vm1053, %v5973, %v5909
        %v6006 = vpack.c.bf16 %v5975, %v5974
        %v6007 = vpack.c.bf16 %v5977, %v5976
        %v6008 = vpack.c.bf16 %v5979, %v5978
        %v6009 = vpack.c.bf16 %v5981, %v5980
        %v6010 = vpack.c.bf16 %v5983, %v5982
        %v6011 = vpack.c.bf16 %v5985, %v5984
        %v6012 = vpack.c.bf16 %v5987, %v5986
        %v6013 = vpack.c.bf16 %v5989, %v5988
        %v6014 = vpack.c.bf16 %v5991, %v5990
        %v6015 = vpack.c.bf16 %v5993, %v5992
        %v6016 = vpack.c.bf16 %v5995, %v5994
        %v6017 = vpack.c.bf16 %v5997, %v5996
        %v6018 = vpack.c.bf16 %v5999, %v5998
        %v6019 = vpack.c.bf16 %v6001, %v6000
        %v6020 = vpack.c.bf16 %v6003, %v6002
        %v6021 = vpack.c.bf16 %v6005, %v6004
        %s6022 = scalar_lea.vmem [#allocation9], 384
        %v6023 = vld [vmem:[%s6022] sm:$0xf]
        %v6024 = vld [vmem:[%s6022 + $0x4] sm:$0xf]
        %v6025 = vld [vmem:[%s6022 + $0x8] sm:$0xf]
        %v6026 = vld [vmem:[%s6022 + $0xc] sm:$0xf]
        %v6027 = vld [vmem:[%s6022 + $0x10] sm:$0xf]
        %v6028 = vld [vmem:[%s6022 + $0x14] sm:$0xf]
        %v6029 = vld [vmem:[%s6022 + $0x18] sm:$0xf]
        %v6030 = vld [vmem:[%s6022 + $0x1c] sm:$0xf]
        %v6031 = vld [vmem:[%s6022 + $0x20] sm:$0xf]
        %v6032 = vld [vmem:[%s6022 + $0x24] sm:$0xf]
        %v6033 = vld [vmem:[%s6022 + $0x28] sm:$0xf]
        %v6034 = vld [vmem:[%s6022 + $0x2c] sm:$0xf]
        %v6047 = vunpack.c.l.b16 %v6023
        %v6048 = vunpack.c.l.b16 %v6024
        %v6049 = vunpack.c.l.b16 %v6025
        %v6050 = vunpack.c.l.b16 %v6026
        %v6051 = vunpack.c.l.b16 %v6027
        %v6052 = vunpack.c.l.b16 %v6028
        %v6053 = vunpack.c.l.b16 %v6029
        %v6054 = vunpack.c.l.b16 %v6030
        %v6055 = vunpack.c.l.b16 %v6031
        %v6056 = vunpack.c.l.b16 %v6032
        %v6057 = vunpack.c.l.b16 %v6033
        %v6058 = vunpack.c.l.b16 %v6034
        %v6059 = vpack.c.b16 %v6048, %v6047
        %v6060 = vpack.c.b16 %v6050, %v6049
        %v6061 = vpack.c.b16 %v6052, %v6051
        %v6062 = vpack.c.b16 %v6054, %v6053
        %v6063 = vpack.c.b16 %v6056, %v6055
        %v6064 = vpack.c.b16 %v6058, %v6057
        %v6072 = vsel %vm1505, %v6006, 0
        %v6075 = vsel %vm1505, %v6007, 0
        %v6078 = vsel %vm1505, %v6008, 0
        %v6081 = vsel %vm1505, %v6009, 0
        %v6084 = vsel %vm1505, %v6010, 0
        %v6087 = vsel %vm1505, %v6011, 0
        %v6090 = vsel %vm1505, %v6012, 0
        %v6093 = vsel %vm1505, %v6013, 0
        %v6096 = vsel %vm1505, %v6014, 0
        %v6099 = vsel %vm1505, %v6015, 0
        %v6102 = vsel %vm1505, %v6016, 0
        %v6105 = vsel %vm1505, %v6017, 0
        %v6108 = vsel %vm1505, %v6018, 0
        %v6111 = vsel %vm1505, %v6019, 0
        %v6114 = vsel %vm1505, %v6020, 0
        %v6117 = vsel %vm1505, %v6021, 0
        %6119 = vmatprep.subr.bf16.mxu0 0
        %6120 = vmatpush1.bf16.msra.mxu0 %v6059
        %6121 = vmatprep.subr.bf16.mxu0 0
        %6122 = vmatpush1.bf16.msra.mxu0 %v6060
        %6123 = vmatprep.subr.bf16.mxu0 0
        %6124 = vmatpush1.bf16.msra.mxu0 %v6061
        %6125 = vmatprep.subr.bf16.mxu0 0
        %6126 = vmatpush1.bf16.msra.mxu0 %v6062
        %6127 = vmatprep.subr.bf16.mxu0 0
        %6128 = vmatpush1.bf16.msra.mxu0 %v6063
        %6129 = vmatprep.subr.bf16.mxu0 0
        %6130 = vmatpush1.bf16.msra.mxu0 %v6064
        %6131 = vmatprep.subr.bf16.mxu0 0
        %6132 = vmatpush1.bf16.msra.mxu0 0
        %6133 = vmatprep.subr.bf16.mxu0 0
        %6134 = vmatpush1.bf16.msra.mxu0 0
        %6135 = vmatprep.subr.bf16.mxu0 0
        %6136 = vmatpush1.bf16.msra.mxu0 0
        %6137 = vmatprep.subr.bf16.mxu0 0
        %6138 = vmatpush1.bf16.msra.mxu0 0
        %6139 = vmatprep.subr.bf16.mxu0 0
        %6140 = vmatpush1.bf16.msra.mxu0 0
        %6141 = vmatprep.subr.bf16.mxu0 0
        %6142 = vmatpush1.bf16.msra.mxu0 0
        %6143 = vmatprep.subr.bf16.mxu0 0
        %6144 = vmatpush1.bf16.msra.mxu0 0
        %6145 = vmatprep.subr.bf16.mxu0 0
        %6146 = vmatpush1.bf16.msra.mxu0 0
        %6147 = vmatprep.subr.bf16.mxu0 0
        %6148 = vmatpush1.bf16.msra.mxu0 0
        %6149 = vmatprep.subr.bf16.mxu0 0
        %6150 = vmatpush1.bf16.msra.mxu0 0
        %6151 = vmatprep.mubr.bf16.mxu0 0
        %6152 = vmatmul.mubr.bf16.gmra.mrb[0].mxu0 %v6072
        %v6153 = vpop.f32.mrb[0].mxu0
        %v6154 = vadd.f32 0.0, %v6153
        %v6155 = vpop.f32.mrb[0].mxu0
        %v6156 = vpop.f32.mrb[0].mxu0
        %v6157 = vadd.f32 0.0, %v6156
        %v6158 = vpop.f32.mrb[0].mxu0
        %6159 = vmatprep.mubr.bf16.mxu0 0
        %6160 = vmatmul.mubr.bf16.gmra.mrb[0].mxu0 %v6075
        %v6161 = vpop.f32.mrb[0].mxu0
        %v6162 = vadd.f32 0.0, %v6161
        %v6163 = vpop.f32.mrb[0].mxu0
        %v6164 = vpop.f32.mrb[0].mxu0
        %v6165 = vadd.f32 0.0, %v6164
        %v6166 = vpop.f32.mrb[0].mxu0
        %6167 = vmatprep.mubr.bf16.mxu0 0
        %6168 = vmatmul.mubr.bf16.gmra.mrb[0].mxu0 %v6078
        %v6169 = vpop.f32.mrb[0].mxu0
        %v6170 = vadd.f32 0.0, %v6169
        %v6171 = vpop.f32.mrb[0].mxu0
        %v6172 = vpop.f32.mrb[0].mxu0
        %v6173 = vadd.f32 0.0, %v6172
        %v6174 = vpop.f32.mrb[0].mxu0
        %6175 = vmatprep.mubr.bf16.mxu0 0
        %6176 = vmatmul.mubr.bf16.gmra.mrb[0].mxu0 %v6081
        %v6177 = vpop.f32.mrb[0].mxu0
        %v6178 = vadd.f32 0.0, %v6177
        %v6179 = vpop.f32.mrb[0].mxu0
        %v6180 = vpop.f32.mrb[0].mxu0
        %v6181 = vadd.f32 0.0, %v6180
        %v6182 = vpop.f32.mrb[0].mxu0
        %6183 = vmatprep.mubr.bf16.mxu0 0
        %6184 = vmatmul.mubr.bf16.gmra.mrb[0].mxu0 %v6084
        %v6185 = vpop.f32.mrb[0].mxu0
        %v6186 = vadd.f32 0.0, %v6185
        %v6187 = vpop.f32.mrb[0].mxu0
        %v6188 = vpop.f32.mrb[0].mxu0
        %v6189 = vadd.f32 0.0, %v6188
        %v6190 = vpop.f32.mrb[0].mxu0
        %6191 = vmatprep.mubr.bf16.mxu0 0
        %6192 = vmatmul.mubr.bf16.gmra.mrb[0].mxu0 %v6087
        %v6193 = vpop.f32.mrb[0].mxu0
        %v6194 = vadd.f32 0.0, %v6193
        %v6195 = vpop.f32.mrb[0].mxu0
        %v6196 = vpop.f32.mrb[0].mxu0
        %v6197 = vadd.f32 0.0, %v6196
        %v6198 = vpop.f32.mrb[0].mxu0
        %6199 = vmatprep.mubr.bf16.mxu0 0
        %6200 = vmatmul.mubr.bf16.gmra.mrb[0].mxu0 %v6090
        %v6201 = vpop.f32.mrb[0].mxu0
        %v6202 = vadd.f32 0.0, %v6201
        %v6203 = vpop.f32.mrb[0].mxu0
        %v6204 = vpop.f32.mrb[0].mxu0
        %v6205 = vadd.f32 0.0, %v6204
        %v6206 = vpop.f32.mrb[0].mxu0
        %6207 = vmatprep.mubr.bf16.mxu0 0
        %6208 = vmatmul.mubr.bf16.gmra.mrb[0].mxu0 %v6093
        %v6209 = vpop.f32.mrb[0].mxu0
        %v6210 = vadd.f32 0.0, %v6209
        %v6211 = vpop.f32.mrb[0].mxu0
        %v6212 = vpop.f32.mrb[0].mxu0
        %v6213 = vadd.f32 0.0, %v6212
        %v6214 = vpop.f32.mrb[0].mxu0
        %6215 = vmatprep.mubr.bf16.mxu0 0
        %6216 = vmatmul.mubr.bf16.gmra.mrb[0].mxu0 %v6096
        %v6217 = vpop.f32.mrb[0].mxu0
        %v6218 = vadd.f32 0.0, %v6217
        %v6219 = vpop.f32.mrb[0].mxu0
        %v6220 = vpop.f32.mrb[0].mxu0
        %v6221 = vadd.f32 0.0, %v6220
        %v6222 = vpop.f32.mrb[0].mxu0
        %6223 = vmatprep.mubr.bf16.mxu0 0
        %6224 = vmatmul.mubr.bf16.gmra.mrb[0].mxu0 %v6099
        %v6225 = vpop.f32.mrb[0].mxu0
        %v6226 = vadd.f32 0.0, %v6225
        %v6227 = vpop.f32.mrb[0].mxu0
        %v6228 = vpop.f32.mrb[0].mxu0
        %v6229 = vadd.f32 0.0, %v6228
        %v6230 = vpop.f32.mrb[0].mxu0
        %6231 = vmatprep.mubr.bf16.mxu0 0
        %6232 = vmatmul.mubr.bf16.gmra.mrb[0].mxu0 %v6102
        %v6233 = vpop.f32.mrb[0].mxu0
        %v6234 = vadd.f32 0.0, %v6233
        %v6235 = vpop.f32.mrb[0].mxu0
        %v6236 = vpop.f32.mrb[0].mxu0
        %v6237 = vadd.f32 0.0, %v6236
        %v6238 = vpop.f32.mrb[0].mxu0
        %6239 = vmatprep.mubr.bf16.mxu0 0
        %6240 = vmatmul.mubr.bf16.gmra.mrb[0].mxu0 %v6105
        %v6241 = vpop.f32.mrb[0].mxu0
        %v6242 = vadd.f32 0.0, %v6241
        %v6243 = vpop.f32.mrb[0].mxu0
        %v6244 = vpop.f32.mrb[0].mxu0
        %v6245 = vadd.f32 0.0, %v6244
        %v6246 = vpop.f32.mrb[0].mxu0
        %6247 = vmatprep.mubr.bf16.mxu0 0
        %6248 = vmatmul.mubr.bf16.gmra.mrb[0].mxu0 %v6108
        %v6249 = vpop.f32.mrb[0].mxu0
        %v6250 = vadd.f32 0.0, %v6249
        %v6251 = vpop.f32.mrb[0].mxu0
        %v6252 = vpop.f32.mrb[0].mxu0
        %v6253 = vadd.f32 0.0, %v6252
        %v6254 = vpop.f32.mrb[0].mxu0
        %6255 = vmatprep.mubr.bf16.mxu0 0
        %6256 = vmatmul.mubr.bf16.gmra.mrb[0].mxu0 %v6111
        %v6257 = vpop.f32.mrb[0].mxu0
        %v6258 = vadd.f32 0.0, %v6257
        %v6259 = vpop.f32.mrb[0].mxu0
        %v6260 = vpop.f32.mrb[0].mxu0
        %v6261 = vadd.f32 0.0, %v6260
        %v6262 = vpop.f32.mrb[0].mxu0
        %6263 = vmatprep.mubr.bf16.mxu0 0
        %6264 = vmatmul.mubr.bf16.gmra.mrb[0].mxu0 %v6114
        %v6265 = vpop.f32.mrb[0].mxu0
        %v6266 = vadd.f32 0.0, %v6265
        %v6267 = vpop.f32.mrb[0].mxu0
        %v6268 = vpop.f32.mrb[0].mxu0
        %v6269 = vadd.f32 0.0, %v6268
        %v6270 = vpop.f32.mrb[0].mxu0
        %6271 = vmatprep.mubr.bf16.mxu0 0
        %6272 = vmatmul.mubr.bf16.gmra.mrb[0].mxu0 %v6117
        %v6273 = vpop.f32.mrb[0].mxu0
        %v6274 = vadd.f32 0.0, %v6273
        %v6275 = vpop.f32.mrb[0].mxu0
        %v6276 = vpop.f32.mrb[0].mxu0
        %v6277 = vadd.f32 0.0, %v6276
        %v6278 = vpop.f32.mrb[0].mxu0
        %6279 = vdwg.mxu0
        %v6280 = vadd.f32 %v5542, %v6154
        %v6281 = vadd.f32 %v5545, %v6157
        %v6282 = vadd.f32 %v5550, %v6162
        %v6283 = vadd.f32 %v5553, %v6165
        %v6284 = vadd.f32 %v5558, %v6170
        %v6285 = vadd.f32 %v5561, %v6173
        %v6286 = vadd.f32 %v5566, %v6178
        %v6287 = vadd.f32 %v5569, %v6181
        %v6288 = vadd.f32 %v5574, %v6186
        %v6289 = vadd.f32 %v5577, %v6189
        %v6290 = vadd.f32 %v5582, %v6194
        %v6291 = vadd.f32 %v5585, %v6197
        %v6292 = vadd.f32 %v5590, %v6202
        %v6293 = vadd.f32 %v5593, %v6205
        %v6294 = vadd.f32 %v5598, %v6210
        %v6295 = vadd.f32 %v5601, %v6213
        %v6296 = vadd.f32 %v5606, %v6218
        %v6297 = vadd.f32 %v5609, %v6221
        %v6298 = vadd.f32 %v5614, %v6226
        %v6299 = vadd.f32 %v5617, %v6229
        %v6300 = vadd.f32 %v5622, %v6234
        %v6301 = vadd.f32 %v5625, %v6237
        %v6302 = vadd.f32 %v5630, %v6242
        %v6303 = vadd.f32 %v5633, %v6245
        %v6304 = vadd.f32 %v5638, %v6250
        %v6305 = vadd.f32 %v5641, %v6253
        %v6306 = vadd.f32 %v5646, %v6258
        %v6307 = vadd.f32 %v5649, %v6261
        %v6308 = vadd.f32 %v5654, %v6266
        %v6309 = vadd.f32 %v5657, %v6269
        %v6310 = vadd.f32 %v5662, %v6274
        %v6311 = vadd.f32 %v5665, %v6277
        %v6312 = vld [vmem:[#allocation2 + $0x4] sm:$0xff]
        %v6313 = vld [vmem:[#allocation2 + $0xc] sm:$0xff]
        %v6314 = vld [vmem:[#allocation2 + $0x24] sm:$0xff]
        %v6315 = vld [vmem:[#allocation2 + $0x2c] sm:$0xff]
        %v6316 = vld [vmem:[#allocation2 + $0x44] sm:$0xff]
        %v6317 = vld [vmem:[#allocation2 + $0x4c] sm:$0xff]
        %v6318 = vld [vmem:[#allocation2 + $0x64] sm:$0xff]
        %v6319 = vld [vmem:[#allocation2 + $0x6c] sm:$0xff]
        %v6320 = vld [vmem:[#allocation2 + $0x84] sm:$0xff]
        %v6321 = vld [vmem:[#allocation2 + $0x8c] sm:$0xff]
        %v6322 = vld [vmem:[#allocation2 + $0xa4] sm:$0xff]
        %v6323 = vld [vmem:[#allocation2 + $0xac] sm:$0xff]
        %v6324 = vld [vmem:[#allocation2 + $0xc4] sm:$0xff]
        %v6325 = vld [vmem:[#allocation2 + $0xcc] sm:$0xff]
        %v6326 = vld [vmem:[#allocation2 + $0xe4] sm:$0xff]
        %v6327 = vld [vmem:[#allocation2 + $0xec] sm:$0xff]
        %v6328 = vld [vmem:[#allocation2 + $0x104] sm:$0xff]
        %v6329 = vld [vmem:[#allocation2 + $0x10c] sm:$0xff]
        %v6330 = vld [vmem:[#allocation2 + $0x124] sm:$0xff]
        %v6331 = vld [vmem:[#allocation2 + $0x12c] sm:$0xff]
        %v6332 = vld [vmem:[#allocation2 + $0x144] sm:$0xff]
        %v6333 = vld [vmem:[#allocation2 + $0x14c] sm:$0xff]
        %v6334 = vld [vmem:[#allocation2 + $0x164] sm:$0xff]
        %v6335 = vld [vmem:[#allocation2 + $0x16c] sm:$0xff]
        %v6336 = vld [vmem:[#allocation2 + $0x184] sm:$0xff]
        %v6337 = vld [vmem:[#allocation2 + $0x18c] sm:$0xff]
        %v6338 = vld [vmem:[#allocation2 + $0x1a4] sm:$0xff]
        %v6339 = vld [vmem:[#allocation2 + $0x1ac] sm:$0xff]
        %v6340 = vld [vmem:[#allocation2 + $0x1c4] sm:$0xff]
        %v6341 = vld [vmem:[#allocation2 + $0x1cc] sm:$0xff]
        %v6342 = vld [vmem:[#allocation2 + $0x1e4] sm:$0xff]
        %v6343 = vld [vmem:[#allocation2 + $0x1ec] sm:$0xff]
        %v6344 = vld [vmem:[#allocation2 + $0x204] sm:$0xff]
        %v6345 = vld [vmem:[#allocation2 + $0x20c] sm:$0xff]
        %v6346 = vld [vmem:[#allocation2 + $0x224] sm:$0xff]
        %v6347 = vld [vmem:[#allocation2 + $0x22c] sm:$0xff]
        %v6348 = vld [vmem:[#allocation2 + $0x244] sm:$0xff]
        %v6349 = vld [vmem:[#allocation2 + $0x24c] sm:$0xff]
        %v6350 = vld [vmem:[#allocation2 + $0x264] sm:$0xff]
        %v6351 = vld [vmem:[#allocation2 + $0x26c] sm:$0xff]
        %v6352 = vld [vmem:[#allocation2 + $0x284] sm:$0xff]
        %v6353 = vld [vmem:[#allocation2 + $0x28c] sm:$0xff]
        %v6354 = vld [vmem:[#allocation2 + $0x2a4] sm:$0xff]
        %v6355 = vld [vmem:[#allocation2 + $0x2ac] sm:$0xff]
        %v6356 = vld [vmem:[#allocation2 + $0x2c4] sm:$0xff]
        %v6357 = vld [vmem:[#allocation2 + $0x2cc] sm:$0xff]
        %v6358 = vld [vmem:[#allocation2 + $0x2e4] sm:$0xff]
        %v6359 = vld [vmem:[#allocation2 + $0x2ec] sm:$0xff]
        %6392 = vrot.lane.b32.xlu0 %v6320, 32
        %v6393 = vpop.permute.xlu0 %6392
        %6394 = vrot.lane.b32.xlu0 %v6321, 32
        %v6395 = vpop.permute.xlu0 %6394
        %6396 = vrot.lane.b32.xlu0 %v6322, 32
        %v6397 = vpop.permute.xlu0 %6396
        %6398 = vrot.lane.b32.xlu0 %v6323, 32
        %v6399 = vpop.permute.xlu0 %6398
        %6400 = vrot.lane.b32.xlu0 %v6324, 32
        %v6401 = vpop.permute.xlu0 %6400
        %6402 = vrot.lane.b32.xlu0 %v6325, 32
        %v6403 = vpop.permute.xlu0 %6402
        %6404 = vrot.lane.b32.xlu0 %v6326, 32
        %v6405 = vpop.permute.xlu0 %6404
        %6406 = vrot.lane.b32.xlu0 %v6327, 32
        %v6407 = vpop.permute.xlu0 %6406
        %6408 = vrot.lane.b32.xlu0 %v6328, 32
        %v6409 = vpop.permute.xlu0 %6408
        %6410 = vrot.lane.b32.xlu0 %v6329, 32
        %v6411 = vpop.permute.xlu0 %6410
        %6412 = vrot.lane.b32.xlu0 %v6330, 32
        %v6413 = vpop.permute.xlu0 %6412
        %6414 = vrot.lane.b32.xlu0 %v6331, 32
        %v6415 = vpop.permute.xlu0 %6414
        %6416 = vrot.lane.b32.xlu0 %v6332, 32
        %v6417 = vpop.permute.xlu0 %6416
        %6418 = vrot.lane.b32.xlu0 %v6333, 32
        %v6419 = vpop.permute.xlu0 %6418
        %6420 = vrot.lane.b32.xlu0 %v6334, 32
        %v6421 = vpop.permute.xlu0 %6420
        %6422 = vrot.lane.b32.xlu0 %v6335, 32
        %v6423 = vpop.permute.xlu0 %6422
        %6424 = vrot.lane.b32.xlu0 %v6336, 32
        %v6425 = vpop.permute.xlu0 %6424
        %6426 = vrot.lane.b32.xlu0 %v6337, 32
        %v6427 = vpop.permute.xlu0 %6426
        %6428 = vrot.lane.b32.xlu0 %v6338, 32
        %v6429 = vpop.permute.xlu0 %6428
        %6430 = vrot.lane.b32.xlu0 %v6339, 32
        %v6431 = vpop.permute.xlu0 %6430
        %6432 = vrot.lane.b32.xlu0 %v6340, 32
        %v6433 = vpop.permute.xlu0 %6432
        %6434 = vrot.lane.b32.xlu0 %v6341, 32
        %v6435 = vpop.permute.xlu0 %6434
        %6436 = vrot.lane.b32.xlu0 %v6342, 32
        %v6437 = vpop.permute.xlu0 %6436
        %6438 = vrot.lane.b32.xlu0 %v6343, 32
        %v6439 = vpop.permute.xlu0 %6438
        %6440 = vrot.lane.b32.xlu0 %v6344, 32
        %v6441 = vpop.permute.xlu0 %6440
        %6442 = vrot.lane.b32.xlu0 %v6345, 32
        %v6443 = vpop.permute.xlu0 %6442
        %6444 = vrot.lane.b32.xlu0 %v6346, 32
        %v6445 = vpop.permute.xlu0 %6444
        %6446 = vrot.lane.b32.xlu0 %v6347, 32
        %v6447 = vpop.permute.xlu0 %6446
        %6448 = vrot.lane.b32.xlu0 %v6348, 32
        %v6449 = vpop.permute.xlu0 %6448
        %6450 = vrot.lane.b32.xlu0 %v6349, 32
        %v6451 = vpop.permute.xlu0 %6450
        %6452 = vrot.lane.b32.xlu0 %v6350, 32
        %v6453 = vpop.permute.xlu0 %6452
        %6454 = vrot.lane.b32.xlu0 %v6351, 32
        %v6455 = vpop.permute.xlu0 %6454
        %6496 = vrot.lane.b32.xlu0 %v6328, 64
        %v6497 = vpop.permute.xlu0 %6496
        %6498 = vrot.lane.b32.xlu0 %v6329, 64
        %v6499 = vpop.permute.xlu0 %6498
        %6500 = vrot.lane.b32.xlu0 %v6330, 64
        %v6501 = vpop.permute.xlu0 %6500
        %6502 = vrot.lane.b32.xlu0 %v6331, 64
        %v6503 = vpop.permute.xlu0 %6502
        %6504 = vrot.lane.b32.xlu0 %v6332, 64
        %v6505 = vpop.permute.xlu0 %6504
        %6506 = vrot.lane.b32.xlu0 %v6333, 64
        %v6507 = vpop.permute.xlu0 %6506
        %6508 = vrot.lane.b32.xlu0 %v6334, 64
        %v6509 = vpop.permute.xlu0 %6508
        %6510 = vrot.lane.b32.xlu0 %v6335, 64
        %v6511 = vpop.permute.xlu0 %6510
        %6512 = vrot.lane.b32.xlu0 %v6336, 64
        %v6513 = vpop.permute.xlu0 %6512
        %6514 = vrot.lane.b32.xlu0 %v6337, 64
        %v6515 = vpop.permute.xlu0 %6514
        %6516 = vrot.lane.b32.xlu0 %v6338, 64
        %v6517 = vpop.permute.xlu0 %6516
        %6518 = vrot.lane.b32.xlu0 %v6339, 64
        %v6519 = vpop.permute.xlu0 %6518
        %6520 = vrot.lane.b32.xlu0 %v6340, 64
        %v6521 = vpop.permute.xlu0 %6520
        %6522 = vrot.lane.b32.xlu0 %v6341, 64
        %v6523 = vpop.permute.xlu0 %6522
        %6524 = vrot.lane.b32.xlu0 %v6342, 64
        %v6525 = vpop.permute.xlu0 %6524
        %6526 = vrot.lane.b32.xlu0 %v6343, 64
        %v6527 = vpop.permute.xlu0 %6526
        %6528 = vrot.lane.b32.xlu0 %v6344, 64
        %v6529 = vpop.permute.xlu0 %6528
        %6530 = vrot.lane.b32.xlu0 %v6345, 64
        %v6531 = vpop.permute.xlu0 %6530
        %6532 = vrot.lane.b32.xlu0 %v6346, 64
        %v6533 = vpop.permute.xlu0 %6532
        %6534 = vrot.lane.b32.xlu0 %v6347, 64
        %v6535 = vpop.permute.xlu0 %6534
        %6536 = vrot.lane.b32.xlu0 %v6348, 64
        %v6537 = vpop.permute.xlu0 %6536
        %6538 = vrot.lane.b32.xlu0 %v6349, 64
        %v6539 = vpop.permute.xlu0 %6538
        %6540 = vrot.lane.b32.xlu0 %v6350, 64
        %v6541 = vpop.permute.xlu0 %6540
        %6542 = vrot.lane.b32.xlu0 %v6351, 64
        %v6543 = vpop.permute.xlu0 %6542
        %6544 = vrot.lane.b32.xlu0 %v6352, 64
        %v6545 = vpop.permute.xlu0 %6544
        %6546 = vrot.lane.b32.xlu0 %v6353, 64
        %v6547 = vpop.permute.xlu0 %6546
        %6548 = vrot.lane.b32.xlu0 %v6354, 64
        %v6549 = vpop.permute.xlu0 %6548
        %6550 = vrot.lane.b32.xlu0 %v6355, 64
        %v6551 = vpop.permute.xlu0 %6550
        %6552 = vrot.lane.b32.xlu0 %v6356, 64
        %v6553 = vpop.permute.xlu0 %6552
        %6554 = vrot.lane.b32.xlu0 %v6357, 64
        %v6555 = vpop.permute.xlu0 %6554
        %6556 = vrot.lane.b32.xlu0 %v6358, 64
        %v6557 = vpop.permute.xlu0 %6556
        %6558 = vrot.lane.b32.xlu0 %v6359, 64
        %v6559 = vpop.permute.xlu0 %6558
        %v6592 = vsel %vm450, %v6312, %v6393
        %v6593 = vsel %vm450, %v6313, %v6395
        %v6594 = vsel %vm450, %v6314, %v6397
        %v6595 = vsel %vm450, %v6315, %v6399
        %v6596 = vsel %vm450, %v6316, %v6401
        %v6597 = vsel %vm450, %v6317, %v6403
        %v6598 = vsel %vm450, %v6318, %v6405
        %v6599 = vsel %vm450, %v6319, %v6407
        %v6600 = vsel %vm450, %v6320, %v6409
        %v6601 = vsel %vm450, %v6321, %v6411
        %v6602 = vsel %vm450, %v6322, %v6413
        %v6603 = vsel %vm450, %v6323, %v6415
        %v6604 = vsel %vm450, %v6324, %v6417
        %v6605 = vsel %vm450, %v6325, %v6419
        %v6606 = vsel %vm450, %v6326, %v6421
        %v6607 = vsel %vm450, %v6327, %v6423
        %v6608 = vsel %vm450, %v6328, %v6425
        %v6609 = vsel %vm450, %v6329, %v6427
        %v6610 = vsel %vm450, %v6330, %v6429
        %v6611 = vsel %vm450, %v6331, %v6431
        %v6612 = vsel %vm450, %v6332, %v6433
        %v6613 = vsel %vm450, %v6333, %v6435
        %v6614 = vsel %vm450, %v6334, %v6437
        %v6615 = vsel %vm450, %v6335, %v6439
        %v6616 = vsel %vm450, %v6336, %v6441
        %v6617 = vsel %vm450, %v6337, %v6443
        %v6618 = vsel %vm450, %v6338, %v6445
        %v6619 = vsel %vm450, %v6339, %v6447
        %v6620 = vsel %vm450, %v6340, %v6449
        %v6621 = vsel %vm450, %v6341, %v6451
        %v6622 = vsel %vm450, %v6342, %v6453
        %v6623 = vsel %vm450, %v6343, %v6455
        %v6624 = vsel %vm1053, %v6592, %v6497
        %v6625 = vsel %vm1053, %v6593, %v6499
        %v6626 = vsel %vm1053, %v6594, %v6501
        %v6627 = vsel %vm1053, %v6595, %v6503
        %v6628 = vsel %vm1053, %v6596, %v6505
        %v6629 = vsel %vm1053, %v6597, %v6507
        %v6630 = vsel %vm1053, %v6598, %v6509
        %v6631 = vsel %vm1053, %v6599, %v6511
        %v6632 = vsel %vm1053, %v6600, %v6513
        %v6633 = vsel %vm1053, %v6601, %v6515
        %v6634 = vsel %vm1053, %v6602, %v6517
        %v6635 = vsel %vm1053, %v6603, %v6519
        %v6636 = vsel %vm1053, %v6604, %v6521
        %v6637 = vsel %vm1053, %v6605, %v6523
        %v6638 = vsel %vm1053, %v6606, %v6525
        %v6639 = vsel %vm1053, %v6607, %v6527
        %v6640 = vsel %vm1053, %v6608, %v6529
        %v6641 = vsel %vm1053, %v6609, %v6531
        %v6642 = vsel %vm1053, %v6610, %v6533
        %v6643 = vsel %vm1053, %v6611, %v6535
        %v6644 = vsel %vm1053, %v6612, %v6537
        %v6645 = vsel %vm1053, %v6613, %v6539
        %v6646 = vsel %vm1053, %v6614, %v6541
        %v6647 = vsel %vm1053, %v6615, %v6543
        %v6648 = vsel %vm1053, %v6616, %v6545
        %v6649 = vsel %vm1053, %v6617, %v6547
        %v6650 = vsel %vm1053, %v6618, %v6549
        %v6651 = vsel %vm1053, %v6619, %v6551
        %v6652 = vsel %vm1053, %v6620, %v6553
        %v6653 = vsel %vm1053, %v6621, %v6555
        %v6654 = vsel %vm1053, %v6622, %v6557
        %v6655 = vsel %vm1053, %v6623, %v6559
        %v6656 = vpack.c.bf16 %v6625, %v6624
        %v6657 = vpack.c.bf16 %v6627, %v6626
        %v6658 = vpack.c.bf16 %v6629, %v6628
        %v6659 = vpack.c.bf16 %v6631, %v6630
        %v6660 = vpack.c.bf16 %v6633, %v6632
        %v6661 = vpack.c.bf16 %v6635, %v6634
        %v6662 = vpack.c.bf16 %v6637, %v6636
        %v6663 = vpack.c.bf16 %v6639, %v6638
        %v6664 = vpack.c.bf16 %v6641, %v6640
        %v6665 = vpack.c.bf16 %v6643, %v6642
        %v6666 = vpack.c.bf16 %v6645, %v6644
        %v6667 = vpack.c.bf16 %v6647, %v6646
        %v6668 = vpack.c.bf16 %v6649, %v6648
        %v6669 = vpack.c.bf16 %v6651, %v6650
        %v6670 = vpack.c.bf16 %v6653, %v6652
        %v6671 = vpack.c.bf16 %v6655, %v6654
        %s6672 = scalar_lea.vmem [#allocation9], 432
        %v6673 = vld [vmem:[%s6672] sm:$0xf]
        %v6674 = vld [vmem:[%s6672 + $0x4] sm:$0xf]
        %v6675 = vld [vmem:[%s6672 + $0x8] sm:$0xf]
        %v6676 = vld [vmem:[%s6672 + $0xc] sm:$0xf]
        %v6677 = vld [vmem:[%s6672 + $0x10] sm:$0xf]
        %v6678 = vld [vmem:[%s6672 + $0x14] sm:$0xf]
        %v6679 = vld [vmem:[%s6672 + $0x18] sm:$0xf]
        %v6680 = vld [vmem:[%s6672 + $0x1c] sm:$0xf]
        %v6681 = vld [vmem:[%s6672 + $0x20] sm:$0xf]
        %v6682 = vld [vmem:[%s6672 + $0x24] sm:$0xf]
        %v6683 = vld [vmem:[%s6672 + $0x28] sm:$0xf]
        %v6684 = vld [vmem:[%s6672 + $0x2c] sm:$0xf]
        %v6685 = vld [vmem:[#allocation2 + $0x8] sm:$0xff]
        %v6686 = vld [vmem:[#allocation2 + $0x10] sm:$0xff]
        %v6687 = vld [vmem:[#allocation2 + $0x28] sm:$0xff]
        %v6688 = vld [vmem:[#allocation2 + $0x30] sm:$0xff]
        %v6689 = vld [vmem:[#allocation2 + $0x48] sm:$0xff]
        %v6690 = vld [vmem:[#allocation2 + $0x50] sm:$0xff]
        %v6691 = vld [vmem:[#allocation2 + $0x68] sm:$0xff]
        %v6692 = vld [vmem:[#allocation2 + $0x70] sm:$0xff]
        %v6693 = vld [vmem:[#allocation2 + $0x88] sm:$0xff]
        %v6694 = vld [vmem:[#allocation2 + $0x90] sm:$0xff]
        %v6695 = vld [vmem:[#allocation2 + $0xa8] sm:$0xff]
        %v6696 = vld [vmem:[#allocation2 + $0xb0] sm:$0xff]
        %v6697 = vld [vmem:[#allocation2 + $0xc8] sm:$0xff]
        %v6698 = vld [vmem:[#allocation2 + $0xd0] sm:$0xff]
        %v6699 = vld [vmem:[#allocation2 + $0xe8] sm:$0xff]
        %v6700 = vld [vmem:[#allocation2 + $0xf0] sm:$0xff]
        %v6701 = vld [vmem:[#allocation2 + $0x108] sm:$0xff]
        %v6702 = vld [vmem:[#allocation2 + $0x110] sm:$0xff]
        %v6703 = vld [vmem:[#allocation2 + $0x128] sm:$0xff]
        %v6704 = vld [vmem:[#allocation2 + $0x130] sm:$0xff]
        %v6705 = vld [vmem:[#allocation2 + $0x148] sm:$0xff]
        %v6706 = vld [vmem:[#allocation2 + $0x150] sm:$0xff]
        %v6707 = vld [vmem:[#allocation2 + $0x168] sm:$0xff]
        %v6708 = vld [vmem:[#allocation2 + $0x170] sm:$0xff]
        %v6709 = vld [vmem:[#allocation2 + $0x188] sm:$0xff]
        %v6710 = vld [vmem:[#allocation2 + $0x190] sm:$0xff]
        %v6711 = vld [vmem:[#allocation2 + $0x1a8] sm:$0xff]
        %v6712 = vld [vmem:[#allocation2 + $0x1b0] sm:$0xff]
        %v6713 = vld [vmem:[#allocation2 + $0x1c8] sm:$0xff]
        %v6714 = vld [vmem:[#allocation2 + $0x1d0] sm:$0xff]
        %v6715 = vld [vmem:[#allocation2 + $0x1e8] sm:$0xff]
        %v6716 = vld [vmem:[#allocation2 + $0x1f0] sm:$0xff]
        %v6717 = vld [vmem:[#allocation2 + $0x208] sm:$0xff]
        %v6718 = vld [vmem:[#allocation2 + $0x210] sm:$0xff]
        %v6719 = vld [vmem:[#allocation2 + $0x228] sm:$0xff]
        %v6720 = vld [vmem:[#allocation2 + $0x230] sm:$0xff]
        %v6721 = vld [vmem:[#allocation2 + $0x248] sm:$0xff]
        %v6722 = vld [vmem:[#allocation2 + $0x250] sm:$0xff]
        %v6723 = vld [vmem:[#allocation2 + $0x268] sm:$0xff]
        %v6724 = vld [vmem:[#allocation2 + $0x270] sm:$0xff]
        %v6725 = vld [vmem:[#allocation2 + $0x288] sm:$0xff]
        %v6726 = vld [vmem:[#allocation2 + $0x290] sm:$0xff]
        %v6727 = vld [vmem:[#allocation2 + $0x2a8] sm:$0xff]
        %v6728 = vld [vmem:[#allocation2 + $0x2b0] sm:$0xff]
        %v6729 = vld [vmem:[#allocation2 + $0x2c8] sm:$0xff]
        %v6730 = vld [vmem:[#allocation2 + $0x2d0] sm:$0xff]
        %v6731 = vld [vmem:[#allocation2 + $0x2e8] sm:$0xff]
        %v6732 = vld [vmem:[#allocation2 + $0x2f0] sm:$0xff]
        %6765 = vrot.lane.b32.xlu0 %v6693, 32
        %v6766 = vpop.permute.xlu0 %6765
        %6767 = vrot.lane.b32.xlu0 %v6694, 32
        %v6768 = vpop.permute.xlu0 %6767
        %6769 = vrot.lane.b32.xlu0 %v6695, 32
        %v6770 = vpop.permute.xlu0 %6769
        %6771 = vrot.lane.b32.xlu0 %v6696, 32
        %v6772 = vpop.permute.xlu0 %6771
        %6773 = vrot.lane.b32.xlu0 %v6697, 32
        %v6774 = vpop.permute.xlu0 %6773
        %6775 = vrot.lane.b32.xlu0 %v6698, 32
        %v6776 = vpop.permute.xlu0 %6775
        %6777 = vrot.lane.b32.xlu0 %v6699, 32
        %v6778 = vpop.permute.xlu0 %6777
        %6779 = vrot.lane.b32.xlu0 %v6700, 32
        %v6780 = vpop.permute.xlu0 %6779
        %6781 = vrot.lane.b32.xlu0 %v6701, 32
        %v6782 = vpop.permute.xlu0 %6781
        %6783 = vrot.lane.b32.xlu0 %v6702, 32
        %v6784 = vpop.permute.xlu0 %6783
        %6785 = vrot.lane.b32.xlu0 %v6703, 32
        %v6786 = vpop.permute.xlu0 %6785
        %6787 = vrot.lane.b32.xlu0 %v6704, 32
        %v6788 = vpop.permute.xlu0 %6787
        %6789 = vrot.lane.b32.xlu0 %v6705, 32
        %v6790 = vpop.permute.xlu0 %6789
        %6791 = vrot.lane.b32.xlu0 %v6706, 32
        %v6792 = vpop.permute.xlu0 %6791
        %6793 = vrot.lane.b32.xlu0 %v6707, 32
        %v6794 = vpop.permute.xlu0 %6793
        %6795 = vrot.lane.b32.xlu0 %v6708, 32
        %v6796 = vpop.permute.xlu0 %6795
        %6797 = vrot.lane.b32.xlu0 %v6709, 32
        %v6798 = vpop.permute.xlu0 %6797
        %6799 = vrot.lane.b32.xlu0 %v6710, 32
        %v6800 = vpop.permute.xlu0 %6799
        %6801 = vrot.lane.b32.xlu0 %v6711, 32
        %v6802 = vpop.permute.xlu0 %6801
        %6803 = vrot.lane.b32.xlu0 %v6712, 32
        %v6804 = vpop.permute.xlu0 %6803
        %6805 = vrot.lane.b32.xlu0 %v6713, 32
        %v6806 = vpop.permute.xlu0 %6805
        %6807 = vrot.lane.b32.xlu0 %v6714, 32
        %v6808 = vpop.permute.xlu0 %6807
        %6809 = vrot.lane.b32.xlu0 %v6715, 32
        %v6810 = vpop.permute.xlu0 %6809
        %6811 = vrot.lane.b32.xlu0 %v6716, 32
        %v6812 = vpop.permute.xlu0 %6811
        %6813 = vrot.lane.b32.xlu0 %v6717, 32
        %v6814 = vpop.permute.xlu0 %6813
        %6815 = vrot.lane.b32.xlu0 %v6718, 32
        %v6816 = vpop.permute.xlu0 %6815
        %6817 = vrot.lane.b32.xlu0 %v6719, 32
        %v6818 = vpop.permute.xlu0 %6817
        %6819 = vrot.lane.b32.xlu0 %v6720, 32
        %v6820 = vpop.permute.xlu0 %6819
        %6821 = vrot.lane.b32.xlu0 %v6721, 32
        %v6822 = vpop.permute.xlu0 %6821
        %6823 = vrot.lane.b32.xlu0 %v6722, 32
        %v6824 = vpop.permute.xlu0 %6823
        %6825 = vrot.lane.b32.xlu0 %v6723, 32
        %v6826 = vpop.permute.xlu0 %6825
        %6827 = vrot.lane.b32.xlu0 %v6724, 32
        %v6828 = vpop.permute.xlu0 %6827
        %6869 = vrot.lane.b32.xlu0 %v6701, 64
        %v6870 = vpop.permute.xlu0 %6869
        %6871 = vrot.lane.b32.xlu0 %v6702, 64
        %v6872 = vpop.permute.xlu0 %6871
        %6873 = vrot.lane.b32.xlu0 %v6703, 64
        %v6874 = vpop.permute.xlu0 %6873
        %6875 = vrot.lane.b32.xlu0 %v6704, 64
        %v6876 = vpop.permute.xlu0 %6875
        %6877 = vrot.lane.b32.xlu0 %v6705, 64
        %v6878 = vpop.permute.xlu0 %6877
        %6879 = vrot.lane.b32.xlu0 %v6706, 64
        %v6880 = vpop.permute.xlu0 %6879
        %6881 = vrot.lane.b32.xlu0 %v6707, 64
        %v6882 = vpop.permute.xlu0 %6881
        %6883 = vrot.lane.b32.xlu0 %v6708, 64
        %v6884 = vpop.permute.xlu0 %6883
        %6885 = vrot.lane.b32.xlu0 %v6709, 64
        %v6886 = vpop.permute.xlu0 %6885
        %6887 = vrot.lane.b32.xlu0 %v6710, 64
        %v6888 = vpop.permute.xlu0 %6887
        %6889 = vrot.lane.b32.xlu0 %v6711, 64
        %v6890 = vpop.permute.xlu0 %6889
        %6891 = vrot.lane.b32.xlu0 %v6712, 64
        %v6892 = vpop.permute.xlu0 %6891
        %6893 = vrot.lane.b32.xlu0 %v6713, 64
        %v6894 = vpop.permute.xlu0 %6893
        %6895 = vrot.lane.b32.xlu0 %v6714, 64
        %v6896 = vpop.permute.xlu0 %6895
        %6897 = vrot.lane.b32.xlu0 %v6715, 64
        %v6898 = vpop.permute.xlu0 %6897
        %6899 = vrot.lane.b32.xlu0 %v6716, 64
        %v6900 = vpop.permute.xlu0 %6899
        %6901 = vrot.lane.b32.xlu0 %v6717, 64
        %v6902 = vpop.permute.xlu0 %6901
        %6903 = vrot.lane.b32.xlu0 %v6718, 64
        %v6904 = vpop.permute.xlu0 %6903
        %6905 = vrot.lane.b32.xlu0 %v6719, 64
        %v6906 = vpop.permute.xlu0 %6905
        %6907 = vrot.lane.b32.xlu0 %v6720, 64
        %v6908 = vpop.permute.xlu0 %6907
        %6909 = vrot.lane.b32.xlu0 %v6721, 64
        %v6910 = vpop.permute.xlu0 %6909
        %6911 = vrot.lane.b32.xlu0 %v6722, 64
        %v6912 = vpop.permute.xlu0 %6911
        %6913 = vrot.lane.b32.xlu0 %v6723, 64
        %v6914 = vpop.permute.xlu0 %6913
        %6915 = vrot.lane.b32.xlu0 %v6724, 64
        %v6916 = vpop.permute.xlu0 %6915
        %6917 = vrot.lane.b32.xlu0 %v6725, 64
        %v6918 = vpop.permute.xlu0 %6917
        %6919 = vrot.lane.b32.xlu0 %v6726, 64
        %v6920 = vpop.permute.xlu0 %6919
        %6921 = vrot.lane.b32.xlu0 %v6727, 64
        %v6922 = vpop.permute.xlu0 %6921
        %6923 = vrot.lane.b32.xlu0 %v6728, 64
        %v6924 = vpop.permute.xlu0 %6923
        %6925 = vrot.lane.b32.xlu0 %v6729, 64
        %v6926 = vpop.permute.xlu0 %6925
        %6927 = vrot.lane.b32.xlu0 %v6730, 64
        %v6928 = vpop.permute.xlu0 %6927
        %6929 = vrot.lane.b32.xlu0 %v6731, 64
        %v6930 = vpop.permute.xlu0 %6929
        %6931 = vrot.lane.b32.xlu0 %v6732, 64
        %v6932 = vpop.permute.xlu0 %6931
        %v6965 = vsel %vm450, %v6685, %v6766
        %v6966 = vsel %vm450, %v6686, %v6768
        %v6967 = vsel %vm450, %v6687, %v6770
        %v6968 = vsel %vm450, %v6688, %v6772
        %v6969 = vsel %vm450, %v6689, %v6774
        %v6970 = vsel %vm450, %v6690, %v6776
        %v6971 = vsel %vm450, %v6691, %v6778
        %v6972 = vsel %vm450, %v6692, %v6780
        %v6973 = vsel %vm450, %v6693, %v6782
        %v6974 = vsel %vm450, %v6694, %v6784
        %v6975 = vsel %vm450, %v6695, %v6786
        %v6976 = vsel %vm450, %v6696, %v6788
        %v6977 = vsel %vm450, %v6697, %v6790
        %v6978 = vsel %vm450, %v6698, %v6792
        %v6979 = vsel %vm450, %v6699, %v6794
        %v6980 = vsel %vm450, %v6700, %v6796
        %v6981 = vsel %vm450, %v6701, %v6798
        %v6982 = vsel %vm450, %v6702, %v6800
        %v6983 = vsel %vm450, %v6703, %v6802
        %v6984 = vsel %vm450, %v6704, %v6804
        %v6985 = vsel %vm450, %v6705, %v6806
        %v6986 = vsel %vm450, %v6706, %v6808
        %v6987 = vsel %vm450, %v6707, %v6810
        %v6988 = vsel %vm450, %v6708, %v6812
        %v6989 = vsel %vm450, %v6709, %v6814
        %v6990 = vsel %vm450, %v6710, %v6816
        %v6991 = vsel %vm450, %v6711, %v6818
        %v6992 = vsel %vm450, %v6712, %v6820
        %v6993 = vsel %vm450, %v6713, %v6822
        %v6994 = vsel %vm450, %v6714, %v6824
        %v6995 = vsel %vm450, %v6715, %v6826
        %v6996 = vsel %vm450, %v6716, %v6828
        %v6997 = vsel %vm1053, %v6965, %v6870
        %v6998 = vsel %vm1053, %v6966, %v6872
        %v6999 = vsel %vm1053, %v6967, %v6874
        %v7000 = vsel %vm1053, %v6968, %v6876
        %v7001 = vsel %vm1053, %v6969, %v6878
        %v7002 = vsel %vm1053, %v6970, %v6880
        %v7003 = vsel %vm1053, %v6971, %v6882
        %v7004 = vsel %vm1053, %v6972, %v6884
        %v7005 = vsel %vm1053, %v6973, %v6886
        %v7006 = vsel %vm1053, %v6974, %v6888
        %v7007 = vsel %vm1053, %v6975, %v6890
        %v7008 = vsel %vm1053, %v6976, %v6892
        %v7009 = vsel %vm1053, %v6977, %v6894
        %v7010 = vsel %vm1053, %v6978, %v6896
        %v7011 = vsel %vm1053, %v6979, %v6898
        %v7012 = vsel %vm1053, %v6980, %v6900
        %v7013 = vsel %vm1053, %v6981, %v6902
        %v7014 = vsel %vm1053, %v6982, %v6904
        %v7015 = vsel %vm1053, %v6983, %v6906
        %v7016 = vsel %vm1053, %v6984, %v6908
        %v7017 = vsel %vm1053, %v6985, %v6910
        %v7018 = vsel %vm1053, %v6986, %v6912
        %v7019 = vsel %vm1053, %v6987, %v6914
        %v7020 = vsel %vm1053, %v6988, %v6916
        %v7021 = vsel %vm1053, %v6989, %v6918
        %v7022 = vsel %vm1053, %v6990, %v6920
        %v7023 = vsel %vm1053, %v6991, %v6922
        %v7024 = vsel %vm1053, %v6992, %v6924
        %v7025 = vsel %vm1053, %v6993, %v6926
        %v7026 = vsel %vm1053, %v6994, %v6928
        %v7027 = vsel %vm1053, %v6995, %v6930
        %v7028 = vsel %vm1053, %v6996, %v6932
        %v7029 = vpack.c.bf16 %v6998, %v6997
        %v7030 = vpack.c.bf16 %v7000, %v6999
        %v7031 = vpack.c.bf16 %v7002, %v7001
        %v7032 = vpack.c.bf16 %v7004, %v7003
        %v7033 = vpack.c.bf16 %v7006, %v7005
        %v7034 = vpack.c.bf16 %v7008, %v7007
        %v7035 = vpack.c.bf16 %v7010, %v7009
        %v7036 = vpack.c.bf16 %v7012, %v7011
        %v7037 = vpack.c.bf16 %v7014, %v7013
        %v7038 = vpack.c.bf16 %v7016, %v7015
        %v7039 = vpack.c.bf16 %v7018, %v7017
        %v7040 = vpack.c.bf16 %v7020, %v7019
        %v7041 = vpack.c.bf16 %v7022, %v7021
        %v7042 = vpack.c.bf16 %v7024, %v7023
        %v7043 = vpack.c.bf16 %v7026, %v7025
        %v7044 = vpack.c.bf16 %v7028, %v7027
        %s7045 = scalar_lea.vmem [#allocation9], 480
        %v7046 = vld [vmem:[%s7045] sm:$0xf]
        %v7047 = vld [vmem:[%s7045 + $0x4] sm:$0xf]
        %v7048 = vld [vmem:[%s7045 + $0x8] sm:$0xf]
        %v7049 = vld [vmem:[%s7045 + $0xc] sm:$0xf]
        %v7050 = vld [vmem:[%s7045 + $0x10] sm:$0xf]
        %v7051 = vld [vmem:[%s7045 + $0x14] sm:$0xf]
        %v7052 = vld [vmem:[%s7045 + $0x18] sm:$0xf]
        %v7053 = vld [vmem:[%s7045 + $0x1c] sm:$0xf]
        %v7054 = vld [vmem:[%s7045 + $0x20] sm:$0xf]
        %v7055 = vld [vmem:[%s7045 + $0x24] sm:$0xf]
        %v7056 = vld [vmem:[%s7045 + $0x28] sm:$0xf]
        %v7057 = vld [vmem:[%s7045 + $0x2c] sm:$0xf]
        %v7070 = vunpack.c.l.b16 %v7046
        %v7071 = vunpack.c.l.b16 %v7047
        %v7072 = vunpack.c.l.b16 %v7048
        %v7073 = vunpack.c.l.b16 %v7049
        %v7074 = vunpack.c.l.b16 %v7050
        %v7075 = vunpack.c.l.b16 %v7051
        %v7076 = vunpack.c.l.b16 %v7052
        %v7077 = vunpack.c.l.b16 %v7053
        %v7078 = vunpack.c.l.b16 %v7054
        %v7079 = vunpack.c.l.b16 %v7055
        %v7080 = vunpack.c.l.b16 %v7056
        %v7081 = vunpack.c.l.b16 %v7057
        %v7082 = vpack.c.b16 %v7071, %v7070
        %v7083 = vpack.c.b16 %v7073, %v7072
        %v7084 = vpack.c.b16 %v7075, %v7074
        %v7085 = vpack.c.b16 %v7077, %v7076
        %v7086 = vpack.c.b16 %v7079, %v7078
        %v7087 = vpack.c.b16 %v7081, %v7080
        %v7095 = vsel %vm1505, %v7029, 0
        %v7098 = vsel %vm1505, %v7030, 0
        %v7101 = vsel %vm1505, %v7031, 0
        %v7104 = vsel %vm1505, %v7032, 0
        %v7107 = vsel %vm1505, %v7033, 0
        %v7110 = vsel %vm1505, %v7034, 0
        %v7113 = vsel %vm1505, %v7035, 0
        %v7116 = vsel %vm1505, %v7036, 0
        %v7119 = vsel %vm1505, %v7037, 0
        %v7122 = vsel %vm1505, %v7038, 0
        %v7125 = vsel %vm1505, %v7039, 0
        %v7128 = vsel %vm1505, %v7040, 0
        %v7131 = vsel %vm1505, %v7041, 0
        %v7134 = vsel %vm1505, %v7042, 0
        %v7137 = vsel %vm1505, %v7043, 0
        %v7140 = vsel %vm1505, %v7044, 0
        %7142 = vmatprep.subr.bf16.mxu0 0
        %7143 = vmatpush1.bf16.msra.mxu0 %v7082
        %7144 = vmatprep.subr.bf16.mxu0 0
        %7145 = vmatpush1.bf16.msra.mxu0 %v7083
        %7146 = vmatprep.subr.bf16.mxu0 0
        %7147 = vmatpush1.bf16.msra.mxu0 %v7084
        %7148 = vmatprep.subr.bf16.mxu0 0
        %7149 = vmatpush1.bf16.msra.mxu0 %v7085
        %7150 = vmatprep.subr.bf16.mxu0 0
        %7151 = vmatpush1.bf16.msra.mxu0 %v7086
        %7152 = vmatprep.subr.bf16.mxu0 0
        %7153 = vmatpush1.bf16.msra.mxu0 %v7087
        %7154 = vmatprep.subr.bf16.mxu0 0
        %7155 = vmatpush1.bf16.msra.mxu0 0
        %7156 = vmatprep.subr.bf16.mxu0 0
        %7157 = vmatpush1.bf16.msra.mxu0 0
        %7158 = vmatprep.subr.bf16.mxu0 0
        %7159 = vmatpush1.bf16.msra.mxu0 0
        %7160 = vmatprep.subr.bf16.mxu0 0
        %7161 = vmatpush1.bf16.msra.mxu0 0
        %7162 = vmatprep.subr.bf16.mxu0 0
        %7163 = vmatpush1.bf16.msra.mxu0 0
        %7164 = vmatprep.subr.bf16.mxu0 0
        %7165 = vmatpush1.bf16.msra.mxu0 0
        %7166 = vmatprep.subr.bf16.mxu0 0
        %7167 = vmatpush1.bf16.msra.mxu0 0
        %7168 = vmatprep.subr.bf16.mxu0 0
        %7169 = vmatpush1.bf16.msra.mxu0 0
        %7170 = vmatprep.subr.bf16.mxu0 0
        %7171 = vmatpush1.bf16.msra.mxu0 0
        %7172 = vmatprep.subr.bf16.mxu0 0
        %7173 = vmatpush1.bf16.msra.mxu0 0
        %7174 = vmatprep.mubr.bf16.mxu0 0
        %7175 = vmatmul.mubr.bf16.gmra.mrb[0].mxu0 %v7095
        %v7176 = vpop.f32.mrb[0].mxu0
        %v7177 = vadd.f32 0.0, %v7176
        %v7178 = vpop.f32.mrb[0].mxu0
        %v7179 = vpop.f32.mrb[0].mxu0
        %v7180 = vadd.f32 0.0, %v7179
        %v7181 = vpop.f32.mrb[0].mxu0
        %7182 = vmatprep.mubr.bf16.mxu0 0
        %7183 = vmatmul.mubr.bf16.gmra.mrb[0].mxu0 %v7098
        %v7184 = vpop.f32.mrb[0].mxu0
        %v7185 = vadd.f32 0.0, %v7184
        %v7186 = vpop.f32.mrb[0].mxu0
        %v7187 = vpop.f32.mrb[0].mxu0
        %v7188 = vadd.f32 0.0, %v7187
        %v7189 = vpop.f32.mrb[0].mxu0
        %7190 = vmatprep.mubr.bf16.mxu0 0
        %7191 = vmatmul.mubr.bf16.gmra.mrb[0].mxu0 %v7101
        %v7192 = vpop.f32.mrb[0].mxu0
        %v7193 = vadd.f32 0.0, %v7192
        %v7194 = vpop.f32.mrb[0].mxu0
        %v7195 = vpop.f32.mrb[0].mxu0
        %v7196 = vadd.f32 0.0, %v7195
        %v7197 = vpop.f32.mrb[0].mxu0
        %7198 = vmatprep.mubr.bf16.mxu0 0
        %7199 = vmatmul.mubr.bf16.gmra.mrb[0].mxu0 %v7104
        %v7200 = vpop.f32.mrb[0].mxu0
        %v7201 = vadd.f32 0.0, %v7200
        %v7202 = vpop.f32.mrb[0].mxu0
        %v7203 = vpop.f32.mrb[0].mxu0
        %v7204 = vadd.f32 0.0, %v7203
        %v7205 = vpop.f32.mrb[0].mxu0
        %7206 = vmatprep.mubr.bf16.mxu0 0
        %7207 = vmatmul.mubr.bf16.gmra.mrb[0].mxu0 %v7107
        %v7208 = vpop.f32.mrb[0].mxu0
        %v7209 = vadd.f32 0.0, %v7208
        %v7210 = vpop.f32.mrb[0].mxu0
        %v7211 = vpop.f32.mrb[0].mxu0
        %v7212 = vadd.f32 0.0, %v7211
        %v7213 = vpop.f32.mrb[0].mxu0
        %7214 = vmatprep.mubr.bf16.mxu0 0
        %7215 = vmatmul.mubr.bf16.gmra.mrb[0].mxu0 %v7110
        %v7216 = vpop.f32.mrb[0].mxu0
        %v7217 = vadd.f32 0.0, %v7216
        %v7218 = vpop.f32.mrb[0].mxu0
        %v7219 = vpop.f32.mrb[0].mxu0
        %v7220 = vadd.f32 0.0, %v7219
        %v7221 = vpop.f32.mrb[0].mxu0
        %7222 = vmatprep.mubr.bf16.mxu0 0
        %7223 = vmatmul.mubr.bf16.gmra.mrb[0].mxu0 %v7113
        %v7224 = vpop.f32.mrb[0].mxu0
        %v7225 = vadd.f32 0.0, %v7224
        %v7226 = vpop.f32.mrb[0].mxu0
        %v7227 = vpop.f32.mrb[0].mxu0
        %v7228 = vadd.f32 0.0, %v7227
        %v7229 = vpop.f32.mrb[0].mxu0
        %7230 = vmatprep.mubr.bf16.mxu0 0
        %7231 = vmatmul.mubr.bf16.gmra.mrb[0].mxu0 %v7116
        %v7232 = vpop.f32.mrb[0].mxu0
        %v7233 = vadd.f32 0.0, %v7232
        %v7234 = vpop.f32.mrb[0].mxu0
        %v7235 = vpop.f32.mrb[0].mxu0
        %v7236 = vadd.f32 0.0, %v7235
        %v7237 = vpop.f32.mrb[0].mxu0
        %7238 = vmatprep.mubr.bf16.mxu0 0
        %7239 = vmatmul.mubr.bf16.gmra.mrb[0].mxu0 %v7119
        %v7240 = vpop.f32.mrb[0].mxu0
        %v7241 = vadd.f32 0.0, %v7240
        %v7242 = vpop.f32.mrb[0].mxu0
        %v7243 = vpop.f32.mrb[0].mxu0
        %v7244 = vadd.f32 0.0, %v7243
        %v7245 = vpop.f32.mrb[0].mxu0
        %7246 = vmatprep.mubr.bf16.mxu0 0
        %7247 = vmatmul.mubr.bf16.gmra.mrb[0].mxu0 %v7122
        %v7248 = vpop.f32.mrb[0].mxu0
        %v7249 = vadd.f32 0.0, %v7248
        %v7250 = vpop.f32.mrb[0].mxu0
        %v7251 = vpop.f32.mrb[0].mxu0
        %v7252 = vadd.f32 0.0, %v7251
        %v7253 = vpop.f32.mrb[0].mxu0
        %7254 = vmatprep.mubr.bf16.mxu0 0
        %7255 = vmatmul.mubr.bf16.gmra.mrb[0].mxu0 %v7125
        %v7256 = vpop.f32.mrb[0].mxu0
        %v7257 = vadd.f32 0.0, %v7256
        %v7258 = vpop.f32.mrb[0].mxu0
        %v7259 = vpop.f32.mrb[0].mxu0
        %v7260 = vadd.f32 0.0, %v7259
        %v7261 = vpop.f32.mrb[0].mxu0
        %7262 = vmatprep.mubr.bf16.mxu0 0
        %7263 = vmatmul.mubr.bf16.gmra.mrb[0].mxu0 %v7128
        %v7264 = vpop.f32.mrb[0].mxu0
        %v7265 = vadd.f32 0.0, %v7264
        %v7266 = vpop.f32.mrb[0].mxu0
        %v7267 = vpop.f32.mrb[0].mxu0
        %v7268 = vadd.f32 0.0, %v7267
        %v7269 = vpop.f32.mrb[0].mxu0
        %7270 = vmatprep.mubr.bf16.mxu0 0
        %7271 = vmatmul.mubr.bf16.gmra.mrb[0].mxu0 %v7131
        %v7272 = vpop.f32.mrb[0].mxu0
        %v7273 = vadd.f32 0.0, %v7272
        %v7274 = vpop.f32.mrb[0].mxu0
        %v7275 = vpop.f32.mrb[0].mxu0
        %v7276 = vadd.f32 0.0, %v7275
        %v7277 = vpop.f32.mrb[0].mxu0
        %7278 = vmatprep.mubr.bf16.mxu0 0
        %7279 = vmatmul.mubr.bf16.gmra.mrb[0].mxu0 %v7134
        %v7280 = vpop.f32.mrb[0].mxu0
        %v7281 = vadd.f32 0.0, %v7280
        %v7282 = vpop.f32.mrb[0].mxu0
        %v7283 = vpop.f32.mrb[0].mxu0
        %v7284 = vadd.f32 0.0, %v7283
        %v7285 = vpop.f32.mrb[0].mxu0
        %7286 = vmatprep.mubr.bf16.mxu0 0
        %7287 = vmatmul.mubr.bf16.gmra.mrb[0].mxu0 %v7137
        %v7288 = vpop.f32.mrb[0].mxu0
        %v7289 = vadd.f32 0.0, %v7288
        %v7290 = vpop.f32.mrb[0].mxu0
        %v7291 = vpop.f32.mrb[0].mxu0
        %v7292 = vadd.f32 0.0, %v7291
        %v7293 = vpop.f32.mrb[0].mxu0
        %7294 = vmatprep.mubr.bf16.mxu0 0
        %7295 = vmatmul.mubr.bf16.gmra.mrb[0].mxu0 %v7140
        %v7296 = vpop.f32.mrb[0].mxu0
        %v7297 = vadd.f32 0.0, %v7296
        %v7298 = vpop.f32.mrb[0].mxu0
        %v7299 = vpop.f32.mrb[0].mxu0
        %v7300 = vadd.f32 0.0, %v7299
        %v7301 = vpop.f32.mrb[0].mxu0
        %7302 = vdwg.mxu0
        %v7315 = vunpack.c.l.b16 %v6673
        %v7316 = vunpack.c.l.b16 %v6674
        %v7317 = vunpack.c.l.b16 %v6675
        %v7318 = vunpack.c.l.b16 %v6676
        %v7319 = vunpack.c.l.b16 %v6677
        %v7320 = vunpack.c.l.b16 %v6678
        %v7321 = vunpack.c.l.b16 %v6679
        %v7322 = vunpack.c.l.b16 %v6680
        %v7323 = vunpack.c.l.b16 %v6681
        %v7324 = vunpack.c.l.b16 %v6682
        %v7325 = vunpack.c.l.b16 %v6683
        %v7326 = vunpack.c.l.b16 %v6684
        %v7327 = vpack.c.b16 %v7316, %v7315
        %v7328 = vpack.c.b16 %v7318, %v7317
        %v7329 = vpack.c.b16 %v7320, %v7319
        %v7330 = vpack.c.b16 %v7322, %v7321
        %v7331 = vpack.c.b16 %v7324, %v7323
        %v7332 = vpack.c.b16 %v7326, %v7325
        %v7340 = vsel %vm1505, %v6656, 0
        %v7343 = vsel %vm1505, %v6657, 0
        %v7346 = vsel %vm1505, %v6658, 0
        %v7349 = vsel %vm1505, %v6659, 0
        %v7352 = vsel %vm1505, %v6660, 0
        %v7355 = vsel %vm1505, %v6661, 0
        %v7358 = vsel %vm1505, %v6662, 0
        %v7361 = vsel %vm1505, %v6663, 0
        %v7364 = vsel %vm1505, %v6664, 0
        %v7367 = vsel %vm1505, %v6665, 0
        %v7370 = vsel %vm1505, %v6666, 0
        %v7373 = vsel %vm1505, %v6667, 0
        %v7376 = vsel %vm1505, %v6668, 0
        %v7379 = vsel %vm1505, %v6669, 0
        %v7382 = vsel %vm1505, %v6670, 0
        %v7385 = vsel %vm1505, %v6671, 0
        %7387 = vmatprep.subr.bf16.mxu0 0
        %7388 = vmatpush1.bf16.msra.mxu0 %v7327
        %7389 = vmatprep.subr.bf16.mxu0 0
        %7390 = vmatpush1.bf16.msra.mxu0 %v7328
        %7391 = vmatprep.subr.bf16.mxu0 0
        %7392 = vmatpush1.bf16.msra.mxu0 %v7329
        %7393 = vmatprep.subr.bf16.mxu0 0
        %7394 = vmatpush1.bf16.msra.mxu0 %v7330
        %7395 = vmatprep.subr.bf16.mxu0 0
        %7396 = vmatpush1.bf16.msra.mxu0 %v7331
        %7397 = vmatprep.subr.bf16.mxu0 0
        %7398 = vmatpush1.bf16.msra.mxu0 %v7332
        %7399 = vmatprep.subr.bf16.mxu0 0
        %7400 = vmatpush1.bf16.msra.mxu0 0
        %7401 = vmatprep.subr.bf16.mxu0 0
        %7402 = vmatpush1.bf16.msra.mxu0 0
        %7403 = vmatprep.subr.bf16.mxu0 0
        %7404 = vmatpush1.bf16.msra.mxu0 0
        %7405 = vmatprep.subr.bf16.mxu0 0
        %7406 = vmatpush1.bf16.msra.mxu0 0
        %7407 = vmatprep.subr.bf16.mxu0 0
        %7408 = vmatpush1.bf16.msra.mxu0 0
        %7409 = vmatprep.subr.bf16.mxu0 0
        %7410 = vmatpush1.bf16.msra.mxu0 0
        %7411 = vmatprep.subr.bf16.mxu0 0
        %7412 = vmatpush1.bf16.msra.mxu0 0
        %7413 = vmatprep.subr.bf16.mxu0 0
        %7414 = vmatpush1.bf16.msra.mxu0 0
        %7415 = vmatprep.subr.bf16.mxu0 0
        %7416 = vmatpush1.bf16.msra.mxu0 0
        %7417 = vmatprep.subr.bf16.mxu0 0
        %7418 = vmatpush1.bf16.msra.mxu0 0
        %7419 = vmatprep.mubr.bf16.mxu0 0
        %7420 = vmatmul.mubr.bf16.gmra.mrb[0].mxu0 %v7340
        %v7421 = vpop.f32.mrb[0].mxu0
        %v7422 = vadd.f32 %v7177, %v7421
        %v7423 = vpop.f32.mrb[0].mxu0
        %v7424 = vpop.f32.mrb[0].mxu0
        %v7425 = vadd.f32 %v7180, %v7424
        %v7426 = vpop.f32.mrb[0].mxu0
        %7427 = vmatprep.mubr.bf16.mxu0 0
        %7428 = vmatmul.mubr.bf16.gmra.mrb[0].mxu0 %v7343
        %v7429 = vpop.f32.mrb[0].mxu0
        %v7430 = vadd.f32 %v7185, %v7429
        %v7431 = vpop.f32.mrb[0].mxu0
        %v7432 = vpop.f32.mrb[0].mxu0
        %v7433 = vadd.f32 %v7188, %v7432
        %v7434 = vpop.f32.mrb[0].mxu0
        %7435 = vmatprep.mubr.bf16.mxu0 0
        %7436 = vmatmul.mubr.bf16.gmra.mrb[0].mxu0 %v7346
        %v7437 = vpop.f32.mrb[0].mxu0
        %v7438 = vadd.f32 %v7193, %v7437
        %v7439 = vpop.f32.mrb[0].mxu0
        %v7440 = vpop.f32.mrb[0].mxu0
        %v7441 = vadd.f32 %v7196, %v7440
        %v7442 = vpop.f32.mrb[0].mxu0
        %7443 = vmatprep.mubr.bf16.mxu0 0
        %7444 = vmatmul.mubr.bf16.gmra.mrb[0].mxu0 %v7349
        %v7445 = vpop.f32.mrb[0].mxu0
        %v7446 = vadd.f32 %v7201, %v7445
        %v7447 = vpop.f32.mrb[0].mxu0
        %v7448 = vpop.f32.mrb[0].mxu0
        %v7449 = vadd.f32 %v7204, %v7448
        %v7450 = vpop.f32.mrb[0].mxu0
        %7451 = vmatprep.mubr.bf16.mxu0 0
        %7452 = vmatmul.mubr.bf16.gmra.mrb[0].mxu0 %v7352
        %v7453 = vpop.f32.mrb[0].mxu0
        %v7454 = vadd.f32 %v7209, %v7453
        %v7455 = vpop.f32.mrb[0].mxu0
        %v7456 = vpop.f32.mrb[0].mxu0
        %v7457 = vadd.f32 %v7212, %v7456
        %v7458 = vpop.f32.mrb[0].mxu0
        %7459 = vmatprep.mubr.bf16.mxu0 0
        %7460 = vmatmul.mubr.bf16.gmra.mrb[0].mxu0 %v7355
        %v7461 = vpop.f32.mrb[0].mxu0
        %v7462 = vadd.f32 %v7217, %v7461
        %v7463 = vpop.f32.mrb[0].mxu0
        %v7464 = vpop.f32.mrb[0].mxu0
        %v7465 = vadd.f32 %v7220, %v7464
        %v7466 = vpop.f32.mrb[0].mxu0
        %7467 = vmatprep.mubr.bf16.mxu0 0
        %7468 = vmatmul.mubr.bf16.gmra.mrb[0].mxu0 %v7358
        %v7469 = vpop.f32.mrb[0].mxu0
        %v7470 = vadd.f32 %v7225, %v7469
        %v7471 = vpop.f32.mrb[0].mxu0
        %v7472 = vpop.f32.mrb[0].mxu0
        %v7473 = vadd.f32 %v7228, %v7472
        %v7474 = vpop.f32.mrb[0].mxu0
        %7475 = vmatprep.mubr.bf16.mxu0 0
        %7476 = vmatmul.mubr.bf16.gmra.mrb[0].mxu0 %v7361
        %v7477 = vpop.f32.mrb[0].mxu0
        %v7478 = vadd.f32 %v7233, %v7477
        %v7479 = vpop.f32.mrb[0].mxu0
        %v7480 = vpop.f32.mrb[0].mxu0
        %v7481 = vadd.f32 %v7236, %v7480
        %v7482 = vpop.f32.mrb[0].mxu0
        %7483 = vmatprep.mubr.bf16.mxu0 0
        %7484 = vmatmul.mubr.bf16.gmra.mrb[0].mxu0 %v7364
        %v7485 = vpop.f32.mrb[0].mxu0
        %v7486 = vadd.f32 %v7241, %v7485
        %v7487 = vpop.f32.mrb[0].mxu0
        %v7488 = vpop.f32.mrb[0].mxu0
        %v7489 = vadd.f32 %v7244, %v7488
        %v7490 = vpop.f32.mrb[0].mxu0
        %7491 = vmatprep.mubr.bf16.mxu0 0
        %7492 = vmatmul.mubr.bf16.gmra.mrb[0].mxu0 %v7367
        %v7493 = vpop.f32.mrb[0].mxu0
        %v7494 = vadd.f32 %v7249, %v7493
        %v7495 = vpop.f32.mrb[0].mxu0
        %v7496 = vpop.f32.mrb[0].mxu0
        %v7497 = vadd.f32 %v7252, %v7496
        %v7498 = vpop.f32.mrb[0].mxu0
        %7499 = vmatprep.mubr.bf16.mxu0 0
        %7500 = vmatmul.mubr.bf16.gmra.mrb[0].mxu0 %v7370
        %v7501 = vpop.f32.mrb[0].mxu0
        %v7502 = vadd.f32 %v7257, %v7501
        %v7503 = vpop.f32.mrb[0].mxu0
        %v7504 = vpop.f32.mrb[0].mxu0
        %v7505 = vadd.f32 %v7260, %v7504
        %v7506 = vpop.f32.mrb[0].mxu0
        %7507 = vmatprep.mubr.bf16.mxu0 0
        %7508 = vmatmul.mubr.bf16.gmra.mrb[0].mxu0 %v7373
        %v7509 = vpop.f32.mrb[0].mxu0
        %v7510 = vadd.f32 %v7265, %v7509
        %v7511 = vpop.f32.mrb[0].mxu0
        %v7512 = vpop.f32.mrb[0].mxu0
        %v7513 = vadd.f32 %v7268, %v7512
        %v7514 = vpop.f32.mrb[0].mxu0
        %7515 = vmatprep.mubr.bf16.mxu0 0
        %7516 = vmatmul.mubr.bf16.gmra.mrb[0].mxu0 %v7376
        %v7517 = vpop.f32.mrb[0].mxu0
        %v7518 = vadd.f32 %v7273, %v7517
        %v7519 = vpop.f32.mrb[0].mxu0
        %v7520 = vpop.f32.mrb[0].mxu0
        %v7521 = vadd.f32 %v7276, %v7520
        %v7522 = vpop.f32.mrb[0].mxu0
        %7523 = vmatprep.mubr.bf16.mxu0 0
        %7524 = vmatmul.mubr.bf16.gmra.mrb[0].mxu0 %v7379
        %v7525 = vpop.f32.mrb[0].mxu0
        %v7526 = vadd.f32 %v7281, %v7525
        %v7527 = vpop.f32.mrb[0].mxu0
        %v7528 = vpop.f32.mrb[0].mxu0
        %v7529 = vadd.f32 %v7284, %v7528
        %v7530 = vpop.f32.mrb[0].mxu0
        %7531 = vmatprep.mubr.bf16.mxu0 0
        %7532 = vmatmul.mubr.bf16.gmra.mrb[0].mxu0 %v7382
        %v7533 = vpop.f32.mrb[0].mxu0
        %v7534 = vadd.f32 %v7289, %v7533
        %v7535 = vpop.f32.mrb[0].mxu0
        %v7536 = vpop.f32.mrb[0].mxu0
        %v7537 = vadd.f32 %v7292, %v7536
        %v7538 = vpop.f32.mrb[0].mxu0
        %7539 = vmatprep.mubr.bf16.mxu0 0
        %7540 = vmatmul.mubr.bf16.gmra.mrb[0].mxu0 %v7385
        %v7541 = vpop.f32.mrb[0].mxu0
        %v7542 = vadd.f32 %v7297, %v7541
        %v7543 = vpop.f32.mrb[0].mxu0
        %v7544 = vpop.f32.mrb[0].mxu0
        %v7545 = vadd.f32 %v7300, %v7544
        %v7546 = vpop.f32.mrb[0].mxu0
        %7547 = vdwg.mxu0
        %v7548 = vld [vmem:[#allocation2 + $0xc] sm:$0xff]
        %v7549 = vld [vmem:[#allocation2 + $0x14] sm:$0xff]
        %v7550 = vld [vmem:[#allocation2 + $0x2c] sm:$0xff]
        %v7551 = vld [vmem:[#allocation2 + $0x34] sm:$0xff]
        %v7552 = vld [vmem:[#allocation2 + $0x4c] sm:$0xff]
        %v7553 = vld [vmem:[#allocation2 + $0x54] sm:$0xff]
        %v7554 = vld [vmem:[#allocation2 + $0x6c] sm:$0xff]
        %v7555 = vld [vmem:[#allocation2 + $0x74] sm:$0xff]
        %v7556 = vld [vmem:[#allocation2 + $0x8c] sm:$0xff]
        %v7557 = vld [vmem:[#allocation2 + $0x94] sm:$0xff]
        %v7558 = vld [vmem:[#allocation2 + $0xac] sm:$0xff]
        %v7559 = vld [vmem:[#allocation2 + $0xb4] sm:$0xff]
        %v7560 = vld [vmem:[#allocation2 + $0xcc] sm:$0xff]
        %v7561 = vld [vmem:[#allocation2 + $0xd4] sm:$0xff]
        %v7562 = vld [vmem:[#allocation2 + $0xec] sm:$0xff]
        %v7563 = vld [vmem:[#allocation2 + $0xf4] sm:$0xff]
        %v7564 = vld [vmem:[#allocation2 + $0x10c] sm:$0xff]
        %v7565 = vld [vmem:[#allocation2 + $0x114] sm:$0xff]
        %v7566 = vld [vmem:[#allocation2 + $0x12c] sm:$0xff]
        %v7567 = vld [vmem:[#allocation2 + $0x134] sm:$0xff]
        %v7568 = vld [vmem:[#allocation2 + $0x14c] sm:$0xff]
        %v7569 = vld [vmem:[#allocation2 + $0x154] sm:$0xff]
        %v7570 = vld [vmem:[#allocation2 + $0x16c] sm:$0xff]
        %v7571 = vld [vmem:[#allocation2 + $0x174] sm:$0xff]
        %v7572 = vld [vmem:[#allocation2 + $0x18c] sm:$0xff]
        %v7573 = vld [vmem:[#allocation2 + $0x194] sm:$0xff]
        %v7574 = vld [vmem:[#allocation2 + $0x1ac] sm:$0xff]
        %v7575 = vld [vmem:[#allocation2 + $0x1b4] sm:$0xff]
        %v7576 = vld [vmem:[#allocation2 + $0x1cc] sm:$0xff]
        %v7577 = vld [vmem:[#allocation2 + $0x1d4] sm:$0xff]
        %v7578 = vld [vmem:[#allocation2 + $0x1ec] sm:$0xff]
        %v7579 = vld [vmem:[#allocation2 + $0x1f4] sm:$0xff]
        %v7580 = vld [vmem:[#allocation2 + $0x20c] sm:$0xff]
        %v7581 = vld [vmem:[#allocation2 + $0x214] sm:$0xff]
        %v7582 = vld [vmem:[#allocation2 + $0x22c] sm:$0xff]
        %v7583 = vld [vmem:[#allocation2 + $0x234] sm:$0xff]
        %v7584 = vld [vmem:[#allocation2 + $0x24c] sm:$0xff]
        %v7585 = vld [vmem:[#allocation2 + $0x254] sm:$0xff]
        %v7586 = vld [vmem:[#allocation2 + $0x26c] sm:$0xff]
        %v7587 = vld [vmem:[#allocation2 + $0x274] sm:$0xff]
        %v7588 = vld [vmem:[#allocation2 + $0x28c] sm:$0xff]
        %v7589 = vld [vmem:[#allocation2 + $0x294] sm:$0xff]
        %v7590 = vld [vmem:[#allocation2 + $0x2ac] sm:$0xff]
        %v7591 = vld [vmem:[#allocation2 + $0x2b4] sm:$0xff]
        %v7592 = vld [vmem:[#allocation2 + $0x2cc] sm:$0xff]
        %v7593 = vld [vmem:[#allocation2 + $0x2d4] sm:$0xff]
        %v7594 = vld [vmem:[#allocation2 + $0x2ec] sm:$0xff]
        %v7595 = vld [vmem:[#allocation2 + $0x2f4] sm:$0xff]
        %7628 = vrot.lane.b32.xlu0 %v7556, 32
        %v7629 = vpop.permute.xlu0 %7628
        %7630 = vrot.lane.b32.xlu0 %v7557, 32
        %v7631 = vpop.permute.xlu0 %7630
        %7632 = vrot.lane.b32.xlu0 %v7558, 32
        %v7633 = vpop.permute.xlu0 %7632
        %7634 = vrot.lane.b32.xlu0 %v7559, 32
        %v7635 = vpop.permute.xlu0 %7634
        %7636 = vrot.lane.b32.xlu0 %v7560, 32
        %v7637 = vpop.permute.xlu0 %7636
        %7638 = vrot.lane.b32.xlu0 %v7561, 32
        %v7639 = vpop.permute.xlu0 %7638
        %7640 = vrot.lane.b32.xlu0 %v7562, 32
        %v7641 = vpop.permute.xlu0 %7640
        %7642 = vrot.lane.b32.xlu0 %v7563, 32
        %v7643 = vpop.permute.xlu0 %7642
        %7644 = vrot.lane.b32.xlu0 %v7564, 32
        %v7645 = vpop.permute.xlu0 %7644
        %7646 = vrot.lane.b32.xlu0 %v7565, 32
        %v7647 = vpop.permute.xlu0 %7646
        %7648 = vrot.lane.b32.xlu0 %v7566, 32
        %v7649 = vpop.permute.xlu0 %7648
        %7650 = vrot.lane.b32.xlu0 %v7567, 32
        %v7651 = vpop.permute.xlu0 %7650
        %7652 = vrot.lane.b32.xlu0 %v7568, 32
        %v7653 = vpop.permute.xlu0 %7652
        %7654 = vrot.lane.b32.xlu0 %v7569, 32
        %v7655 = vpop.permute.xlu0 %7654
        %7656 = vrot.lane.b32.xlu0 %v7570, 32
        %v7657 = vpop.permute.xlu0 %7656
        %7658 = vrot.lane.b32.xlu0 %v7571, 32
        %v7659 = vpop.permute.xlu0 %7658
        %7660 = vrot.lane.b32.xlu0 %v7572, 32
        %v7661 = vpop.permute.xlu0 %7660
        %7662 = vrot.lane.b32.xlu0 %v7573, 32
        %v7663 = vpop.permute.xlu0 %7662
        %7664 = vrot.lane.b32.xlu0 %v7574, 32
        %v7665 = vpop.permute.xlu0 %7664
        %7666 = vrot.lane.b32.xlu0 %v7575, 32
        %v7667 = vpop.permute.xlu0 %7666
        %7668 = vrot.lane.b32.xlu0 %v7576, 32
        %v7669 = vpop.permute.xlu0 %7668
        %7670 = vrot.lane.b32.xlu0 %v7577, 32
        %v7671 = vpop.permute.xlu0 %7670
        %7672 = vrot.lane.b32.xlu0 %v7578, 32
        %v7673 = vpop.permute.xlu0 %7672
        %7674 = vrot.lane.b32.xlu0 %v7579, 32
        %v7675 = vpop.permute.xlu0 %7674
        %7676 = vrot.lane.b32.xlu0 %v7580, 32
        %v7677 = vpop.permute.xlu0 %7676
        %7678 = vrot.lane.b32.xlu0 %v7581, 32
        %v7679 = vpop.permute.xlu0 %7678
        %7680 = vrot.lane.b32.xlu0 %v7582, 32
        %v7681 = vpop.permute.xlu0 %7680
        %7682 = vrot.lane.b32.xlu0 %v7583, 32
        %v7683 = vpop.permute.xlu0 %7682
        %7684 = vrot.lane.b32.xlu0 %v7584, 32
        %v7685 = vpop.permute.xlu0 %7684
        %7686 = vrot.lane.b32.xlu0 %v7585, 32
        %v7687 = vpop.permute.xlu0 %7686
        %7688 = vrot.lane.b32.xlu0 %v7586, 32
        %v7689 = vpop.permute.xlu0 %7688
        %7690 = vrot.lane.b32.xlu0 %v7587, 32
        %v7691 = vpop.permute.xlu0 %7690
        %7732 = vrot.lane.b32.xlu0 %v7564, 64
        %v7733 = vpop.permute.xlu0 %7732
        %7734 = vrot.lane.b32.xlu0 %v7565, 64
        %v7735 = vpop.permute.xlu0 %7734
        %7736 = vrot.lane.b32.xlu0 %v7566, 64
        %v7737 = vpop.permute.xlu0 %7736
        %7738 = vrot.lane.b32.xlu0 %v7567, 64
        %v7739 = vpop.permute.xlu0 %7738
        %7740 = vrot.lane.b32.xlu0 %v7568, 64
        %v7741 = vpop.permute.xlu0 %7740
        %7742 = vrot.lane.b32.xlu0 %v7569, 64
        %v7743 = vpop.permute.xlu0 %7742
        %7744 = vrot.lane.b32.xlu0 %v7570, 64
        %v7745 = vpop.permute.xlu0 %7744
        %7746 = vrot.lane.b32.xlu0 %v7571, 64
        %v7747 = vpop.permute.xlu0 %7746
        %7748 = vrot.lane.b32.xlu0 %v7572, 64
        %v7749 = vpop.permute.xlu0 %7748
        %7750 = vrot.lane.b32.xlu0 %v7573, 64
        %v7751 = vpop.permute.xlu0 %7750
        %7752 = vrot.lane.b32.xlu0 %v7574, 64
        %v7753 = vpop.permute.xlu0 %7752
        %7754 = vrot.lane.b32.xlu0 %v7575, 64
        %v7755 = vpop.permute.xlu0 %7754
        %7756 = vrot.lane.b32.xlu0 %v7576, 64
        %v7757 = vpop.permute.xlu0 %7756
        %7758 = vrot.lane.b32.xlu0 %v7577, 64
        %v7759 = vpop.permute.xlu0 %7758
        %7760 = vrot.lane.b32.xlu0 %v7578, 64
        %v7761 = vpop.permute.xlu0 %7760
        %7762 = vrot.lane.b32.xlu0 %v7579, 64
        %v7763 = vpop.permute.xlu0 %7762
        %7764 = vrot.lane.b32.xlu0 %v7580, 64
        %v7765 = vpop.permute.xlu0 %7764
        %7766 = vrot.lane.b32.xlu0 %v7581, 64
        %v7767 = vpop.permute.xlu0 %7766
        %7768 = vrot.lane.b32.xlu0 %v7582, 64
        %v7769 = vpop.permute.xlu0 %7768
        %7770 = vrot.lane.b32.xlu0 %v7583, 64
        %v7771 = vpop.permute.xlu0 %7770
        %7772 = vrot.lane.b32.xlu0 %v7584, 64
        %v7773 = vpop.permute.xlu0 %7772
        %7774 = vrot.lane.b32.xlu0 %v7585, 64
        %v7775 = vpop.permute.xlu0 %7774
        %7776 = vrot.lane.b32.xlu0 %v7586, 64
        %v7777 = vpop.permute.xlu0 %7776
        %7778 = vrot.lane.b32.xlu0 %v7587, 64
        %v7779 = vpop.permute.xlu0 %7778
        %7780 = vrot.lane.b32.xlu0 %v7588, 64
        %v7781 = vpop.permute.xlu0 %7780
        %7782 = vrot.lane.b32.xlu0 %v7589, 64
        %v7783 = vpop.permute.xlu0 %7782
        %7784 = vrot.lane.b32.xlu0 %v7590, 64
        %v7785 = vpop.permute.xlu0 %7784
        %7786 = vrot.lane.b32.xlu0 %v7591, 64
        %v7787 = vpop.permute.xlu0 %7786
        %7788 = vrot.lane.b32.xlu0 %v7592, 64
        %v7789 = vpop.permute.xlu0 %7788
        %7790 = vrot.lane.b32.xlu0 %v7593, 64
        %v7791 = vpop.permute.xlu0 %7790
        %7792 = vrot.lane.b32.xlu0 %v7594, 64
        %v7793 = vpop.permute.xlu0 %7792
        %7794 = vrot.lane.b32.xlu0 %v7595, 64
        %v7795 = vpop.permute.xlu0 %7794
        %v7828 = vsel %vm450, %v7548, %v7629
        %v7829 = vsel %vm450, %v7549, %v7631
        %v7830 = vsel %vm450, %v7550, %v7633
        %v7831 = vsel %vm450, %v7551, %v7635
        %v7832 = vsel %vm450, %v7552, %v7637
        %v7833 = vsel %vm450, %v7553, %v7639
        %v7834 = vsel %vm450, %v7554, %v7641
        %v7835 = vsel %vm450, %v7555, %v7643
        %v7836 = vsel %vm450, %v7556, %v7645
        %v7837 = vsel %vm450, %v7557, %v7647
        %v7838 = vsel %vm450, %v7558, %v7649
        %v7839 = vsel %vm450, %v7559, %v7651
        %v7840 = vsel %vm450, %v7560, %v7653
        %v7841 = vsel %vm450, %v7561, %v7655
        %v7842 = vsel %vm450, %v7562, %v7657
        %v7843 = vsel %vm450, %v7563, %v7659
        %v7844 = vsel %vm450, %v7564, %v7661
        %v7845 = vsel %vm450, %v7565, %v7663
        %v7846 = vsel %vm450, %v7566, %v7665
        %v7847 = vsel %vm450, %v7567, %v7667
        %v7848 = vsel %vm450, %v7568, %v7669
        %v7849 = vsel %vm450, %v7569, %v7671
        %v7850 = vsel %vm450, %v7570, %v7673
        %v7851 = vsel %vm450, %v7571, %v7675
        %v7852 = vsel %vm450, %v7572, %v7677
        %v7853 = vsel %vm450, %v7573, %v7679
        %v7854 = vsel %vm450, %v7574, %v7681
        %v7855 = vsel %vm450, %v7575, %v7683
        %v7856 = vsel %vm450, %v7576, %v7685
        %v7857 = vsel %vm450, %v7577, %v7687
        %v7858 = vsel %vm450, %v7578, %v7689
        %v7859 = vsel %vm450, %v7579, %v7691
        %v7860 = vsel %vm1053, %v7828, %v7733
        %v7861 = vsel %vm1053, %v7829, %v7735
        %v7862 = vsel %vm1053, %v7830, %v7737
        %v7863 = vsel %vm1053, %v7831, %v7739
        %v7864 = vsel %vm1053, %v7832, %v7741
        %v7865 = vsel %vm1053, %v7833, %v7743
        %v7866 = vsel %vm1053, %v7834, %v7745
        %v7867 = vsel %vm1053, %v7835, %v7747
        %v7868 = vsel %vm1053, %v7836, %v7749
        %v7869 = vsel %vm1053, %v7837, %v7751
        %v7870 = vsel %vm1053, %v7838, %v7753
        %v7871 = vsel %vm1053, %v7839, %v7755
        %v7872 = vsel %vm1053, %v7840, %v7757
        %v7873 = vsel %vm1053, %v7841, %v7759
        %v7874 = vsel %vm1053, %v7842, %v7761
        %v7875 = vsel %vm1053, %v7843, %v7763
        %v7876 = vsel %vm1053, %v7844, %v7765
        %v7877 = vsel %vm1053, %v7845, %v7767
        %v7878 = vsel %vm1053, %v7846, %v7769
        %v7879 = vsel %vm1053, %v7847, %v7771
        %v7880 = vsel %vm1053, %v7848, %v7773
        %v7881 = vsel %vm1053, %v7849, %v7775
        %v7882 = vsel %vm1053, %v7850, %v7777
        %v7883 = vsel %vm1053, %v7851, %v7779
        %v7884 = vsel %vm1053, %v7852, %v7781
        %v7885 = vsel %vm1053, %v7853, %v7783
        %v7886 = vsel %vm1053, %v7854, %v7785
        %v7887 = vsel %vm1053, %v7855, %v7787
        %v7888 = vsel %vm1053, %v7856, %v7789
        %v7889 = vsel %vm1053, %v7857, %v7791
        %v7890 = vsel %vm1053, %v7858, %v7793
        %v7891 = vsel %vm1053, %v7859, %v7795
        %v7892 = vpack.c.bf16 %v7861, %v7860
        %v7893 = vpack.c.bf16 %v7863, %v7862
        %v7894 = vpack.c.bf16 %v7865, %v7864
        %v7895 = vpack.c.bf16 %v7867, %v7866
        %v7896 = vpack.c.bf16 %v7869, %v7868
        %v7897 = vpack.c.bf16 %v7871, %v7870
        %v7898 = vpack.c.bf16 %v7873, %v7872
        %v7899 = vpack.c.bf16 %v7875, %v7874
        %v7900 = vpack.c.bf16 %v7877, %v7876
        %v7901 = vpack.c.bf16 %v7879, %v7878
        %v7902 = vpack.c.bf16 %v7881, %v7880
        %v7903 = vpack.c.bf16 %v7883, %v7882
        %v7904 = vpack.c.bf16 %v7885, %v7884
        %v7905 = vpack.c.bf16 %v7887, %v7886
        %v7906 = vpack.c.bf16 %v7889, %v7888
        %v7907 = vpack.c.bf16 %v7891, %v7890
        %s7908 = scalar_lea.vmem [#allocation9], 528
        %v7909 = vld [vmem:[%s7908] sm:$0xf]
        %v7910 = vld [vmem:[%s7908 + $0x4] sm:$0xf]
        %v7911 = vld [vmem:[%s7908 + $0x8] sm:$0xf]
        %v7912 = vld [vmem:[%s7908 + $0xc] sm:$0xf]
        %v7913 = vld [vmem:[%s7908 + $0x10] sm:$0xf]
        %v7914 = vld [vmem:[%s7908 + $0x14] sm:$0xf]
        %v7915 = vld [vmem:[%s7908 + $0x18] sm:$0xf]
        %v7916 = vld [vmem:[%s7908 + $0x1c] sm:$0xf]
        %v7917 = vld [vmem:[%s7908 + $0x20] sm:$0xf]
        %v7918 = vld [vmem:[%s7908 + $0x24] sm:$0xf]
        %v7919 = vld [vmem:[%s7908 + $0x28] sm:$0xf]
        %v7920 = vld [vmem:[%s7908 + $0x2c] sm:$0xf]
        %v7933 = vunpack.c.l.b16 %v7909
        %v7934 = vunpack.c.l.b16 %v7910
        %v7935 = vunpack.c.l.b16 %v7911
        %v7936 = vunpack.c.l.b16 %v7912
        %v7937 = vunpack.c.l.b16 %v7913
        %v7938 = vunpack.c.l.b16 %v7914
        %v7939 = vunpack.c.l.b16 %v7915
        %v7940 = vunpack.c.l.b16 %v7916
        %v7941 = vunpack.c.l.b16 %v7917
        %v7942 = vunpack.c.l.b16 %v7918
        %v7943 = vunpack.c.l.b16 %v7919
        %v7944 = vunpack.c.l.b16 %v7920
        %v7945 = vpack.c.b16 %v7934, %v7933
        %v7946 = vpack.c.b16 %v7936, %v7935
        %v7947 = vpack.c.b16 %v7938, %v7937
        %v7948 = vpack.c.b16 %v7940, %v7939
        %v7949 = vpack.c.b16 %v7942, %v7941
        %v7950 = vpack.c.b16 %v7944, %v7943
        %v7958 = vsel %vm1505, %v7892, 0
        %v7961 = vsel %vm1505, %v7893, 0
        %v7964 = vsel %vm1505, %v7894, 0
        %v7967 = vsel %vm1505, %v7895, 0
        %v7970 = vsel %vm1505, %v7896, 0
        %v7973 = vsel %vm1505, %v7897, 0
        %v7976 = vsel %vm1505, %v7898, 0
        %v7979 = vsel %vm1505, %v7899, 0
        %v7982 = vsel %vm1505, %v7900, 0
        %v7985 = vsel %vm1505, %v7901, 0
        %v7988 = vsel %vm1505, %v7902, 0
        %v7991 = vsel %vm1505, %v7903, 0
        %v7994 = vsel %vm1505, %v7904, 0
        %v7997 = vsel %vm1505, %v7905, 0
        %v8000 = vsel %vm1505, %v7906, 0
        %v8003 = vsel %vm1505, %v7907, 0
        %8005 = vmatprep.subr.bf16.mxu0 0
        %8006 = vmatpush1.bf16.msra.mxu0 %v7945
        %8007 = vmatprep.subr.bf16.mxu0 0
        %8008 = vmatpush1.bf16.msra.mxu0 %v7946
        %8009 = vmatprep.subr.bf16.mxu0 0
        %8010 = vmatpush1.bf16.msra.mxu0 %v7947
        %8011 = vmatprep.subr.bf16.mxu0 0
        %8012 = vmatpush1.bf16.msra.mxu0 %v7948
        %8013 = vmatprep.subr.bf16.mxu0 0
        %8014 = vmatpush1.bf16.msra.mxu0 %v7949
        %8015 = vmatprep.subr.bf16.mxu0 0
        %8016 = vmatpush1.bf16.msra.mxu0 %v7950
        %8017 = vmatprep.subr.bf16.mxu0 0
        %8018 = vmatpush1.bf16.msra.mxu0 0
        %8019 = vmatprep.subr.bf16.mxu0 0
        %8020 = vmatpush1.bf16.msra.mxu0 0
        %8021 = vmatprep.subr.bf16.mxu0 0
        %8022 = vmatpush1.bf16.msra.mxu0 0
        %8023 = vmatprep.subr.bf16.mxu0 0
        %8024 = vmatpush1.bf16.msra.mxu0 0
        %8025 = vmatprep.subr.bf16.mxu0 0
        %8026 = vmatpush1.bf16.msra.mxu0 0
        %8027 = vmatprep.subr.bf16.mxu0 0
        %8028 = vmatpush1.bf16.msra.mxu0 0
        %8029 = vmatprep.subr.bf16.mxu0 0
        %8030 = vmatpush1.bf16.msra.mxu0 0
        %8031 = vmatprep.subr.bf16.mxu0 0
        %8032 = vmatpush1.bf16.msra.mxu0 0
        %8033 = vmatprep.subr.bf16.mxu0 0
        %8034 = vmatpush1.bf16.msra.mxu0 0
        %8035 = vmatprep.subr.bf16.mxu0 0
        %8036 = vmatpush1.bf16.msra.mxu0 0
        %8037 = vmatprep.mubr.bf16.mxu0 0
        %8038 = vmatmul.mubr.bf16.gmra.mrb[0].mxu0 %v7958
        %v8039 = vpop.f32.mrb[0].mxu0
        %v8040 = vadd.f32 0.0, %v8039
        %v8041 = vpop.f32.mrb[0].mxu0
        %v8042 = vpop.f32.mrb[0].mxu0
        %v8043 = vadd.f32 0.0, %v8042
        %v8044 = vpop.f32.mrb[0].mxu0
        %8045 = vmatprep.mubr.bf16.mxu0 0
        %8046 = vmatmul.mubr.bf16.gmra.mrb[0].mxu0 %v7961
        %v8047 = vpop.f32.mrb[0].mxu0
        %v8048 = vadd.f32 0.0, %v8047
        %v8049 = vpop.f32.mrb[0].mxu0
        %v8050 = vpop.f32.mrb[0].mxu0
        %v8051 = vadd.f32 0.0, %v8050
        %v8052 = vpop.f32.mrb[0].mxu0
        %8053 = vmatprep.mubr.bf16.mxu0 0
        %8054 = vmatmul.mubr.bf16.gmra.mrb[0].mxu0 %v7964
        %v8055 = vpop.f32.mrb[0].mxu0
        %v8056 = vadd.f32 0.0, %v8055
        %v8057 = vpop.f32.mrb[0].mxu0
        %v8058 = vpop.f32.mrb[0].mxu0
        %v8059 = vadd.f32 0.0, %v8058
        %v8060 = vpop.f32.mrb[0].mxu0
        %8061 = vmatprep.mubr.bf16.mxu0 0
        %8062 = vmatmul.mubr.bf16.gmra.mrb[0].mxu0 %v7967
        %v8063 = vpop.f32.mrb[0].mxu0
        %v8064 = vadd.f32 0.0, %v8063
        %v8065 = vpop.f32.mrb[0].mxu0
        %v8066 = vpop.f32.mrb[0].mxu0
        %v8067 = vadd.f32 0.0, %v8066
        %v8068 = vpop.f32.mrb[0].mxu0
        %8069 = vmatprep.mubr.bf16.mxu0 0
        %8070 = vmatmul.mubr.bf16.gmra.mrb[0].mxu0 %v7970
        %v8071 = vpop.f32.mrb[0].mxu0
        %v8072 = vadd.f32 0.0, %v8071
        %v8073 = vpop.f32.mrb[0].mxu0
        %v8074 = vpop.f32.mrb[0].mxu0
        %v8075 = vadd.f32 0.0, %v8074
        %v8076 = vpop.f32.mrb[0].mxu0
        %8077 = vmatprep.mubr.bf16.mxu0 0
        %8078 = vmatmul.mubr.bf16.gmra.mrb[0].mxu0 %v7973
        %v8079 = vpop.f32.mrb[0].mxu0
        %v8080 = vadd.f32 0.0, %v8079
        %v8081 = vpop.f32.mrb[0].mxu0
        %v8082 = vpop.f32.mrb[0].mxu0
        %v8083 = vadd.f32 0.0, %v8082
        %v8084 = vpop.f32.mrb[0].mxu0
        %8085 = vmatprep.mubr.bf16.mxu0 0
        %8086 = vmatmul.mubr.bf16.gmra.mrb[0].mxu0 %v7976
        %v8087 = vpop.f32.mrb[0].mxu0
        %v8088 = vadd.f32 0.0, %v8087
        %v8089 = vpop.f32.mrb[0].mxu0
        %v8090 = vpop.f32.mrb[0].mxu0
        %v8091 = vadd.f32 0.0, %v8090
        %v8092 = vpop.f32.mrb[0].mxu0
        %8093 = vmatprep.mubr.bf16.mxu0 0
        %8094 = vmatmul.mubr.bf16.gmra.mrb[0].mxu0 %v7979
        %v8095 = vpop.f32.mrb[0].mxu0
        %v8096 = vadd.f32 0.0, %v8095
        %v8097 = vpop.f32.mrb[0].mxu0
        %v8098 = vpop.f32.mrb[0].mxu0
        %v8099 = vadd.f32 0.0, %v8098
        %v8100 = vpop.f32.mrb[0].mxu0
        %8101 = vmatprep.mubr.bf16.mxu0 0
        %8102 = vmatmul.mubr.bf16.gmra.mrb[0].mxu0 %v7982
        %v8103 = vpop.f32.mrb[0].mxu0
        %v8104 = vadd.f32 0.0, %v8103
        %v8105 = vpop.f32.mrb[0].mxu0
        %v8106 = vpop.f32.mrb[0].mxu0
        %v8107 = vadd.f32 0.0, %v8106
        %v8108 = vpop.f32.mrb[0].mxu0
        %8109 = vmatprep.mubr.bf16.mxu0 0
        %8110 = vmatmul.mubr.bf16.gmra.mrb[0].mxu0 %v7985
        %v8111 = vpop.f32.mrb[0].mxu0
        %v8112 = vadd.f32 0.0, %v8111
        %v8113 = vpop.f32.mrb[0].mxu0
        %v8114 = vpop.f32.mrb[0].mxu0
        %v8115 = vadd.f32 0.0, %v8114
        %v8116 = vpop.f32.mrb[0].mxu0
        %8117 = vmatprep.mubr.bf16.mxu0 0
        %8118 = vmatmul.mubr.bf16.gmra.mrb[0].mxu0 %v7988
        %v8119 = vpop.f32.mrb[0].mxu0
        %v8120 = vadd.f32 0.0, %v8119
        %v8121 = vpop.f32.mrb[0].mxu0
        %v8122 = vpop.f32.mrb[0].mxu0
        %v8123 = vadd.f32 0.0, %v8122
        %v8124 = vpop.f32.mrb[0].mxu0
        %8125 = vmatprep.mubr.bf16.mxu0 0
        %8126 = vmatmul.mubr.bf16.gmra.mrb[0].mxu0 %v7991
        %v8127 = vpop.f32.mrb[0].mxu0
        %v8128 = vadd.f32 0.0, %v8127
        %v8129 = vpop.f32.mrb[0].mxu0
        %v8130 = vpop.f32.mrb[0].mxu0
        %v8131 = vadd.f32 0.0, %v8130
        %v8132 = vpop.f32.mrb[0].mxu0
        %8133 = vmatprep.mubr.bf16.mxu0 0
        %8134 = vmatmul.mubr.bf16.gmra.mrb[0].mxu0 %v7994
        %v8135 = vpop.f32.mrb[0].mxu0
        %v8136 = vadd.f32 0.0, %v8135
        %v8137 = vpop.f32.mrb[0].mxu0
        %v8138 = vpop.f32.mrb[0].mxu0
        %v8139 = vadd.f32 0.0, %v8138
        %v8140 = vpop.f32.mrb[0].mxu0
        %8141 = vmatprep.mubr.bf16.mxu0 0
        %8142 = vmatmul.mubr.bf16.gmra.mrb[0].mxu0 %v7997
        %v8143 = vpop.f32.mrb[0].mxu0
        %v8144 = vadd.f32 0.0, %v8143
        %v8145 = vpop.f32.mrb[0].mxu0
        %v8146 = vpop.f32.mrb[0].mxu0
        %v8147 = vadd.f32 0.0, %v8146
        %v8148 = vpop.f32.mrb[0].mxu0
        %8149 = vmatprep.mubr.bf16.mxu0 0
        %8150 = vmatmul.mubr.bf16.gmra.mrb[0].mxu0 %v8000
        %v8151 = vpop.f32.mrb[0].mxu0
        %v8152 = vadd.f32 0.0, %v8151
        %v8153 = vpop.f32.mrb[0].mxu0
        %v8154 = vpop.f32.mrb[0].mxu0
        %v8155 = vadd.f32 0.0, %v8154
        %v8156 = vpop.f32.mrb[0].mxu0
        %8157 = vmatprep.mubr.bf16.mxu0 0
        %8158 = vmatmul.mubr.bf16.gmra.mrb[0].mxu0 %v8003
        %v8159 = vpop.f32.mrb[0].mxu0
        %v8160 = vadd.f32 0.0, %v8159
        %v8161 = vpop.f32.mrb[0].mxu0
        %v8162 = vpop.f32.mrb[0].mxu0
        %v8163 = vadd.f32 0.0, %v8162
        %v8164 = vpop.f32.mrb[0].mxu0
        %8165 = vdwg.mxu0
        %v8166 = vadd.f32 %v7422, %v8040
        %v8167 = vadd.f32 %v7425, %v8043
        %v8168 = vadd.f32 %v7430, %v8048
        %v8169 = vadd.f32 %v7433, %v8051
        %v8170 = vadd.f32 %v7438, %v8056
        %v8171 = vadd.f32 %v7441, %v8059
        %v8172 = vadd.f32 %v7446, %v8064
        %v8173 = vadd.f32 %v7449, %v8067
        %v8174 = vadd.f32 %v7454, %v8072
        %v8175 = vadd.f32 %v7457, %v8075
        %v8176 = vadd.f32 %v7462, %v8080
        %v8177 = vadd.f32 %v7465, %v8083
        %v8178 = vadd.f32 %v7470, %v8088
        %v8179 = vadd.f32 %v7473, %v8091
        %v8180 = vadd.f32 %v7478, %v8096
        %v8181 = vadd.f32 %v7481, %v8099
        %v8182 = vadd.f32 %v7486, %v8104
        %v8183 = vadd.f32 %v7489, %v8107
        %v8184 = vadd.f32 %v7494, %v8112
        %v8185 = vadd.f32 %v7497, %v8115
        %v8186 = vadd.f32 %v7502, %v8120
        %v8187 = vadd.f32 %v7505, %v8123
        %v8188 = vadd.f32 %v7510, %v8128
        %v8189 = vadd.f32 %v7513, %v8131
        %v8190 = vadd.f32 %v7518, %v8136
        %v8191 = vadd.f32 %v7521, %v8139
        %v8192 = vadd.f32 %v7526, %v8144
        %v8193 = vadd.f32 %v7529, %v8147
        %v8194 = vadd.f32 %v7534, %v8152
        %v8195 = vadd.f32 %v7537, %v8155
        %v8196 = vadd.f32 %v7542, %v8160
        %v8197 = vadd.f32 %v7545, %v8163
        %8230 = vrot.lane.b32.xlu0 %v4411, 32
        %v8231 = vpop.permute.xlu0 %8230
        %8232 = vrot.lane.b32.xlu0 %v4412, 32
        %v8233 = vpop.permute.xlu0 %8232
        %8234 = vrot.lane.b32.xlu0 %v4413, 32
        %v8235 = vpop.permute.xlu0 %8234
        %8236 = vrot.lane.b32.xlu0 %v4414, 32
        %v8237 = vpop.permute.xlu0 %8236
        %8238 = vrot.lane.b32.xlu0 %v4415, 32
        %v8239 = vpop.permute.xlu0 %8238
        %8240 = vrot.lane.b32.xlu0 %v4416, 32
        %v8241 = vpop.permute.xlu0 %8240
        %8242 = vrot.lane.b32.xlu0 %v4417, 32
        %v8243 = vpop.permute.xlu0 %8242
        %8244 = vrot.lane.b32.xlu0 %v4418, 32
        %v8245 = vpop.permute.xlu0 %8244
        %8246 = vrot.lane.b32.xlu0 %v4419, 32
        %v8247 = vpop.permute.xlu0 %8246
        %8248 = vrot.lane.b32.xlu0 %v4420, 32
        %v8249 = vpop.permute.xlu0 %8248
        %8250 = vrot.lane.b32.xlu0 %v4421, 32
        %v8251 = vpop.permute.xlu0 %8250
        %8252 = vrot.lane.b32.xlu0 %v4422, 32
        %v8253 = vpop.permute.xlu0 %8252
        %8254 = vrot.lane.b32.xlu0 %v4423, 32
        %v8255 = vpop.permute.xlu0 %8254
        %8256 = vrot.lane.b32.xlu0 %v4424, 32
        %v8257 = vpop.permute.xlu0 %8256
        %8258 = vrot.lane.b32.xlu0 %v4425, 32
        %v8259 = vpop.permute.xlu0 %8258
        %8260 = vrot.lane.b32.xlu0 %v4426, 32
        %v8261 = vpop.permute.xlu0 %8260
        %8262 = vrot.lane.b32.xlu0 %v4427, 32
        %v8263 = vpop.permute.xlu0 %8262
        %8264 = vrot.lane.b32.xlu0 %v4428, 32
        %v8265 = vpop.permute.xlu0 %8264
        %8266 = vrot.lane.b32.xlu0 %v4429, 32
        %v8267 = vpop.permute.xlu0 %8266
        %8268 = vrot.lane.b32.xlu0 %v4430, 32
        %v8269 = vpop.permute.xlu0 %8268
        %8270 = vrot.lane.b32.xlu0 %v4431, 32
        %v8271 = vpop.permute.xlu0 %8270
        %8272 = vrot.lane.b32.xlu0 %v4432, 32
        %v8273 = vpop.permute.xlu0 %8272
        %8274 = vrot.lane.b32.xlu0 %v4433, 32
        %v8275 = vpop.permute.xlu0 %8274
        %8276 = vrot.lane.b32.xlu0 %v4434, 32
        %v8277 = vpop.permute.xlu0 %8276
        %8278 = vrot.lane.b32.xlu0 %v4435, 32
        %v8279 = vpop.permute.xlu0 %8278
        %8280 = vrot.lane.b32.xlu0 %v4436, 32
        %v8281 = vpop.permute.xlu0 %8280
        %8282 = vrot.lane.b32.xlu0 %v4437, 32
        %v8283 = vpop.permute.xlu0 %8282
        %8284 = vrot.lane.b32.xlu0 %v4438, 32
        %v8285 = vpop.permute.xlu0 %8284
        %8286 = vrot.lane.b32.xlu0 %v4439, 32
        %v8287 = vpop.permute.xlu0 %8286
        %8288 = vrot.lane.b32.xlu0 %v4440, 32
        %v8289 = vpop.permute.xlu0 %8288
        %8290 = vrot.lane.b32.xlu0 %v4441, 32
        %v8291 = vpop.permute.xlu0 %8290
        %8292 = vrot.lane.b32.xlu0 %v4442, 32
        %v8293 = vpop.permute.xlu0 %8292
        %8358 = vrot.lane.b32.xlu0 %v6280, 64
        %v8359 = vpop.permute.xlu0 %8358
        %8360 = vrot.lane.b32.xlu0 %v6281, 64
        %v8361 = vpop.permute.xlu0 %8360
        %8362 = vrot.lane.b32.xlu0 %v6282, 64
        %v8363 = vpop.permute.xlu0 %8362
        %8364 = vrot.lane.b32.xlu0 %v6283, 64
        %v8365 = vpop.permute.xlu0 %8364
        %8366 = vrot.lane.b32.xlu0 %v6284, 64
        %v8367 = vpop.permute.xlu0 %8366
        %8368 = vrot.lane.b32.xlu0 %v6285, 64
        %v8369 = vpop.permute.xlu0 %8368
        %8370 = vrot.lane.b32.xlu0 %v6286, 64
        %v8371 = vpop.permute.xlu0 %8370
        %8372 = vrot.lane.b32.xlu0 %v6287, 64
        %v8373 = vpop.permute.xlu0 %8372
        %8374 = vrot.lane.b32.xlu0 %v6288, 64
        %v8375 = vpop.permute.xlu0 %8374
        %8376 = vrot.lane.b32.xlu0 %v6289, 64
        %v8377 = vpop.permute.xlu0 %8376
        %8378 = vrot.lane.b32.xlu0 %v6290, 64
        %v8379 = vpop.permute.xlu0 %8378
        %8380 = vrot.lane.b32.xlu0 %v6291, 64
        %v8381 = vpop.permute.xlu0 %8380
        %8382 = vrot.lane.b32.xlu0 %v6292, 64
        %v8383 = vpop.permute.xlu0 %8382
        %8384 = vrot.lane.b32.xlu0 %v6293, 64
        %v8385 = vpop.permute.xlu0 %8384
        %8386 = vrot.lane.b32.xlu0 %v6294, 64
        %v8387 = vpop.permute.xlu0 %8386
        %8388 = vrot.lane.b32.xlu0 %v6295, 64
        %v8389 = vpop.permute.xlu0 %8388
        %8390 = vrot.lane.b32.xlu0 %v6296, 64
        %v8391 = vpop.permute.xlu0 %8390
        %8392 = vrot.lane.b32.xlu0 %v6297, 64
        %v8393 = vpop.permute.xlu0 %8392
        %8394 = vrot.lane.b32.xlu0 %v6298, 64
        %v8395 = vpop.permute.xlu0 %8394
        %8396 = vrot.lane.b32.xlu0 %v6299, 64
        %v8397 = vpop.permute.xlu0 %8396
        %8398 = vrot.lane.b32.xlu0 %v6300, 64
        %v8399 = vpop.permute.xlu0 %8398
        %8400 = vrot.lane.b32.xlu0 %v6301, 64
        %v8401 = vpop.permute.xlu0 %8400
        %8402 = vrot.lane.b32.xlu0 %v6302, 64
        %v8403 = vpop.permute.xlu0 %8402
        %8404 = vrot.lane.b32.xlu0 %v6303, 64
        %v8405 = vpop.permute.xlu0 %8404
        %8406 = vrot.lane.b32.xlu0 %v6304, 64
        %v8407 = vpop.permute.xlu0 %8406
        %8408 = vrot.lane.b32.xlu0 %v6305, 64
        %v8409 = vpop.permute.xlu0 %8408
        %8410 = vrot.lane.b32.xlu0 %v6306, 64
        %v8411 = vpop.permute.xlu0 %8410
        %8412 = vrot.lane.b32.xlu0 %v6307, 64
        %v8413 = vpop.permute.xlu0 %8412
        %8414 = vrot.lane.b32.xlu0 %v6308, 64
        %v8415 = vpop.permute.xlu0 %8414
        %8416 = vrot.lane.b32.xlu0 %v6309, 64
        %v8417 = vpop.permute.xlu0 %8416
        %8418 = vrot.lane.b32.xlu0 %v6310, 64
        %v8419 = vpop.permute.xlu0 %8418
        %8420 = vrot.lane.b32.xlu0 %v6311, 64
        %v8421 = vpop.permute.xlu0 %8420
        %8486 = vrot.lane.b32.xlu0 %v8166, 96
        %v8487 = vpop.permute.xlu0 %8486
        %8488 = vrot.lane.b32.xlu0 %v8167, 96
        %v8489 = vpop.permute.xlu0 %8488
        %8490 = vrot.lane.b32.xlu0 %v8168, 96
        %v8491 = vpop.permute.xlu0 %8490
        %8492 = vrot.lane.b32.xlu0 %v8169, 96
        %v8493 = vpop.permute.xlu0 %8492
        %8494 = vrot.lane.b32.xlu0 %v8170, 96
        %v8495 = vpop.permute.xlu0 %8494
        %8496 = vrot.lane.b32.xlu0 %v8171, 96
        %v8497 = vpop.permute.xlu0 %8496
        %8498 = vrot.lane.b32.xlu0 %v8172, 96
        %v8499 = vpop.permute.xlu0 %8498
        %8500 = vrot.lane.b32.xlu0 %v8173, 96
        %v8501 = vpop.permute.xlu0 %8500
        %8502 = vrot.lane.b32.xlu0 %v8174, 96
        %v8503 = vpop.permute.xlu0 %8502
        %8504 = vrot.lane.b32.xlu0 %v8175, 96
        %v8505 = vpop.permute.xlu0 %8504
        %8506 = vrot.lane.b32.xlu0 %v8176, 96
        %v8507 = vpop.permute.xlu0 %8506
        %8508 = vrot.lane.b32.xlu0 %v8177, 96
        %v8509 = vpop.permute.xlu0 %8508
        %8510 = vrot.lane.b32.xlu0 %v8178, 96
        %v8511 = vpop.permute.xlu0 %8510
        %8512 = vrot.lane.b32.xlu0 %v8179, 96
        %v8513 = vpop.permute.xlu0 %8512
        %8514 = vrot.lane.b32.xlu0 %v8180, 96
        %v8515 = vpop.permute.xlu0 %8514
        %8516 = vrot.lane.b32.xlu0 %v8181, 96
        %v8517 = vpop.permute.xlu0 %8516
        %8518 = vrot.lane.b32.xlu0 %v8182, 96
        %v8519 = vpop.permute.xlu0 %8518
        %8520 = vrot.lane.b32.xlu0 %v8183, 96
        %v8521 = vpop.permute.xlu0 %8520
        %8522 = vrot.lane.b32.xlu0 %v8184, 96
        %v8523 = vpop.permute.xlu0 %8522
        %8524 = vrot.lane.b32.xlu0 %v8185, 96
        %v8525 = vpop.permute.xlu0 %8524
        %8526 = vrot.lane.b32.xlu0 %v8186, 96
        %v8527 = vpop.permute.xlu0 %8526
        %8528 = vrot.lane.b32.xlu0 %v8187, 96
        %v8529 = vpop.permute.xlu0 %8528
        %8530 = vrot.lane.b32.xlu0 %v8188, 96
        %v8531 = vpop.permute.xlu0 %8530
        %8532 = vrot.lane.b32.xlu0 %v8189, 96
        %v8533 = vpop.permute.xlu0 %8532
        %8534 = vrot.lane.b32.xlu0 %v8190, 96
        %v8535 = vpop.permute.xlu0 %8534
        %8536 = vrot.lane.b32.xlu0 %v8191, 96
        %v8537 = vpop.permute.xlu0 %8536
        %8538 = vrot.lane.b32.xlu0 %v8192, 96
        %v8539 = vpop.permute.xlu0 %8538
        %8540 = vrot.lane.b32.xlu0 %v8193, 96
        %v8541 = vpop.permute.xlu0 %8540
        %8542 = vrot.lane.b32.xlu0 %v8194, 96
        %v8543 = vpop.permute.xlu0 %8542
        %8544 = vrot.lane.b32.xlu0 %v8195, 96
        %v8545 = vpop.permute.xlu0 %8544
        %8546 = vrot.lane.b32.xlu0 %v8196, 96
        %v8547 = vpop.permute.xlu0 %8546
        %8548 = vrot.lane.b32.xlu0 %v8197, 96
        %v8549 = vpop.permute.xlu0 %8548
        %v8582 = vsel %vm450, %v2560, %v8231
        %v8583 = vsel %vm450, %v2561, %v8233
        %v8584 = vsel %vm450, %v2562, %v8235
        %v8585 = vsel %vm450, %v2563, %v8237
        %v8586 = vsel %vm450, %v2564, %v8239
        %v8587 = vsel %vm450, %v2565, %v8241
        %v8588 = vsel %vm450, %v2566, %v8243
        %v8589 = vsel %vm450, %v2567, %v8245
        %v8590 = vsel %vm450, %v2568, %v8247
        %v8591 = vsel %vm450, %v2569, %v8249
        %v8592 = vsel %vm450, %v2570, %v8251
        %v8593 = vsel %vm450, %v2571, %v8253
        %v8594 = vsel %vm450, %v2572, %v8255
        %v8595 = vsel %vm450, %v2573, %v8257
        %v8596 = vsel %vm450, %v2574, %v8259
        %v8597 = vsel %vm450, %v2575, %v8261
        %v8598 = vsel %vm450, %v2576, %v8263
        %v8599 = vsel %vm450, %v2577, %v8265
        %v8600 = vsel %vm450, %v2578, %v8267
        %v8601 = vsel %vm450, %v2579, %v8269
        %v8602 = vsel %vm450, %v2580, %v8271
        %v8603 = vsel %vm450, %v2581, %v8273
        %v8604 = vsel %vm450, %v2582, %v8275
        %v8605 = vsel %vm450, %v2583, %v8277
        %v8606 = vsel %vm450, %v2584, %v8279
        %v8607 = vsel %vm450, %v2585, %v8281
        %v8608 = vsel %vm450, %v2586, %v8283
        %v8609 = vsel %vm450, %v2587, %v8285
        %v8610 = vsel %vm450, %v2588, %v8287
        %v8611 = vsel %vm450, %v2589, %v8289
        %v8612 = vsel %vm450, %v2590, %v8291
        %v8613 = vsel %vm450, %v2591, %v8293
        %v8614 = vsel %vm1053, %v8582, %v8359
        %v8615 = vsel %vm1053, %v8583, %v8361
        %v8616 = vsel %vm1053, %v8584, %v8363
        %v8617 = vsel %vm1053, %v8585, %v8365
        %v8618 = vsel %vm1053, %v8586, %v8367
        %v8619 = vsel %vm1053, %v8587, %v8369
        %v8620 = vsel %vm1053, %v8588, %v8371
        %v8621 = vsel %vm1053, %v8589, %v8373
        %v8622 = vsel %vm1053, %v8590, %v8375
        %v8623 = vsel %vm1053, %v8591, %v8377
        %v8624 = vsel %vm1053, %v8592, %v8379
        %v8625 = vsel %vm1053, %v8593, %v8381
        %v8626 = vsel %vm1053, %v8594, %v8383
        %v8627 = vsel %vm1053, %v8595, %v8385
        %v8628 = vsel %vm1053, %v8596, %v8387
        %v8629 = vsel %vm1053, %v8597, %v8389
        %v8630 = vsel %vm1053, %v8598, %v8391
        %v8631 = vsel %vm1053, %v8599, %v8393
        %v8632 = vsel %vm1053, %v8600, %v8395
        %v8633 = vsel %vm1053, %v8601, %v8397
        %v8634 = vsel %vm1053, %v8602, %v8399
        %v8635 = vsel %vm1053, %v8603, %v8401
        %v8636 = vsel %vm1053, %v8604, %v8403
        %v8637 = vsel %vm1053, %v8605, %v8405
        %v8638 = vsel %vm1053, %v8606, %v8407
        %v8639 = vsel %vm1053, %v8607, %v8409
        %v8640 = vsel %vm1053, %v8608, %v8411
        %v8641 = vsel %vm1053, %v8609, %v8413
        %v8642 = vsel %vm1053, %v8610, %v8415
        %v8643 = vsel %vm1053, %v8611, %v8417
        %v8644 = vsel %vm1053, %v8612, %v8419
        %v8645 = vsel %vm1053, %v8613, %v8421
        %v8646 = vsel %vm1505, %v8614, %v8487
        %v8647 = vsel %vm1505, %v8615, %v8489
        %v8648 = vsel %vm1505, %v8616, %v8491
        %v8649 = vsel %vm1505, %v8617, %v8493
        %v8650 = vsel %vm1505, %v8618, %v8495
        %v8651 = vsel %vm1505, %v8619, %v8497
        %v8652 = vsel %vm1505, %v8620, %v8499
        %v8653 = vsel %vm1505, %v8621, %v8501
        %v8654 = vsel %vm1505, %v8622, %v8503
        %v8655 = vsel %vm1505, %v8623, %v8505
        %v8656 = vsel %vm1505, %v8624, %v8507
        %v8657 = vsel %vm1505, %v8625, %v8509
        %v8658 = vsel %vm1505, %v8626, %v8511
        %v8659 = vsel %vm1505, %v8627, %v8513
        %v8660 = vsel %vm1505, %v8628, %v8515
        %v8661 = vsel %vm1505, %v8629, %v8517
        %v8662 = vsel %vm1505, %v8630, %v8519
        %v8663 = vsel %vm1505, %v8631, %v8521
        %v8664 = vsel %vm1505, %v8632, %v8523
        %v8665 = vsel %vm1505, %v8633, %v8525
        %v8666 = vsel %vm1505, %v8634, %v8527
        %v8667 = vsel %vm1505, %v8635, %v8529
        %v8668 = vsel %vm1505, %v8636, %v8531
        %v8669 = vsel %vm1505, %v8637, %v8533
        %v8670 = vsel %vm1505, %v8638, %v8535
        %v8671 = vsel %vm1505, %v8639, %v8537
        %v8672 = vsel %vm1505, %v8640, %v8539
        %v8673 = vsel %vm1505, %v8641, %v8541
        %v8674 = vsel %vm1505, %v8642, %v8543
        %v8675 = vsel %vm1505, %v8643, %v8545
        %v8676 = vsel %vm1505, %v8644, %v8547
        %v8677 = vsel %vm1505, %v8645, %v8549
        %v8678 = vld [vmem:[#allocation11] sm:$0x1]
        %v8680 = vlaneseq
        %v8681 = vshrl.u32 %v8680, 7
        %v8682 = vsub.s32 0, %v8681
        %v8683 = vrot.slane %v8678, %v8682
        %v8685 = vadd.f32 %v8646, %v8683
        %v8686 = vadd.f32 %v8647, %v8683
        %v8687 = vadd.f32 %v8648, %v8683
        %v8688 = vadd.f32 %v8649, %v8683
        %v8689 = vadd.f32 %v8650, %v8683
        %v8690 = vadd.f32 %v8651, %v8683
        %v8691 = vadd.f32 %v8652, %v8683
        %v8692 = vadd.f32 %v8653, %v8683
        %v8693 = vadd.f32 %v8654, %v8683
        %v8694 = vadd.f32 %v8655, %v8683
        %v8695 = vadd.f32 %v8656, %v8683
        %v8696 = vadd.f32 %v8657, %v8683
        %v8697 = vadd.f32 %v8658, %v8683
        %v8698 = vadd.f32 %v8659, %v8683
        %v8699 = vadd.f32 %v8660, %v8683
        %v8700 = vadd.f32 %v8661, %v8683
        %v8701 = vadd.f32 %v8662, %v8683
        %v8702 = vadd.f32 %v8663, %v8683
        %v8703 = vadd.f32 %v8664, %v8683
        %v8704 = vadd.f32 %v8665, %v8683
        %v8705 = vadd.f32 %v8666, %v8683
        %v8706 = vadd.f32 %v8667, %v8683
        %v8707 = vadd.f32 %v8668, %v8683
        %v8708 = vadd.f32 %v8669, %v8683
        %v8709 = vadd.f32 %v8670, %v8683
        %v8710 = vadd.f32 %v8671, %v8683
        %v8711 = vadd.f32 %v8672, %v8683
        %v8712 = vadd.f32 %v8673, %v8683
        %v8713 = vadd.f32 %v8674, %v8683
        %v8714 = vadd.f32 %v8675, %v8683
        %v8715 = vadd.f32 %v8676, %v8683
        %v8716 = vadd.f32 %v8677, %v8683
        %vm8717 = vcmp.ge.f32.partialorder %v8685, 0.0
        %vm8718 = vcmp.ge.f32.partialorder %v8686, 0.0
        %vm8719 = vcmp.ge.f32.partialorder %v8687, 0.0
        %vm8720 = vcmp.ge.f32.partialorder %v8688, 0.0
        %vm8721 = vcmp.ge.f32.partialorder %v8689, 0.0
        %vm8722 = vcmp.ge.f32.partialorder %v8690, 0.0
        %vm8723 = vcmp.ge.f32.partialorder %v8691, 0.0
        %vm8724 = vcmp.ge.f32.partialorder %v8692, 0.0
        %vm8725 = vcmp.ge.f32.partialorder %v8693, 0.0
        %vm8726 = vcmp.ge.f32.partialorder %v8694, 0.0
        %vm8727 = vcmp.ge.f32.partialorder %v8695, 0.0
        %vm8728 = vcmp.ge.f32.partialorder %v8696, 0.0
        %vm8729 = vcmp.ge.f32.partialorder %v8697, 0.0
        %vm8730 = vcmp.ge.f32.partialorder %v8698, 0.0
        %vm8731 = vcmp.ge.f32.partialorder %v8699, 0.0
        %vm8732 = vcmp.ge.f32.partialorder %v8700, 0.0
        %vm8733 = vcmp.ge.f32.partialorder %v8701, 0.0
        %vm8734 = vcmp.ge.f32.partialorder %v8702, 0.0
        %vm8735 = vcmp.ge.f32.partialorder %v8703, 0.0
        %vm8736 = vcmp.ge.f32.partialorder %v8704, 0.0
        %vm8737 = vcmp.ge.f32.partialorder %v8705, 0.0
        %vm8738 = vcmp.ge.f32.partialorder %v8706, 0.0
        %vm8739 = vcmp.ge.f32.partialorder %v8707, 0.0
        %vm8740 = vcmp.ge.f32.partialorder %v8708, 0.0
        %vm8741 = vcmp.ge.f32.partialorder %v8709, 0.0
        %vm8742 = vcmp.ge.f32.partialorder %v8710, 0.0
        %vm8743 = vcmp.ge.f32.partialorder %v8711, 0.0
        %vm8744 = vcmp.ge.f32.partialorder %v8712, 0.0
        %vm8745 = vcmp.ge.f32.partialorder %v8713, 0.0
        %vm8746 = vcmp.ge.f32.partialorder %v8714, 0.0
        %vm8747 = vcmp.ge.f32.partialorder %v8715, 0.0
        %vm8748 = vcmp.ge.f32.partialorder %v8716, 0.0
        %v8749 = vmul.f32 %v8685, 0.2
        %v8750 = vmul.f32 %v8686, 0.2
        %v8751 = vmul.f32 %v8687, 0.2
        %v8752 = vmul.f32 %v8688, 0.2
        %v8753 = vmul.f32 %v8689, 0.2
        %v8754 = vmul.f32 %v8690, 0.2
        %v8755 = vmul.f32 %v8691, 0.2
        %v8756 = vmul.f32 %v8692, 0.2
        %v8757 = vmul.f32 %v8693, 0.2
        %v8758 = vmul.f32 %v8694, 0.2
        %v8759 = vmul.f32 %v8695, 0.2
        %v8760 = vmul.f32 %v8696, 0.2
        %v8761 = vmul.f32 %v8697, 0.2
        %v8762 = vmul.f32 %v8698, 0.2
        %v8763 = vmul.f32 %v8699, 0.2
        %v8764 = vmul.f32 %v8700, 0.2
        %v8765 = vmul.f32 %v8701, 0.2
        %v8766 = vmul.f32 %v8702, 0.2
        %v8767 = vmul.f32 %v8703, 0.2
        %v8768 = vmul.f32 %v8704, 0.2
        %v8769 = vmul.f32 %v8705, 0.2
        %v8770 = vmul.f32 %v8706, 0.2
        %v8771 = vmul.f32 %v8707, 0.2
        %v8772 = vmul.f32 %v8708, 0.2
        %v8773 = vmul.f32 %v8709, 0.2
        %v8774 = vmul.f32 %v8710, 0.2
        %v8775 = vmul.f32 %v8711, 0.2
        %v8776 = vmul.f32 %v8712, 0.2
        %v8777 = vmul.f32 %v8713, 0.2
        %v8778 = vmul.f32 %v8714, 0.2
        %v8779 = vmul.f32 %v8715, 0.2
        %v8780 = vmul.f32 %v8716, 0.2
        %v8781 = vsel %vm8717, %v8685, %v8749
        %v8782 = vsel %vm8718, %v8686, %v8750
        %v8783 = vsel %vm8719, %v8687, %v8751
        %v8784 = vsel %vm8720, %v8688, %v8752
        %v8785 = vsel %vm8721, %v8689, %v8753
        %v8786 = vsel %vm8722, %v8690, %v8754
        %v8787 = vsel %vm8723, %v8691, %v8755
        %v8788 = vsel %vm8724, %v8692, %v8756
        %v8789 = vsel %vm8725, %v8693, %v8757
        %v8790 = vsel %vm8726, %v8694, %v8758
        %v8791 = vsel %vm8727, %v8695, %v8759
        %v8792 = vsel %vm8728, %v8696, %v8760
        %v8793 = vsel %vm8729, %v8697, %v8761
        %v8794 = vsel %vm8730, %v8698, %v8762
        %v8795 = vsel %vm8731, %v8699, %v8763
        %v8796 = vsel %vm8732, %v8700, %v8764
        %v8797 = vsel %vm8733, %v8701, %v8765
        %v8798 = vsel %vm8734, %v8702, %v8766
        %v8799 = vsel %vm8735, %v8703, %v8767
        %v8800 = vsel %vm8736, %v8704, %v8768
        %v8801 = vsel %vm8737, %v8705, %v8769
        %v8802 = vsel %vm8738, %v8706, %v8770
        %v8803 = vsel %vm8739, %v8707, %v8771
        %v8804 = vsel %vm8740, %v8708, %v8772
        %v8805 = vsel %vm8741, %v8709, %v8773
        %v8806 = vsel %vm8742, %v8710, %v8774
        %v8807 = vsel %vm8743, %v8711, %v8775
        %v8808 = vsel %vm8744, %v8712, %v8776
        %v8809 = vsel %vm8745, %v8713, %v8777
        %v8810 = vsel %vm8746, %v8714, %v8778
        %v8811 = vsel %vm8747, %v8715, %v8779
        %v8812 = vsel %vm8748, %v8716, %v8780
        %v8813 = vpack.c.bf16 %v8782, %v8781
        %v8814 = vpack.c.bf16 %v8784, %v8783
        %v8815 = vpack.c.bf16 %v8786, %v8785
        %v8816 = vpack.c.bf16 %v8788, %v8787
        %v8817 = vpack.c.bf16 %v8790, %v8789
        %v8818 = vpack.c.bf16 %v8792, %v8791
        %v8819 = vpack.c.bf16 %v8794, %v8793
        %v8820 = vpack.c.bf16 %v8796, %v8795
        %v8821 = vpack.c.bf16 %v8798, %v8797
        %v8822 = vpack.c.bf16 %v8800, %v8799
        %v8823 = vpack.c.bf16 %v8802, %v8801
        %v8824 = vpack.c.bf16 %v8804, %v8803
        %v8825 = vpack.c.bf16 %v8806, %v8805
        %v8826 = vpack.c.bf16 %v8808, %v8807
        %v8827 = vpack.c.bf16 %v8810, %v8809
        %v8828 = vpack.c.bf16 %v8812, %v8811
        %v8829 = vld [vmem:[#allocation12] sm:$0xf]
        %v8830 = vld [vmem:[#allocation12 + $0x4] sm:$0xf]
        %v8831 = vld [vmem:[#allocation12 + $0x8] sm:$0xf]
        %v8832 = vld [vmem:[#allocation12 + $0xc] sm:$0xf]
        %v8833 = vld [vmem:[#allocation12 + $0x10] sm:$0xf]
        %v8834 = vld [vmem:[#allocation12 + $0x14] sm:$0xf]
        %v8835 = vld [vmem:[#allocation12 + $0x18] sm:$0xf]
        %v8836 = vld [vmem:[#allocation12 + $0x1c] sm:$0xf]
        %v8837 = vld [vmem:[#allocation12 + $0x20] sm:$0xf]
        %v8838 = vld [vmem:[#allocation12 + $0x24] sm:$0xf]
        %v8839 = vld [vmem:[#allocation12 + $0x28] sm:$0xf]
        %v8840 = vld [vmem:[#allocation12 + $0x2c] sm:$0xf]
        %v8841 = vld [vmem:[#allocation12 + $0x30] sm:$0xf]
        %v8842 = vld [vmem:[#allocation12 + $0x34] sm:$0xf]
        %v8843 = vld [vmem:[#allocation12 + $0x38] sm:$0xf]
        %v8844 = vld [vmem:[#allocation12 + $0x3c] sm:$0xf]
        %v8845 = vld [vmem:[#allocation14] sm:$0x1]
        %v8847 = vlaneseq
        %v8848 = vshrl.u32 %v8847, 7
        %v8849 = vsub.s32 0, %v8848
        %v8850 = vrot.slane %v8845, %v8849
        %v8868 = vunpack.c.l.b16 %v8829
        %v8869 = vunpack.c.l.b16 %v8830
        %v8870 = vunpack.c.l.b16 %v8831
        %v8871 = vunpack.c.l.b16 %v8832
        %v8872 = vunpack.c.l.b16 %v8833
        %v8873 = vunpack.c.l.b16 %v8834
        %v8874 = vunpack.c.l.b16 %v8835
        %v8875 = vunpack.c.l.b16 %v8836
        %v8876 = vunpack.c.l.b16 %v8837
        %v8877 = vunpack.c.l.b16 %v8838
        %v8878 = vunpack.c.l.b16 %v8839
        %v8879 = vunpack.c.l.b16 %v8840
        %v8880 = vunpack.c.l.b16 %v8841
        %v8881 = vunpack.c.l.b16 %v8842
        %v8882 = vunpack.c.l.b16 %v8843
        %v8883 = vunpack.c.l.b16 %v8844
        %v8884 = vpack.c.b16 %v8869, %v8868
        %v8885 = vpack.c.b16 %v8871, %v8870
        %v8886 = vpack.c.b16 %v8873, %v8872
        %v8887 = vpack.c.b16 %v8875, %v8874
        %v8888 = vpack.c.b16 %v8877, %v8876
        %v8889 = vpack.c.b16 %v8879, %v8878
        %v8890 = vpack.c.b16 %v8881, %v8880
        %v8891 = vpack.c.b16 %v8883, %v8882
        %8900 = vmatprep.subr.bf16.mxu0 0
        %8901 = vmatpush1.bf16.msra.mxu0 %v8884
        %8902 = vmatprep.subr.bf16.mxu0 0
        %8903 = vmatpush1.bf16.msra.mxu0 %v8885
        %8904 = vmatprep.subr.bf16.mxu0 0
        %8905 = vmatpush1.bf16.msra.mxu0 %v8886
        %8906 = vmatprep.subr.bf16.mxu0 0
        %8907 = vmatpush1.bf16.msra.mxu0 %v8887
        %8908 = vmatprep.subr.bf16.mxu0 0
        %8909 = vmatpush1.bf16.msra.mxu0 %v8888
        %8910 = vmatprep.subr.bf16.mxu0 0
        %8911 = vmatpush1.bf16.msra.mxu0 %v8889
        %8912 = vmatprep.subr.bf16.mxu0 0
        %8913 = vmatpush1.bf16.msra.mxu0 %v8890
        %8914 = vmatprep.subr.bf16.mxu0 0
        %8915 = vmatpush1.bf16.msra.mxu0 %v8891
        %8916 = vmatprep.subr.bf16.mxu0 0
        %8917 = vmatpush1.bf16.msra.mxu0 0
        %8918 = vmatprep.subr.bf16.mxu0 0
        %8919 = vmatpush1.bf16.msra.mxu0 0
        %8920 = vmatprep.subr.bf16.mxu0 0
        %8921 = vmatpush1.bf16.msra.mxu0 0
        %8922 = vmatprep.subr.bf16.mxu0 0
        %8923 = vmatpush1.bf16.msra.mxu0 0
        %8924 = vmatprep.subr.bf16.mxu0 0
        %8925 = vmatpush1.bf16.msra.mxu0 0
        %8926 = vmatprep.subr.bf16.mxu0 0
        %8927 = vmatpush1.bf16.msra.mxu0 0
        %8928 = vmatprep.subr.bf16.mxu0 0
        %8929 = vmatpush1.bf16.msra.mxu0 0
        %8930 = vmatprep.subr.bf16.mxu0 0
        %8931 = vmatpush1.bf16.msra.mxu0 0
        %8932 = vmatprep.mubr.bf16.mxu0 0
        %8933 = vmatmul.mubr.bf16.gmra.mrb[0].mxu0 %v8813
        %v8934 = vpop.f32.mrb[0].mxu0
        %v8935 = vadd.f32 %v8850, %v8934
        %v8936 = vpop.f32.mrb[0].mxu0
        %v8937 = vpop.f32.mrb[0].mxu0
        %v8938 = vadd.f32 %v8850, %v8937
        %v8939 = vpop.f32.mrb[0].mxu0
        %8940 = vmatprep.mubr.bf16.mxu0 0
        %8941 = vmatmul.mubr.bf16.gmra.mrb[0].mxu0 %v8814
        %v8942 = vpop.f32.mrb[0].mxu0
        %v8943 = vadd.f32 %v8850, %v8942
        %v8944 = vpop.f32.mrb[0].mxu0
        %v8945 = vpop.f32.mrb[0].mxu0
        %v8946 = vadd.f32 %v8850, %v8945
        %v8947 = vpop.f32.mrb[0].mxu0
        %8948 = vmatprep.mubr.bf16.mxu0 0
        %8949 = vmatmul.mubr.bf16.gmra.mrb[0].mxu0 %v8815
        %v8950 = vpop.f32.mrb[0].mxu0
        %v8951 = vadd.f32 %v8850, %v8950
        %v8952 = vpop.f32.mrb[0].mxu0
        %v8953 = vpop.f32.mrb[0].mxu0
        %v8954 = vadd.f32 %v8850, %v8953
        %v8955 = vpop.f32.mrb[0].mxu0
        %8956 = vmatprep.mubr.bf16.mxu0 0
        %8957 = vmatmul.mubr.bf16.gmra.mrb[0].mxu0 %v8816
        %v8958 = vpop.f32.mrb[0].mxu0
        %v8959 = vadd.f32 %v8850, %v8958
        %v8960 = vpop.f32.mrb[0].mxu0
        %v8961 = vpop.f32.mrb[0].mxu0
        %v8962 = vadd.f32 %v8850, %v8961
        %v8963 = vpop.f32.mrb[0].mxu0
        %8964 = vmatprep.mubr.bf16.mxu0 0
        %8965 = vmatmul.mubr.bf16.gmra.mrb[0].mxu0 %v8817
        %v8966 = vpop.f32.mrb[0].mxu0
        %v8967 = vadd.f32 %v8850, %v8966
        %v8968 = vpop.f32.mrb[0].mxu0
        %v8969 = vpop.f32.mrb[0].mxu0
        %v8970 = vadd.f32 %v8850, %v8969
        %v8971 = vpop.f32.mrb[0].mxu0
        %8972 = vmatprep.mubr.bf16.mxu0 0
        %8973 = vmatmul.mubr.bf16.gmra.mrb[0].mxu0 %v8818
        %v8974 = vpop.f32.mrb[0].mxu0
        %v8975 = vadd.f32 %v8850, %v8974
        %v8976 = vpop.f32.mrb[0].mxu0
        %v8977 = vpop.f32.mrb[0].mxu0
        %v8978 = vadd.f32 %v8850, %v8977
        %v8979 = vpop.f32.mrb[0].mxu0
        %8980 = vmatprep.mubr.bf16.mxu0 0
        %8981 = vmatmul.mubr.bf16.gmra.mrb[0].mxu0 %v8819
        %v8982 = vpop.f32.mrb[0].mxu0
        %v8983 = vadd.f32 %v8850, %v8982
        %v8984 = vpop.f32.mrb[0].mxu0
        %v8985 = vpop.f32.mrb[0].mxu0
        %v8986 = vadd.f32 %v8850, %v8985
        %v8987 = vpop.f32.mrb[0].mxu0
        %8988 = vmatprep.mubr.bf16.mxu0 0
        %8989 = vmatmul.mubr.bf16.gmra.mrb[0].mxu0 %v8820
        %v8990 = vpop.f32.mrb[0].mxu0
        %v8991 = vadd.f32 %v8850, %v8990
        %v8992 = vpop.f32.mrb[0].mxu0
        %v8993 = vpop.f32.mrb[0].mxu0
        %v8994 = vadd.f32 %v8850, %v8993
        %v8995 = vpop.f32.mrb[0].mxu0
        %8996 = vmatprep.mubr.bf16.mxu0 0
        %8997 = vmatmul.mubr.bf16.gmra.mrb[0].mxu0 %v8821
        %v8998 = vpop.f32.mrb[0].mxu0
        %v8999 = vadd.f32 %v8850, %v8998
        %v9000 = vpop.f32.mrb[0].mxu0
        %v9001 = vpop.f32.mrb[0].mxu0
        %v9002 = vadd.f32 %v8850, %v9001
        %v9003 = vpop.f32.mrb[0].mxu0
        %9004 = vmatprep.mubr.bf16.mxu0 0
        %9005 = vmatmul.mubr.bf16.gmra.mrb[0].mxu0 %v8822
        %v9006 = vpop.f32.mrb[0].mxu0
        %v9007 = vadd.f32 %v8850, %v9006
        %v9008 = vpop.f32.mrb[0].mxu0
        %v9009 = vpop.f32.mrb[0].mxu0
        %v9010 = vadd.f32 %v8850, %v9009
        %v9011 = vpop.f32.mrb[0].mxu0
        %9012 = vmatprep.mubr.bf16.mxu0 0
        %9013 = vmatmul.mubr.bf16.gmra.mrb[0].mxu0 %v8823
        %v9014 = vpop.f32.mrb[0].mxu0
        %v9015 = vadd.f32 %v8850, %v9014
        %v9016 = vpop.f32.mrb[0].mxu0
        %v9017 = vpop.f32.mrb[0].mxu0
        %v9018 = vadd.f32 %v8850, %v9017
        %v9019 = vpop.f32.mrb[0].mxu0
        %9020 = vmatprep.mubr.bf16.mxu0 0
        %9021 = vmatmul.mubr.bf16.gmra.mrb[0].mxu0 %v8824
        %v9022 = vpop.f32.mrb[0].mxu0
        %v9023 = vadd.f32 %v8850, %v9022
        %v9024 = vpop.f32.mrb[0].mxu0
        %v9025 = vpop.f32.mrb[0].mxu0
        %v9026 = vadd.f32 %v8850, %v9025
        %v9027 = vpop.f32.mrb[0].mxu0
        %9028 = vmatprep.mubr.bf16.mxu0 0
        %9029 = vmatmul.mubr.bf16.gmra.mrb[0].mxu0 %v8825
        %v9030 = vpop.f32.mrb[0].mxu0
        %v9031 = vadd.f32 %v8850, %v9030
        %v9032 = vpop.f32.mrb[0].mxu0
        %v9033 = vpop.f32.mrb[0].mxu0
        %v9034 = vadd.f32 %v8850, %v9033
        %v9035 = vpop.f32.mrb[0].mxu0
        %9036 = vmatprep.mubr.bf16.mxu0 0
        %9037 = vmatmul.mubr.bf16.gmra.mrb[0].mxu0 %v8826
        %v9038 = vpop.f32.mrb[0].mxu0
        %v9039 = vadd.f32 %v8850, %v9038
        %v9040 = vpop.f32.mrb[0].mxu0
        %v9041 = vpop.f32.mrb[0].mxu0
        %v9042 = vadd.f32 %v8850, %v9041
        %v9043 = vpop.f32.mrb[0].mxu0
        %9044 = vmatprep.mubr.bf16.mxu0 0
        %9045 = vmatmul.mubr.bf16.gmra.mrb[0].mxu0 %v8827
        %v9046 = vpop.f32.mrb[0].mxu0
        %v9047 = vadd.f32 %v8850, %v9046
        %v9048 = vpop.f32.mrb[0].mxu0
        %v9049 = vpop.f32.mrb[0].mxu0
        %v9050 = vadd.f32 %v8850, %v9049
        %v9051 = vpop.f32.mrb[0].mxu0
        %9052 = vmatprep.mubr.bf16.mxu0 0
        %9053 = vmatmul.mubr.bf16.gmra.mrb[0].mxu0 %v8828
        %v9054 = vpop.f32.mrb[0].mxu0
        %v9055 = vadd.f32 %v8850, %v9054
        %v9056 = vpop.f32.mrb[0].mxu0
        %v9057 = vpop.f32.mrb[0].mxu0
        %v9058 = vadd.f32 %v8850, %v9057
        %v9059 = vpop.f32.mrb[0].mxu0
        %9060 = vdwg.mxu0
        %v9061 = vadd.f32 %v8935, %v379
        %v9062 = vadd.f32 %v8938, %v380
        %v9063 = vadd.f32 %v8943, %v381
        %v9064 = vadd.f32 %v8946, %v382
        %v9065 = vadd.f32 %v8951, %v383
        %v9066 = vadd.f32 %v8954, %v384
        %v9067 = vadd.f32 %v8959, %v385
        %v9068 = vadd.f32 %v8962, %v386
        %v9069 = vadd.f32 %v8967, %v387
        %v9070 = vadd.f32 %v8970, %v388
        %v9071 = vadd.f32 %v8975, %v389
        %v9072 = vadd.f32 %v8978, %v390
        %v9073 = vadd.f32 %v8983, %v391
        %v9074 = vadd.f32 %v8986, %v392
        %v9075 = vadd.f32 %v8991, %v393
        %v9076 = vadd.f32 %v8994, %v394
        %v9077 = vadd.f32 %v8999, %v395
        %v9078 = vadd.f32 %v9002, %v396
        %v9079 = vadd.f32 %v9007, %v397
        %v9080 = vadd.f32 %v9010, %v398
        %v9081 = vadd.f32 %v9015, %v399
        %v9082 = vadd.f32 %v9018, %v400
        %v9083 = vadd.f32 %v9023, %v401
        %v9084 = vadd.f32 %v9026, %v402
        %v9085 = vadd.f32 %v9031, %v403
        %v9086 = vadd.f32 %v9034, %v404
        %v9087 = vadd.f32 %v9039, %v405
        %v9088 = vadd.f32 %v9042, %v406
        %v9089 = vadd.f32 %v9047, %v407
        %v9090 = vadd.f32 %v9050, %v408
        %v9091 = vadd.f32 %v9055, %v409
        %v9092 = vadd.f32 %v9058, %v410
        %9093 = vst.msk [vmem:[%s377] sm:$0xff] %vm450, %v9061
        %9094 = vst.msk [vmem:[%s377 + $0x8] sm:$0xff] %vm450, %v9062
        %9095 = vst.msk [vmem:[%s377 + $0x10] sm:$0xff] %vm450, %v9063
        %9096 = vst.msk [vmem:[%s377 + $0x18] sm:$0xff] %vm450, %v9064
        %9097 = vst.msk [vmem:[%s377 + $0x20] sm:$0xff] %vm450, %v9065
        %9098 = vst.msk [vmem:[%s377 + $0x28] sm:$0xff] %vm450, %v9066
        %9099 = vst.msk [vmem:[%s377 + $0x30] sm:$0xff] %vm450, %v9067
        %9100 = vst.msk [vmem:[%s377 + $0x38] sm:$0xff] %vm450, %v9068
        %9101 = vst.msk [vmem:[%s377 + $0x40] sm:$0xff] %vm450, %v9069
        %9102 = vst.msk [vmem:[%s377 + $0x48] sm:$0xff] %vm450, %v9070
        %9103 = vst.msk [vmem:[%s377 + $0x50] sm:$0xff] %vm450, %v9071
        %9104 = vst.msk [vmem:[%s377 + $0x58] sm:$0xff] %vm450, %v9072
        %9105 = vst.msk [vmem:[%s377 + $0x60] sm:$0xff] %vm450, %v9073
        %9106 = vst.msk [vmem:[%s377 + $0x68] sm:$0xff] %vm450, %v9074
        %9107 = vst.msk [vmem:[%s377 + $0x70] sm:$0xff] %vm450, %v9075
        %9108 = vst.msk [vmem:[%s377 + $0x78] sm:$0xff] %vm450, %v9076
        %9109 = vst.msk [vmem:[%s377 + $0x80] sm:$0xff] %vm450, %v9077
        %9110 = vst.msk [vmem:[%s377 + $0x88] sm:$0xff] %vm450, %v9078
        %9111 = vst.msk [vmem:[%s377 + $0x90] sm:$0xff] %vm450, %v9079
        %9112 = vst.msk [vmem:[%s377 + $0x98] sm:$0xff] %vm450, %v9080
        %9113 = vst.msk [vmem:[%s377 + $0xa0] sm:$0xff] %vm450, %v9081
        %9114 = vst.msk [vmem:[%s377 + $0xa8] sm:$0xff] %vm450, %v9082
        %9115 = vst.msk [vmem:[%s377 + $0xb0] sm:$0xff] %vm450, %v9083
        %9116 = vst.msk [vmem:[%s377 + $0xb8] sm:$0xff] %vm450, %v9084
        %9117 = vst.msk [vmem:[%s377 + $0xc0] sm:$0xff] %vm450, %v9085
        %9118 = vst.msk [vmem:[%s377 + $0xc8] sm:$0xff] %vm450, %v9086
        %9119 = vst.msk [vmem:[%s377 + $0xd0] sm:$0xff] %vm450, %v9087
        %9120 = vst.msk [vmem:[%s377 + $0xd8] sm:$0xff] %vm450, %v9088
        %9121 = vst.msk [vmem:[%s377 + $0xe0] sm:$0xff] %vm450, %v9089
        %9122 = vst.msk [vmem:[%s377 + $0xe8] sm:$0xff] %vm450, %v9090
        %9123 = vst.msk [vmem:[%s377 + $0xf0] sm:$0xff] %vm450, %v9091
        %9124 = vst.msk [vmem:[%s377 + $0xf8] sm:$0xff] %vm450, %v9092
        %s9125 = sand.u32 %s187, 1
        %s9126 = scalar_lea.sflag [#allocation5], %s9125
        %s9127 = sand.u32 %s187, 1
        %s9128 = smul.addr %s9127, 256
        %s9129 = scalar_lea.vmem [#allocation15], %s9128
        // Predicated region
        $region77: #{tpu_custom_call.1} parent=47 // pred_check
          %p9130 = pneg %p197
        $region78: #{tpu_custom_call.1} parent=47 // pred_check_branch
          %9132 = sbr.rel (%p9130) target = $region80
        $region79: #{tpu_custom_call.1} parent=47 // pred_region
          %s9134 = ssub.s32 4096, 4096
          %9135 = vsyncadd %s9126, %s9134
          %s9136 = smul.addr %s27, 32
          %s9137 = smul.addr %s9136, 128
          %s9138 = scalar_lea.hbm %s7, %s9137
          %s9139 = sshll.u32 %s9129, 4
          %s9140 = int_to_ptr.vmem [resolvable:$true] %s9139
          %9145 = dma.vmem_to_hbm [thread:$0]  %s9140, 4096, %s9138, %s9126, 128, 128, 8
        $region80: #{tpu_custom_call.1} parent=47 // pred_fallthru
          _
      $region48: #{tpu_custom_call.1} parent=5 // pred_fallthru
        _
      %p9146 = scmp.le.s32.totalorder 2, %s22
      // Predicated region
      $region81: #{tpu_custom_call.1} parent=5 // pred_check
        %p9147 = pneg %p9146
      $region82: #{tpu_custom_call.1} parent=5 // pred_check_branch
        %9149 = sbr.rel (%p9147) target = $region84
      $region83: #{tpu_custom_call.1} parent=5 // pred_region
        %s9150 = ssub.s32 %s22, 2
        // Predicated region
        $region85: #{tpu_custom_call.1} parent=83 // pred_check
          %p9151 = pneg %p203
        $region86: #{tpu_custom_call.1} parent=83 // pred_check_branch
          %9153 = sbr.rel (%p9151) target = $region88
        $region87: #{tpu_custom_call.1} parent=83 // pred_region
          %s9154 = sand.u32 %s188, 1
          %s9155 = scalar_lea.sflag [#allocation5], %s9154
          %s9156 = sand.u32 %s188, 1
          %s9157 = smul.addr %s9156, 256
          %s9158 = scalar_lea.vmem [#allocation15], %s9157
          %9159 = dma.done %s9155, 4096
        $region88: #{tpu_custom_call.1} parent=83 // pred_fallthru
          _
      $region84: #{tpu_custom_call.1} parent=5 // pred_fallthru
        _
    $region6: #{tpu_custom_call.1} parent=1 // loop_footer
      %s26 = sadd.s32 1, %s22
    $region7: #{tpu_custom_call.1} parent=1 // loop_footer_branch
      %21 = sbr.rel target = $region3
    $region8: #{tpu_custom_call.1} parent=1 // loop_exit
      _
    %9160 = vsyncpa [#allocation4], 1
    %s9161 = scalar_lea.sflag [#allocation4], 1
    %9162 = vsyncpa %s9161, 1
    %9163 = vsyncpa [#allocation7], 1
    %9164 = vsyncpa [#allocation10], 1
    %9165 = vsyncpa [#allocation13], 1
    %9166 = vsyncpa [#allocation5], 1
    %s9167 = scalar_lea.sflag [#allocation5], 1
    %9168 = vsyncpa %s9167, 1

</llo_original>
